<compile_context>
chip_gen: v7x
topology: tpu7x:2x2x1
jax: 0.10.0
libtpu: 0.0.40
codegen_flags: <defaults>
</compile_context>

<pallas_src>
import functools

import jax
import jax.numpy as jnp
from jax.experimental import pallas as pl
from jax.experimental.pallas import tpu as pltpu

# ---- model hyper-parameters (small shapes consistent with the module) -------
T           = 4     # time steps
B           = 2     # batch
C_IN        = 4     # input image channels
H = W       = 8     # spatial  -> N = 64 tokens, B*N = 128 (one full lane)
EMBED_DIMS  = 32    # D
NUM_HEADS   = 4
MLP_RATIO   = 4
DEPTHS      = 2
NUM_CLASSES = 10
ENC_OUT_CH  = EMBED_DIMS   # == embed_dims -> projection = nn.Identity()
TAU         = 2.0
BN_EPS      = 1e-5


# ------------------------------- kernel --------------------------------------
def _lif_step(v_ref, inp, thr, first):
    """MultiStepLIFNode(tau=2, v_reset=0, hard reset).  `first` folds the zero
    membrane init into the t==0 step (v_prev == 0 -> v = inp/tau), so no
    up-front zero stores and no redundant reload of zeros."""
    if first:
        v = inp * (1.0 / TAU)
    else:
        v_prev = v_ref[...]
        v = v_prev + (inp - v_prev) * (1.0 / TAU)
    spike = (v >= thr).astype(jnp.float32)
    v_ref[...] = v * (1.0 - spike)
    return spike


def spikformer_kernel(*refs, depths, batch, time_steps):
    """Fused forward: encoder -> DEPTHS Spikformer blocks over T steps -> head.

    Activation layout everywhere: (features, M) with M = B*N on the lane axis.
    """
    it = iter(refs)
    x_ref, w_enc_ref, b_enc_ref = next(it), next(it), next(it)
    blk_w_refs = [tuple(next(it) for _ in range(8)) for _ in range(depths)]
    w_head_ref, b_head_ref = next(it), next(it)
    hmask_ref, bmask_ref, pool_ref = next(it), next(it), next(it)
    logits_ref, spikes_ref = next(it), next(it)
    blk_s = [tuple(next(it) for _ in range(5)) for _ in range(depths)]

    D = w_enc_ref.shape[0]
    M = x_ref.shape[1]

    # ---- encoder: 1x1 conv as W^T @ X, per-time-step adaptive thresholds ----
    feat = jnp.dot(w_enc_ref[...], x_ref[...],
                   preferred_element_type=jnp.float32) + b_enc_ref[...]   # (D, M)
    # TODO(synk): threshold schedule 0.05*t kept from the previous version;
    # verify against the actual ConvSTAL encoder (0.05*(t+1) / strict '>').
    sp = [(feat >= (0.05 * t)).astype(jnp.float32) for t in range(time_steps)]
    spikes_ref[...] = jnp.stack(sp, axis=0)          # one dense (T, D, M) store

    # ---- hoisted constants: read once, reused across the unrolled T loop ----
    head_mask = hmask_ref[...]                        # (D, D) same-head mask
    bmasks = [bmask_ref[b] for b in range(batch)]     # per-batch (D, M) lane masks
    blk_w = []
    for r in blk_w_refs:
        wqkv, bqkv = r[0][...], r[1][...]
        wp, bp = r[2][...], r[3][...]
        w1, b1 = r[4][...], r[5][...]
        w2, b2 = r[6][...], r[7][...]
        blk_w.append((
            wqkv, jnp.broadcast_to(bqkv, (bqkv.shape[0], M)),
            wp,   jnp.broadcast_to(bp,   (D, M)),
            w1,   jnp.broadcast_to(b1,   (b1.shape[0], M)),
            w2,   jnp.broadcast_to(b2,   (D, M)),
        ))

    def block_step(x, w, s, first):
        wqkv, bqkv, wp, bp, w1, b1, w2, b2 = w
        vqkv, va, vp, v1, v2 = s
        # fused q/k/v projection (+folded BN) and LIF
        qkv = jnp.dot(wqkv, x, preferred_element_type=jnp.float32) + bqkv
        s_qkv = _lif_step(vqkv, qkv, 1.0, first)                   # (3D, M)
        q = s_qkv[0:D]
        k = s_qkv[D:2 * D]
        v = s_qkv[2 * D:3 * D]

        # spiking self-attention (no softmax), reassociated: scale * q @ (k^T v).
        # Batch separation by full-width lane masks (no lane slicing / concat),
        # head separation by the constant (D, D) block-diagonal mask on kv.
        kT = jnp.transpose(k)                                      # (M, D), 1 relayout
        parts = []
        for b in range(batch):
            kv = jnp.dot(v * bmasks[b], kT,
                         preferred_element_type=jnp.float32)       # (D, D)
            ob = jnp.dot(kv * head_mask, q,
                         preferred_element_type=jnp.float32)       # (D, M)
            parts.append(ob * bmasks[b])
        attn = parts[0]
        for p in parts[1:]:
            attn = attn + p
        attn = attn * 0.125

        s_attn = _lif_step(va, attn, 0.5, first)                   # attn LIF v_th=0.5
        proj = jnp.dot(wp, s_attn, preferred_element_type=jnp.float32) + bp
        x = x + _lif_step(vp, proj, 1.0, first)                    # residual 1
        # spiking MLP
        h1 = jnp.dot(w1, x, preferred_element_type=jnp.float32) + b1
        s1 = _lif_step(v1, h1, 1.0, first)                         # (Dh, M)
        h2 = jnp.dot(w2, s1, preferred_element_type=jnp.float32) + b2
        return x + _lif_step(v2, h2, 1.0, first)                   # residual 2

    # ---- unrolled time loop over the transformer blocks ----
    acc = None
    for t in range(time_steps):
        x = sp[t]
        for w, s in zip(blk_w, blk_s):
            x = block_step(x, w, s, first=(t == 0))
        acc = x if acc is None else acc + x

    # head: mean over tokens and T as ONE (D,M)@(M,B) matmul, then Linear
    pooled = jnp.dot(acc, pool_ref[...], preferred_element_type=jnp.float32)  # (D, B)
    logits_ref[...] = (jnp.dot(w_head_ref[...], pooled,
                               preferred_element_type=jnp.float32)
                       + b_head_ref[...])                          # (classes, B)


# ------------------------------ wrapper ---------------------------------------
def spikformer_forward(x_nchw, params):
    Bb, C, Hh, Ww = x_nchw.shape
    N = Hh * Ww
    M = Bb * N
    D = params['w_enc'].shape[0]
    Dh = params['blocks'][0]['w1'].shape[0]
    nc = params['w_head'].shape[0]
    hd = D // NUM_HEADS

    # NCHW -> (C, B*H*W): channels on sublanes, batch-major tokens on lanes.
    x_in = jnp.transpose(x_nchw, (1, 0, 2, 3)).reshape(C, M)

    # Constant masks / pooling matrix (shape-only -> constant-folded under jit).
    di = jnp.arange(D)
    head_mask = (di[:, None] // hd == di[None, :] // hd).astype(jnp.float32)      # (D, D)
    mi = jnp.arange(M)
    bsel = (mi[None, :] // N == jnp.arange(Bb)[:, None]).astype(jnp.float32)      # (B, M)
    batch_masks = jnp.broadcast_to(bsel[:, None, :], (Bb, D, M))                  # (B, D, M)
    pool_mat = jnp.transpose(bsel) * (1.0 / (T * N))                              # (M, B)

    inputs = [x_in, params['w_enc'], params['b_enc']]
    for blk in params['blocks']:
        inputs += [blk[k] for k in
                   ('wqkv', 'bqkv', 'wp', 'bp', 'w1', 'b1', 'w2', 'b2')]
    inputs += [params['w_head'], params['b_head'], head_mask, batch_masks, pool_mat]

    scratch = []
    for _ in params['blocks']:
        scratch += [pltpu.VMEM((3 * D, M), jnp.float32),   # v_qkv
                    pltpu.VMEM((D, M), jnp.float32),       # v_attn
                    pltpu.VMEM((D, M), jnp.float32),       # v_proj
                    pltpu.VMEM((Dh, M), jnp.float32),      # v_fc1
                    pltpu.VMEM((D, M), jnp.float32)]       # v_fc2

    kernel = functools.partial(
        spikformer_kernel,
        depths=len(params['blocks']), batch=Bb, time_steps=T)

    # TODO(synk): for repeated/streaming inference, add an outer grid axis over
    # sample groups (weights index_map -> block 0) to amortize launch cost; on
    # v7x mark it "parallel" to use both TensorCores.
    logits_t, spikes = pl.pallas_call(
        kernel,
        out_shape=(jax.ShapeDtypeStruct((nc, Bb), jnp.float32),
                   jax.ShapeDtypeStruct((T, D, M), jnp.float32)),
        in_specs=[pl.BlockSpec(memory_space=pltpu.MemorySpace.VMEM)] * len(inputs),
        out_specs=(pl.BlockSpec(memory_space=pltpu.MemorySpace.VMEM),
                   pl.BlockSpec(memory_space=pltpu.MemorySpace.VMEM)),
        scratch_shapes=scratch,
    )(*inputs)

    logits = logits_t.T                                            # (B, classes)
    # embeddings in the ConvSTAL layout (B, T, C_enc*H*W), channel-major flatten.
    # projection == nn.Identity() because encoder_out_channels == embed_dims.
    # TODO(synk): the Conv2d(1x1)+LayerNorm(embed_dims) projection branch of the
    # original module (encoder_out_channels != embed_dims case) is skipped.
    embeddings = (spikes.reshape(T, D, Bb, N)
                        .transpose(2, 0, 1, 3)
                        .reshape(Bb, T, D * N))
    return logits, embeddings


# ------------------------------ parameters ------------------------------------
def init_params(key):
    D, Dh = EMBED_DIMS, EMBED_DIMS * MLP_RATIO
    bn_fold = 1.0 / jnp.sqrt(1.0 + BN_EPS)   # eval-mode BatchNorm1d, init stats
    keys = jax.random.split(key, 2 + DEPTHS)
    params = {
        # all weights stored transposed: (out_features, in_features)
        'w_enc': jax.random.normal(keys[0], (ENC_OUT_CH, C_IN), jnp.float32) * 0.3,
        'b_enc': jnp.zeros((ENC_OUT_CH, 1), jnp.float32),
        'w_head': jax.random.normal(keys[1], (NUM_CLASSES, D), jnp.float32) * 0.02,
        'b_head': jnp.zeros((NUM_CLASSES, 1), jnp.float32),
    }
    blocks = []
    for d in range(DEPTHS):
        bk = jax.random.split(keys[2 + d], 4)
        std = 0.3   # synthetic init (larger than trunc_normal 0.02 so LIFs fire)
        blk = {
            'wqkv': jax.random.normal(bk[0], (3 * D, D), jnp.float32) * std * bn_fold,
            'bqkv': jnp.zeros((3 * D, 1), jnp.float32),
            'wp':   jax.random.normal(bk[1], (D, D), jnp.float32) * std * bn_fold,
            'bp':   jnp.zeros((D, 1), jnp.float32),
            'w1':   jax.random.normal(bk[2], (Dh, D), jnp.float32) * std * bn_fold,
            'b1':   jnp.zeros((Dh, 1), jnp.float32),
            'w2':   jax.random.normal(bk[3], (D, Dh), jnp.float32) * std * bn_fold,
            'b2':   jnp.zeros((D, 1), jnp.float32),
        }
        blocks.append(blk)
    params['blocks'] = blocks
    return params


if __name__ == "__main__":
    key = jax.random.PRNGKey(0)
    pkey, xkey = jax.random.split(key)
    params = init_params(pkey)
    x = jax.random.normal(xkey, (B, C_IN, H, W), jnp.float32)   # NCHW input

    logits, embeddings = jax.jit(spikformer_forward)(x, params)
    jax.block_until_ready((logits, embeddings))

    assert logits.shape == (B, NUM_CLASSES)
    assert embeddings.shape == (B, T, ENC_OUT_CH * H * W)
    print("KERNEL_OK")
</pallas_src>

<mosaic_0001>
module attributes {stable_mosaic.version = 11 : i64} {
  func.func @spikformer_kernel(%arg0: memref<4x128xf32, #tpu.memory_space<vmem>>, %arg1: memref<32x4xf32, #tpu.memory_space<vmem>>, %arg2: memref<32x1xf32, #tpu.memory_space<vmem>>, %arg3: memref<96x32xf32, #tpu.memory_space<vmem>>, %arg4: memref<96x1xf32, #tpu.memory_space<vmem>>, %arg5: memref<32x32xf32, #tpu.memory_space<vmem>>, %arg6: memref<32x1xf32, #tpu.memory_space<vmem>>, %arg7: memref<128x32xf32, #tpu.memory_space<vmem>>, %arg8: memref<128x1xf32, #tpu.memory_space<vmem>>, %arg9: memref<32x128xf32, #tpu.memory_space<vmem>>, %arg10: memref<32x1xf32, #tpu.memory_space<vmem>>, %arg11: memref<96x32xf32, #tpu.memory_space<vmem>>, %arg12: memref<96x1xf32, #tpu.memory_space<vmem>>, %arg13: memref<32x32xf32, #tpu.memory_space<vmem>>, %arg14: memref<32x1xf32, #tpu.memory_space<vmem>>, %arg15: memref<128x32xf32, #tpu.memory_space<vmem>>, %arg16: memref<128x1xf32, #tpu.memory_space<vmem>>, %arg17: memref<32x128xf32, #tpu.memory_space<vmem>>, %arg18: memref<32x1xf32, #tpu.memory_space<vmem>>, %arg19: memref<10x32xf32, #tpu.memory_space<vmem>>, %arg20: memref<10x1xf32, #tpu.memory_space<vmem>>, %arg21: memref<32x32xf32, #tpu.memory_space<vmem>>, %arg22: memref<2x32x128xf32, #tpu.memory_space<vmem>>, %arg23: memref<128x2xf32, #tpu.memory_space<vmem>>, %arg24: memref<10x2xf32, #tpu.memory_space<vmem>>, %arg25: memref<4x32x128xf32, #tpu.memory_space<vmem>>, %arg26: memref<96x128xf32, #tpu.memory_space<vmem>>, %arg27: memref<32x128xf32, #tpu.memory_space<vmem>>, %arg28: memref<32x128xf32, #tpu.memory_space<vmem>>, %arg29: memref<128x128xf32, #tpu.memory_space<vmem>>, %arg30: memref<32x128xf32, #tpu.memory_space<vmem>>, %arg31: memref<96x128xf32, #tpu.memory_space<vmem>>, %arg32: memref<32x128xf32, #tpu.memory_space<vmem>>, %arg33: memref<32x128xf32, #tpu.memory_space<vmem>>, %arg34: memref<128x128xf32, #tpu.memory_space<vmem>>, %arg35: memref<32x128xf32, #tpu.memory_space<vmem>>) attributes {dimension_semantics = [], scalar_prefetch = 0 : i64, scratch_operands = 10 : i64, tpu.core_type = #tpu.core_type<tc>} {
    %c0 = arith.constant 0 : index
    %c0_0 = arith.constant 0 : index
    %0 = vector.load %arg1[%c0, %c0_0] : memref<32x4xf32, #tpu.memory_space<vmem>>, vector<32x4xf32>
    %c0_1 = arith.constant 0 : index
    %c0_2 = arith.constant 0 : index
    %1 = vector.load %arg0[%c0_1, %c0_2] : memref<4x128xf32, #tpu.memory_space<vmem>>, vector<4x128xf32>
    %cst = arith.constant dense<0.000000e+00> : vector<32x128xf32>
    %2 = tpu.matmul %0, %1, %cst {dimension_numbers = #tpu.dot_dimension_numbers<[1], [0], [0], [1], [0, 0, 1, 1], [], []>} : vector<32x4xf32>, vector<4x128xf32>, vector<32x128xf32> -> vector<32x128xf32>
    %c0_3 = arith.constant 0 : index
    %c0_4 = arith.constant 0 : index
    %3 = vector.load %arg2[%c0_3, %c0_4] : memref<32x1xf32, #tpu.memory_space<vmem>>, vector<32x1xf32>
    %4 = vector.broadcast %3 : vector<32x1xf32> to vector<32x128xf32>
    %5 = arith.addf %2, %4 : vector<32x128xf32>
    %cst_5 = arith.constant 0.000000e+00 : f32
    %6 = vector.broadcast %cst_5 : f32 to vector<32x128xf32>
    %7 = arith.cmpf oge, %5, %6 : vector<32x128xf32>
    %8 = arith.extui %7 : vector<32x128xi1> to vector<32x128xi32>
    %9 = arith.sitofp %8 : vector<32x128xi32> to vector<32x128xf32>
    %cst_6 = arith.constant 5.000000e-02 : f32
    %10 = vector.broadcast %cst_6 : f32 to vector<32x128xf32>
    %11 = arith.cmpf oge, %5, %10 : vector<32x128xf32>
    %12 = arith.extui %11 : vector<32x128xi1> to vector<32x128xi32>
    %13 = arith.sitofp %12 : vector<32x128xi32> to vector<32x128xf32>
    %cst_7 = arith.constant 1.000000e-01 : f32
    %14 = vector.broadcast %cst_7 : f32 to vector<32x128xf32>
    %15 = arith.cmpf oge, %5, %14 : vector<32x128xf32>
    %16 = arith.extui %15 : vector<32x128xi1> to vector<32x128xi32>
    %17 = arith.sitofp %16 : vector<32x128xi32> to vector<32x128xf32>
    %cst_8 = arith.constant 1.500000e-01 : f32
    %18 = vector.broadcast %cst_8 : f32 to vector<32x128xf32>
    %19 = arith.cmpf oge, %5, %18 : vector<32x128xf32>
    %20 = arith.extui %19 : vector<32x128xi1> to vector<32x128xi32>
    %21 = arith.sitofp %20 : vector<32x128xi32> to vector<32x128xf32>
    %22 = vector.shape_cast %9 : vector<32x128xf32> to vector<1x32x128xf32>
    %23 = vector.shape_cast %13 : vector<32x128xf32> to vector<1x32x128xf32>
    %24 = vector.shape_cast %17 : vector<32x128xf32> to vector<1x32x128xf32>
    %25 = vector.shape_cast %21 : vector<32x128xf32> to vector<1x32x128xf32>
    %26 = tpu.concatenate %22, %23, %24, %25 in 0 : vector<1x32x128xf32>, vector<1x32x128xf32>, vector<1x32x128xf32>, vector<1x32x128xf32> -> vector<4x32x128xf32>
    %c0_9 = arith.constant 0 : index
    %c0_10 = arith.constant 0 : index
    %c0_11 = arith.constant 0 : index
    %27 = vector.load %arg25[%c0_9, %c0_10, %c0_11] : memref<4x32x128xf32, #tpu.memory_space<vmem>>, vector<4x32x128xf32>
    tpu.vector_store %arg25[%c0_9, %c0_10, %c0_11], %26 {strides = array<i32>} : memref<4x32x128xf32, #tpu.memory_space<vmem>>, vector<4x32x128xf32>,
    %c0_12 = arith.constant 0 : index
    %c0_13 = arith.constant 0 : index
    %28 = vector.load %arg21[%c0_12, %c0_13] : memref<32x32xf32, #tpu.memory_space<vmem>>, vector<32x32xf32>
    %c0_14 = arith.constant 0 : index
    %c0_15 = arith.constant 0 : index
    %c0_16 = arith.constant 0 : index
    %29 = vector.load %arg22[%c0_14, %c0_15, %c0_16] : memref<2x32x128xf32, #tpu.memory_space<vmem>>, vector<1x32x128xf32>
    %30 = vector.shape_cast %29 : vector<1x32x128xf32> to vector<32x128xf32>
    %c1 = arith.constant 1 : index
    %c0_17 = arith.constant 0 : index
    %c0_18 = arith.constant 0 : index
    %31 = vector.load %arg22[%c1, %c0_17, %c0_18] : memref<2x32x128xf32, #tpu.memory_space<vmem>>, vector<1x32x128xf32>
    %32 = vector.shape_cast %31 : vector<1x32x128xf32> to vector<32x128xf32>
    %c0_19 = arith.constant 0 : index
    %c0_20 = arith.constant 0 : index
    %33 = vector.load %arg3[%c0_19, %c0_20] : memref<96x32xf32, #tpu.memory_space<vmem>>, vector<96x32xf32>
    %c0_21 = arith.constant 0 : index
    %c0_22 = arith.constant 0 : index
    %34 = vector.load %arg4[%c0_21, %c0_22] : memref<96x1xf32, #tpu.memory_space<vmem>>, vector<96x1xf32>
    %c0_23 = arith.constant 0 : index
    %c0_24 = arith.constant 0 : index
    %35 = vector.load %arg5[%c0_23, %c0_24] : memref<32x32xf32, #tpu.memory_space<vmem>>, vector<32x32xf32>
    %c0_25 = arith.constant 0 : index
    %c0_26 = arith.constant 0 : index
    %36 = vector.load %arg6[%c0_25, %c0_26] : memref<32x1xf32, #tpu.memory_space<vmem>>, vector<32x1xf32>
    %c0_27 = arith.constant 0 : index
    %c0_28 = arith.constant 0 : index
    %37 = vector.load %arg7[%c0_27, %c0_28] : memref<128x32xf32, #tpu.memory_space<vmem>>, vector<128x32xf32>
    %c0_29 = arith.constant 0 : index
    %c0_30 = arith.constant 0 : index
    %38 = vector.load %arg8[%c0_29, %c0_30] : memref<128x1xf32, #tpu.memory_space<vmem>>, vector<128x1xf32>
    %c0_31 = arith.constant 0 : index
    %c0_32 = arith.constant 0 : index
    %39 = vector.load %arg9[%c0_31, %c0_32] : memref<32x128xf32, #tpu.memory_space<vmem>>, vector<32x128xf32>
    %c0_33 = arith.constant 0 : index
    %c0_34 = arith.constant 0 : index
    %40 = vector.load %arg10[%c0_33, %c0_34] : memref<32x1xf32, #tpu.memory_space<vmem>>, vector<32x1xf32>
    %41 = vector.shape_cast %34 : vector<96x1xf32> to vector<96x1xf32>
    %42 = vector.broadcast %41 : vector<96x1xf32> to vector<96x128xf32>
    %43 = vector.shape_cast %36 : vector<32x1xf32> to vector<32x1xf32>
    %44 = vector.broadcast %43 : vector<32x1xf32> to vector<32x128xf32>
    %45 = vector.shape_cast %38 : vector<128x1xf32> to vector<128x1xf32>
    %46 = vector.broadcast %45 : vector<128x1xf32> to vector<128x128xf32>
    %47 = vector.shape_cast %40 : vector<32x1xf32> to vector<32x1xf32>
    %48 = vector.broadcast %47 : vector<32x1xf32> to vector<32x128xf32>
    %c0_35 = arith.constant 0 : index
    %c0_36 = arith.constant 0 : index
    %49 = vector.load %arg11[%c0_35, %c0_36] : memref<96x32xf32, #tpu.memory_space<vmem>>, vector<96x32xf32>
    %c0_37 = arith.constant 0 : index
    %c0_38 = arith.constant 0 : index
    %50 = vector.load %arg12[%c0_37, %c0_38] : memref<96x1xf32, #tpu.memory_space<vmem>>, vector<96x1xf32>
    %c0_39 = arith.constant 0 : index
    %c0_40 = arith.constant 0 : index
    %51 = vector.load %arg13[%c0_39, %c0_40] : memref<32x32xf32, #tpu.memory_space<vmem>>, vector<32x32xf32>
    %c0_41 = arith.constant 0 : index
    %c0_42 = arith.constant 0 : index
    %52 = vector.load %arg14[%c0_41, %c0_42] : memref<32x1xf32, #tpu.memory_space<vmem>>, vector<32x1xf32>
    %c0_43 = arith.constant 0 : index
    %c0_44 = arith.constant 0 : index
    %53 = vector.load %arg15[%c0_43, %c0_44] : memref<128x32xf32, #tpu.memory_space<vmem>>, vector<128x32xf32>
    %c0_45 = arith.constant 0 : index
    %c0_46 = arith.constant 0 : index
    %54 = vector.load %arg16[%c0_45, %c0_46] : memref<128x1xf32, #tpu.memory_space<vmem>>, vector<128x1xf32>
    %c0_47 = arith.constant 0 : index
    %c0_48 = arith.constant 0 : index
    %55 = vector.load %arg17[%c0_47, %c0_48] : memref<32x128xf32, #tpu.memory_space<vmem>>, vector<32x128xf32>
    %c0_49 = arith.constant 0 : index
    %c0_50 = arith.constant 0 : index
    %56 = vector.load %arg18[%c0_49, %c0_50] : memref<32x1xf32, #tpu.memory_space<vmem>>, vector<32x1xf32>
    %57 = vector.shape_cast %50 : vector<96x1xf32> to vector<96x1xf32>
    %58 = vector.broadcast %57 : vector<96x1xf32> to vector<96x128xf32>
    %59 = vector.shape_cast %52 : vector<32x1xf32> to vector<32x1xf32>
    %60 = vector.broadcast %59 : vector<32x1xf32> to vector<32x128xf32>
    %61 = vector.shape_cast %54 : vector<128x1xf32> to vector<128x1xf32>
    %62 = vector.broadcast %61 : vector<128x1xf32> to vector<128x128xf32>
    %63 = vector.shape_cast %56 : vector<32x1xf32> to vector<32x1xf32>
    %64 = vector.broadcast %63 : vector<32x1xf32> to vector<32x128xf32>
    %cst_51 = arith.constant dense<0.000000e+00> : vector<96x128xf32>
    %65 = tpu.matmul %33, %9, %cst_51 {dimension_numbers = #tpu.dot_dimension_numbers<[1], [0], [0], [1], [0, 0, 1, 1], [], []>} : vector<96x32xf32>, vector<32x128xf32>, vector<96x128xf32> -> vector<96x128xf32>
    %66 = arith.addf %65, %42 : vector<96x128xf32>
    %cst_52 = arith.constant 5.000000e-01 : f32
    %67 = vector.broadcast %cst_52 : f32 to vector<96x128xf32>
    %68 = arith.mulf %66, %67 : vector<96x128xf32>
    %cst_53 = arith.constant 1.000000e+00 : f32
    %69 = vector.broadcast %cst_53 : f32 to vector<96x128xf32>
    %70 = arith.cmpf oge, %68, %69 : vector<96x128xf32>
    %71 = arith.extui %70 : vector<96x128xi1> to vector<96x128xi32>
    %72 = arith.sitofp %71 : vector<96x128xi32> to vector<96x128xf32>
    %cst_54 = arith.constant 1.000000e+00 : f32
    %73 = vector.broadcast %cst_54 : f32 to vector<96x128xf32>
    %74 = arith.subf %73, %72 : vector<96x128xf32>
    %75 = arith.mulf %68, %74 : vector<96x128xf32>
    %c0_55 = arith.constant 0 : index
    %c0_56 = arith.constant 0 : index
    %76 = vector.load %arg26[%c0_55, %c0_56] : memref<96x128xf32, #tpu.memory_space<vmem>>, vector<96x128xf32>
    tpu.vector_store %arg26[%c0_55, %c0_56], %75 {strides = array<i32>} : memref<96x128xf32, #tpu.memory_space<vmem>>, vector<96x128xf32>,
    %77 = vector.extract_strided_slice %72 {offsets = [0, 0], sizes = [32, 128], strides = [1, 1]} : vector<96x128xf32> to vector<32x128xf32>
    %78 = vector.extract_strided_slice %72 {offsets = [32, 0], sizes = [32, 128], strides = [1, 1]} : vector<96x128xf32> to vector<32x128xf32>
    %79 = vector.extract_strided_slice %72 {offsets = [64, 0], sizes = [32, 128], strides = [1, 1]} : vector<96x128xf32> to vector<32x128xf32>
    %80 = tpu.transpose %78, [1, 0] : vector<32x128xf32> -> vector<128x32xf32>
    %81 = arith.mulf %79, %30 : vector<32x128xf32>
    %cst_57 = arith.constant dense<0.000000e+00> : vector<32x32xf32>
    %82 = tpu.matmul %81, %80, %cst_57 {dimension_numbers = #tpu.dot_dimension_numbers<[1], [0], [0], [1], [0, 0, 1, 1], [], []>} : vector<32x128xf32>, vector<128x32xf32>, vector<32x32xf32> -> vector<32x32xf32>
    %83 = arith.mulf %82, %28 : vector<32x32xf32>
    %cst_58 = arith.constant dense<0.000000e+00> : vector<32x128xf32>
    %84 = tpu.matmul %83, %77, %cst_58 {dimension_numbers = #tpu.dot_dimension_numbers<[1], [0], [0], [1], [0, 0, 1, 1], [], []>} : vector<32x32xf32>, vector<32x128xf32>, vector<32x128xf32> -> vector<32x128xf32>
    %85 = arith.mulf %84, %30 : vector<32x128xf32>
    %86 = arith.mulf %79, %32 : vector<32x128xf32>
    %cst_59 = arith.constant dense<0.000000e+00> : vector<32x32xf32>
    %87 = tpu.matmul %86, %80, %cst_59 {dimension_numbers = #tpu.dot_dimension_numbers<[1], [0], [0], [1], [0, 0, 1, 1], [], []>} : vector<32x128xf32>, vector<128x32xf32>, vector<32x32xf32> -> vector<32x32xf32>
    %88 = arith.mulf %87, %28 : vector<32x32xf32>
    %cst_60 = arith.constant dense<0.000000e+00> : vector<32x128xf32>
    %89 = tpu.matmul %88, %77, %cst_60 {dimension_numbers = #tpu.dot_dimension_numbers<[1], [0], [0], [1], [0, 0, 1, 1], [], []>} : vector<32x32xf32>, vector<32x128xf32>, vector<32x128xf32> -> vector<32x128xf32>
    %90 = arith.mulf %89, %32 : vector<32x128xf32>
    %91 = arith.addf %85, %90 : vector<32x128xf32>
    %cst_61 = arith.constant 1.250000e-01 : f32
    %92 = vector.broadcast %cst_61 : f32 to vector<32x128xf32>
    %93 = arith.mulf %91, %92 : vector<32x128xf32>
    %cst_62 = arith.constant 5.000000e-01 : f32
    %94 = vector.broadcast %cst_62 : f32 to vector<32x128xf32>
    %95 = arith.mulf %93, %94 : vector<32x128xf32>
    %cst_63 = arith.constant 5.000000e-01 : f32
    %96 = vector.broadcast %cst_63 : f32 to vector<32x128xf32>
    %97 = arith.cmpf oge, %95, %96 : vector<32x128xf32>
    %98 = arith.extui %97 : vector<32x128xi1> to vector<32x128xi32>
    %99 = arith.sitofp %98 : vector<32x128xi32> to vector<32x128xf32>
    %cst_64 = arith.constant 1.000000e+00 : f32
    %100 = vector.broadcast %cst_64 : f32 to vector<32x128xf32>
    %101 = arith.subf %100, %99 : vector<32x128xf32>
    %102 = arith.mulf %95, %101 : vector<32x128xf32>
    %c0_65 = arith.constant 0 : index
    %c0_66 = arith.constant 0 : index
    %103 = vector.load %arg27[%c0_65, %c0_66] : memref<32x128xf32, #tpu.memory_space<vmem>>, vector<32x128xf32>
    tpu.vector_store %arg27[%c0_65, %c0_66], %102 {strides = array<i32>} : memref<32x128xf32, #tpu.memory_space<vmem>>, vector<32x128xf32>,
    %cst_67 = arith.constant dense<0.000000e+00> : vector<32x128xf32>
    %104 = tpu.matmul %35, %99, %cst_67 {dimension_numbers = #tpu.dot_dimension_numbers<[1], [0], [0], [1], [0, 0, 1, 1], [], []>} : vector<32x32xf32>, vector<32x128xf32>, vector<32x128xf32> -> vector<32x128xf32>
    %105 = arith.addf %104, %44 : vector<32x128xf32>
    %cst_68 = arith.constant 5.000000e-01 : f32
    %106 = vector.broadcast %cst_68 : f32 to vector<32x128xf32>
    %107 = arith.mulf %105, %106 : vector<32x128xf32>
    %cst_69 = arith.constant 1.000000e+00 : f32
    %108 = vector.broadcast %cst_69 : f32 to vector<32x128xf32>
    %109 = arith.cmpf oge, %107, %108 : vector<32x128xf32>
    %110 = arith.extui %109 : vector<32x128xi1> to vector<32x128xi32>
    %111 = arith.sitofp %110 : vector<32x128xi32> to vector<32x128xf32>
    %cst_70 = arith.constant 1.000000e+00 : f32
    %112 = vector.broadcast %cst_70 : f32 to vector<32x128xf32>
    %113 = arith.subf %112, %111 : vector<32x128xf32>
    %114 = arith.mulf %107, %113 : vector<32x128xf32>
    %c0_71 = arith.constant 0 : index
    %c0_72 = arith.constant 0 : index
    %115 = vector.load %arg28[%c0_71, %c0_72] : memref<32x128xf32, #tpu.memory_space<vmem>>, vector<32x128xf32>
    tpu.vector_store %arg28[%c0_71, %c0_72], %114 {strides = array<i32>} : memref<32x128xf32, #tpu.memory_space<vmem>>, vector<32x128xf32>,
    %116 = arith.addf %9, %111 : vector<32x128xf32>
    %cst_73 = arith.constant dense<0.000000e+00> : vector<128x128xf32>
    %117 = tpu.matmul %37, %116, %cst_73 {dimension_numbers = #tpu.dot_dimension_numbers<[1], [0], [0], [1], [0, 0, 1, 1], [], []>} : vector<128x32xf32>, vector<32x128xf32>, vector<128x128xf32> -> vector<128x128xf32>
    %118 = arith.addf %117, %46 : vector<128x128xf32>
    %cst_74 = arith.constant 5.000000e-01 : f32
    %119 = vector.broadcast %cst_74 : f32 to vector<128x128xf32>
    %120 = arith.mulf %118, %119 : vector<128x128xf32>
    %cst_75 = arith.constant 1.000000e+00 : f32
    %121 = vector.broadcast %cst_75 : f32 to vector<128x128xf32>
    %122 = arith.cmpf oge, %120, %121 : vector<128x128xf32>
    %123 = arith.extui %122 : vector<128x128xi1> to vector<128x128xi32>
    %124 = arith.sitofp %123 : vector<128x128xi32> to vector<128x128xf32>
    %cst_76 = arith.constant 1.000000e+00 : f32
    %125 = vector.broadcast %cst_76 : f32 to vector<128x128xf32>
    %126 = arith.subf %125, %124 : vector<128x128xf32>
    %127 = arith.mulf %120, %126 : vector<128x128xf32>
    %c0_77 = arith.constant 0 : index
    %c0_78 = arith.constant 0 : index
    %128 = vector.load %arg29[%c0_77, %c0_78] : memref<128x128xf32, #tpu.memory_space<vmem>>, vector<128x128xf32>
    tpu.vector_store %arg29[%c0_77, %c0_78], %127 {strides = array<i32>} : memref<128x128xf32, #tpu.memory_space<vmem>>, vector<128x128xf32>,
    %cst_79 = arith.constant dense<0.000000e+00> : vector<32x128xf32>
    %129 = tpu.matmul %39, %124, %cst_79 {dimension_numbers = #tpu.dot_dimension_numbers<[1], [0], [0], [1], [0, 0, 1, 1], [], []>} : vector<32x128xf32>, vector<128x128xf32>, vector<32x128xf32> -> vector<32x128xf32>
    %130 = arith.addf %129, %48 : vector<32x128xf32>
    %cst_80 = arith.constant 5.000000e-01 : f32
    %131 = vector.broadcast %cst_80 : f32 to vector<32x128xf32>
    %132 = arith.mulf %130, %131 : vector<32x128xf32>
    %cst_81 = arith.constant 1.000000e+00 : f32
    %133 = vector.broadcast %cst_81 : f32 to vector<32x128xf32>
    %134 = arith.cmpf oge, %132, %133 : vector<32x128xf32>
    %135 = arith.extui %134 : vector<32x128xi1> to vector<32x128xi32>
    %136 = arith.sitofp %135 : vector<32x128xi32> to vector<32x128xf32>
    %cst_82 = arith.constant 1.000000e+00 : f32
    %137 = vector.broadcast %cst_82 : f32 to vector<32x128xf32>
    %138 = arith.subf %137, %136 : vector<32x128xf32>
    %139 = arith.mulf %132, %138 : vector<32x128xf32>
    %c0_83 = arith.constant 0 : index
    %c0_84 = arith.constant 0 : index
    %140 = vector.load %arg30[%c0_83, %c0_84] : memref<32x128xf32, #tpu.memory_space<vmem>>, vector<32x128xf32>
    tpu.vector_store %arg30[%c0_83, %c0_84], %139 {strides = array<i32>} : memref<32x128xf32, #tpu.memory_space<vmem>>, vector<32x128xf32>,
    %141 = arith.addf %116, %136 : vector<32x128xf32>
    %cst_85 = arith.constant dense<0.000000e+00> : vector<96x128xf32>
    %142 = tpu.matmul %49, %141, %cst_85 {dimension_numbers = #tpu.dot_dimension_numbers<[1], [0], [0], [1], [0, 0, 1, 1], [], []>} : vector<96x32xf32>, vector<32x128xf32>, vector<96x128xf32> -> vector<96x128xf32>
    %143 = arith.addf %142, %58 : vector<96x128xf32>
    %cst_86 = arith.constant 5.000000e-01 : f32
    %144 = vector.broadcast %cst_86 : f32 to vector<96x128xf32>
    %145 = arith.mulf %143, %144 : vector<96x128xf32>
    %cst_87 = arith.constant 1.000000e+00 : f32
    %146 = vector.broadcast %cst_87 : f32 to vector<96x128xf32>
    %147 = arith.cmpf oge, %145, %146 : vector<96x128xf32>
    %148 = arith.extui %147 : vector<96x128xi1> to vector<96x128xi32>
    %149 = arith.sitofp %148 : vector<96x128xi32> to vector<96x128xf32>
    %cst_88 = arith.constant 1.000000e+00 : f32
    %150 = vector.broadcast %cst_88 : f32 to vector<96x128xf32>
    %151 = arith.subf %150, %149 : vector<96x128xf32>
    %152 = arith.mulf %145, %151 : vector<96x128xf32>
    %c0_89 = arith.constant 0 : index
    %c0_90 = arith.constant 0 : index
    %153 = vector.load %arg31[%c0_89, %c0_90] : memref<96x128xf32, #tpu.memory_space<vmem>>, vector<96x128xf32>
    tpu.vector_store %arg31[%c0_89, %c0_90], %152 {strides = array<i32>} : memref<96x128xf32, #tpu.memory_space<vmem>>, vector<96x128xf32>,
    %154 = vector.extract_strided_slice %149 {offsets = [0, 0], sizes = [32, 128], strides = [1, 1]} : vector<96x128xf32> to vector<32x128xf32>
    %155 = vector.extract_strided_slice %149 {offsets = [32, 0], sizes = [32, 128], strides = [1, 1]} : vector<96x128xf32> to vector<32x128xf32>
    %156 = vector.extract_strided_slice %149 {offsets = [64, 0], sizes = [32, 128], strides = [1, 1]} : vector<96x128xf32> to vector<32x128xf32>
    %157 = tpu.transpose %155, [1, 0] : vector<32x128xf32> -> vector<128x32xf32>
    %158 = arith.mulf %156, %30 : vector<32x128xf32>
    %cst_91 = arith.constant dense<0.000000e+00> : vector<32x32xf32>
    %159 = tpu.matmul %158, %157, %cst_91 {dimension_numbers = #tpu.dot_dimension_numbers<[1], [0], [0], [1], [0, 0, 1, 1], [], []>} : vector<32x128xf32>, vector<128x32xf32>, vector<32x32xf32> -> vector<32x32xf32>
    %160 = arith.mulf %159, %28 : vector<32x32xf32>
    %cst_92 = arith.constant dense<0.000000e+00> : vector<32x128xf32>
    %161 = tpu.matmul %160, %154, %cst_92 {dimension_numbers = #tpu.dot_dimension_numbers<[1], [0], [0], [1], [0, 0, 1, 1], [], []>} : vector<32x32xf32>, vector<32x128xf32>, vector<32x128xf32> -> vector<32x128xf32>
    %162 = arith.mulf %161, %30 : vector<32x128xf32>
    %163 = arith.mulf %156, %32 : vector<32x128xf32>
    %cst_93 = arith.constant dense<0.000000e+00> : vector<32x32xf32>
    %164 = tpu.matmul %163, %157, %cst_93 {dimension_numbers = #tpu.dot_dimension_numbers<[1], [0], [0], [1], [0, 0, 1, 1], [], []>} : vector<32x128xf32>, vector<128x32xf32>, vector<32x32xf32> -> vector<32x32xf32>
    %165 = arith.mulf %164, %28 : vector<32x32xf32>
    %cst_94 = arith.constant dense<0.000000e+00> : vector<32x128xf32>
    %166 = tpu.matmul %165, %154, %cst_94 {dimension_numbers = #tpu.dot_dimension_numbers<[1], [0], [0], [1], [0, 0, 1, 1], [], []>} : vector<32x32xf32>, vector<32x128xf32>, vector<32x128xf32> -> vector<32x128xf32>
    %167 = arith.mulf %166, %32 : vector<32x128xf32>
    %168 = arith.addf %162, %167 : vector<32x128xf32>
    %cst_95 = arith.constant 1.250000e-01 : f32
    %169 = vector.broadcast %cst_95 : f32 to vector<32x128xf32>
    %170 = arith.mulf %168, %169 : vector<32x128xf32>
    %cst_96 = arith.constant 5.000000e-01 : f32
    %171 = vector.broadcast %cst_96 : f32 to vector<32x128xf32>
    %172 = arith.mulf %170, %171 : vector<32x128xf32>
    %cst_97 = arith.constant 5.000000e-01 : f32
    %173 = vector.broadcast %cst_97 : f32 to vector<32x128xf32>
    %174 = arith.cmpf oge, %172, %173 : vector<32x128xf32>
    %175 = arith.extui %174 : vector<32x128xi1> to vector<32x128xi32>
    %176 = arith.sitofp %175 : vector<32x128xi32> to vector<32x128xf32>
    %cst_98 = arith.constant 1.000000e+00 : f32
    %177 = vector.broadcast %cst_98 : f32 to vector<32x128xf32>
    %178 = arith.subf %177, %176 : vector<32x128xf32>
    %179 = arith.mulf %172, %178 : vector<32x128xf32>
    %c0_99 = arith.constant 0 : index
    %c0_100 = arith.constant 0 : index
    %180 = vector.load %arg32[%c0_99, %c0_100] : memref<32x128xf32, #tpu.memory_space<vmem>>, vector<32x128xf32>
    tpu.vector_store %arg32[%c0_99, %c0_100], %179 {strides = array<i32>} : memref<32x128xf32, #tpu.memory_space<vmem>>, vector<32x128xf32>,
    %cst_101 = arith.constant dense<0.000000e+00> : vector<32x128xf32>
    %181 = tpu.matmul %51, %176, %cst_101 {dimension_numbers = #tpu.dot_dimension_numbers<[1], [0], [0], [1], [0, 0, 1, 1], [], []>} : vector<32x32xf32>, vector<32x128xf32>, vector<32x128xf32> -> vector<32x128xf32>
    %182 = arith.addf %181, %60 : vector<32x128xf32>
    %cst_102 = arith.constant 5.000000e-01 : f32
    %183 = vector.broadcast %cst_102 : f32 to vector<32x128xf32>
    %184 = arith.mulf %182, %183 : vector<32x128xf32>
    %cst_103 = arith.constant 1.000000e+00 : f32
    %185 = vector.broadcast %cst_103 : f32 to vector<32x128xf32>
    %186 = arith.cmpf oge, %184, %185 : vector<32x128xf32>
    %187 = arith.extui %186 : vector<32x128xi1> to vector<32x128xi32>
    %188 = arith.sitofp %187 : vector<32x128xi32> to vector<32x128xf32>
    %cst_104 = arith.constant 1.000000e+00 : f32
    %189 = vector.broadcast %cst_104 : f32 to vector<32x128xf32>
    %190 = arith.subf %189, %188 : vector<32x128xf32>
    %191 = arith.mulf %184, %190 : vector<32x128xf32>
    %c0_105 = arith.constant 0 : index
    %c0_106 = arith.constant 0 : index
    %192 = vector.load %arg33[%c0_105, %c0_106] : memref<32x128xf32, #tpu.memory_space<vmem>>, vector<32x128xf32>
    tpu.vector_store %arg33[%c0_105, %c0_106], %191 {strides = array<i32>} : memref<32x128xf32, #tpu.memory_space<vmem>>, vector<32x128xf32>,
    %193 = arith.addf %141, %188 : vector<32x128xf32>
    %cst_107 = arith.constant dense<0.000000e+00> : vector<128x128xf32>
    %194 = tpu.matmul %53, %193, %cst_107 {dimension_numbers = #tpu.dot_dimension_numbers<[1], [0], [0], [1], [0, 0, 1, 1], [], []>} : vector<128x32xf32>, vector<32x128xf32>, vector<128x128xf32> -> vector<128x128xf32>
    %195 = arith.addf %194, %62 : vector<128x128xf32>
    %cst_108 = arith.constant 5.000000e-01 : f32
    %196 = vector.broadcast %cst_108 : f32 to vector<128x128xf32>
    %197 = arith.mulf %195, %196 : vector<128x128xf32>
    %cst_109 = arith.constant 1.000000e+00 : f32
    %198 = vector.broadcast %cst_109 : f32 to vector<128x128xf32>
    %199 = arith.cmpf oge, %197, %198 : vector<128x128xf32>
    %200 = arith.extui %199 : vector<128x128xi1> to vector<128x128xi32>
    %201 = arith.sitofp %200 : vector<128x128xi32> to vector<128x128xf32>
    %cst_110 = arith.constant 1.000000e+00 : f32
    %202 = vector.broadcast %cst_110 : f32 to vector<128x128xf32>
    %203 = arith.subf %202, %201 : vector<128x128xf32>
    %204 = arith.mulf %197, %203 : vector<128x128xf32>
    %c0_111 = arith.constant 0 : index
    %c0_112 = arith.constant 0 : index
    %205 = vector.load %arg34[%c0_111, %c0_112] : memref<128x128xf32, #tpu.memory_space<vmem>>, vector<128x128xf32>
    tpu.vector_store %arg34[%c0_111, %c0_112], %204 {strides = array<i32>} : memref<128x128xf32, #tpu.memory_space<vmem>>, vector<128x128xf32>,
    %cst_113 = arith.constant dense<0.000000e+00> : vector<32x128xf32>
    %206 = tpu.matmul %55, %201, %cst_113 {dimension_numbers = #tpu.dot_dimension_numbers<[1], [0], [0], [1], [0, 0, 1, 1], [], []>} : vector<32x128xf32>, vector<128x128xf32>, vector<32x128xf32> -> vector<32x128xf32>
    %207 = arith.addf %206, %64 : vector<32x128xf32>
    %cst_114 = arith.constant 5.000000e-01 : f32
    %208 = vector.broadcast %cst_114 : f32 to vector<32x128xf32>
    %209 = arith.mulf %207, %208 : vector<32x128xf32>
    %cst_115 = arith.constant 1.000000e+00 : f32
    %210 = vector.broadcast %cst_115 : f32 to vector<32x128xf32>
    %211 = arith.cmpf oge, %209, %210 : vector<32x128xf32>
    %212 = arith.extui %211 : vector<32x128xi1> to vector<32x128xi32>
    %213 = arith.sitofp %212 : vector<32x128xi32> to vector<32x128xf32>
    %cst_116 = arith.constant 1.000000e+00 : f32
    %214 = vector.broadcast %cst_116 : f32 to vector<32x128xf32>
    %215 = arith.subf %214, %213 : vector<32x128xf32>
    %216 = arith.mulf %209, %215 : vector<32x128xf32>
    %c0_117 = arith.constant 0 : index
    %c0_118 = arith.constant 0 : index
    %217 = vector.load %arg35[%c0_117, %c0_118] : memref<32x128xf32, #tpu.memory_space<vmem>>, vector<32x128xf32>
    tpu.vector_store %arg35[%c0_117, %c0_118], %216 {strides = array<i32>} : memref<32x128xf32, #tpu.memory_space<vmem>>, vector<32x128xf32>,
    %218 = arith.addf %193, %213 : vector<32x128xf32>
    %cst_119 = arith.constant dense<0.000000e+00> : vector<96x128xf32>
    %219 = tpu.matmul %33, %13, %cst_119 {dimension_numbers = #tpu.dot_dimension_numbers<[1], [0], [0], [1], [0, 0, 1, 1], [], []>} : vector<96x32xf32>, vector<32x128xf32>, vector<96x128xf32> -> vector<96x128xf32>
    %220 = arith.addf %219, %42 : vector<96x128xf32>
    %c0_120 = arith.constant 0 : index
    %c0_121 = arith.constant 0 : index
    %221 = vector.load %arg26[%c0_120, %c0_121] : memref<96x128xf32, #tpu.memory_space<vmem>>, vector<96x128xf32>
    %222 = arith.subf %220, %221 : vector<96x128xf32>
    %cst_122 = arith.constant 5.000000e-01 : f32
    %223 = vector.broadcast %cst_122 : f32 to vector<96x128xf32>
    %224 = arith.mulf %222, %223 : vector<96x128xf32>
    %225 = arith.addf %221, %224 : vector<96x128xf32>
    %cst_123 = arith.constant 1.000000e+00 : f32
    %226 = vector.broadcast %cst_123 : f32 to vector<96x128xf32>
    %227 = arith.cmpf oge, %225, %226 : vector<96x128xf32>
    %228 = arith.extui %227 : vector<96x128xi1> to vector<96x128xi32>
    %229 = arith.sitofp %228 : vector<96x128xi32> to vector<96x128xf32>
    %cst_124 = arith.constant 1.000000e+00 : f32
    %230 = vector.broadcast %cst_124 : f32 to vector<96x128xf32>
    %231 = arith.subf %230, %229 : vector<96x128xf32>
    %232 = arith.mulf %225, %231 : vector<96x128xf32>
    %c0_125 = arith.constant 0 : index
    %c0_126 = arith.constant 0 : index
    %233 = vector.load %arg26[%c0_125, %c0_126] : memref<96x128xf32, #tpu.memory_space<vmem>>, vector<96x128xf32>
    tpu.vector_store %arg26[%c0_125, %c0_126], %232 {strides = array<i32>} : memref<96x128xf32, #tpu.memory_space<vmem>>, vector<96x128xf32>,
    %234 = vector.extract_strided_slice %229 {offsets = [0, 0], sizes = [32, 128], strides = [1, 1]} : vector<96x128xf32> to vector<32x128xf32>
    %235 = vector.extract_strided_slice %229 {offsets = [32, 0], sizes = [32, 128], strides = [1, 1]} : vector<96x128xf32> to vector<32x128xf32>
    %236 = vector.extract_strided_slice %229 {offsets = [64, 0], sizes = [32, 128], strides = [1, 1]} : vector<96x128xf32> to vector<32x128xf32>
    %237 = tpu.transpose %235, [1, 0] : vector<32x128xf32> -> vector<128x32xf32>
    %238 = arith.mulf %236, %30 : vector<32x128xf32>
    %cst_127 = arith.constant dense<0.000000e+00> : vector<32x32xf32>
    %239 = tpu.matmul %238, %237, %cst_127 {dimension_numbers = #tpu.dot_dimension_numbers<[1], [0], [0], [1], [0, 0, 1, 1], [], []>} : vector<32x128xf32>, vector<128x32xf32>, vector<32x32xf32> -> vector<32x32xf32>
    %240 = arith.mulf %239, %28 : vector<32x32xf32>
    %cst_128 = arith.constant dense<0.000000e+00> : vector<32x128xf32>
    %241 = tpu.matmul %240, %234, %cst_128 {dimension_numbers = #tpu.dot_dimension_numbers<[1], [0], [0], [1], [0, 0, 1, 1], [], []>} : vector<32x32xf32>, vector<32x128xf32>, vector<32x128xf32> -> vector<32x128xf32>
    %242 = arith.mulf %241, %30 : vector<32x128xf32>
    %243 = arith.mulf %236, %32 : vector<32x128xf32>
    %cst_129 = arith.constant dense<0.000000e+00> : vector<32x32xf32>
    %244 = tpu.matmul %243, %237, %cst_129 {dimension_numbers = #tpu.dot_dimension_numbers<[1], [0], [0], [1], [0, 0, 1, 1], [], []>} : vector<32x128xf32>, vector<128x32xf32>, vector<32x32xf32> -> vector<32x32xf32>
    %245 = arith.mulf %244, %28 : vector<32x32xf32>
    %cst_130 = arith.constant dense<0.000000e+00> : vector<32x128xf32>
    %246 = tpu.matmul %245, %234, %cst_130 {dimension_numbers = #tpu.dot_dimension_numbers<[1], [0], [0], [1], [0, 0, 1, 1], [], []>} : vector<32x32xf32>, vector<32x128xf32>, vector<32x128xf32> -> vector<32x128xf32>
    %247 = arith.mulf %246, %32 : vector<32x128xf32>
    %248 = arith.addf %242, %247 : vector<32x128xf32>
    %cst_131 = arith.constant 1.250000e-01 : f32
    %249 = vector.broadcast %cst_131 : f32 to vector<32x128xf32>
    %250 = arith.mulf %248, %249 : vector<32x128xf32>
    %c0_132 = arith.constant 0 : index
    %c0_133 = arith.constant 0 : index
    %251 = vector.load %arg27[%c0_132, %c0_133] : memref<32x128xf32, #tpu.memory_space<vmem>>, vector<32x128xf32>
    %252 = arith.subf %250, %251 : vector<32x128xf32>
    %cst_134 = arith.constant 5.000000e-01 : f32
    %253 = vector.broadcast %cst_134 : f32 to vector<32x128xf32>
    %254 = arith.mulf %252, %253 : vector<32x128xf32>
    %255 = arith.addf %251, %254 : vector<32x128xf32>
    %cst_135 = arith.constant 5.000000e-01 : f32
    %256 = vector.broadcast %cst_135 : f32 to vector<32x128xf32>
    %257 = arith.cmpf oge, %255, %256 : vector<32x128xf32>
    %258 = arith.extui %257 : vector<32x128xi1> to vector<32x128xi32>
    %259 = arith.sitofp %258 : vector<32x128xi32> to vector<32x128xf32>
    %cst_136 = arith.constant 1.000000e+00 : f32
    %260 = vector.broadcast %cst_136 : f32 to vector<32x128xf32>
    %261 = arith.subf %260, %259 : vector<32x128xf32>
    %262 = arith.mulf %255, %261 : vector<32x128xf32>
    %c0_137 = arith.constant 0 : index
    %c0_138 = arith.constant 0 : index
    %263 = vector.load %arg27[%c0_137, %c0_138] : memref<32x128xf32, #tpu.memory_space<vmem>>, vector<32x128xf32>
    tpu.vector_store %arg27[%c0_137, %c0_138], %262 {strides = array<i32>} : memref<32x128xf32, #tpu.memory_space<vmem>>, vector<32x128xf32>,
    %cst_139 = arith.constant dense<0.000000e+00> : vector<32x128xf32>
    %264 = tpu.matmul %35, %259, %cst_139 {dimension_numbers = #tpu.dot_dimension_numbers<[1], [0], [0], [1], [0, 0, 1, 1], [], []>} : vector<32x32xf32>, vector<32x128xf32>, vector<32x128xf32> -> vector<32x128xf32>
    %265 = arith.addf %264, %44 : vector<32x128xf32>
    %c0_140 = arith.constant 0 : index
    %c0_141 = arith.constant 0 : index
    %266 = vector.load %arg28[%c0_140, %c0_141] : memref<32x128xf32, #tpu.memory_space<vmem>>, vector<32x128xf32>
    %267 = arith.subf %265, %266 : vector<32x128xf32>
    %cst_142 = arith.constant 5.000000e-01 : f32
    %268 = vector.broadcast %cst_142 : f32 to vector<32x128xf32>
    %269 = arith.mulf %267, %268 : vector<32x128xf32>
    %270 = arith.addf %266, %269 : vector<32x128xf32>
    %cst_143 = arith.constant 1.000000e+00 : f32
    %271 = vector.broadcast %cst_143 : f32 to vector<32x128xf32>
    %272 = arith.cmpf oge, %270, %271 : vector<32x128xf32>
    %273 = arith.extui %272 : vector<32x128xi1> to vector<32x128xi32>
    %274 = arith.sitofp %273 : vector<32x128xi32> to vector<32x128xf32>
    %cst_144 = arith.constant 1.000000e+00 : f32
    %275 = vector.broadcast %cst_144 : f32 to vector<32x128xf32>
    %276 = arith.subf %275, %274 : vector<32x128xf32>
    %277 = arith.mulf %270, %276 : vector<32x128xf32>
    %c0_145 = arith.constant 0 : index
    %c0_146 = arith.constant 0 : index
    %278 = vector.load %arg28[%c0_145, %c0_146] : memref<32x128xf32, #tpu.memory_space<vmem>>, vector<32x128xf32>
    tpu.vector_store %arg28[%c0_145, %c0_146], %277 {strides = array<i32>} : memref<32x128xf32, #tpu.memory_space<vmem>>, vector<32x128xf32>,
    %279 = arith.addf %13, %274 : vector<32x128xf32>
    %cst_147 = arith.constant dense<0.000000e+00> : vector<128x128xf32>
    %280 = tpu.matmul %37, %279, %cst_147 {dimension_numbers = #tpu.dot_dimension_numbers<[1], [0], [0], [1], [0, 0, 1, 1], [], []>} : vector<128x32xf32>, vector<32x128xf32>, vector<128x128xf32> -> vector<128x128xf32>
    %281 = arith.addf %280, %46 : vector<128x128xf32>
    %c0_148 = arith.constant 0 : index
    %c0_149 = arith.constant 0 : index
    %282 = vector.load %arg29[%c0_148, %c0_149] : memref<128x128xf32, #tpu.memory_space<vmem>>, vector<128x128xf32>
    %283 = arith.subf %281, %282 : vector<128x128xf32>
    %cst_150 = arith.constant 5.000000e-01 : f32
    %284 = vector.broadcast %cst_150 : f32 to vector<128x128xf32>
    %285 = arith.mulf %283, %284 : vector<128x128xf32>
    %286 = arith.addf %282, %285 : vector<128x128xf32>
    %cst_151 = arith.constant 1.000000e+00 : f32
    %287 = vector.broadcast %cst_151 : f32 to vector<128x128xf32>
    %288 = arith.cmpf oge, %286, %287 : vector<128x128xf32>
    %289 = arith.extui %288 : vector<128x128xi1> to vector<128x128xi32>
    %290 = arith.sitofp %289 : vector<128x128xi32> to vector<128x128xf32>
    %cst_152 = arith.constant 1.000000e+00 : f32
    %291 = vector.broadcast %cst_152 : f32 to vector<128x128xf32>
    %292 = arith.subf %291, %290 : vector<128x128xf32>
    %293 = arith.mulf %286, %292 : vector<128x128xf32>
    %c0_153 = arith.constant 0 : index
    %c0_154 = arith.constant 0 : index
    %294 = vector.load %arg29[%c0_153, %c0_154] : memref<128x128xf32, #tpu.memory_space<vmem>>, vector<128x128xf32>
    tpu.vector_store %arg29[%c0_153, %c0_154], %293 {strides = array<i32>} : memref<128x128xf32, #tpu.memory_space<vmem>>, vector<128x128xf32>,
    %cst_155 = arith.constant dense<0.000000e+00> : vector<32x128xf32>
    %295 = tpu.matmul %39, %290, %cst_155 {dimension_numbers = #tpu.dot_dimension_numbers<[1], [0], [0], [1], [0, 0, 1, 1], [], []>} : vector<32x128xf32>, vector<128x128xf32>, vector<32x128xf32> -> vector<32x128xf32>
    %296 = arith.addf %295, %48 : vector<32x128xf32>
    %c0_156 = arith.constant 0 : index
    %c0_157 = arith.constant 0 : index
    %297 = vector.load %arg30[%c0_156, %c0_157] : memref<32x128xf32, #tpu.memory_space<vmem>>, vector<32x128xf32>
    %298 = arith.subf %296, %297 : vector<32x128xf32>
    %cst_158 = arith.constant 5.000000e-01 : f32
    %299 = vector.broadcast %cst_158 : f32 to vector<32x128xf32>
    %300 = arith.mulf %298, %299 : vector<32x128xf32>
    %301 = arith.addf %297, %300 : vector<32x128xf32>
    %cst_159 = arith.constant 1.000000e+00 : f32
    %302 = vector.broadcast %cst_159 : f32 to vector<32x128xf32>
    %303 = arith.cmpf oge, %301, %302 : vector<32x128xf32>
    %304 = arith.extui %303 : vector<32x128xi1> to vector<32x128xi32>
    %305 = arith.sitofp %304 : vector<32x128xi32> to vector<32x128xf32>
    %cst_160 = arith.constant 1.000000e+00 : f32
    %306 = vector.broadcast %cst_160 : f32 to vector<32x128xf32>
    %307 = arith.subf %306, %305 : vector<32x128xf32>
    %308 = arith.mulf %301, %307 : vector<32x128xf32>
    %c0_161 = arith.constant 0 : index
    %c0_162 = arith.constant 0 : index
    %309 = vector.load %arg30[%c0_161, %c0_162] : memref<32x128xf32, #tpu.memory_space<vmem>>, vector<32x128xf32>
    tpu.vector_store %arg30[%c0_161, %c0_162], %308 {strides = array<i32>} : memref<32x128xf32, #tpu.memory_space<vmem>>, vector<32x128xf32>,
    %310 = arith.addf %279, %305 : vector<32x128xf32>
    %cst_163 = arith.constant dense<0.000000e+00> : vector<96x128xf32>
    %311 = tpu.matmul %49, %310, %cst_163 {dimension_numbers = #tpu.dot_dimension_numbers<[1], [0], [0], [1], [0, 0, 1, 1], [], []>} : vector<96x32xf32>, vector<32x128xf32>, vector<96x128xf32> -> vector<96x128xf32>
    %312 = arith.addf %311, %58 : vector<96x128xf32>
    %c0_164 = arith.constant 0 : index
    %c0_165 = arith.constant 0 : index
    %313 = vector.load %arg31[%c0_164, %c0_165] : memref<96x128xf32, #tpu.memory_space<vmem>>, vector<96x128xf32>
    %314 = arith.subf %312, %313 : vector<96x128xf32>
    %cst_166 = arith.constant 5.000000e-01 : f32
    %315 = vector.broadcast %cst_166 : f32 to vector<96x128xf32>
    %316 = arith.mulf %314, %315 : vector<96x128xf32>
    %317 = arith.addf %313, %316 : vector<96x128xf32>
    %cst_167 = arith.constant 1.000000e+00 : f32
    %318 = vector.broadcast %cst_167 : f32 to vector<96x128xf32>
    %319 = arith.cmpf oge, %317, %318 : vector<96x128xf32>
    %320 = arith.extui %319 : vector<96x128xi1> to vector<96x128xi32>
    %321 = arith.sitofp %320 : vector<96x128xi32> to vector<96x128xf32>
    %cst_168 = arith.constant 1.000000e+00 : f32
    %322 = vector.broadcast %cst_168 : f32 to vector<96x128xf32>
    %323 = arith.subf %322, %321 : vector<96x128xf32>
    %324 = arith.mulf %317, %323 : vector<96x128xf32>
    %c0_169 = arith.constant 0 : index
    %c0_170 = arith.constant 0 : index
    %325 = vector.load %arg31[%c0_169, %c0_170] : memref<96x128xf32, #tpu.memory_space<vmem>>, vector<96x128xf32>
    tpu.vector_store %arg31[%c0_169, %c0_170], %324 {strides = array<i32>} : memref<96x128xf32, #tpu.memory_space<vmem>>, vector<96x128xf32>,
    %326 = vector.extract_strided_slice %321 {offsets = [0, 0], sizes = [32, 128], strides = [1, 1]} : vector<96x128xf32> to vector<32x128xf32>
    %327 = vector.extract_strided_slice %321 {offsets = [32, 0], sizes = [32, 128], strides = [1, 1]} : vector<96x128xf32> to vector<32x128xf32>
    %328 = vector.extract_strided_slice %321 {offsets = [64, 0], sizes = [32, 128], strides = [1, 1]} : vector<96x128xf32> to vector<32x128xf32>
    %329 = tpu.transpose %327, [1, 0] : vector<32x128xf32> -> vector<128x32xf32>
    %330 = arith.mulf %328, %30 : vector<32x128xf32>
    %cst_171 = arith.constant dense<0.000000e+00> : vector<32x32xf32>
    %331 = tpu.matmul %330, %329, %cst_171 {dimension_numbers = #tpu.dot_dimension_numbers<[1], [0], [0], [1], [0, 0, 1, 1], [], []>} : vector<32x128xf32>, vector<128x32xf32>, vector<32x32xf32> -> vector<32x32xf32>
    %332 = arith.mulf %331, %28 : vector<32x32xf32>
    %cst_172 = arith.constant dense<0.000000e+00> : vector<32x128xf32>
    %333 = tpu.matmul %332, %326, %cst_172 {dimension_numbers = #tpu.dot_dimension_numbers<[1], [0], [0], [1], [0, 0, 1, 1], [], []>} : vector<32x32xf32>, vector<32x128xf32>, vector<32x128xf32> -> vector<32x128xf32>
    %334 = arith.mulf %333, %30 : vector<32x128xf32>
    %335 = arith.mulf %328, %32 : vector<32x128xf32>
    %cst_173 = arith.constant dense<0.000000e+00> : vector<32x32xf32>
    %336 = tpu.matmul %335, %329, %cst_173 {dimension_numbers = #tpu.dot_dimension_numbers<[1], [0], [0], [1], [0, 0, 1, 1], [], []>} : vector<32x128xf32>, vector<128x32xf32>, vector<32x32xf32> -> vector<32x32xf32>
    %337 = arith.mulf %336, %28 : vector<32x32xf32>
    %cst_174 = arith.constant dense<0.000000e+00> : vector<32x128xf32>
    %338 = tpu.matmul %337, %326, %cst_174 {dimension_numbers = #tpu.dot_dimension_numbers<[1], [0], [0], [1], [0, 0, 1, 1], [], []>} : vector<32x32xf32>, vector<32x128xf32>, vector<32x128xf32> -> vector<32x128xf32>
    %339 = arith.mulf %338, %32 : vector<32x128xf32>
    %340 = arith.addf %334, %339 : vector<32x128xf32>
    %cst_175 = arith.constant 1.250000e-01 : f32
    %341 = vector.broadcast %cst_175 : f32 to vector<32x128xf32>
    %342 = arith.mulf %340, %341 : vector<32x128xf32>
    %c0_176 = arith.constant 0 : index
    %c0_177 = arith.constant 0 : index
    %343 = vector.load %arg32[%c0_176, %c0_177] : memref<32x128xf32, #tpu.memory_space<vmem>>, vector<32x128xf32>
    %344 = arith.subf %342, %343 : vector<32x128xf32>
    %cst_178 = arith.constant 5.000000e-01 : f32
    %345 = vector.broadcast %cst_178 : f32 to vector<32x128xf32>
    %346 = arith.mulf %344, %345 : vector<32x128xf32>
    %347 = arith.addf %343, %346 : vector<32x128xf32>
    %cst_179 = arith.constant 5.000000e-01 : f32
    %348 = vector.broadcast %cst_179 : f32 to vector<32x128xf32>
    %349 = arith.cmpf oge, %347, %348 : vector<32x128xf32>
    %350 = arith.extui %349 : vector<32x128xi1> to vector<32x128xi32>
    %351 = arith.sitofp %350 : vector<32x128xi32> to vector<32x128xf32>
    %cst_180 = arith.constant 1.000000e+00 : f32
    %352 = vector.broadcast %cst_180 : f32 to vector<32x128xf32>
    %353 = arith.subf %352, %351 : vector<32x128xf32>
    %354 = arith.mulf %347, %353 : vector<32x128xf32>
    %c0_181 = arith.constant 0 : index
    %c0_182 = arith.constant 0 : index
    %355 = vector.load %arg32[%c0_181, %c0_182] : memref<32x128xf32, #tpu.memory_space<vmem>>, vector<32x128xf32>
    tpu.vector_store %arg32[%c0_181, %c0_182], %354 {strides = array<i32>} : memref<32x128xf32, #tpu.memory_space<vmem>>, vector<32x128xf32>,
    %cst_183 = arith.constant dense<0.000000e+00> : vector<32x128xf32>
    %356 = tpu.matmul %51, %351, %cst_183 {dimension_numbers = #tpu.dot_dimension_numbers<[1], [0], [0], [1], [0, 0, 1, 1], [], []>} : vector<32x32xf32>, vector<32x128xf32>, vector<32x128xf32> -> vector<32x128xf32>
    %357 = arith.addf %356, %60 : vector<32x128xf32>
    %c0_184 = arith.constant 0 : index
    %c0_185 = arith.constant 0 : index
    %358 = vector.load %arg33[%c0_184, %c0_185] : memref<32x128xf32, #tpu.memory_space<vmem>>, vector<32x128xf32>
    %359 = arith.subf %357, %358 : vector<32x128xf32>
    %cst_186 = arith.constant 5.000000e-01 : f32
    %360 = vector.broadcast %cst_186 : f32 to vector<32x128xf32>
    %361 = arith.mulf %359, %360 : vector<32x128xf32>
    %362 = arith.addf %358, %361 : vector<32x128xf32>
    %cst_187 = arith.constant 1.000000e+00 : f32
    %363 = vector.broadcast %cst_187 : f32 to vector<32x128xf32>
    %364 = arith.cmpf oge, %362, %363 : vector<32x128xf32>
    %365 = arith.extui %364 : vector<32x128xi1> to vector<32x128xi32>
    %366 = arith.sitofp %365 : vector<32x128xi32> to vector<32x128xf32>
    %cst_188 = arith.constant 1.000000e+00 : f32
    %367 = vector.broadcast %cst_188 : f32 to vector<32x128xf32>
    %368 = arith.subf %367, %366 : vector<32x128xf32>
    %369 = arith.mulf %362, %368 : vector<32x128xf32>
    %c0_189 = arith.constant 0 : index
    %c0_190 = arith.constant 0 : index
    %370 = vector.load %arg33[%c0_189, %c0_190] : memref<32x128xf32, #tpu.memory_space<vmem>>, vector<32x128xf32>
    tpu.vector_store %arg33[%c0_189, %c0_190], %369 {strides = array<i32>} : memref<32x128xf32, #tpu.memory_space<vmem>>, vector<32x128xf32>,
    %371 = arith.addf %310, %366 : vector<32x128xf32>
    %cst_191 = arith.constant dense<0.000000e+00> : vector<128x128xf32>
    %372 = tpu.matmul %53, %371, %cst_191 {dimension_numbers = #tpu.dot_dimension_numbers<[1], [0], [0], [1], [0, 0, 1, 1], [], []>} : vector<128x32xf32>, vector<32x128xf32>, vector<128x128xf32> -> vector<128x128xf32>
    %373 = arith.addf %372, %62 : vector<128x128xf32>
    %c0_192 = arith.constant 0 : index
    %c0_193 = arith.constant 0 : index
    %374 = vector.load %arg34[%c0_192, %c0_193] : memref<128x128xf32, #tpu.memory_space<vmem>>, vector<128x128xf32>
    %375 = arith.subf %373, %374 : vector<128x128xf32>
    %cst_194 = arith.constant 5.000000e-01 : f32
    %376 = vector.broadcast %cst_194 : f32 to vector<128x128xf32>
    %377 = arith.mulf %375, %376 : vector<128x128xf32>
    %378 = arith.addf %374, %377 : vector<128x128xf32>
    %cst_195 = arith.constant 1.000000e+00 : f32
    %379 = vector.broadcast %cst_195 : f32 to vector<128x128xf32>
    %380 = arith.cmpf oge, %378, %379 : vector<128x128xf32>
    %381 = arith.extui %380 : vector<128x128xi1> to vector<128x128xi32>
    %382 = arith.sitofp %381 : vector<128x128xi32> to vector<128x128xf32>
    %cst_196 = arith.constant 1.000000e+00 : f32
    %383 = vector.broadcast %cst_196 : f32 to vector<128x128xf32>
    %384 = arith.subf %383, %382 : vector<128x128xf32>
    %385 = arith.mulf %378, %384 : vector<128x128xf32>
    %c0_197 = arith.constant 0 : index
    %c0_198 = arith.constant 0 : index
    %386 = vector.load %arg34[%c0_197, %c0_198] : memref<128x128xf32, #tpu.memory_space<vmem>>, vector<128x128xf32>
    tpu.vector_store %arg34[%c0_197, %c0_198], %385 {strides = array<i32>} : memref<128x128xf32, #tpu.memory_space<vmem>>, vector<128x128xf32>,
    %cst_199 = arith.constant dense<0.000000e+00> : vector<32x128xf32>
    %387 = tpu.matmul %55, %382, %cst_199 {dimension_numbers = #tpu.dot_dimension_numbers<[1], [0], [0], [1], [0, 0, 1, 1], [], []>} : vector<32x128xf32>, vector<128x128xf32>, vector<32x128xf32> -> vector<32x128xf32>
    %388 = arith.addf %387, %64 : vector<32x128xf32>
    %c0_200 = arith.constant 0 : index
    %c0_201 = arith.constant 0 : index
    %389 = vector.load %arg35[%c0_200, %c0_201] : memref<32x128xf32, #tpu.memory_space<vmem>>, vector<32x128xf32>
    %390 = arith.subf %388, %389 : vector<32x128xf32>
    %cst_202 = arith.constant 5.000000e-01 : f32
    %391 = vector.broadcast %cst_202 : f32 to vector<32x128xf32>
    %392 = arith.mulf %390, %391 : vector<32x128xf32>
    %393 = arith.addf %389, %392 : vector<32x128xf32>
    %cst_203 = arith.constant 1.000000e+00 : f32
    %394 = vector.broadcast %cst_203 : f32 to vector<32x128xf32>
    %395 = arith.cmpf oge, %393, %394 : vector<32x128xf32>
    %396 = arith.extui %395 : vector<32x128xi1> to vector<32x128xi32>
    %397 = arith.sitofp %396 : vector<32x128xi32> to vector<32x128xf32>
    %cst_204 = arith.constant 1.000000e+00 : f32
    %398 = vector.broadcast %cst_204 : f32 to vector<32x128xf32>
    %399 = arith.subf %398, %397 : vector<32x128xf32>
    %400 = arith.mulf %393, %399 : vector<32x128xf32>
    %c0_205 = arith.constant 0 : index
    %c0_206 = arith.constant 0 : index
    %401 = vector.load %arg35[%c0_205, %c0_206] : memref<32x128xf32, #tpu.memory_space<vmem>>, vector<32x128xf32>
    tpu.vector_store %arg35[%c0_205, %c0_206], %400 {strides = array<i32>} : memref<32x128xf32, #tpu.memory_space<vmem>>, vector<32x128xf32>,
    %402 = arith.addf %371, %397 : vector<32x128xf32>
    %403 = arith.addf %218, %402 : vector<32x128xf32>
    %cst_207 = arith.constant dense<0.000000e+00> : vector<96x128xf32>
    %404 = tpu.matmul %33, %17, %cst_207 {dimension_numbers = #tpu.dot_dimension_numbers<[1], [0], [0], [1], [0, 0, 1, 1], [], []>} : vector<96x32xf32>, vector<32x128xf32>, vector<96x128xf32> -> vector<96x128xf32>
    %405 = arith.addf %404, %42 : vector<96x128xf32>
    %c0_208 = arith.constant 0 : index
    %c0_209 = arith.constant 0 : index
    %406 = vector.load %arg26[%c0_208, %c0_209] : memref<96x128xf32, #tpu.memory_space<vmem>>, vector<96x128xf32>
    %407 = arith.subf %405, %406 : vector<96x128xf32>
    %cst_210 = arith.constant 5.000000e-01 : f32
    %408 = vector.broadcast %cst_210 : f32 to vector<96x128xf32>
    %409 = arith.mulf %407, %408 : vector<96x128xf32>
    %410 = arith.addf %406, %409 : vector<96x128xf32>
    %cst_211 = arith.constant 1.000000e+00 : f32
    %411 = vector.broadcast %cst_211 : f32 to vector<96x128xf32>
    %412 = arith.cmpf oge, %410, %411 : vector<96x128xf32>
    %413 = arith.extui %412 : vector<96x128xi1> to vector<96x128xi32>
    %414 = arith.sitofp %413 : vector<96x128xi32> to vector<96x128xf32>
    %cst_212 = arith.constant 1.000000e+00 : f32
    %415 = vector.broadcast %cst_212 : f32 to vector<96x128xf32>
    %416 = arith.subf %415, %414 : vector<96x128xf32>
    %417 = arith.mulf %410, %416 : vector<96x128xf32>
    %c0_213 = arith.constant 0 : index
    %c0_214 = arith.constant 0 : index
    %418 = vector.load %arg26[%c0_213, %c0_214] : memref<96x128xf32, #tpu.memory_space<vmem>>, vector<96x128xf32>
    tpu.vector_store %arg26[%c0_213, %c0_214], %417 {strides = array<i32>} : memref<96x128xf32, #tpu.memory_space<vmem>>, vector<96x128xf32>,
    %419 = vector.extract_strided_slice %414 {offsets = [0, 0], sizes = [32, 128], strides = [1, 1]} : vector<96x128xf32> to vector<32x128xf32>
    %420 = vector.extract_strided_slice %414 {offsets = [32, 0], sizes = [32, 128], strides = [1, 1]} : vector<96x128xf32> to vector<32x128xf32>
    %421 = vector.extract_strided_slice %414 {offsets = [64, 0], sizes = [32, 128], strides = [1, 1]} : vector<96x128xf32> to vector<32x128xf32>
    %422 = tpu.transpose %420, [1, 0] : vector<32x128xf32> -> vector<128x32xf32>
    %423 = arith.mulf %421, %30 : vector<32x128xf32>
    %cst_215 = arith.constant dense<0.000000e+00> : vector<32x32xf32>
    %424 = tpu.matmul %423, %422, %cst_215 {dimension_numbers = #tpu.dot_dimension_numbers<[1], [0], [0], [1], [0, 0, 1, 1], [], []>} : vector<32x128xf32>, vector<128x32xf32>, vector<32x32xf32> -> vector<32x32xf32>
    %425 = arith.mulf %424, %28 : vector<32x32xf32>
    %cst_216 = arith.constant dense<0.000000e+00> : vector<32x128xf32>
    %426 = tpu.matmul %425, %419, %cst_216 {dimension_numbers = #tpu.dot_dimension_numbers<[1], [0], [0], [1], [0, 0, 1, 1], [], []>} : vector<32x32xf32>, vector<32x128xf32>, vector<32x128xf32> -> vector<32x128xf32>
    %427 = arith.mulf %426, %30 : vector<32x128xf32>
    %428 = arith.mulf %421, %32 : vector<32x128xf32>
    %cst_217 = arith.constant dense<0.000000e+00> : vector<32x32xf32>
    %429 = tpu.matmul %428, %422, %cst_217 {dimension_numbers = #tpu.dot_dimension_numbers<[1], [0], [0], [1], [0, 0, 1, 1], [], []>} : vector<32x128xf32>, vector<128x32xf32>, vector<32x32xf32> -> vector<32x32xf32>
    %430 = arith.mulf %429, %28 : vector<32x32xf32>
    %cst_218 = arith.constant dense<0.000000e+00> : vector<32x128xf32>
    %431 = tpu.matmul %430, %419, %cst_218 {dimension_numbers = #tpu.dot_dimension_numbers<[1], [0], [0], [1], [0, 0, 1, 1], [], []>} : vector<32x32xf32>, vector<32x128xf32>, vector<32x128xf32> -> vector<32x128xf32>
    %432 = arith.mulf %431, %32 : vector<32x128xf32>
    %433 = arith.addf %427, %432 : vector<32x128xf32>
    %cst_219 = arith.constant 1.250000e-01 : f32
    %434 = vector.broadcast %cst_219 : f32 to vector<32x128xf32>
    %435 = arith.mulf %433, %434 : vector<32x128xf32>
    %c0_220 = arith.constant 0 : index
    %c0_221 = arith.constant 0 : index
    %436 = vector.load %arg27[%c0_220, %c0_221] : memref<32x128xf32, #tpu.memory_space<vmem>>, vector<32x128xf32>
    %437 = arith.subf %435, %436 : vector<32x128xf32>
    %cst_222 = arith.constant 5.000000e-01 : f32
    %438 = vector.broadcast %cst_222 : f32 to vector<32x128xf32>
    %439 = arith.mulf %437, %438 : vector<32x128xf32>
    %440 = arith.addf %436, %439 : vector<32x128xf32>
    %cst_223 = arith.constant 5.000000e-01 : f32
    %441 = vector.broadcast %cst_223 : f32 to vector<32x128xf32>
    %442 = arith.cmpf oge, %440, %441 : vector<32x128xf32>
    %443 = arith.extui %442 : vector<32x128xi1> to vector<32x128xi32>
    %444 = arith.sitofp %443 : vector<32x128xi32> to vector<32x128xf32>
    %cst_224 = arith.constant 1.000000e+00 : f32
    %445 = vector.broadcast %cst_224 : f32 to vector<32x128xf32>
    %446 = arith.subf %445, %444 : vector<32x128xf32>
    %447 = arith.mulf %440, %446 : vector<32x128xf32>
    %c0_225 = arith.constant 0 : index
    %c0_226 = arith.constant 0 : index
    %448 = vector.load %arg27[%c0_225, %c0_226] : memref<32x128xf32, #tpu.memory_space<vmem>>, vector<32x128xf32>
    tpu.vector_store %arg27[%c0_225, %c0_226], %447 {strides = array<i32>} : memref<32x128xf32, #tpu.memory_space<vmem>>, vector<32x128xf32>,
    %cst_227 = arith.constant dense<0.000000e+00> : vector<32x128xf32>
    %449 = tpu.matmul %35, %444, %cst_227 {dimension_numbers = #tpu.dot_dimension_numbers<[1], [0], [0], [1], [0, 0, 1, 1], [], []>} : vector<32x32xf32>, vector<32x128xf32>, vector<32x128xf32> -> vector<32x128xf32>
    %450 = arith.addf %449, %44 : vector<32x128xf32>
    %c0_228 = arith.constant 0 : index
    %c0_229 = arith.constant 0 : index
    %451 = vector.load %arg28[%c0_228, %c0_229] : memref<32x128xf32, #tpu.memory_space<vmem>>, vector<32x128xf32>
    %452 = arith.subf %450, %451 : vector<32x128xf32>
    %cst_230 = arith.constant 5.000000e-01 : f32
    %453 = vector.broadcast %cst_230 : f32 to vector<32x128xf32>
    %454 = arith.mulf %452, %453 : vector<32x128xf32>
    %455 = arith.addf %451, %454 : vector<32x128xf32>
    %cst_231 = arith.constant 1.000000e+00 : f32
    %456 = vector.broadcast %cst_231 : f32 to vector<32x128xf32>
    %457 = arith.cmpf oge, %455, %456 : vector<32x128xf32>
    %458 = arith.extui %457 : vector<32x128xi1> to vector<32x128xi32>
    %459 = arith.sitofp %458 : vector<32x128xi32> to vector<32x128xf32>
    %cst_232 = arith.constant 1.000000e+00 : f32
    %460 = vector.broadcast %cst_232 : f32 to vector<32x128xf32>
    %461 = arith.subf %460, %459 : vector<32x128xf32>
    %462 = arith.mulf %455, %461 : vector<32x128xf32>
    %c0_233 = arith.constant 0 : index
    %c0_234 = arith.constant 0 : index
    %463 = vector.load %arg28[%c0_233, %c0_234] : memref<32x128xf32, #tpu.memory_space<vmem>>, vector<32x128xf32>
    tpu.vector_store %arg28[%c0_233, %c0_234], %462 {strides = array<i32>} : memref<32x128xf32, #tpu.memory_space<vmem>>, vector<32x128xf32>,
    %464 = arith.addf %17, %459 : vector<32x128xf32>
    %cst_235 = arith.constant dense<0.000000e+00> : vector<128x128xf32>
    %465 = tpu.matmul %37, %464, %cst_235 {dimension_numbers = #tpu.dot_dimension_numbers<[1], [0], [0], [1], [0, 0, 1, 1], [], []>} : vector<128x32xf32>, vector<32x128xf32>, vector<128x128xf32> -> vector<128x128xf32>
    %466 = arith.addf %465, %46 : vector<128x128xf32>
    %c0_236 = arith.constant 0 : index
    %c0_237 = arith.constant 0 : index
    %467 = vector.load %arg29[%c0_236, %c0_237] : memref<128x128xf32, #tpu.memory_space<vmem>>, vector<128x128xf32>
    %468 = arith.subf %466, %467 : vector<128x128xf32>
    %cst_238 = arith.constant 5.000000e-01 : f32
    %469 = vector.broadcast %cst_238 : f32 to vector<128x128xf32>
    %470 = arith.mulf %468, %469 : vector<128x128xf32>
    %471 = arith.addf %467, %470 : vector<128x128xf32>
    %cst_239 = arith.constant 1.000000e+00 : f32
    %472 = vector.broadcast %cst_239 : f32 to vector<128x128xf32>
    %473 = arith.cmpf oge, %471, %472 : vector<128x128xf32>
    %474 = arith.extui %473 : vector<128x128xi1> to vector<128x128xi32>
    %475 = arith.sitofp %474 : vector<128x128xi32> to vector<128x128xf32>
    %cst_240 = arith.constant 1.000000e+00 : f32
    %476 = vector.broadcast %cst_240 : f32 to vector<128x128xf32>
    %477 = arith.subf %476, %475 : vector<128x128xf32>
    %478 = arith.mulf %471, %477 : vector<128x128xf32>
    %c0_241 = arith.constant 0 : index
    %c0_242 = arith.constant 0 : index
    %479 = vector.load %arg29[%c0_241, %c0_242] : memref<128x128xf32, #tpu.memory_space<vmem>>, vector<128x128xf32>
    tpu.vector_store %arg29[%c0_241, %c0_242], %478 {strides = array<i32>} : memref<128x128xf32, #tpu.memory_space<vmem>>, vector<128x128xf32>,
    %cst_243 = arith.constant dense<0.000000e+00> : vector<32x128xf32>
    %480 = tpu.matmul %39, %475, %cst_243 {dimension_numbers = #tpu.dot_dimension_numbers<[1], [0], [0], [1], [0, 0, 1, 1], [], []>} : vector<32x128xf32>, vector<128x128xf32>, vector<32x128xf32> -> vector<32x128xf32>
    %481 = arith.addf %480, %48 : vector<32x128xf32>
    %c0_244 = arith.constant 0 : index
    %c0_245 = arith.constant 0 : index
    %482 = vector.load %arg30[%c0_244, %c0_245] : memref<32x128xf32, #tpu.memory_space<vmem>>, vector<32x128xf32>
    %483 = arith.subf %481, %482 : vector<32x128xf32>
    %cst_246 = arith.constant 5.000000e-01 : f32
    %484 = vector.broadcast %cst_246 : f32 to vector<32x128xf32>
    %485 = arith.mulf %483, %484 : vector<32x128xf32>
    %486 = arith.addf %482, %485 : vector<32x128xf32>
    %cst_247 = arith.constant 1.000000e+00 : f32
    %487 = vector.broadcast %cst_247 : f32 to vector<32x128xf32>
    %488 = arith.cmpf oge, %486, %487 : vector<32x128xf32>
    %489 = arith.extui %488 : vector<32x128xi1> to vector<32x128xi32>
    %490 = arith.sitofp %489 : vector<32x128xi32> to vector<32x128xf32>
    %cst_248 = arith.constant 1.000000e+00 : f32
    %491 = vector.broadcast %cst_248 : f32 to vector<32x128xf32>
    %492 = arith.subf %491, %490 : vector<32x128xf32>
    %493 = arith.mulf %486, %492 : vector<32x128xf32>
    %c0_249 = arith.constant 0 : index
    %c0_250 = arith.constant 0 : index
    %494 = vector.load %arg30[%c0_249, %c0_250] : memref<32x128xf32, #tpu.memory_space<vmem>>, vector<32x128xf32>
    tpu.vector_store %arg30[%c0_249, %c0_250], %493 {strides = array<i32>} : memref<32x128xf32, #tpu.memory_space<vmem>>, vector<32x128xf32>,
    %495 = arith.addf %464, %490 : vector<32x128xf32>
    %cst_251 = arith.constant dense<0.000000e+00> : vector<96x128xf32>
    %496 = tpu.matmul %49, %495, %cst_251 {dimension_numbers = #tpu.dot_dimension_numbers<[1], [0], [0], [1], [0, 0, 1, 1], [], []>} : vector<96x32xf32>, vector<32x128xf32>, vector<96x128xf32> -> vector<96x128xf32>
    %497 = arith.addf %496, %58 : vector<96x128xf32>
    %c0_252 = arith.constant 0 : index
    %c0_253 = arith.constant 0 : index
    %498 = vector.load %arg31[%c0_252, %c0_253] : memref<96x128xf32, #tpu.memory_space<vmem>>, vector<96x128xf32>
    %499 = arith.subf %497, %498 : vector<96x128xf32>
    %cst_254 = arith.constant 5.000000e-01 : f32
    %500 = vector.broadcast %cst_254 : f32 to vector<96x128xf32>
    %501 = arith.mulf %499, %500 : vector<96x128xf32>
    %502 = arith.addf %498, %501 : vector<96x128xf32>
    %cst_255 = arith.constant 1.000000e+00 : f32
    %503 = vector.broadcast %cst_255 : f32 to vector<96x128xf32>
    %504 = arith.cmpf oge, %502, %503 : vector<96x128xf32>
    %505 = arith.extui %504 : vector<96x128xi1> to vector<96x128xi32>
    %506 = arith.sitofp %505 : vector<96x128xi32> to vector<96x128xf32>
    %cst_256 = arith.constant 1.000000e+00 : f32
    %507 = vector.broadcast %cst_256 : f32 to vector<96x128xf32>
    %508 = arith.subf %507, %506 : vector<96x128xf32>
    %509 = arith.mulf %502, %508 : vector<96x128xf32>
    %c0_257 = arith.constant 0 : index
    %c0_258 = arith.constant 0 : index
    %510 = vector.load %arg31[%c0_257, %c0_258] : memref<96x128xf32, #tpu.memory_space<vmem>>, vector<96x128xf32>
    tpu.vector_store %arg31[%c0_257, %c0_258], %509 {strides = array<i32>} : memref<96x128xf32, #tpu.memory_space<vmem>>, vector<96x128xf32>,
    %511 = vector.extract_strided_slice %506 {offsets = [0, 0], sizes = [32, 128], strides = [1, 1]} : vector<96x128xf32> to vector<32x128xf32>
    %512 = vector.extract_strided_slice %506 {offsets = [32, 0], sizes = [32, 128], strides = [1, 1]} : vector<96x128xf32> to vector<32x128xf32>
    %513 = vector.extract_strided_slice %506 {offsets = [64, 0], sizes = [32, 128], strides = [1, 1]} : vector<96x128xf32> to vector<32x128xf32>
    %514 = tpu.transpose %512, [1, 0] : vector<32x128xf32> -> vector<128x32xf32>
    %515 = arith.mulf %513, %30 : vector<32x128xf32>
    %cst_259 = arith.constant dense<0.000000e+00> : vector<32x32xf32>
    %516 = tpu.matmul %515, %514, %cst_259 {dimension_numbers = #tpu.dot_dimension_numbers<[1], [0], [0], [1], [0, 0, 1, 1], [], []>} : vector<32x128xf32>, vector<128x32xf32>, vector<32x32xf32> -> vector<32x32xf32>
    %517 = arith.mulf %516, %28 : vector<32x32xf32>
    %cst_260 = arith.constant dense<0.000000e+00> : vector<32x128xf32>
    %518 = tpu.matmul %517, %511, %cst_260 {dimension_numbers = #tpu.dot_dimension_numbers<[1], [0], [0], [1], [0, 0, 1, 1], [], []>} : vector<32x32xf32>, vector<32x128xf32>, vector<32x128xf32> -> vector<32x128xf32>
    %519 = arith.mulf %518, %30 : vector<32x128xf32>
    %520 = arith.mulf %513, %32 : vector<32x128xf32>
    %cst_261 = arith.constant dense<0.000000e+00> : vector<32x32xf32>
    %521 = tpu.matmul %520, %514, %cst_261 {dimension_numbers = #tpu.dot_dimension_numbers<[1], [0], [0], [1], [0, 0, 1, 1], [], []>} : vector<32x128xf32>, vector<128x32xf32>, vector<32x32xf32> -> vector<32x32xf32>
    %522 = arith.mulf %521, %28 : vector<32x32xf32>
    %cst_262 = arith.constant dense<0.000000e+00> : vector<32x128xf32>
    %523 = tpu.matmul %522, %511, %cst_262 {dimension_numbers = #tpu.dot_dimension_numbers<[1], [0], [0], [1], [0, 0, 1, 1], [], []>} : vector<32x32xf32>, vector<32x128xf32>, vector<32x128xf32> -> vector<32x128xf32>
    %524 = arith.mulf %523, %32 : vector<32x128xf32>
    %525 = arith.addf %519, %524 : vector<32x128xf32>
    %cst_263 = arith.constant 1.250000e-01 : f32
    %526 = vector.broadcast %cst_263 : f32 to vector<32x128xf32>
    %527 = arith.mulf %525, %526 : vector<32x128xf32>
    %c0_264 = arith.constant 0 : index
    %c0_265 = arith.constant 0 : index
    %528 = vector.load %arg32[%c0_264, %c0_265] : memref<32x128xf32, #tpu.memory_space<vmem>>, vector<32x128xf32>
    %529 = arith.subf %527, %528 : vector<32x128xf32>
    %cst_266 = arith.constant 5.000000e-01 : f32
    %530 = vector.broadcast %cst_266 : f32 to vector<32x128xf32>
    %531 = arith.mulf %529, %530 : vector<32x128xf32>
    %532 = arith.addf %528, %531 : vector<32x128xf32>
    %cst_267 = arith.constant 5.000000e-01 : f32
    %533 = vector.broadcast %cst_267 : f32 to vector<32x128xf32>
    %534 = arith.cmpf oge, %532, %533 : vector<32x128xf32>
    %535 = arith.extui %534 : vector<32x128xi1> to vector<32x128xi32>
    %536 = arith.sitofp %535 : vector<32x128xi32> to vector<32x128xf32>
    %cst_268 = arith.constant 1.000000e+00 : f32
    %537 = vector.broadcast %cst_268 : f32 to vector<32x128xf32>
    %538 = arith.subf %537, %536 : vector<32x128xf32>
    %539 = arith.mulf %532, %538 : vector<32x128xf32>
    %c0_269 = arith.constant 0 : index
    %c0_270 = arith.constant 0 : index
    %540 = vector.load %arg32[%c0_269, %c0_270] : memref<32x128xf32, #tpu.memory_space<vmem>>, vector<32x128xf32>
    tpu.vector_store %arg32[%c0_269, %c0_270], %539 {strides = array<i32>} : memref<32x128xf32, #tpu.memory_space<vmem>>, vector<32x128xf32>,
    %cst_271 = arith.constant dense<0.000000e+00> : vector<32x128xf32>
    %541 = tpu.matmul %51, %536, %cst_271 {dimension_numbers = #tpu.dot_dimension_numbers<[1], [0], [0], [1], [0, 0, 1, 1], [], []>} : vector<32x32xf32>, vector<32x128xf32>, vector<32x128xf32> -> vector<32x128xf32>
    %542 = arith.addf %541, %60 : vector<32x128xf32>
    %c0_272 = arith.constant 0 : index
    %c0_273 = arith.constant 0 : index
    %543 = vector.load %arg33[%c0_272, %c0_273] : memref<32x128xf32, #tpu.memory_space<vmem>>, vector<32x128xf32>
    %544 = arith.subf %542, %543 : vector<32x128xf32>
    %cst_274 = arith.constant 5.000000e-01 : f32
    %545 = vector.broadcast %cst_274 : f32 to vector<32x128xf32>
    %546 = arith.mulf %544, %545 : vector<32x128xf32>
    %547 = arith.addf %543, %546 : vector<32x128xf32>
    %cst_275 = arith.constant 1.000000e+00 : f32
    %548 = vector.broadcast %cst_275 : f32 to vector<32x128xf32>
    %549 = arith.cmpf oge, %547, %548 : vector<32x128xf32>
    %550 = arith.extui %549 : vector<32x128xi1> to vector<32x128xi32>
    %551 = arith.sitofp %550 : vector<32x128xi32> to vector<32x128xf32>
    %cst_276 = arith.constant 1.000000e+00 : f32
    %552 = vector.broadcast %cst_276 : f32 to vector<32x128xf32>
    %553 = arith.subf %552, %551 : vector<32x128xf32>
    %554 = arith.mulf %547, %553 : vector<32x128xf32>
    %c0_277 = arith.constant 0 : index
    %c0_278 = arith.constant 0 : index
    %555 = vector.load %arg33[%c0_277, %c0_278] : memref<32x128xf32, #tpu.memory_space<vmem>>, vector<32x128xf32>
    tpu.vector_store %arg33[%c0_277, %c0_278], %554 {strides = array<i32>} : memref<32x128xf32, #tpu.memory_space<vmem>>, vector<32x128xf32>,
    %556 = arith.addf %495, %551 : vector<32x128xf32>
    %cst_279 = arith.constant dense<0.000000e+00> : vector<128x128xf32>
    %557 = tpu.matmul %53, %556, %cst_279 {dimension_numbers = #tpu.dot_dimension_numbers<[1], [0], [0], [1], [0, 0, 1, 1], [], []>} : vector<128x32xf32>, vector<32x128xf32>, vector<128x128xf32> -> vector<128x128xf32>
    %558 = arith.addf %557, %62 : vector<128x128xf32>
    %c0_280 = arith.constant 0 : index
    %c0_281 = arith.constant 0 : index
    %559 = vector.load %arg34[%c0_280, %c0_281] : memref<128x128xf32, #tpu.memory_space<vmem>>, vector<128x128xf32>
    %560 = arith.subf %558, %559 : vector<128x128xf32>
    %cst_282 = arith.constant 5.000000e-01 : f32
    %561 = vector.broadcast %cst_282 : f32 to vector<128x128xf32>
    %562 = arith.mulf %560, %561 : vector<128x128xf32>
    %563 = arith.addf %559, %562 : vector<128x128xf32>
    %cst_283 = arith.constant 1.000000e+00 : f32
    %564 = vector.broadcast %cst_283 : f32 to vector<128x128xf32>
    %565 = arith.cmpf oge, %563, %564 : vector<128x128xf32>
    %566 = arith.extui %565 : vector<128x128xi1> to vector<128x128xi32>
    %567 = arith.sitofp %566 : vector<128x128xi32> to vector<128x128xf32>
    %cst_284 = arith.constant 1.000000e+00 : f32
    %568 = vector.broadcast %cst_284 : f32 to vector<128x128xf32>
    %569 = arith.subf %568, %567 : vector<128x128xf32>
    %570 = arith.mulf %563, %569 : vector<128x128xf32>
    %c0_285 = arith.constant 0 : index
    %c0_286 = arith.constant 0 : index
    %571 = vector.load %arg34[%c0_285, %c0_286] : memref<128x128xf32, #tpu.memory_space<vmem>>, vector<128x128xf32>
    tpu.vector_store %arg34[%c0_285, %c0_286], %570 {strides = array<i32>} : memref<128x128xf32, #tpu.memory_space<vmem>>, vector<128x128xf32>,
    %cst_287 = arith.constant dense<0.000000e+00> : vector<32x128xf32>
    %572 = tpu.matmul %55, %567, %cst_287 {dimension_numbers = #tpu.dot_dimension_numbers<[1], [0], [0], [1], [0, 0, 1, 1], [], []>} : vector<32x128xf32>, vector<128x128xf32>, vector<32x128xf32> -> vector<32x128xf32>
    %573 = arith.addf %572, %64 : vector<32x128xf32>
    %c0_288 = arith.constant 0 : index
    %c0_289 = arith.constant 0 : index
    %574 = vector.load %arg35[%c0_288, %c0_289] : memref<32x128xf32, #tpu.memory_space<vmem>>, vector<32x128xf32>
    %575 = arith.subf %573, %574 : vector<32x128xf32>
    %cst_290 = arith.constant 5.000000e-01 : f32
    %576 = vector.broadcast %cst_290 : f32 to vector<32x128xf32>
    %577 = arith.mulf %575, %576 : vector<32x128xf32>
    %578 = arith.addf %574, %577 : vector<32x128xf32>
    %cst_291 = arith.constant 1.000000e+00 : f32
    %579 = vector.broadcast %cst_291 : f32 to vector<32x128xf32>
    %580 = arith.cmpf oge, %578, %579 : vector<32x128xf32>
    %581 = arith.extui %580 : vector<32x128xi1> to vector<32x128xi32>
    %582 = arith.sitofp %581 : vector<32x128xi32> to vector<32x128xf32>
    %cst_292 = arith.constant 1.000000e+00 : f32
    %583 = vector.broadcast %cst_292 : f32 to vector<32x128xf32>
    %584 = arith.subf %583, %582 : vector<32x128xf32>
    %585 = arith.mulf %578, %584 : vector<32x128xf32>
    %c0_293 = arith.constant 0 : index
    %c0_294 = arith.constant 0 : index
    %586 = vector.load %arg35[%c0_293, %c0_294] : memref<32x128xf32, #tpu.memory_space<vmem>>, vector<32x128xf32>
    tpu.vector_store %arg35[%c0_293, %c0_294], %585 {strides = array<i32>} : memref<32x128xf32, #tpu.memory_space<vmem>>, vector<32x128xf32>,
    %587 = arith.addf %556, %582 : vector<32x128xf32>
    %588 = arith.addf %403, %587 : vector<32x128xf32>
    %cst_295 = arith.constant dense<0.000000e+00> : vector<96x128xf32>
    %589 = tpu.matmul %33, %21, %cst_295 {dimension_numbers = #tpu.dot_dimension_numbers<[1], [0], [0], [1], [0, 0, 1, 1], [], []>} : vector<96x32xf32>, vector<32x128xf32>, vector<96x128xf32> -> vector<96x128xf32>
    %590 = arith.addf %589, %42 : vector<96x128xf32>
    %c0_296 = arith.constant 0 : index
    %c0_297 = arith.constant 0 : index
    %591 = vector.load %arg26[%c0_296, %c0_297] : memref<96x128xf32, #tpu.memory_space<vmem>>, vector<96x128xf32>
    %592 = arith.subf %590, %591 : vector<96x128xf32>
    %cst_298 = arith.constant 5.000000e-01 : f32
    %593 = vector.broadcast %cst_298 : f32 to vector<96x128xf32>
    %594 = arith.mulf %592, %593 : vector<96x128xf32>
    %595 = arith.addf %591, %594 : vector<96x128xf32>
    %cst_299 = arith.constant 1.000000e+00 : f32
    %596 = vector.broadcast %cst_299 : f32 to vector<96x128xf32>
    %597 = arith.cmpf oge, %595, %596 : vector<96x128xf32>
    %598 = arith.extui %597 : vector<96x128xi1> to vector<96x128xi32>
    %599 = arith.sitofp %598 : vector<96x128xi32> to vector<96x128xf32>
    %cst_300 = arith.constant 1.000000e+00 : f32
    %600 = vector.broadcast %cst_300 : f32 to vector<96x128xf32>
    %601 = arith.subf %600, %599 : vector<96x128xf32>
    %602 = arith.mulf %595, %601 : vector<96x128xf32>
    %c0_301 = arith.constant 0 : index
    %c0_302 = arith.constant 0 : index
    %603 = vector.load %arg26[%c0_301, %c0_302] : memref<96x128xf32, #tpu.memory_space<vmem>>, vector<96x128xf32>
    tpu.vector_store %arg26[%c0_301, %c0_302], %602 {strides = array<i32>} : memref<96x128xf32, #tpu.memory_space<vmem>>, vector<96x128xf32>,
    %604 = vector.extract_strided_slice %599 {offsets = [0, 0], sizes = [32, 128], strides = [1, 1]} : vector<96x128xf32> to vector<32x128xf32>
    %605 = vector.extract_strided_slice %599 {offsets = [32, 0], sizes = [32, 128], strides = [1, 1]} : vector<96x128xf32> to vector<32x128xf32>
    %606 = vector.extract_strided_slice %599 {offsets = [64, 0], sizes = [32, 128], strides = [1, 1]} : vector<96x128xf32> to vector<32x128xf32>
    %607 = tpu.transpose %605, [1, 0] : vector<32x128xf32> -> vector<128x32xf32>
    %608 = arith.mulf %606, %30 : vector<32x128xf32>
    %cst_303 = arith.constant dense<0.000000e+00> : vector<32x32xf32>
    %609 = tpu.matmul %608, %607, %cst_303 {dimension_numbers = #tpu.dot_dimension_numbers<[1], [0], [0], [1], [0, 0, 1, 1], [], []>} : vector<32x128xf32>, vector<128x32xf32>, vector<32x32xf32> -> vector<32x32xf32>
    %610 = arith.mulf %609, %28 : vector<32x32xf32>
    %cst_304 = arith.constant dense<0.000000e+00> : vector<32x128xf32>
    %611 = tpu.matmul %610, %604, %cst_304 {dimension_numbers = #tpu.dot_dimension_numbers<[1], [0], [0], [1], [0, 0, 1, 1], [], []>} : vector<32x32xf32>, vector<32x128xf32>, vector<32x128xf32> -> vector<32x128xf32>
    %612 = arith.mulf %611, %30 : vector<32x128xf32>
    %613 = arith.mulf %606, %32 : vector<32x128xf32>
    %cst_305 = arith.constant dense<0.000000e+00> : vector<32x32xf32>
    %614 = tpu.matmul %613, %607, %cst_305 {dimension_numbers = #tpu.dot_dimension_numbers<[1], [0], [0], [1], [0, 0, 1, 1], [], []>} : vector<32x128xf32>, vector<128x32xf32>, vector<32x32xf32> -> vector<32x32xf32>
    %615 = arith.mulf %614, %28 : vector<32x32xf32>
    %cst_306 = arith.constant dense<0.000000e+00> : vector<32x128xf32>
    %616 = tpu.matmul %615, %604, %cst_306 {dimension_numbers = #tpu.dot_dimension_numbers<[1], [0], [0], [1], [0, 0, 1, 1], [], []>} : vector<32x32xf32>, vector<32x128xf32>, vector<32x128xf32> -> vector<32x128xf32>
    %617 = arith.mulf %616, %32 : vector<32x128xf32>
    %618 = arith.addf %612, %617 : vector<32x128xf32>
    %cst_307 = arith.constant 1.250000e-01 : f32
    %619 = vector.broadcast %cst_307 : f32 to vector<32x128xf32>
    %620 = arith.mulf %618, %619 : vector<32x128xf32>
    %c0_308 = arith.constant 0 : index
    %c0_309 = arith.constant 0 : index
    %621 = vector.load %arg27[%c0_308, %c0_309] : memref<32x128xf32, #tpu.memory_space<vmem>>, vector<32x128xf32>
    %622 = arith.subf %620, %621 : vector<32x128xf32>
    %cst_310 = arith.constant 5.000000e-01 : f32
    %623 = vector.broadcast %cst_310 : f32 to vector<32x128xf32>
    %624 = arith.mulf %622, %623 : vector<32x128xf32>
    %625 = arith.addf %621, %624 : vector<32x128xf32>
    %cst_311 = arith.constant 5.000000e-01 : f32
    %626 = vector.broadcast %cst_311 : f32 to vector<32x128xf32>
    %627 = arith.cmpf oge, %625, %626 : vector<32x128xf32>
    %628 = arith.extui %627 : vector<32x128xi1> to vector<32x128xi32>
    %629 = arith.sitofp %628 : vector<32x128xi32> to vector<32x128xf32>
    %cst_312 = arith.constant 1.000000e+00 : f32
    %630 = vector.broadcast %cst_312 : f32 to vector<32x128xf32>
    %631 = arith.subf %630, %629 : vector<32x128xf32>
    %632 = arith.mulf %625, %631 : vector<32x128xf32>
    %c0_313 = arith.constant 0 : index
    %c0_314 = arith.constant 0 : index
    %633 = vector.load %arg27[%c0_313, %c0_314] : memref<32x128xf32, #tpu.memory_space<vmem>>, vector<32x128xf32>
    tpu.vector_store %arg27[%c0_313, %c0_314], %632 {strides = array<i32>} : memref<32x128xf32, #tpu.memory_space<vmem>>, vector<32x128xf32>,
    %cst_315 = arith.constant dense<0.000000e+00> : vector<32x128xf32>
    %634 = tpu.matmul %35, %629, %cst_315 {dimension_numbers = #tpu.dot_dimension_numbers<[1], [0], [0], [1], [0, 0, 1, 1], [], []>} : vector<32x32xf32>, vector<32x128xf32>, vector<32x128xf32> -> vector<32x128xf32>
    %635 = arith.addf %634, %44 : vector<32x128xf32>
    %c0_316 = arith.constant 0 : index
    %c0_317 = arith.constant 0 : index
    %636 = vector.load %arg28[%c0_316, %c0_317] : memref<32x128xf32, #tpu.memory_space<vmem>>, vector<32x128xf32>
    %637 = arith.subf %635, %636 : vector<32x128xf32>
    %cst_318 = arith.constant 5.000000e-01 : f32
    %638 = vector.broadcast %cst_318 : f32 to vector<32x128xf32>
    %639 = arith.mulf %637, %638 : vector<32x128xf32>
    %640 = arith.addf %636, %639 : vector<32x128xf32>
    %cst_319 = arith.constant 1.000000e+00 : f32
    %641 = vector.broadcast %cst_319 : f32 to vector<32x128xf32>
    %642 = arith.cmpf oge, %640, %641 : vector<32x128xf32>
    %643 = arith.extui %642 : vector<32x128xi1> to vector<32x128xi32>
    %644 = arith.sitofp %643 : vector<32x128xi32> to vector<32x128xf32>
    %cst_320 = arith.constant 1.000000e+00 : f32
    %645 = vector.broadcast %cst_320 : f32 to vector<32x128xf32>
    %646 = arith.subf %645, %644 : vector<32x128xf32>
    %647 = arith.mulf %640, %646 : vector<32x128xf32>
    %c0_321 = arith.constant 0 : index
    %c0_322 = arith.constant 0 : index
    %648 = vector.load %arg28[%c0_321, %c0_322] : memref<32x128xf32, #tpu.memory_space<vmem>>, vector<32x128xf32>
    tpu.vector_store %arg28[%c0_321, %c0_322], %647 {strides = array<i32>} : memref<32x128xf32, #tpu.memory_space<vmem>>, vector<32x128xf32>,
    %649 = arith.addf %21, %644 : vector<32x128xf32>
    %cst_323 = arith.constant dense<0.000000e+00> : vector<128x128xf32>
    %650 = tpu.matmul %37, %649, %cst_323 {dimension_numbers = #tpu.dot_dimension_numbers<[1], [0], [0], [1], [0, 0, 1, 1], [], []>} : vector<128x32xf32>, vector<32x128xf32>, vector<128x128xf32> -> vector<128x128xf32>
    %651 = arith.addf %650, %46 : vector<128x128xf32>
    %c0_324 = arith.constant 0 : index
    %c0_325 = arith.constant 0 : index
    %652 = vector.load %arg29[%c0_324, %c0_325] : memref<128x128xf32, #tpu.memory_space<vmem>>, vector<128x128xf32>
    %653 = arith.subf %651, %652 : vector<128x128xf32>
    %cst_326 = arith.constant 5.000000e-01 : f32
    %654 = vector.broadcast %cst_326 : f32 to vector<128x128xf32>
    %655 = arith.mulf %653, %654 : vector<128x128xf32>
    %656 = arith.addf %652, %655 : vector<128x128xf32>
    %cst_327 = arith.constant 1.000000e+00 : f32
    %657 = vector.broadcast %cst_327 : f32 to vector<128x128xf32>
    %658 = arith.cmpf oge, %656, %657 : vector<128x128xf32>
    %659 = arith.extui %658 : vector<128x128xi1> to vector<128x128xi32>
    %660 = arith.sitofp %659 : vector<128x128xi32> to vector<128x128xf32>
    %cst_328 = arith.constant 1.000000e+00 : f32
    %661 = vector.broadcast %cst_328 : f32 to vector<128x128xf32>
    %662 = arith.subf %661, %660 : vector<128x128xf32>
    %663 = arith.mulf %656, %662 : vector<128x128xf32>
    %c0_329 = arith.constant 0 : index
    %c0_330 = arith.constant 0 : index
    %664 = vector.load %arg29[%c0_329, %c0_330] : memref<128x128xf32, #tpu.memory_space<vmem>>, vector<128x128xf32>
    tpu.vector_store %arg29[%c0_329, %c0_330], %663 {strides = array<i32>} : memref<128x128xf32, #tpu.memory_space<vmem>>, vector<128x128xf32>,
    %cst_331 = arith.constant dense<0.000000e+00> : vector<32x128xf32>
    %665 = tpu.matmul %39, %660, %cst_331 {dimension_numbers = #tpu.dot_dimension_numbers<[1], [0], [0], [1], [0, 0, 1, 1], [], []>} : vector<32x128xf32>, vector<128x128xf32>, vector<32x128xf32> -> vector<32x128xf32>
    %666 = arith.addf %665, %48 : vector<32x128xf32>
    %c0_332 = arith.constant 0 : index
    %c0_333 = arith.constant 0 : index
    %667 = vector.load %arg30[%c0_332, %c0_333] : memref<32x128xf32, #tpu.memory_space<vmem>>, vector<32x128xf32>
    %668 = arith.subf %666, %667 : vector<32x128xf32>
    %cst_334 = arith.constant 5.000000e-01 : f32
    %669 = vector.broadcast %cst_334 : f32 to vector<32x128xf32>
    %670 = arith.mulf %668, %669 : vector<32x128xf32>
    %671 = arith.addf %667, %670 : vector<32x128xf32>
    %cst_335 = arith.constant 1.000000e+00 : f32
    %672 = vector.broadcast %cst_335 : f32 to vector<32x128xf32>
    %673 = arith.cmpf oge, %671, %672 : vector<32x128xf32>
    %674 = arith.extui %673 : vector<32x128xi1> to vector<32x128xi32>
    %675 = arith.sitofp %674 : vector<32x128xi32> to vector<32x128xf32>
    %cst_336 = arith.constant 1.000000e+00 : f32
    %676 = vector.broadcast %cst_336 : f32 to vector<32x128xf32>
    %677 = arith.subf %676, %675 : vector<32x128xf32>
    %678 = arith.mulf %671, %677 : vector<32x128xf32>
    %c0_337 = arith.constant 0 : index
    %c0_338 = arith.constant 0 : index
    %679 = vector.load %arg30[%c0_337, %c0_338] : memref<32x128xf32, #tpu.memory_space<vmem>>, vector<32x128xf32>
    tpu.vector_store %arg30[%c0_337, %c0_338], %678 {strides = array<i32>} : memref<32x128xf32, #tpu.memory_space<vmem>>, vector<32x128xf32>,
    %680 = arith.addf %649, %675 : vector<32x128xf32>
    %cst_339 = arith.constant dense<0.000000e+00> : vector<96x128xf32>
    %681 = tpu.matmul %49, %680, %cst_339 {dimension_numbers = #tpu.dot_dimension_numbers<[1], [0], [0], [1], [0, 0, 1, 1], [], []>} : vector<96x32xf32>, vector<32x128xf32>, vector<96x128xf32> -> vector<96x128xf32>
    %682 = arith.addf %681, %58 : vector<96x128xf32>
    %c0_340 = arith.constant 0 : index
    %c0_341 = arith.constant 0 : index
    %683 = vector.load %arg31[%c0_340, %c0_341] : memref<96x128xf32, #tpu.memory_space<vmem>>, vector<96x128xf32>
    %684 = arith.subf %682, %683 : vector<96x128xf32>
    %cst_342 = arith.constant 5.000000e-01 : f32
    %685 = vector.broadcast %cst_342 : f32 to vector<96x128xf32>
    %686 = arith.mulf %684, %685 : vector<96x128xf32>
    %687 = arith.addf %683, %686 : vector<96x128xf32>
    %cst_343 = arith.constant 1.000000e+00 : f32
    %688 = vector.broadcast %cst_343 : f32 to vector<96x128xf32>
    %689 = arith.cmpf oge, %687, %688 : vector<96x128xf32>
    %690 = arith.extui %689 : vector<96x128xi1> to vector<96x128xi32>
    %691 = arith.sitofp %690 : vector<96x128xi32> to vector<96x128xf32>
    %cst_344 = arith.constant 1.000000e+00 : f32
    %692 = vector.broadcast %cst_344 : f32 to vector<96x128xf32>
    %693 = arith.subf %692, %691 : vector<96x128xf32>
    %694 = arith.mulf %687, %693 : vector<96x128xf32>
    %c0_345 = arith.constant 0 : index
    %c0_346 = arith.constant 0 : index
    %695 = vector.load %arg31[%c0_345, %c0_346] : memref<96x128xf32, #tpu.memory_space<vmem>>, vector<96x128xf32>
    tpu.vector_store %arg31[%c0_345, %c0_346], %694 {strides = array<i32>} : memref<96x128xf32, #tpu.memory_space<vmem>>, vector<96x128xf32>,
    %696 = vector.extract_strided_slice %691 {offsets = [0, 0], sizes = [32, 128], strides = [1, 1]} : vector<96x128xf32> to vector<32x128xf32>
    %697 = vector.extract_strided_slice %691 {offsets = [32, 0], sizes = [32, 128], strides = [1, 1]} : vector<96x128xf32> to vector<32x128xf32>
    %698 = vector.extract_strided_slice %691 {offsets = [64, 0], sizes = [32, 128], strides = [1, 1]} : vector<96x128xf32> to vector<32x128xf32>
    %699 = tpu.transpose %697, [1, 0] : vector<32x128xf32> -> vector<128x32xf32>
    %700 = arith.mulf %698, %30 : vector<32x128xf32>
    %cst_347 = arith.constant dense<0.000000e+00> : vector<32x32xf32>
    %701 = tpu.matmul %700, %699, %cst_347 {dimension_numbers = #tpu.dot_dimension_numbers<[1], [0], [0], [1], [0, 0, 1, 1], [], []>} : vector<32x128xf32>, vector<128x32xf32>, vector<32x32xf32> -> vector<32x32xf32>
    %702 = arith.mulf %701, %28 : vector<32x32xf32>
    %cst_348 = arith.constant dense<0.000000e+00> : vector<32x128xf32>
    %703 = tpu.matmul %702, %696, %cst_348 {dimension_numbers = #tpu.dot_dimension_numbers<[1], [0], [0], [1], [0, 0, 1, 1], [], []>} : vector<32x32xf32>, vector<32x128xf32>, vector<32x128xf32> -> vector<32x128xf32>
    %704 = arith.mulf %703, %30 : vector<32x128xf32>
    %705 = arith.mulf %698, %32 : vector<32x128xf32>
    %cst_349 = arith.constant dense<0.000000e+00> : vector<32x32xf32>
    %706 = tpu.matmul %705, %699, %cst_349 {dimension_numbers = #tpu.dot_dimension_numbers<[1], [0], [0], [1], [0, 0, 1, 1], [], []>} : vector<32x128xf32>, vector<128x32xf32>, vector<32x32xf32> -> vector<32x32xf32>
    %707 = arith.mulf %706, %28 : vector<32x32xf32>
    %cst_350 = arith.constant dense<0.000000e+00> : vector<32x128xf32>
    %708 = tpu.matmul %707, %696, %cst_350 {dimension_numbers = #tpu.dot_dimension_numbers<[1], [0], [0], [1], [0, 0, 1, 1], [], []>} : vector<32x32xf32>, vector<32x128xf32>, vector<32x128xf32> -> vector<32x128xf32>
    %709 = arith.mulf %708, %32 : vector<32x128xf32>
    %710 = arith.addf %704, %709 : vector<32x128xf32>
    %cst_351 = arith.constant 1.250000e-01 : f32
    %711 = vector.broadcast %cst_351 : f32 to vector<32x128xf32>
    %712 = arith.mulf %710, %711 : vector<32x128xf32>
    %c0_352 = arith.constant 0 : index
    %c0_353 = arith.constant 0 : index
    %713 = vector.load %arg32[%c0_352, %c0_353] : memref<32x128xf32, #tpu.memory_space<vmem>>, vector<32x128xf32>
    %714 = arith.subf %712, %713 : vector<32x128xf32>
    %cst_354 = arith.constant 5.000000e-01 : f32
    %715 = vector.broadcast %cst_354 : f32 to vector<32x128xf32>
    %716 = arith.mulf %714, %715 : vector<32x128xf32>
    %717 = arith.addf %713, %716 : vector<32x128xf32>
    %cst_355 = arith.constant 5.000000e-01 : f32
    %718 = vector.broadcast %cst_355 : f32 to vector<32x128xf32>
    %719 = arith.cmpf oge, %717, %718 : vector<32x128xf32>
    %720 = arith.extui %719 : vector<32x128xi1> to vector<32x128xi32>
    %721 = arith.sitofp %720 : vector<32x128xi32> to vector<32x128xf32>
    %cst_356 = arith.constant 1.000000e+00 : f32
    %722 = vector.broadcast %cst_356 : f32 to vector<32x128xf32>
    %723 = arith.subf %722, %721 : vector<32x128xf32>
    %724 = arith.mulf %717, %723 : vector<32x128xf32>
    %c0_357 = arith.constant 0 : index
    %c0_358 = arith.constant 0 : index
    %725 = vector.load %arg32[%c0_357, %c0_358] : memref<32x128xf32, #tpu.memory_space<vmem>>, vector<32x128xf32>
    tpu.vector_store %arg32[%c0_357, %c0_358], %724 {strides = array<i32>} : memref<32x128xf32, #tpu.memory_space<vmem>>, vector<32x128xf32>,
    %cst_359 = arith.constant dense<0.000000e+00> : vector<32x128xf32>
    %726 = tpu.matmul %51, %721, %cst_359 {dimension_numbers = #tpu.dot_dimension_numbers<[1], [0], [0], [1], [0, 0, 1, 1], [], []>} : vector<32x32xf32>, vector<32x128xf32>, vector<32x128xf32> -> vector<32x128xf32>
    %727 = arith.addf %726, %60 : vector<32x128xf32>
    %c0_360 = arith.constant 0 : index
    %c0_361 = arith.constant 0 : index
    %728 = vector.load %arg33[%c0_360, %c0_361] : memref<32x128xf32, #tpu.memory_space<vmem>>, vector<32x128xf32>
    %729 = arith.subf %727, %728 : vector<32x128xf32>
    %cst_362 = arith.constant 5.000000e-01 : f32
    %730 = vector.broadcast %cst_362 : f32 to vector<32x128xf32>
    %731 = arith.mulf %729, %730 : vector<32x128xf32>
    %732 = arith.addf %728, %731 : vector<32x128xf32>
    %cst_363 = arith.constant 1.000000e+00 : f32
    %733 = vector.broadcast %cst_363 : f32 to vector<32x128xf32>
    %734 = arith.cmpf oge, %732, %733 : vector<32x128xf32>
    %735 = arith.extui %734 : vector<32x128xi1> to vector<32x128xi32>
    %736 = arith.sitofp %735 : vector<32x128xi32> to vector<32x128xf32>
    %cst_364 = arith.constant 1.000000e+00 : f32
    %737 = vector.broadcast %cst_364 : f32 to vector<32x128xf32>
    %738 = arith.subf %737, %736 : vector<32x128xf32>
    %739 = arith.mulf %732, %738 : vector<32x128xf32>
    %c0_365 = arith.constant 0 : index
    %c0_366 = arith.constant 0 : index
    %740 = vector.load %arg33[%c0_365, %c0_366] : memref<32x128xf32, #tpu.memory_space<vmem>>, vector<32x128xf32>
    tpu.vector_store %arg33[%c0_365, %c0_366], %739 {strides = array<i32>} : memref<32x128xf32, #tpu.memory_space<vmem>>, vector<32x128xf32>,
    %741 = arith.addf %680, %736 : vector<32x128xf32>
    %cst_367 = arith.constant dense<0.000000e+00> : vector<128x128xf32>
    %742 = tpu.matmul %53, %741, %cst_367 {dimension_numbers = #tpu.dot_dimension_numbers<[1], [0], [0], [1], [0, 0, 1, 1], [], []>} : vector<128x32xf32>, vector<32x128xf32>, vector<128x128xf32> -> vector<128x128xf32>
    %743 = arith.addf %742, %62 : vector<128x128xf32>
    %c0_368 = arith.constant 0 : index
    %c0_369 = arith.constant 0 : index
    %744 = vector.load %arg34[%c0_368, %c0_369] : memref<128x128xf32, #tpu.memory_space<vmem>>, vector<128x128xf32>
    %745 = arith.subf %743, %744 : vector<128x128xf32>
    %cst_370 = arith.constant 5.000000e-01 : f32
    %746 = vector.broadcast %cst_370 : f32 to vector<128x128xf32>
    %747 = arith.mulf %745, %746 : vector<128x128xf32>
    %748 = arith.addf %744, %747 : vector<128x128xf32>
    %cst_371 = arith.constant 1.000000e+00 : f32
    %749 = vector.broadcast %cst_371 : f32 to vector<128x128xf32>
    %750 = arith.cmpf oge, %748, %749 : vector<128x128xf32>
    %751 = arith.extui %750 : vector<128x128xi1> to vector<128x128xi32>
    %752 = arith.sitofp %751 : vector<128x128xi32> to vector<128x128xf32>
    %cst_372 = arith.constant 1.000000e+00 : f32
    %753 = vector.broadcast %cst_372 : f32 to vector<128x128xf32>
    %754 = arith.subf %753, %752 : vector<128x128xf32>
    %755 = arith.mulf %748, %754 : vector<128x128xf32>
    %c0_373 = arith.constant 0 : index
    %c0_374 = arith.constant 0 : index
    %756 = vector.load %arg34[%c0_373, %c0_374] : memref<128x128xf32, #tpu.memory_space<vmem>>, vector<128x128xf32>
    tpu.vector_store %arg34[%c0_373, %c0_374], %755 {strides = array<i32>} : memref<128x128xf32, #tpu.memory_space<vmem>>, vector<128x128xf32>,
    %cst_375 = arith.constant dense<0.000000e+00> : vector<32x128xf32>
    %757 = tpu.matmul %55, %752, %cst_375 {dimension_numbers = #tpu.dot_dimension_numbers<[1], [0], [0], [1], [0, 0, 1, 1], [], []>} : vector<32x128xf32>, vector<128x128xf32>, vector<32x128xf32> -> vector<32x128xf32>
    %758 = arith.addf %757, %64 : vector<32x128xf32>
    %c0_376 = arith.constant 0 : index
    %c0_377 = arith.constant 0 : index
    %759 = vector.load %arg35[%c0_376, %c0_377] : memref<32x128xf32, #tpu.memory_space<vmem>>, vector<32x128xf32>
    %760 = arith.subf %758, %759 : vector<32x128xf32>
    %cst_378 = arith.constant 5.000000e-01 : f32
    %761 = vector.broadcast %cst_378 : f32 to vector<32x128xf32>
    %762 = arith.mulf %760, %761 : vector<32x128xf32>
    %763 = arith.addf %759, %762 : vector<32x128xf32>
    %cst_379 = arith.constant 1.000000e+00 : f32
    %764 = vector.broadcast %cst_379 : f32 to vector<32x128xf32>
    %765 = arith.cmpf oge, %763, %764 : vector<32x128xf32>
    %766 = arith.extui %765 : vector<32x128xi1> to vector<32x128xi32>
    %767 = arith.sitofp %766 : vector<32x128xi32> to vector<32x128xf32>
    %cst_380 = arith.constant 1.000000e+00 : f32
    %768 = vector.broadcast %cst_380 : f32 to vector<32x128xf32>
    %769 = arith.subf %768, %767 : vector<32x128xf32>
    %770 = arith.mulf %763, %769 : vector<32x128xf32>
    %c0_381 = arith.constant 0 : index
    %c0_382 = arith.constant 0 : index
    %771 = vector.load %arg35[%c0_381, %c0_382] : memref<32x128xf32, #tpu.memory_space<vmem>>, vector<32x128xf32>
    tpu.vector_store %arg35[%c0_381, %c0_382], %770 {strides = array<i32>} : memref<32x128xf32, #tpu.memory_space<vmem>>, vector<32x128xf32>,
    %772 = arith.addf %741, %767 : vector<32x128xf32>
    %773 = arith.addf %588, %772 : vector<32x128xf32>
    %c0_383 = arith.constant 0 : index
    %c0_384 = arith.constant 0 : index
    %774 = vector.load %arg23[%c0_383, %c0_384] : memref<128x2xf32, #tpu.memory_space<vmem>>, vector<128x2xf32>
    %cst_385 = arith.constant dense<0.000000e+00> : vector<32x2xf32>
    %775 = tpu.matmul %773, %774, %cst_385 {dimension_numbers = #tpu.dot_dimension_numbers<[1], [0], [0], [1], [0, 0, 1, 1], [], []>} : vector<32x128xf32>, vector<128x2xf32>, vector<32x2xf32> -> vector<32x2xf32>
    %c0_386 = arith.constant 0 : index
    %c0_387 = arith.constant 0 : index
    %776 = vector.load %arg19[%c0_386, %c0_387] : memref<10x32xf32, #tpu.memory_space<vmem>>, vector<10x32xf32>
    %cst_388 = arith.constant dense<0.000000e+00> : vector<10x2xf32>
    %777 = tpu.matmul %776, %775, %cst_388 {dimension_numbers = #tpu.dot_dimension_numbers<[1], [0], [0], [1], [0, 0, 1, 1], [], []>} : vector<10x32xf32>, vector<32x2xf32>, vector<10x2xf32> -> vector<10x2xf32>
    %c0_389 = arith.constant 0 : index
    %c0_390 = arith.constant 0 : index
    %778 = vector.load %arg20[%c0_389, %c0_390] : memref<10x1xf32, #tpu.memory_space<vmem>>, vector<10x1xf32>
    %779 = vector.broadcast %778 : vector<10x1xf32> to vector<10x2xf32>
    %780 = arith.addf %777, %779 : vector<10x2xf32>
    %c0_391 = arith.constant 0 : index
    %c0_392 = arith.constant 0 : index
    %781 = vector.load %arg24[%c0_391, %c0_392] : memref<10x2xf32, #tpu.memory_space<vmem>>, vector<10x2xf32>
    tpu.vector_store %arg24[%c0_391, %c0_392], %780 {strides = array<i32>} : memref<10x2xf32, #tpu.memory_space<vmem>>, vector<10x2xf32>,
    return
  }
}

</mosaic_0001>

<llo_original>
// kernel: spikformer_forward.1
$region0: #{spikformer_forward.1}
  #allocation0 [shape = 'u32[]', space=smem, size = 0x4, offset = 0x4, fixed_abs, tag = 'smem constant byte address 0x4 - core index']
  #allocation1 [shape = 'u32[144,128]{1,0:T(1,128)}', space=vmem, size = 0x12000, scoped, tag = 'internal scratch']
  #allocation2 [shape = 'f32[96,128]{1,0:T(8,128)}', space=vmem, size = 0xc000, scoped, tag = 'scratch operand']
  #allocation3 [shape = 'f32[32,128]{1,0:T(8,128)}', space=vmem, size = 0x4000, scoped, tag = 'scratch operand']
  #allocation4 [shape = 'f32[32,128]{1,0:T(8,128)}', space=vmem, size = 0x4000, scoped, tag = 'scratch operand']
  #allocation5 [shape = 'f32[128,128]{1,0:T(8,128)}', space=vmem, size = 0x10000, scoped, tag = 'scratch operand']
  #allocation6 [shape = 'f32[32,128]{1,0:T(8,128)}', space=vmem, size = 0x4000, scoped, tag = 'scratch operand']
  #allocation7 [shape = 'f32[96,128]{1,0:T(8,128)}', space=vmem, size = 0xc000, scoped, tag = 'scratch operand']
  #allocation8 [shape = 'f32[32,128]{1,0:T(8,128)}', space=vmem, size = 0x4000, scoped, tag = 'scratch operand']
  #allocation9 [shape = 'f32[32,128]{1,0:T(8,128)}', space=vmem, size = 0x4000, scoped, tag = 'scratch operand']
  #allocation10 [shape = 'f32[128,128]{1,0:T(8,128)}', space=vmem, size = 0x10000, scoped, tag = 'scratch operand']
  #allocation11 [shape = 'f32[32,128]{1,0:T(8,128)}', space=vmem, size = 0x4000, scoped, tag = 'scratch operand']
  %s0 = inlined_call_operand.vmem [shape: f32[4,128], index: 0, kind: input, shape index: {}]
  %s1 = inlined_call_operand.vmem [shape: f32[32,4], index: 1, kind: input, shape index: {}]
  %s2 = inlined_call_operand.vmem [shape: f32[32,1], index: 2, kind: input, shape index: {}]
  %s3 = inlined_call_operand.vmem [shape: f32[96,32], index: 3, kind: input, shape index: {}]
  %s4 = inlined_call_operand.vmem [shape: f32[96,1], index: 4, kind: input, shape index: {}]
  %s5 = inlined_call_operand.vmem [shape: f32[32,32], index: 5, kind: input, shape index: {}]
  %s6 = inlined_call_operand.vmem [shape: f32[32,1], index: 6, kind: input, shape index: {}]
  %s7 = inlined_call_operand.vmem [shape: f32[128,32], index: 7, kind: input, shape index: {}]
  %s8 = inlined_call_operand.vmem [shape: f32[128,1], index: 8, kind: input, shape index: {}]
  %s9 = inlined_call_operand.vmem [shape: f32[32,128], index: 9, kind: input, shape index: {}]
  %s10 = inlined_call_operand.vmem [shape: f32[32,1], index: 10, kind: input, shape index: {}]
  %s11 = inlined_call_operand.vmem [shape: f32[96,32], index: 11, kind: input, shape index: {}]
  %s12 = inlined_call_operand.vmem [shape: f32[96,1], index: 12, kind: input, shape index: {}]
  %s13 = inlined_call_operand.vmem [shape: f32[32,32], index: 13, kind: input, shape index: {}]
  %s14 = inlined_call_operand.vmem [shape: f32[32,1], index: 14, kind: input, shape index: {}]
  %s15 = inlined_call_operand.vmem [shape: f32[128,32], index: 15, kind: input, shape index: {}]
  %s16 = inlined_call_operand.vmem [shape: f32[128,1], index: 16, kind: input, shape index: {}]
  %s17 = inlined_call_operand.vmem [shape: f32[32,128], index: 17, kind: input, shape index: {}]
  %s18 = inlined_call_operand.vmem [shape: f32[32,1], index: 18, kind: input, shape index: {}]
  %s19 = inlined_call_operand.vmem [shape: f32[10,32], index: 19, kind: input, shape index: {}]
  %s20 = inlined_call_operand.vmem [shape: f32[10,1], index: 20, kind: input, shape index: {}]
  %s21 = inlined_call_operand.vmem [shape: f32[32,32], index: 21, kind: input, shape index: {}]
  %s22 = inlined_call_operand.vmem [shape: f32[2,32,128], index: 22, kind: input, shape index: {}]
  %s23 = inlined_call_operand.vmem [shape: f32[128,2], index: 23, kind: input, shape index: {}]
  %s24 = inlined_call_operand.vmem [shape: f32[10,2], index: 24, kind: output, shape index: {0}]
  %s25 = inlined_call_operand.vmem [shape: f32[4,32,128], index: 25, kind: output, shape index: {1}]
  %26 = xla_tuple %s24, %s25
  %s27 = sld [smem:[#allocation0]]
  $region114: #{spikformer_forward.1} parent=0
    _
  %s29 = ssub.s32 1, %s27
  %s30 = scalar_select 0, %s29, %s27
  // Predicated region
  $region2: #{spikformer_forward.1} parent=0 // pred_check
    _
  $region3: #{spikformer_forward.1} parent=0 // pred_check_branch
    %32 = sbr.rel (0) target = $region5
  $region4: #{spikformer_forward.1} parent=0 // pred_region
    _
  $region5: #{spikformer_forward.1} parent=0 // pred_fallthru
    _
  // Predicated region
  $region6: #{spikformer_forward.1} parent=0 // pred_check
    _
  $region7: #{spikformer_forward.1} parent=0 // pred_check_branch
    %34 = sbr.rel (0) target = $region9
  $region8: #{spikformer_forward.1} parent=0 // pred_region
    _
  $region9: #{spikformer_forward.1} parent=0 // pred_fallthru
    _
  // Predicated region
  $region10: #{spikformer_forward.1} parent=0 // pred_check
    _
  $region11: #{spikformer_forward.1} parent=0 // pred_check_branch
    %36 = sbr.rel (0) target = $region13
  $region12: #{spikformer_forward.1} parent=0 // pred_region
    _
  $region13: #{spikformer_forward.1} parent=0 // pred_fallthru
    _
  // Predicated region
  $region14: #{spikformer_forward.1} parent=0 // pred_check
    _
  $region15: #{spikformer_forward.1} parent=0 // pred_check_branch
    %38 = sbr.rel (0) target = $region17
  $region16: #{spikformer_forward.1} parent=0 // pred_region
    _
  $region17: #{spikformer_forward.1} parent=0 // pred_fallthru
    _
  // Predicated region
  $region18: #{spikformer_forward.1} parent=0 // pred_check
    _
  $region19: #{spikformer_forward.1} parent=0 // pred_check_branch
    %40 = sbr.rel (0) target = $region21
  $region20: #{spikformer_forward.1} parent=0 // pred_region
    _
  $region21: #{spikformer_forward.1} parent=0 // pred_fallthru
    _
  // Predicated region
  $region22: #{spikformer_forward.1} parent=0 // pred_check
    _
  $region23: #{spikformer_forward.1} parent=0 // pred_check_branch
    %42 = sbr.rel (0) target = $region25
  $region24: #{spikformer_forward.1} parent=0 // pred_region
    _
  $region25: #{spikformer_forward.1} parent=0 // pred_fallthru
    _
  // Predicated region
  $region26: #{spikformer_forward.1} parent=0 // pred_check
    _
  $region27: #{spikformer_forward.1} parent=0 // pred_check_branch
    %44 = sbr.rel (0) target = $region29
  $region28: #{spikformer_forward.1} parent=0 // pred_region
    _
  $region29: #{spikformer_forward.1} parent=0 // pred_fallthru
    _
  // Predicated region
  $region30: #{spikformer_forward.1} parent=0 // pred_check
    _
  $region31: #{spikformer_forward.1} parent=0 // pred_check_branch
    %46 = sbr.rel (0) target = $region33
  $region32: #{spikformer_forward.1} parent=0 // pred_region
    _
  $region33: #{spikformer_forward.1} parent=0 // pred_fallthru
    _
  // Predicated region
  $region34: #{spikformer_forward.1} parent=0 // pred_check
    _
  $region35: #{spikformer_forward.1} parent=0 // pred_check_branch
    %48 = sbr.rel (0) target = $region37
  $region36: #{spikformer_forward.1} parent=0 // pred_region
    _
  $region37: #{spikformer_forward.1} parent=0 // pred_fallthru
    _
  // Predicated region
  $region38: #{spikformer_forward.1} parent=0 // pred_check
    _
  $region39: #{spikformer_forward.1} parent=0 // pred_check_branch
    %50 = sbr.rel (0) target = $region41
  $region40: #{spikformer_forward.1} parent=0 // pred_region
    _
  $region41: #{spikformer_forward.1} parent=0 // pred_fallthru
    _
  // Predicated region
  $region42: #{spikformer_forward.1} parent=0 // pred_check
    _
  $region43: #{spikformer_forward.1} parent=0 // pred_check_branch
    %52 = sbr.rel (0) target = $region45
  $region44: #{spikformer_forward.1} parent=0 // pred_region
    _
  $region45: #{spikformer_forward.1} parent=0 // pred_fallthru
    _
  // Predicated region
  $region46: #{spikformer_forward.1} parent=0 // pred_check
    _
  $region47: #{spikformer_forward.1} parent=0 // pred_check_branch
    %54 = sbr.rel (0) target = $region49
  $region48: #{spikformer_forward.1} parent=0 // pred_region
    _
  $region49: #{spikformer_forward.1} parent=0 // pred_fallthru
    _
  // Predicated region
  $region50: #{spikformer_forward.1} parent=0 // pred_check
    _
  $region51: #{spikformer_forward.1} parent=0 // pred_check_branch
    %56 = sbr.rel (0) target = $region53
  $region52: #{spikformer_forward.1} parent=0 // pred_region
    _
  $region53: #{spikformer_forward.1} parent=0 // pred_fallthru
    _
  // Predicated region
  $region54: #{spikformer_forward.1} parent=0 // pred_check
    _
  $region55: #{spikformer_forward.1} parent=0 // pred_check_branch
    %58 = sbr.rel (0) target = $region57
  $region56: #{spikformer_forward.1} parent=0 // pred_region
    _
  $region57: #{spikformer_forward.1} parent=0 // pred_fallthru
    _
  // Predicated region
  $region58: #{spikformer_forward.1} parent=0 // pred_check
    _
  $region59: #{spikformer_forward.1} parent=0 // pred_check_branch
    %60 = sbr.rel (0) target = $region61
  $region60: #{spikformer_forward.1} parent=0 // pred_region
    _
  $region61: #{spikformer_forward.1} parent=0 // pred_fallthru
    _
  // Predicated region
  $region62: #{spikformer_forward.1} parent=0 // pred_check
    _
  $region63: #{spikformer_forward.1} parent=0 // pred_check_branch
    %62 = sbr.rel (0) target = $region65
  $region64: #{spikformer_forward.1} parent=0 // pred_region
    _
  $region65: #{spikformer_forward.1} parent=0 // pred_fallthru
    _
  // Predicated region
  $region66: #{spikformer_forward.1} parent=0 // pred_check
    _
  $region67: #{spikformer_forward.1} parent=0 // pred_check_branch
    %64 = sbr.rel (0) target = $region69
  $region68: #{spikformer_forward.1} parent=0 // pred_region
    _
  $region69: #{spikformer_forward.1} parent=0 // pred_fallthru
    _
  // Predicated region
  $region70: #{spikformer_forward.1} parent=0 // pred_check
    _
  $region71: #{spikformer_forward.1} parent=0 // pred_check_branch
    %66 = sbr.rel (0) target = $region73
  $region72: #{spikformer_forward.1} parent=0 // pred_region
    _
  $region73: #{spikformer_forward.1} parent=0 // pred_fallthru
    _
  // Predicated region
  $region74: #{spikformer_forward.1} parent=0 // pred_check
    _
  $region75: #{spikformer_forward.1} parent=0 // pred_check_branch
    %68 = sbr.rel (0) target = $region77
  $region76: #{spikformer_forward.1} parent=0 // pred_region
    _
  $region77: #{spikformer_forward.1} parent=0 // pred_fallthru
    _
  // Predicated region
  $region78: #{spikformer_forward.1} parent=0 // pred_check
    _
  $region79: #{spikformer_forward.1} parent=0 // pred_check_branch
    %70 = sbr.rel (0) target = $region81
  $region80: #{spikformer_forward.1} parent=0 // pred_region
    _
  $region81: #{spikformer_forward.1} parent=0 // pred_fallthru
    _
  // Predicated region
  $region82: #{spikformer_forward.1} parent=0 // pred_check
    _
  $region83: #{spikformer_forward.1} parent=0 // pred_check_branch
    %72 = sbr.rel (0) target = $region85
  $region84: #{spikformer_forward.1} parent=0 // pred_region
    _
  $region85: #{spikformer_forward.1} parent=0 // pred_fallthru
    _
  // Predicated region
  $region86: #{spikformer_forward.1} parent=0 // pred_check
    _
  $region87: #{spikformer_forward.1} parent=0 // pred_check_branch
    %74 = sbr.rel (0) target = $region89
  $region88: #{spikformer_forward.1} parent=0 // pred_region
    _
  $region89: #{spikformer_forward.1} parent=0 // pred_fallthru
    _
  // Predicated region
  $region90: #{spikformer_forward.1} parent=0 // pred_check
    _
  $region91: #{spikformer_forward.1} parent=0 // pred_check_branch
    %76 = sbr.rel (0) target = $region93
  $region92: #{spikformer_forward.1} parent=0 // pred_region
    _
  $region93: #{spikformer_forward.1} parent=0 // pred_fallthru
    _
  // Predicated region
  $region94: #{spikformer_forward.1} parent=0 // pred_check
    _
  $region95: #{spikformer_forward.1} parent=0 // pred_check_branch
    %78 = sbr.rel (0) target = $region97
  $region96: #{spikformer_forward.1} parent=0 // pred_region
    _
  $region97: #{spikformer_forward.1} parent=0 // pred_fallthru
    _
  %v79 = vld [vmem:[%s1] sm:$0xff]
  %v80 = vld [vmem:[%s1 + $0x8] sm:$0xff]
  %v81 = vld [vmem:[%s1 + $0x10] sm:$0xff]
  %v82 = vld [vmem:[%s1 + $0x18] sm:$0xff]
  %v83 = vld [vmem:[%s0] sm:$0xf]
  %v84 = vld [vmem:[%s2] sm:$0xff]
  %v85 = vld [vmem:[%s2 + $0x8] sm:$0xff]
  %v86 = vld [vmem:[%s2 + $0x10] sm:$0xff]
  %v87 = vld [vmem:[%s2 + $0x18] sm:$0xff]
  %89 = vset.pattern.permute.xlu0 0
  %90 = vperm.xlu0 %89, %v84
  %v91 = vpop.permute.xlu0 %90
  %94 = vset.pattern.permute.xlu0 0
  %95 = vperm.xlu0 %94, %v85
  %v96 = vpop.permute.xlu0 %95
  %99 = vset.pattern.permute.xlu0 0
  %100 = vperm.xlu0 %99, %v86
  %v101 = vpop.permute.xlu0 %100
  %104 = vset.pattern.permute.xlu0 0
  %105 = vperm.xlu0 %104, %v87
  %v106 = vpop.permute.xlu0 %105
  %vm108 = vcmask 31744
  %v110 = vsel %vm108, %v79, 0
  %v113 = vsel %vm108, %v80, 0
  %v116 = vsel %vm108, %v81, 0
  %v119 = vsel %vm108, %v82, 0
  %vm121 = vcmask 1043456
  %v123 = vsel %vm121, %v83, 0
  %125 = vmatprep.subr.mxu0 0.0
  %126 = vmatpush1.msra.mxu0 %v123
  %127 = vmatprep.subr.mxu0 0.0
  %128 = vmatpush1.msra.mxu0 0.0
  %129 = vmatprep.subr.mxu0 0.0
  %130 = vmatpush1.msra.mxu0 0.0
  %131 = vmatprep.subr.mxu0 0.0
  %132 = vmatpush1.msra.mxu0 0.0
  %133 = vmatprep.subr.mxu0 0.0
  %134 = vmatpush1.msra.mxu0 0.0
  %135 = vmatprep.subr.mxu0 0.0
  %136 = vmatpush1.msra.mxu0 0.0
  %137 = vmatprep.subr.mxu0 0.0
  %138 = vmatpush1.msra.mxu0 0.0
  %139 = vmatprep.subr.mxu0 0.0
  %140 = vmatpush1.msra.mxu0 0.0
  %141 = vmatprep.subr.mxu0 0.0
  %142 = vmatpush1.msra.mxu0 0.0
  %143 = vmatprep.subr.mxu0 0.0
  %144 = vmatpush1.msra.mxu0 0.0
  %145 = vmatprep.subr.mxu0 0.0
  %146 = vmatpush1.msra.mxu0 0.0
  %147 = vmatprep.subr.mxu0 0.0
  %148 = vmatpush1.msra.mxu0 0.0
  %149 = vmatprep.subr.mxu0 0.0
  %150 = vmatpush1.msra.mxu0 0.0
  %151 = vmatprep.subr.mxu0 0.0
  %152 = vmatpush1.msra.mxu0 0.0
  %153 = vmatprep.subr.mxu0 0.0
  %154 = vmatpush1.msra.mxu0 0.0
  %155 = vmatprep.subr.mxu0 0.0
  %156 = vmatpush1.msra.mxu0 0.0
  %157 = vmatprep.subr.mxu0 0.0
  %158 = vmatpush1.msra.mxu0 0.0
  %159 = vmatprep.subr.mxu0 0.0
  %160 = vmatpush1.msra.mxu0 0.0
  %161 = vmatprep.subr.mxu0 0.0
  %162 = vmatpush1.msra.mxu0 0.0
  %163 = vmatprep.subr.mxu0 0.0
  %164 = vmatpush1.msra.mxu0 0.0
  %165 = vmatprep.subr.mxu0 0.0
  %166 = vmatpush1.msra.mxu0 0.0
  %167 = vmatprep.subr.mxu0 0.0
  %168 = vmatpush1.msra.mxu0 0.0
  %169 = vmatprep.subr.mxu0 0.0
  %170 = vmatpush1.msra.mxu0 0.0
  %171 = vmatprep.subr.mxu0 0.0
  %172 = vmatpush1.msra.mxu0 0.0
  %173 = vmatprep.subr.mxu0 0.0
  %174 = vmatpush1.msra.mxu0 0.0
  %175 = vmatprep.subr.mxu0 0.0
  %176 = vmatpush1.msra.mxu0 0.0
  %177 = vmatprep.subr.mxu0 0.0
  %178 = vmatpush1.msra.mxu0 0.0
  %179 = vmatprep.subr.mxu0 0.0
  %180 = vmatpush1.msra.mxu0 0.0
  %181 = vmatprep.subr.mxu0 0.0
  %182 = vmatpush1.msra.mxu0 0.0
  %183 = vmatprep.subr.mxu0 0.0
  %184 = vmatpush1.msra.mxu0 0.0
  %185 = vmatprep.subr.mxu0 0.0
  %186 = vmatpush1.msra.mxu0 0.0
  %187 = vmatprep.subr.mxu0 0.0
  %188 = vmatpush1.msra.mxu0 0.0
  %189 = vmatprep.mubr.f32.mxu0 0.0
  %190 = vmatmul.mubr.f32.gmra.mrb[0].mxu0 %v110
  %v191 = vpop.f32.mrb[0].mxu0
  %v192 = vadd.f32 %v91, %v191
  %v193 = vpop.f32.mrb[0].mxu0
  %194 = vmatprep.mubr.f32.mxu0 0.0
  %195 = vmatmul.mubr.f32.gmra.mrb[0].mxu0 %v113
  %v196 = vpop.f32.mrb[0].mxu0
  %v197 = vadd.f32 %v96, %v196
  %v198 = vpop.f32.mrb[0].mxu0
  %199 = vmatprep.mubr.f32.mxu0 0.0
  %200 = vmatmul.mubr.f32.gmra.mrb[0].mxu0 %v116
  %v201 = vpop.f32.mrb[0].mxu0
  %v202 = vadd.f32 %v101, %v201
  %v203 = vpop.f32.mrb[0].mxu0
  %204 = vmatprep.mubr.f32.mxu0 0.0
  %205 = vmatmul.mubr.f32.gmra.mrb[0].mxu0 %v119
  %v206 = vpop.f32.mrb[0].mxu0
  %v207 = vadd.f32 %v106, %v206
  %v208 = vpop.f32.mrb[0].mxu0
  %209 = vdwg.mxu0
  %vm210 = vcmp.ge.f32.partialorder %v192, 0.0
  %vm211 = vcmp.ge.f32.partialorder %v197, 0.0
  %vm212 = vcmp.ge.f32.partialorder %v202, 0.0
  %vm213 = vcmp.ge.f32.partialorder %v207, 0.0
  %v214 = vsel %vm210, 1, 0
  %v215 = vsel %vm211, 1, 0
  %v216 = vsel %vm212, 1, 0
  %v217 = vsel %vm213, 1, 0
  %v218 = vcvt.s32.f32 %v214
  %v219 = vcvt.s32.f32 %v215
  %v220 = vcvt.s32.f32 %v216
  %v221 = vcvt.s32.f32 %v217
  %vm222 = vcmp.ge.f32.partialorder %v192, 0.05
  %vm223 = vcmp.ge.f32.partialorder %v197, 0.05
  %vm224 = vcmp.ge.f32.partialorder %v202, 0.05
  %vm225 = vcmp.ge.f32.partialorder %v207, 0.05
  %v226 = vsel %vm222, 1, 0
  %v227 = vsel %vm223, 1, 0
  %v228 = vsel %vm224, 1, 0
  %v229 = vsel %vm225, 1, 0
  %v230 = vcvt.s32.f32 %v226
  %v231 = vcvt.s32.f32 %v227
  %v232 = vcvt.s32.f32 %v228
  %v233 = vcvt.s32.f32 %v229
  %vm234 = vcmp.ge.f32.partialorder %v192, 0.1
  %vm235 = vcmp.ge.f32.partialorder %v197, 0.1
  %vm236 = vcmp.ge.f32.partialorder %v202, 0.1
  %vm237 = vcmp.ge.f32.partialorder %v207, 0.1
  %v238 = vsel %vm234, 1, 0
  %v239 = vsel %vm235, 1, 0
  %v240 = vsel %vm236, 1, 0
  %v241 = vsel %vm237, 1, 0
  %v242 = vcvt.s32.f32 %v238
  %v243 = vcvt.s32.f32 %v239
  %v244 = vcvt.s32.f32 %v240
  %v245 = vcvt.s32.f32 %v241
  %vm246 = vcmp.ge.f32.partialorder %v192, 0.15
  %vm247 = vcmp.ge.f32.partialorder %v197, 0.15
  %vm248 = vcmp.ge.f32.partialorder %v202, 0.15
  %vm249 = vcmp.ge.f32.partialorder %v207, 0.15
  %v250 = vsel %vm246, 1, 0
  %v251 = vsel %vm247, 1, 0
  %v252 = vsel %vm248, 1, 0
  %v253 = vsel %vm249, 1, 0
  %v254 = vcvt.s32.f32 %v250
  %v255 = vcvt.s32.f32 %v251
  %v256 = vcvt.s32.f32 %v252
  %v257 = vcvt.s32.f32 %v253
  %258 = vst [vmem:[%s25] sm:$0xff] %v218
  %259 = vst [vmem:[%s25 + $0x8] sm:$0xff] %v219
  %260 = vst [vmem:[%s25 + $0x10] sm:$0xff] %v220
  %261 = vst [vmem:[%s25 + $0x18] sm:$0xff] %v221
  %262 = vst [vmem:[%s25 + $0x20] sm:$0xff] %v230
  %263 = vst [vmem:[%s25 + $0x28] sm:$0xff] %v231
  %264 = vst [vmem:[%s25 + $0x30] sm:$0xff] %v232
  %265 = vst [vmem:[%s25 + $0x38] sm:$0xff] %v233
  %266 = vst [vmem:[%s25 + $0x40] sm:$0xff] %v242
  %267 = vst [vmem:[%s25 + $0x48] sm:$0xff] %v243
  %268 = vst [vmem:[%s25 + $0x50] sm:$0xff] %v244
  %269 = vst [vmem:[%s25 + $0x58] sm:$0xff] %v245
  %270 = vst [vmem:[%s25 + $0x60] sm:$0xff] %v254
  %271 = vst [vmem:[%s25 + $0x68] sm:$0xff] %v255
  %272 = vst [vmem:[%s25 + $0x70] sm:$0xff] %v256
  %273 = vst [vmem:[%s25 + $0x78] sm:$0xff] %v257
  %v274 = vld [vmem:[%s21] sm:$0xff]
  %v275 = vld [vmem:[%s21 + $0x8] sm:$0xff]
  %v276 = vld [vmem:[%s21 + $0x10] sm:$0xff]
  %v277 = vld [vmem:[%s21 + $0x18] sm:$0xff]
  %v278 = vld [vmem:[%s22] sm:$0xff]
  %v279 = vld [vmem:[%s22 + $0x8] sm:$0xff]
  %v280 = vld [vmem:[%s22 + $0x10] sm:$0xff]
  %v281 = vld [vmem:[%s22 + $0x18] sm:$0xff]
  %s282 = scalar_lea.vmem %s22, 32
  %v283 = vld [vmem:[%s282] sm:$0xff]
  %v284 = vld [vmem:[%s282 + $0x8] sm:$0xff]
  %v285 = vld [vmem:[%s282 + $0x10] sm:$0xff]
  %v286 = vld [vmem:[%s282 + $0x18] sm:$0xff]
  %v287 = vld [vmem:[%s3] sm:$0xff]
  %v288 = vld [vmem:[%s3 + $0x8] sm:$0xff]
  %v289 = vld [vmem:[%s3 + $0x10] sm:$0xff]
  %v290 = vld [vmem:[%s3 + $0x18] sm:$0xff]
  %v291 = vld [vmem:[%s3 + $0x20] sm:$0xff]
  %v292 = vld [vmem:[%s3 + $0x28] sm:$0xff]
  %v293 = vld [vmem:[%s3 + $0x30] sm:$0xff]
  %v294 = vld [vmem:[%s3 + $0x38] sm:$0xff]
  %v295 = vld [vmem:[%s3 + $0x40] sm:$0xff]
  %v296 = vld [vmem:[%s3 + $0x48] sm:$0xff]
  %v297 = vld [vmem:[%s3 + $0x50] sm:$0xff]
  %v298 = vld [vmem:[%s3 + $0x58] sm:$0xff]
  %v299 = vld [vmem:[%s4] sm:$0xff]
  %v300 = vld [vmem:[%s4 + $0x8] sm:$0xff]
  %v301 = vld [vmem:[%s4 + $0x10] sm:$0xff]
  %v302 = vld [vmem:[%s4 + $0x18] sm:$0xff]
  %v303 = vld [vmem:[%s4 + $0x20] sm:$0xff]
  %v304 = vld [vmem:[%s4 + $0x28] sm:$0xff]
  %v305 = vld [vmem:[%s4 + $0x30] sm:$0xff]
  %v306 = vld [vmem:[%s4 + $0x38] sm:$0xff]
  %v307 = vld [vmem:[%s4 + $0x40] sm:$0xff]
  %v308 = vld [vmem:[%s4 + $0x48] sm:$0xff]
  %v309 = vld [vmem:[%s4 + $0x50] sm:$0xff]
  %v310 = vld [vmem:[%s4 + $0x58] sm:$0xff]
  %v311 = vld [vmem:[%s5] sm:$0xff]
  %v312 = vld [vmem:[%s5 + $0x8] sm:$0xff]
  %v313 = vld [vmem:[%s5 + $0x10] sm:$0xff]
  %v314 = vld [vmem:[%s5 + $0x18] sm:$0xff]
  %v315 = vld [vmem:[%s6] sm:$0xff]
  %v316 = vld [vmem:[%s6 + $0x8] sm:$0xff]
  %v317 = vld [vmem:[%s6 + $0x10] sm:$0xff]
  %v318 = vld [vmem:[%s6 + $0x18] sm:$0xff]
  %v319 = vld [vmem:[%s7] sm:$0xff]
  %v320 = vld [vmem:[%s7 + $0x8] sm:$0xff]
  %v321 = vld [vmem:[%s7 + $0x10] sm:$0xff]
  %v322 = vld [vmem:[%s7 + $0x18] sm:$0xff]
  %v323 = vld [vmem:[%s7 + $0x20] sm:$0xff]
  %v324 = vld [vmem:[%s7 + $0x28] sm:$0xff]
  %v325 = vld [vmem:[%s7 + $0x30] sm:$0xff]
  %v326 = vld [vmem:[%s7 + $0x38] sm:$0xff]
  %v327 = vld [vmem:[%s7 + $0x40] sm:$0xff]
  %v328 = vld [vmem:[%s7 + $0x48] sm:$0xff]
  %v329 = vld [vmem:[%s7 + $0x50] sm:$0xff]
  %v330 = vld [vmem:[%s7 + $0x58] sm:$0xff]
  %v331 = vld [vmem:[%s7 + $0x60] sm:$0xff]
  %v332 = vld [vmem:[%s7 + $0x68] sm:$0xff]
  %v333 = vld [vmem:[%s7 + $0x70] sm:$0xff]
  %v334 = vld [vmem:[%s7 + $0x78] sm:$0xff]
  %v335 = vld [vmem:[%s8] sm:$0xff]
  %v336 = vld [vmem:[%s8 + $0x8] sm:$0xff]
  %v337 = vld [vmem:[%s8 + $0x10] sm:$0xff]
  %v338 = vld [vmem:[%s8 + $0x18] sm:$0xff]
  %v339 = vld [vmem:[%s8 + $0x20] sm:$0xff]
  %v340 = vld [vmem:[%s8 + $0x28] sm:$0xff]
  %v341 = vld [vmem:[%s8 + $0x30] sm:$0xff]
  %v342 = vld [vmem:[%s8 + $0x38] sm:$0xff]
  %v343 = vld [vmem:[%s8 + $0x40] sm:$0xff]
  %v344 = vld [vmem:[%s8 + $0x48] sm:$0xff]
  %v345 = vld [vmem:[%s8 + $0x50] sm:$0xff]
  %v346 = vld [vmem:[%s8 + $0x58] sm:$0xff]
  %v347 = vld [vmem:[%s8 + $0x60] sm:$0xff]
  %v348 = vld [vmem:[%s8 + $0x68] sm:$0xff]
  %v349 = vld [vmem:[%s8 + $0x70] sm:$0xff]
  %v350 = vld [vmem:[%s8 + $0x78] sm:$0xff]
  %v351 = vld [vmem:[%s9] sm:$0xff]
  %v352 = vld [vmem:[%s9 + $0x8] sm:$0xff]
  %v353 = vld [vmem:[%s9 + $0x10] sm:$0xff]
  %v354 = vld [vmem:[%s9 + $0x18] sm:$0xff]
  %v355 = vld [vmem:[%s10] sm:$0xff]
  %v356 = vld [vmem:[%s10 + $0x8] sm:$0xff]
  %v357 = vld [vmem:[%s10 + $0x10] sm:$0xff]
  %v358 = vld [vmem:[%s10 + $0x18] sm:$0xff]
  %360 = vset.pattern.permute.xlu0 0
  %361 = vperm.xlu0 %360, %v299
  %v362 = vpop.permute.xlu0 %361
  %365 = vset.pattern.permute.xlu0 0
  %366 = vperm.xlu0 %365, %v300
  %v367 = vpop.permute.xlu0 %366
  %370 = vset.pattern.permute.xlu0 0
  %371 = vperm.xlu0 %370, %v301
  %v372 = vpop.permute.xlu0 %371
  %375 = vset.pattern.permute.xlu0 0
  %376 = vperm.xlu0 %375, %v302
  %v377 = vpop.permute.xlu0 %376
  %380 = vset.pattern.permute.xlu0 0
  %381 = vperm.xlu0 %380, %v303
  %v382 = vpop.permute.xlu0 %381
  %385 = vset.pattern.permute.xlu0 0
  %386 = vperm.xlu0 %385, %v304
  %v387 = vpop.permute.xlu0 %386
  %390 = vset.pattern.permute.xlu0 0
  %391 = vperm.xlu0 %390, %v305
  %v392 = vpop.permute.xlu0 %391
  %395 = vset.pattern.permute.xlu0 0
  %396 = vperm.xlu0 %395, %v306
  %v397 = vpop.permute.xlu0 %396
  %400 = vset.pattern.permute.xlu0 0
  %401 = vperm.xlu0 %400, %v307
  %v402 = vpop.permute.xlu0 %401
  %405 = vset.pattern.permute.xlu0 0
  %406 = vperm.xlu0 %405, %v308
  %v407 = vpop.permute.xlu0 %406
  %410 = vset.pattern.permute.xlu0 0
  %411 = vperm.xlu0 %410, %v309
  %v412 = vpop.permute.xlu0 %411
  %415 = vset.pattern.permute.xlu0 0
  %416 = vperm.xlu0 %415, %v310
  %v417 = vpop.permute.xlu0 %416
  %420 = vset.pattern.permute.xlu0 0
  %421 = vperm.xlu0 %420, %v315
  %v422 = vpop.permute.xlu0 %421
  %425 = vset.pattern.permute.xlu0 0
  %426 = vperm.xlu0 %425, %v316
  %v427 = vpop.permute.xlu0 %426
  %430 = vset.pattern.permute.xlu0 0
  %431 = vperm.xlu0 %430, %v317
  %v432 = vpop.permute.xlu0 %431
  %435 = vset.pattern.permute.xlu0 0
  %436 = vperm.xlu0 %435, %v318
  %v437 = vpop.permute.xlu0 %436
  %440 = vset.pattern.permute.xlu0 0
  %441 = vperm.xlu0 %440, %v335
  %v442 = vpop.permute.xlu0 %441
  %445 = vset.pattern.permute.xlu0 0
  %446 = vperm.xlu0 %445, %v336
  %v447 = vpop.permute.xlu0 %446
  %450 = vset.pattern.permute.xlu0 0
  %451 = vperm.xlu0 %450, %v337
  %v452 = vpop.permute.xlu0 %451
  %455 = vset.pattern.permute.xlu0 0
  %456 = vperm.xlu0 %455, %v338
  %v457 = vpop.permute.xlu0 %456
  %460 = vset.pattern.permute.xlu0 0
  %461 = vperm.xlu0 %460, %v339
  %v462 = vpop.permute.xlu0 %461
  %465 = vset.pattern.permute.xlu0 0
  %466 = vperm.xlu0 %465, %v340
  %v467 = vpop.permute.xlu0 %466
  %470 = vset.pattern.permute.xlu0 0
  %471 = vperm.xlu0 %470, %v341
  %v472 = vpop.permute.xlu0 %471
  %475 = vset.pattern.permute.xlu0 0
  %476 = vperm.xlu0 %475, %v342
  %v477 = vpop.permute.xlu0 %476
  %480 = vset.pattern.permute.xlu0 0
  %481 = vperm.xlu0 %480, %v343
  %v482 = vpop.permute.xlu0 %481
  %485 = vset.pattern.permute.xlu0 0
  %486 = vperm.xlu0 %485, %v344
  %v487 = vpop.permute.xlu0 %486
  %490 = vset.pattern.permute.xlu0 0
  %491 = vperm.xlu0 %490, %v345
  %v492 = vpop.permute.xlu0 %491
  %495 = vset.pattern.permute.xlu0 0
  %496 = vperm.xlu0 %495, %v346
  %v497 = vpop.permute.xlu0 %496
  %500 = vset.pattern.permute.xlu0 0
  %501 = vperm.xlu0 %500, %v347
  %v502 = vpop.permute.xlu0 %501
  %505 = vset.pattern.permute.xlu0 0
  %506 = vperm.xlu0 %505, %v348
  %v507 = vpop.permute.xlu0 %506
  %510 = vset.pattern.permute.xlu0 0
  %511 = vperm.xlu0 %510, %v349
  %v512 = vpop.permute.xlu0 %511
  %515 = vset.pattern.permute.xlu0 0
  %516 = vperm.xlu0 %515, %v350
  %v517 = vpop.permute.xlu0 %516
  %520 = vset.pattern.permute.xlu0 0
  %521 = vperm.xlu0 %520, %v355
  %v522 = vpop.permute.xlu0 %521
  %525 = vset.pattern.permute.xlu0 0
  %526 = vperm.xlu0 %525, %v356
  %v527 = vpop.permute.xlu0 %526
  %530 = vset.pattern.permute.xlu0 0
  %531 = vperm.xlu0 %530, %v357
  %v532 = vpop.permute.xlu0 %531
  %535 = vset.pattern.permute.xlu0 0
  %536 = vperm.xlu0 %535, %v358
  %v537 = vpop.permute.xlu0 %536
  %v539 = vld [vmem:[%s11] sm:$0xff]
  %v540 = vld [vmem:[%s11 + $0x8] sm:$0xff]
  %v541 = vld [vmem:[%s11 + $0x10] sm:$0xff]
  %v542 = vld [vmem:[%s11 + $0x18] sm:$0xff]
  %v543 = vld [vmem:[%s11 + $0x20] sm:$0xff]
  %v544 = vld [vmem:[%s11 + $0x28] sm:$0xff]
  %v545 = vld [vmem:[%s11 + $0x30] sm:$0xff]
  %v546 = vld [vmem:[%s11 + $0x38] sm:$0xff]
  %v547 = vld [vmem:[%s11 + $0x40] sm:$0xff]
  %v548 = vld [vmem:[%s11 + $0x48] sm:$0xff]
  %v549 = vld [vmem:[%s11 + $0x50] sm:$0xff]
  %v550 = vld [vmem:[%s11 + $0x58] sm:$0xff]
  %v551 = vld [vmem:[%s12] sm:$0xff]
  %v552 = vld [vmem:[%s12 + $0x8] sm:$0xff]
  %v553 = vld [vmem:[%s12 + $0x10] sm:$0xff]
  %v554 = vld [vmem:[%s12 + $0x18] sm:$0xff]
  %v555 = vld [vmem:[%s12 + $0x20] sm:$0xff]
  %v556 = vld [vmem:[%s12 + $0x28] sm:$0xff]
  %v557 = vld [vmem:[%s12 + $0x30] sm:$0xff]
  %v558 = vld [vmem:[%s12 + $0x38] sm:$0xff]
  %v559 = vld [vmem:[%s12 + $0x40] sm:$0xff]
  %v560 = vld [vmem:[%s12 + $0x48] sm:$0xff]
  %v561 = vld [vmem:[%s12 + $0x50] sm:$0xff]
  %v562 = vld [vmem:[%s12 + $0x58] sm:$0xff]
  %v563 = vld [vmem:[%s13] sm:$0xff]
  %v564 = vld [vmem:[%s13 + $0x8] sm:$0xff]
  %v565 = vld [vmem:[%s13 + $0x10] sm:$0xff]
  %v566 = vld [vmem:[%s13 + $0x18] sm:$0xff]
  %v567 = vld [vmem:[%s14] sm:$0xff]
  %v568 = vld [vmem:[%s14 + $0x8] sm:$0xff]
  %v569 = vld [vmem:[%s14 + $0x10] sm:$0xff]
  %v570 = vld [vmem:[%s14 + $0x18] sm:$0xff]
  %v571 = vld [vmem:[%s15] sm:$0xff]
  %v572 = vld [vmem:[%s15 + $0x8] sm:$0xff]
  %v573 = vld [vmem:[%s15 + $0x10] sm:$0xff]
  %v574 = vld [vmem:[%s15 + $0x18] sm:$0xff]
  %v575 = vld [vmem:[%s15 + $0x20] sm:$0xff]
  %v576 = vld [vmem:[%s15 + $0x28] sm:$0xff]
  %v577 = vld [vmem:[%s15 + $0x30] sm:$0xff]
  %v578 = vld [vmem:[%s15 + $0x38] sm:$0xff]
  %v579 = vld [vmem:[%s15 + $0x40] sm:$0xff]
  %v580 = vld [vmem:[%s15 + $0x48] sm:$0xff]
  %v581 = vld [vmem:[%s15 + $0x50] sm:$0xff]
  %v582 = vld [vmem:[%s15 + $0x58] sm:$0xff]
  %v583 = vld [vmem:[%s15 + $0x60] sm:$0xff]
  %v584 = vld [vmem:[%s15 + $0x68] sm:$0xff]
  %v585 = vld [vmem:[%s15 + $0x70] sm:$0xff]
  %v586 = vld [vmem:[%s15 + $0x78] sm:$0xff]
  %v587 = vld [vmem:[%s16] sm:$0xff]
  %v588 = vld [vmem:[%s16 + $0x8] sm:$0xff]
  %v589 = vld [vmem:[%s16 + $0x10] sm:$0xff]
  %v590 = vld [vmem:[%s16 + $0x18] sm:$0xff]
  %v591 = vld [vmem:[%s16 + $0x20] sm:$0xff]
  %v592 = vld [vmem:[%s16 + $0x28] sm:$0xff]
  %v593 = vld [vmem:[%s16 + $0x30] sm:$0xff]
  %v594 = vld [vmem:[%s16 + $0x38] sm:$0xff]
  %v595 = vld [vmem:[%s16 + $0x40] sm:$0xff]
  %v596 = vld [vmem:[%s16 + $0x48] sm:$0xff]
  %v597 = vld [vmem:[%s16 + $0x50] sm:$0xff]
  %v598 = vld [vmem:[%s16 + $0x58] sm:$0xff]
  %v599 = vld [vmem:[%s16 + $0x60] sm:$0xff]
  %v600 = vld [vmem:[%s16 + $0x68] sm:$0xff]
  %v601 = vld [vmem:[%s16 + $0x70] sm:$0xff]
  %v602 = vld [vmem:[%s16 + $0x78] sm:$0xff]
  %v603 = vld [vmem:[%s17] sm:$0xff]
  %v604 = vld [vmem:[%s17 + $0x8] sm:$0xff]
  %v605 = vld [vmem:[%s17 + $0x10] sm:$0xff]
  %v606 = vld [vmem:[%s17 + $0x18] sm:$0xff]
  %v607 = vld [vmem:[%s18] sm:$0xff]
  %v608 = vld [vmem:[%s18 + $0x8] sm:$0xff]
  %v609 = vld [vmem:[%s18 + $0x10] sm:$0xff]
  %v610 = vld [vmem:[%s18 + $0x18] sm:$0xff]
  %612 = vset.pattern.permute.xlu0 0
  %613 = vperm.xlu0 %612, %v551
  %v614 = vpop.permute.xlu0 %613
  %617 = vset.pattern.permute.xlu0 0
  %618 = vperm.xlu0 %617, %v552
  %v619 = vpop.permute.xlu0 %618
  %622 = vset.pattern.permute.xlu0 0
  %623 = vperm.xlu0 %622, %v553
  %v624 = vpop.permute.xlu0 %623
  %627 = vset.pattern.permute.xlu0 0
  %628 = vperm.xlu0 %627, %v554
  %v629 = vpop.permute.xlu0 %628
  %632 = vset.pattern.permute.xlu0 0
  %633 = vperm.xlu0 %632, %v555
  %v634 = vpop.permute.xlu0 %633
  %637 = vset.pattern.permute.xlu0 0
  %638 = vperm.xlu0 %637, %v556
  %v639 = vpop.permute.xlu0 %638
  %642 = vset.pattern.permute.xlu0 0
  %643 = vperm.xlu0 %642, %v557
  %v644 = vpop.permute.xlu0 %643
  %647 = vset.pattern.permute.xlu0 0
  %648 = vperm.xlu0 %647, %v558
  %v649 = vpop.permute.xlu0 %648
  %652 = vset.pattern.permute.xlu0 0
  %653 = vperm.xlu0 %652, %v559
  %v654 = vpop.permute.xlu0 %653
  %657 = vset.pattern.permute.xlu0 0
  %658 = vperm.xlu0 %657, %v560
  %v659 = vpop.permute.xlu0 %658
  %662 = vset.pattern.permute.xlu0 0
  %663 = vperm.xlu0 %662, %v561
  %v664 = vpop.permute.xlu0 %663
  %667 = vset.pattern.permute.xlu0 0
  %668 = vperm.xlu0 %667, %v562
  %v669 = vpop.permute.xlu0 %668
  %672 = vset.pattern.permute.xlu0 0
  %673 = vperm.xlu0 %672, %v567
  %v674 = vpop.permute.xlu0 %673
  %677 = vset.pattern.permute.xlu0 0
  %678 = vperm.xlu0 %677, %v568
  %v679 = vpop.permute.xlu0 %678
  %682 = vset.pattern.permute.xlu0 0
  %683 = vperm.xlu0 %682, %v569
  %v684 = vpop.permute.xlu0 %683
  %687 = vset.pattern.permute.xlu0 0
  %688 = vperm.xlu0 %687, %v570
  %v689 = vpop.permute.xlu0 %688
  %692 = vset.pattern.permute.xlu0 0
  %693 = vperm.xlu0 %692, %v587
  %v694 = vpop.permute.xlu0 %693
  %697 = vset.pattern.permute.xlu0 0
  %698 = vperm.xlu0 %697, %v588
  %v699 = vpop.permute.xlu0 %698
  %702 = vset.pattern.permute.xlu0 0
  %703 = vperm.xlu0 %702, %v589
  %v704 = vpop.permute.xlu0 %703
  %707 = vset.pattern.permute.xlu0 0
  %708 = vperm.xlu0 %707, %v590
  %v709 = vpop.permute.xlu0 %708
  %712 = vset.pattern.permute.xlu0 0
  %713 = vperm.xlu0 %712, %v591
  %v714 = vpop.permute.xlu0 %713
  %717 = vset.pattern.permute.xlu0 0
  %718 = vperm.xlu0 %717, %v592
  %v719 = vpop.permute.xlu0 %718
  %722 = vset.pattern.permute.xlu0 0
  %723 = vperm.xlu0 %722, %v593
  %v724 = vpop.permute.xlu0 %723
  %727 = vset.pattern.permute.xlu0 0
  %728 = vperm.xlu0 %727, %v594
  %v729 = vpop.permute.xlu0 %728
  %732 = vset.pattern.permute.xlu0 0
  %733 = vperm.xlu0 %732, %v595
  %v734 = vpop.permute.xlu0 %733
  %737 = vset.pattern.permute.xlu0 0
  %738 = vperm.xlu0 %737, %v596
  %v739 = vpop.permute.xlu0 %738
  %742 = vset.pattern.permute.xlu0 0
  %743 = vperm.xlu0 %742, %v597
  %v744 = vpop.permute.xlu0 %743
  %747 = vset.pattern.permute.xlu0 0
  %748 = vperm.xlu0 %747, %v598
  %v749 = vpop.permute.xlu0 %748
  %752 = vset.pattern.permute.xlu0 0
  %753 = vperm.xlu0 %752, %v599
  %v754 = vpop.permute.xlu0 %753
  %757 = vset.pattern.permute.xlu0 0
  %758 = vperm.xlu0 %757, %v600
  %v759 = vpop.permute.xlu0 %758
  %762 = vset.pattern.permute.xlu0 0
  %763 = vperm.xlu0 %762, %v601
  %v764 = vpop.permute.xlu0 %763
  %767 = vset.pattern.permute.xlu0 0
  %768 = vperm.xlu0 %767, %v602
  %v769 = vpop.permute.xlu0 %768
  %772 = vset.pattern.permute.xlu0 0
  %773 = vperm.xlu0 %772, %v607
  %v774 = vpop.permute.xlu0 %773
  %777 = vset.pattern.permute.xlu0 0
  %778 = vperm.xlu0 %777, %v608
  %v779 = vpop.permute.xlu0 %778
  %782 = vset.pattern.permute.xlu0 0
  %783 = vperm.xlu0 %782, %v609
  %v784 = vpop.permute.xlu0 %783
  %787 = vset.pattern.permute.xlu0 0
  %788 = vperm.xlu0 %787, %v610
  %v789 = vpop.permute.xlu0 %788
  %vm791 = vcmask 261120
  %v793 = vsel %vm791, %v287, 0
  %v796 = vsel %vm791, %v288, 0
  %v799 = vsel %vm791, %v289, 0
  %v802 = vsel %vm791, %v290, 0
  %v805 = vsel %vm791, %v291, 0
  %v808 = vsel %vm791, %v292, 0
  %v811 = vsel %vm791, %v293, 0
  %v814 = vsel %vm791, %v294, 0
  %v817 = vsel %vm791, %v295, 0
  %v820 = vsel %vm791, %v296, 0
  %v823 = vsel %vm791, %v297, 0
  %v826 = vsel %vm791, %v298, 0
  %828 = vmatprep.subr.mxu0 0.0
  %829 = vmatpush1.msra.mxu0 %v218
  %830 = vmatprep.subr.mxu0 0.0
  %831 = vmatpush1.msra.mxu0 %v219
  %832 = vmatprep.subr.mxu0 0.0
  %833 = vmatpush1.msra.mxu0 %v220
  %834 = vmatprep.subr.mxu0 0.0
  %835 = vmatpush1.msra.mxu0 %v221
  %836 = vmatprep.subr.mxu0 0.0
  %837 = vmatpush1.msra.mxu0 0.0
  %838 = vmatprep.subr.mxu0 0.0
  %839 = vmatpush1.msra.mxu0 0.0
  %840 = vmatprep.subr.mxu0 0.0
  %841 = vmatpush1.msra.mxu0 0.0
  %842 = vmatprep.subr.mxu0 0.0
  %843 = vmatpush1.msra.mxu0 0.0
  %844 = vmatprep.subr.mxu0 0.0
  %845 = vmatpush1.msra.mxu0 0.0
  %846 = vmatprep.subr.mxu0 0.0
  %847 = vmatpush1.msra.mxu0 0.0
  %848 = vmatprep.subr.mxu0 0.0
  %849 = vmatpush1.msra.mxu0 0.0
  %850 = vmatprep.subr.mxu0 0.0
  %851 = vmatpush1.msra.mxu0 0.0
  %852 = vmatprep.subr.mxu0 0.0
  %853 = vmatpush1.msra.mxu0 0.0
  %854 = vmatprep.subr.mxu0 0.0
  %855 = vmatpush1.msra.mxu0 0.0
  %856 = vmatprep.subr.mxu0 0.0
  %857 = vmatpush1.msra.mxu0 0.0
  %858 = vmatprep.subr.mxu0 0.0
  %859 = vmatpush1.msra.mxu0 0.0
  %860 = vmatprep.subr.mxu0 0.0
  %861 = vmatpush1.msra.mxu0 0.0
  %862 = vmatprep.subr.mxu0 0.0
  %863 = vmatpush1.msra.mxu0 0.0
  %864 = vmatprep.subr.mxu0 0.0
  %865 = vmatpush1.msra.mxu0 0.0
  %866 = vmatprep.subr.mxu0 0.0
  %867 = vmatpush1.msra.mxu0 0.0
  %868 = vmatprep.subr.mxu0 0.0
  %869 = vmatpush1.msra.mxu0 0.0
  %870 = vmatprep.subr.mxu0 0.0
  %871 = vmatpush1.msra.mxu0 0.0
  %872 = vmatprep.subr.mxu0 0.0
  %873 = vmatpush1.msra.mxu0 0.0
  %874 = vmatprep.subr.mxu0 0.0
  %875 = vmatpush1.msra.mxu0 0.0
  %876 = vmatprep.subr.mxu0 0.0
  %877 = vmatpush1.msra.mxu0 0.0
  %878 = vmatprep.subr.mxu0 0.0
  %879 = vmatpush1.msra.mxu0 0.0
  %880 = vmatprep.subr.mxu0 0.0
  %881 = vmatpush1.msra.mxu0 0.0
  %882 = vmatprep.subr.mxu0 0.0
  %883 = vmatpush1.msra.mxu0 0.0
  %884 = vmatprep.subr.mxu0 0.0
  %885 = vmatpush1.msra.mxu0 0.0
  %886 = vmatprep.subr.mxu0 0.0
  %887 = vmatpush1.msra.mxu0 0.0
  %888 = vmatprep.subr.mxu0 0.0
  %889 = vmatpush1.msra.mxu0 0.0
  %890 = vmatprep.subr.mxu0 0.0
  %891 = vmatpush1.msra.mxu0 0.0
  %892 = vmatprep.mubr.f32.mxu0 0.0
  %893 = vmatmul.mubr.f32.gmra.mrb[0].mxu0 %v793
  %v894 = vpop.f32.mrb[0].mxu0
  %v895 = vadd.f32 %v362, %v894
  %v896 = vpop.f32.mrb[0].mxu0
  %897 = vmatprep.mubr.f32.mxu0 0.0
  %898 = vmatmul.mubr.f32.gmra.mrb[0].mxu0 %v796
  %v899 = vpop.f32.mrb[0].mxu0
  %v900 = vadd.f32 %v367, %v899
  %v901 = vpop.f32.mrb[0].mxu0
  %902 = vmatprep.mubr.f32.mxu0 0.0
  %903 = vmatmul.mubr.f32.gmra.mrb[0].mxu0 %v799
  %v904 = vpop.f32.mrb[0].mxu0
  %v905 = vadd.f32 %v372, %v904
  %v906 = vpop.f32.mrb[0].mxu0
  %907 = vmatprep.mubr.f32.mxu0 0.0
  %908 = vmatmul.mubr.f32.gmra.mrb[0].mxu0 %v802
  %v909 = vpop.f32.mrb[0].mxu0
  %v910 = vadd.f32 %v377, %v909
  %v911 = vpop.f32.mrb[0].mxu0
  %912 = vmatprep.mubr.f32.mxu0 0.0
  %913 = vmatmul.mubr.f32.gmra.mrb[0].mxu0 %v805
  %v914 = vpop.f32.mrb[0].mxu0
  %v915 = vadd.f32 %v382, %v914
  %v916 = vpop.f32.mrb[0].mxu0
  %917 = vmatprep.mubr.f32.mxu0 0.0
  %918 = vmatmul.mubr.f32.gmra.mrb[0].mxu0 %v808
  %v919 = vpop.f32.mrb[0].mxu0
  %v920 = vadd.f32 %v387, %v919
  %v921 = vpop.f32.mrb[0].mxu0
  %922 = vmatprep.mubr.f32.mxu0 0.0
  %923 = vmatmul.mubr.f32.gmra.mrb[0].mxu0 %v811
  %v924 = vpop.f32.mrb[0].mxu0
  %v925 = vadd.f32 %v392, %v924
  %v926 = vpop.f32.mrb[0].mxu0
  %927 = vmatprep.mubr.f32.mxu0 0.0
  %928 = vmatmul.mubr.f32.gmra.mrb[0].mxu0 %v814
  %v929 = vpop.f32.mrb[0].mxu0
  %v930 = vadd.f32 %v397, %v929
  %v931 = vpop.f32.mrb[0].mxu0
  %932 = vmatprep.mubr.f32.mxu0 0.0
  %933 = vmatmul.mubr.f32.gmra.mrb[0].mxu0 %v817
  %v934 = vpop.f32.mrb[0].mxu0
  %v935 = vadd.f32 %v402, %v934
  %v936 = vpop.f32.mrb[0].mxu0
  %937 = vmatprep.mubr.f32.mxu0 0.0
  %938 = vmatmul.mubr.f32.gmra.mrb[0].mxu0 %v820
  %v939 = vpop.f32.mrb[0].mxu0
  %v940 = vadd.f32 %v407, %v939
  %v941 = vpop.f32.mrb[0].mxu0
  %942 = vmatprep.mubr.f32.mxu0 0.0
  %943 = vmatmul.mubr.f32.gmra.mrb[0].mxu0 %v823
  %v944 = vpop.f32.mrb[0].mxu0
  %v945 = vadd.f32 %v412, %v944
  %v946 = vpop.f32.mrb[0].mxu0
  %947 = vmatprep.mubr.f32.mxu0 0.0
  %948 = vmatmul.mubr.f32.gmra.mrb[0].mxu0 %v826
  %v949 = vpop.f32.mrb[0].mxu0
  %v950 = vadd.f32 %v417, %v949
  %v951 = vpop.f32.mrb[0].mxu0
  %952 = vdwg.mxu0
  %v953 = vmul.f32 %v895, 0.5
  %v954 = vmul.f32 %v900, 0.5
  %v955 = vmul.f32 %v905, 0.5
  %v956 = vmul.f32 %v910, 0.5
  %v957 = vmul.f32 %v915, 0.5
  %v958 = vmul.f32 %v920, 0.5
  %v959 = vmul.f32 %v925, 0.5
  %v960 = vmul.f32 %v930, 0.5
  %v961 = vmul.f32 %v935, 0.5
  %v962 = vmul.f32 %v940, 0.5
  %v963 = vmul.f32 %v945, 0.5
  %v964 = vmul.f32 %v950, 0.5
  %vm965 = vcmp.ge.f32.partialorder %v953, 1.0
  %vm966 = vcmp.ge.f32.partialorder %v954, 1.0
  %vm967 = vcmp.ge.f32.partialorder %v955, 1.0
  %vm968 = vcmp.ge.f32.partialorder %v956, 1.0
  %vm969 = vcmp.ge.f32.partialorder %v957, 1.0
  %vm970 = vcmp.ge.f32.partialorder %v958, 1.0
  %vm971 = vcmp.ge.f32.partialorder %v959, 1.0
  %vm972 = vcmp.ge.f32.partialorder %v960, 1.0
  %vm973 = vcmp.ge.f32.partialorder %v961, 1.0
  %vm974 = vcmp.ge.f32.partialorder %v962, 1.0
  %vm975 = vcmp.ge.f32.partialorder %v963, 1.0
  %vm976 = vcmp.ge.f32.partialorder %v964, 1.0
  %v977 = vsel %vm965, 1, 0
  %v978 = vsel %vm966, 1, 0
  %v979 = vsel %vm967, 1, 0
  %v980 = vsel %vm968, 1, 0
  %v981 = vsel %vm969, 1, 0
  %v982 = vsel %vm970, 1, 0
  %v983 = vsel %vm971, 1, 0
  %v984 = vsel %vm972, 1, 0
  %v985 = vsel %vm973, 1, 0
  %v986 = vsel %vm974, 1, 0
  %v987 = vsel %vm975, 1, 0
  %v988 = vsel %vm976, 1, 0
  %v989 = vcvt.s32.f32 %v977
  %v990 = vcvt.s32.f32 %v978
  %v991 = vcvt.s32.f32 %v979
  %v992 = vcvt.s32.f32 %v980
  %v993 = vcvt.s32.f32 %v981
  %v994 = vcvt.s32.f32 %v982
  %v995 = vcvt.s32.f32 %v983
  %v996 = vcvt.s32.f32 %v984
  %v997 = vcvt.s32.f32 %v985
  %v998 = vcvt.s32.f32 %v986
  %v999 = vcvt.s32.f32 %v987
  %v1000 = vcvt.s32.f32 %v988
  %v1001 = vsub.f32 1.0, %v989
  %v1002 = vsub.f32 1.0, %v990
  %v1003 = vsub.f32 1.0, %v991
  %v1004 = vsub.f32 1.0, %v992
  %v1005 = vsub.f32 1.0, %v993
  %v1006 = vsub.f32 1.0, %v994
  %v1007 = vsub.f32 1.0, %v995
  %v1008 = vsub.f32 1.0, %v996
  %v1009 = vsub.f32 1.0, %v997
  %v1010 = vsub.f32 1.0, %v998
  %v1011 = vsub.f32 1.0, %v999
  %v1012 = vsub.f32 1.0, %v1000
  %v1013 = vmul.f32 %v953, %v1001
  %v1014 = vmul.f32 %v954, %v1002
  %v1015 = vmul.f32 %v955, %v1003
  %v1016 = vmul.f32 %v956, %v1004
  %v1017 = vmul.f32 %v957, %v1005
  %v1018 = vmul.f32 %v958, %v1006
  %v1019 = vmul.f32 %v959, %v1007
  %v1020 = vmul.f32 %v960, %v1008
  %v1021 = vmul.f32 %v961, %v1009
  %v1022 = vmul.f32 %v962, %v1010
  %v1023 = vmul.f32 %v963, %v1011
  %v1024 = vmul.f32 %v964, %v1012
  %1025 = vst [vmem:[#allocation2] sm:$0xff] %v1013
  %1026 = vst [vmem:[#allocation2 + $0x8] sm:$0xff] %v1014
  %1027 = vst [vmem:[#allocation2 + $0x10] sm:$0xff] %v1015
  %1028 = vst [vmem:[#allocation2 + $0x18] sm:$0xff] %v1016
  %1029 = vst [vmem:[#allocation2 + $0x20] sm:$0xff] %v1017
  %1030 = vst [vmem:[#allocation2 + $0x28] sm:$0xff] %v1018
  %1031 = vst [vmem:[#allocation2 + $0x30] sm:$0xff] %v1019
  %1032 = vst [vmem:[#allocation2 + $0x38] sm:$0xff] %v1020
  %1033 = vst [vmem:[#allocation2 + $0x40] sm:$0xff] %v1021
  %1034 = vst [vmem:[#allocation2 + $0x48] sm:$0xff] %v1022
  %1035 = vst [vmem:[#allocation2 + $0x50] sm:$0xff] %v1023
  %1036 = vst [vmem:[#allocation2 + $0x58] sm:$0xff] %v1024
  %v1037 = vmul.f32 %v997, %v278
  %v1038 = vmul.f32 %v998, %v279
  %v1039 = vmul.f32 %v999, %v280
  %v1040 = vmul.f32 %v1000, %v281
  %1041 = vmatprep.subr.mxu0 0.0
  %1042 = vmatpush1.xpose.msra.mxu0 %v993
  %1043 = vmatprep.subr.mxu0 0.0
  %1044 = vmatpush1.xpose.msra.mxu0 %v994
  %1045 = vmatprep.subr.mxu0 0.0
  %1046 = vmatpush1.xpose.msra.mxu0 %v995
  %1047 = vmatprep.subr.mxu0 0.0
  %1048 = vmatpush1.xpose.msra.mxu0 %v996
  %1049 = vmatprep.subr.mxu0 0.0
  %1050 = vmatpush1.xpose.msra.mxu0 0.0
  %1051 = vmatprep.subr.mxu0 0.0
  %1052 = vmatpush1.xpose.msra.mxu0 0.0
  %1053 = vmatprep.subr.mxu0 0.0
  %1054 = vmatpush1.xpose.msra.mxu0 0.0
  %1055 = vmatprep.subr.mxu0 0.0
  %1056 = vmatpush1.xpose.msra.mxu0 0.0
  %1057 = vmatprep.subr.mxu0 0.0
  %1058 = vmatpush1.xpose.msra.mxu0 0.0
  %1059 = vmatprep.subr.mxu0 0.0
  %1060 = vmatpush1.xpose.msra.mxu0 0.0
  %1061 = vmatprep.subr.mxu0 0.0
  %1062 = vmatpush1.xpose.msra.mxu0 0.0
  %1063 = vmatprep.subr.mxu0 0.0
  %1064 = vmatpush1.xpose.msra.mxu0 0.0
  %1065 = vmatprep.subr.mxu0 0.0
  %1066 = vmatpush1.xpose.msra.mxu0 0.0
  %1067 = vmatprep.subr.mxu0 0.0
  %1068 = vmatpush1.xpose.msra.mxu0 0.0
  %1069 = vmatprep.subr.mxu0 0.0
  %1070 = vmatpush1.xpose.msra.mxu0 0.0
  %1071 = vmatprep.subr.mxu0 0.0
  %1072 = vmatpush1.xpose.msra.mxu0 0.0
  %1073 = vmatprep.subr.mxu0 0.0
  %1074 = vmatpush1.xpose.msra.mxu0 0.0
  %1075 = vmatprep.subr.mxu0 0.0
  %1076 = vmatpush1.xpose.msra.mxu0 0.0
  %1077 = vmatprep.subr.mxu0 0.0
  %1078 = vmatpush1.xpose.msra.mxu0 0.0
  %1079 = vmatprep.subr.mxu0 0.0
  %1080 = vmatpush1.xpose.msra.mxu0 0.0
  %1081 = vmatprep.subr.mxu0 0.0
  %1082 = vmatpush1.xpose.msra.mxu0 0.0
  %1083 = vmatprep.subr.mxu0 0.0
  %1084 = vmatpush1.xpose.msra.mxu0 0.0
  %1085 = vmatprep.subr.mxu0 0.0
  %1086 = vmatpush1.xpose.msra.mxu0 0.0
  %1087 = vmatprep.subr.mxu0 0.0
  %1088 = vmatpush1.xpose.msra.mxu0 0.0
  %1089 = vmatprep.subr.mxu0 0.0
  %1090 = vmatpush1.xpose.msra.mxu0 0.0
  %1091 = vmatprep.subr.mxu0 0.0
  %1092 = vmatpush1.xpose.msra.mxu0 0.0
  %1093 = vmatprep.subr.mxu0 0.0
  %1094 = vmatpush1.xpose.msra.mxu0 0.0
  %1095 = vmatprep.subr.mxu0 0.0
  %1096 = vmatpush1.xpose.msra.mxu0 0.0
  %1097 = vmatprep.subr.mxu0 0.0
  %1098 = vmatpush1.xpose.msra.mxu0 0.0
  %1099 = vmatprep.subr.mxu0 0.0
  %1100 = vmatpush1.xpose.msra.mxu0 0.0
  %1101 = vmatprep.subr.mxu0 0.0
  %1102 = vmatpush1.xpose.msra.mxu0 0.0
  %1103 = vmatprep.subr.mxu0 0.0
  %1104 = vmatpush1.xpose.msra.mxu0 0.0
  %1105 = vmatprep.mubr.f32.mxu0 0.0
  %1106 = vmatmul.mubr.f32.gmra.mrb[0].mxu0 %v1037
  %v1107 = vpop.f32.mrb[0].mxu0
  %v1108 = vadd.f32 0.0, %v1107
  %v1109 = vpop.f32.mrb[0].mxu0
  %1110 = vmatprep.mubr.f32.mxu0 0.0
  %1111 = vmatmul.mubr.f32.gmra.mrb[0].mxu0 %v1038
  %v1112 = vpop.f32.mrb[0].mxu0
  %v1113 = vadd.f32 0.0, %v1112
  %v1114 = vpop.f32.mrb[0].mxu0
  %1115 = vmatprep.mubr.f32.mxu0 0.0
  %1116 = vmatmul.mubr.f32.gmra.mrb[0].mxu0 %v1039
  %v1117 = vpop.f32.mrb[0].mxu0
  %v1118 = vadd.f32 0.0, %v1117
  %v1119 = vpop.f32.mrb[0].mxu0
  %1120 = vmatprep.mubr.f32.mxu0 0.0
  %1121 = vmatmul.mubr.f32.gmra.mrb[0].mxu0 %v1040
  %v1122 = vpop.f32.mrb[0].mxu0
  %v1123 = vadd.f32 0.0, %v1122
  %v1124 = vpop.f32.mrb[0].mxu0
  %1125 = vdwg.mxu0
  %v1126 = vmul.f32 %v1108, %v274
  %v1127 = vmul.f32 %v1113, %v275
  %v1128 = vmul.f32 %v1118, %v276
  %v1129 = vmul.f32 %v1123, %v277
  %v1131 = vsel %vm791, %v1126, 0
  %v1134 = vsel %vm791, %v1127, 0
  %v1137 = vsel %vm791, %v1128, 0
  %v1140 = vsel %vm791, %v1129, 0
  %1142 = vmatprep.subr.mxu0 0.0
  %1143 = vmatpush1.msra.mxu0 %v989
  %1144 = vmatprep.subr.mxu0 0.0
  %1145 = vmatpush1.msra.mxu0 %v990
  %1146 = vmatprep.subr.mxu0 0.0
  %1147 = vmatpush1.msra.mxu0 %v991
  %1148 = vmatprep.subr.mxu0 0.0
  %1149 = vmatpush1.msra.mxu0 %v992
  %1150 = vmatprep.subr.mxu0 0.0
  %1151 = vmatpush1.msra.mxu0 0.0
  %1152 = vmatprep.subr.mxu0 0.0
  %1153 = vmatpush1.msra.mxu0 0.0
  %1154 = vmatprep.subr.mxu0 0.0
  %1155 = vmatpush1.msra.mxu0 0.0
  %1156 = vmatprep.subr.mxu0 0.0
  %1157 = vmatpush1.msra.mxu0 0.0
  %1158 = vmatprep.subr.mxu0 0.0
  %1159 = vmatpush1.msra.mxu0 0.0
  %1160 = vmatprep.subr.mxu0 0.0
  %1161 = vmatpush1.msra.mxu0 0.0
  %1162 = vmatprep.subr.mxu0 0.0
  %1163 = vmatpush1.msra.mxu0 0.0
  %1164 = vmatprep.subr.mxu0 0.0
  %1165 = vmatpush1.msra.mxu0 0.0
  %1166 = vmatprep.subr.mxu0 0.0
  %1167 = vmatpush1.msra.mxu0 0.0
  %1168 = vmatprep.subr.mxu0 0.0
  %1169 = vmatpush1.msra.mxu0 0.0
  %1170 = vmatprep.subr.mxu0 0.0
  %1171 = vmatpush1.msra.mxu0 0.0
  %1172 = vmatprep.subr.mxu0 0.0
  %1173 = vmatpush1.msra.mxu0 0.0
  %1174 = vmatprep.subr.mxu0 0.0
  %1175 = vmatpush1.msra.mxu0 0.0
  %1176 = vmatprep.subr.mxu0 0.0
  %1177 = vmatpush1.msra.mxu0 0.0
  %1178 = vmatprep.subr.mxu0 0.0
  %1179 = vmatpush1.msra.mxu0 0.0
  %1180 = vmatprep.subr.mxu0 0.0
  %1181 = vmatpush1.msra.mxu0 0.0
  %1182 = vmatprep.subr.mxu0 0.0
  %1183 = vmatpush1.msra.mxu0 0.0
  %1184 = vmatprep.subr.mxu0 0.0
  %1185 = vmatpush1.msra.mxu0 0.0
  %1186 = vmatprep.subr.mxu0 0.0
  %1187 = vmatpush1.msra.mxu0 0.0
  %1188 = vmatprep.subr.mxu0 0.0
  %1189 = vmatpush1.msra.mxu0 0.0
  %1190 = vmatprep.subr.mxu0 0.0
  %1191 = vmatpush1.msra.mxu0 0.0
  %1192 = vmatprep.subr.mxu0 0.0
  %1193 = vmatpush1.msra.mxu0 0.0
  %1194 = vmatprep.subr.mxu0 0.0
  %1195 = vmatpush1.msra.mxu0 0.0
  %1196 = vmatprep.subr.mxu0 0.0
  %1197 = vmatpush1.msra.mxu0 0.0
  %1198 = vmatprep.subr.mxu0 0.0
  %1199 = vmatpush1.msra.mxu0 0.0
  %1200 = vmatprep.subr.mxu0 0.0
  %1201 = vmatpush1.msra.mxu0 0.0
  %1202 = vmatprep.subr.mxu0 0.0
  %1203 = vmatpush1.msra.mxu0 0.0
  %1204 = vmatprep.subr.mxu0 0.0
  %1205 = vmatpush1.msra.mxu0 0.0
  %1206 = vmatprep.mubr.f32.mxu0 0.0
  %1207 = vmatmul.mubr.f32.gmra.mrb[0].mxu0 %v1131
  %v1208 = vpop.f32.mrb[0].mxu0
  %v1209 = vadd.f32 0.0, %v1208
  %v1210 = vpop.f32.mrb[0].mxu0
  %1211 = vmatprep.mubr.f32.mxu0 0.0
  %1212 = vmatmul.mubr.f32.gmra.mrb[0].mxu0 %v1134
  %v1213 = vpop.f32.mrb[0].mxu0
  %v1214 = vadd.f32 0.0, %v1213
  %v1215 = vpop.f32.mrb[0].mxu0
  %1216 = vmatprep.mubr.f32.mxu0 0.0
  %1217 = vmatmul.mubr.f32.gmra.mrb[0].mxu0 %v1137
  %v1218 = vpop.f32.mrb[0].mxu0
  %v1219 = vadd.f32 0.0, %v1218
  %v1220 = vpop.f32.mrb[0].mxu0
  %1221 = vmatprep.mubr.f32.mxu0 0.0
  %1222 = vmatmul.mubr.f32.gmra.mrb[0].mxu0 %v1140
  %v1223 = vpop.f32.mrb[0].mxu0
  %v1224 = vadd.f32 0.0, %v1223
  %v1225 = vpop.f32.mrb[0].mxu0
  %1226 = vdwg.mxu0
  %v1227 = vmul.f32 %v1209, %v278
  %v1228 = vmul.f32 %v1214, %v279
  %v1229 = vmul.f32 %v1219, %v280
  %v1230 = vmul.f32 %v1224, %v281
  %v1231 = vmul.f32 %v997, %v283
  %v1232 = vmul.f32 %v998, %v284
  %v1233 = vmul.f32 %v999, %v285
  %v1234 = vmul.f32 %v1000, %v286
  %1235 = vmatprep.subr.mxu0 0.0
  %1236 = vmatpush1.xpose.msra.mxu0 %v993
  %1237 = vmatprep.subr.mxu0 0.0
  %1238 = vmatpush1.xpose.msra.mxu0 %v994
  %1239 = vmatprep.subr.mxu0 0.0
  %1240 = vmatpush1.xpose.msra.mxu0 %v995
  %1241 = vmatprep.subr.mxu0 0.0
  %1242 = vmatpush1.xpose.msra.mxu0 %v996
  %1243 = vmatprep.subr.mxu0 0.0
  %1244 = vmatpush1.xpose.msra.mxu0 0.0
  %1245 = vmatprep.subr.mxu0 0.0
  %1246 = vmatpush1.xpose.msra.mxu0 0.0
  %1247 = vmatprep.subr.mxu0 0.0
  %1248 = vmatpush1.xpose.msra.mxu0 0.0
  %1249 = vmatprep.subr.mxu0 0.0
  %1250 = vmatpush1.xpose.msra.mxu0 0.0
  %1251 = vmatprep.subr.mxu0 0.0
  %1252 = vmatpush1.xpose.msra.mxu0 0.0
  %1253 = vmatprep.subr.mxu0 0.0
  %1254 = vmatpush1.xpose.msra.mxu0 0.0
  %1255 = vmatprep.subr.mxu0 0.0
  %1256 = vmatpush1.xpose.msra.mxu0 0.0
  %1257 = vmatprep.subr.mxu0 0.0
  %1258 = vmatpush1.xpose.msra.mxu0 0.0
  %1259 = vmatprep.subr.mxu0 0.0
  %1260 = vmatpush1.xpose.msra.mxu0 0.0
  %1261 = vmatprep.subr.mxu0 0.0
  %1262 = vmatpush1.xpose.msra.mxu0 0.0
  %1263 = vmatprep.subr.mxu0 0.0
  %1264 = vmatpush1.xpose.msra.mxu0 0.0
  %1265 = vmatprep.subr.mxu0 0.0
  %1266 = vmatpush1.xpose.msra.mxu0 0.0
  %1267 = vmatprep.subr.mxu0 0.0
  %1268 = vmatpush1.xpose.msra.mxu0 0.0
  %1269 = vmatprep.subr.mxu0 0.0
  %1270 = vmatpush1.xpose.msra.mxu0 0.0
  %1271 = vmatprep.subr.mxu0 0.0
  %1272 = vmatpush1.xpose.msra.mxu0 0.0
  %1273 = vmatprep.subr.mxu0 0.0
  %1274 = vmatpush1.xpose.msra.mxu0 0.0
  %1275 = vmatprep.subr.mxu0 0.0
  %1276 = vmatpush1.xpose.msra.mxu0 0.0
  %1277 = vmatprep.subr.mxu0 0.0
  %1278 = vmatpush1.xpose.msra.mxu0 0.0
  %1279 = vmatprep.subr.mxu0 0.0
  %1280 = vmatpush1.xpose.msra.mxu0 0.0
  %1281 = vmatprep.subr.mxu0 0.0
  %1282 = vmatpush1.xpose.msra.mxu0 0.0
  %1283 = vmatprep.subr.mxu0 0.0
  %1284 = vmatpush1.xpose.msra.mxu0 0.0
  %1285 = vmatprep.subr.mxu0 0.0
  %1286 = vmatpush1.xpose.msra.mxu0 0.0
  %1287 = vmatprep.subr.mxu0 0.0
  %1288 = vmatpush1.xpose.msra.mxu0 0.0
  %1289 = vmatprep.subr.mxu0 0.0
  %1290 = vmatpush1.xpose.msra.mxu0 0.0
  %1291 = vmatprep.subr.mxu0 0.0
  %1292 = vmatpush1.xpose.msra.mxu0 0.0
  %1293 = vmatprep.subr.mxu0 0.0
  %1294 = vmatpush1.xpose.msra.mxu0 0.0
  %1295 = vmatprep.subr.mxu0 0.0
  %1296 = vmatpush1.xpose.msra.mxu0 0.0
  %1297 = vmatprep.subr.mxu0 0.0
  %1298 = vmatpush1.xpose.msra.mxu0 0.0
  %1299 = vmatprep.mubr.f32.mxu0 0.0
  %1300 = vmatmul.mubr.f32.gmra.mrb[0].mxu0 %v1231
  %v1301 = vpop.f32.mrb[0].mxu0
  %v1302 = vadd.f32 0.0, %v1301
  %v1303 = vpop.f32.mrb[0].mxu0
  %1304 = vmatprep.mubr.f32.mxu0 0.0
  %1305 = vmatmul.mubr.f32.gmra.mrb[0].mxu0 %v1232
  %v1306 = vpop.f32.mrb[0].mxu0
  %v1307 = vadd.f32 0.0, %v1306
  %v1308 = vpop.f32.mrb[0].mxu0
  %1309 = vmatprep.mubr.f32.mxu0 0.0
  %1310 = vmatmul.mubr.f32.gmra.mrb[0].mxu0 %v1233
  %v1311 = vpop.f32.mrb[0].mxu0
  %v1312 = vadd.f32 0.0, %v1311
  %v1313 = vpop.f32.mrb[0].mxu0
  %1314 = vmatprep.mubr.f32.mxu0 0.0
  %1315 = vmatmul.mubr.f32.gmra.mrb[0].mxu0 %v1234
  %v1316 = vpop.f32.mrb[0].mxu0
  %v1317 = vadd.f32 0.0, %v1316
  %v1318 = vpop.f32.mrb[0].mxu0
  %1319 = vdwg.mxu0
  %v1320 = vmul.f32 %v1302, %v274
  %v1321 = vmul.f32 %v1307, %v275
  %v1322 = vmul.f32 %v1312, %v276
  %v1323 = vmul.f32 %v1317, %v277
  %v1325 = vsel %vm791, %v1320, 0
  %v1328 = vsel %vm791, %v1321, 0
  %v1331 = vsel %vm791, %v1322, 0
  %v1334 = vsel %vm791, %v1323, 0
  %1336 = vmatprep.subr.mxu0 0.0
  %1337 = vmatpush1.msra.mxu0 %v989
  %1338 = vmatprep.subr.mxu0 0.0
  %1339 = vmatpush1.msra.mxu0 %v990
  %1340 = vmatprep.subr.mxu0 0.0
  %1341 = vmatpush1.msra.mxu0 %v991
  %1342 = vmatprep.subr.mxu0 0.0
  %1343 = vmatpush1.msra.mxu0 %v992
  %1344 = vmatprep.subr.mxu0 0.0
  %1345 = vmatpush1.msra.mxu0 0.0
  %1346 = vmatprep.subr.mxu0 0.0
  %1347 = vmatpush1.msra.mxu0 0.0
  %1348 = vmatprep.subr.mxu0 0.0
  %1349 = vmatpush1.msra.mxu0 0.0
  %1350 = vmatprep.subr.mxu0 0.0
  %1351 = vmatpush1.msra.mxu0 0.0
  %1352 = vmatprep.subr.mxu0 0.0
  %1353 = vmatpush1.msra.mxu0 0.0
  %1354 = vmatprep.subr.mxu0 0.0
  %1355 = vmatpush1.msra.mxu0 0.0
  %1356 = vmatprep.subr.mxu0 0.0
  %1357 = vmatpush1.msra.mxu0 0.0
  %1358 = vmatprep.subr.mxu0 0.0
  %1359 = vmatpush1.msra.mxu0 0.0
  %1360 = vmatprep.subr.mxu0 0.0
  %1361 = vmatpush1.msra.mxu0 0.0
  %1362 = vmatprep.subr.mxu0 0.0
  %1363 = vmatpush1.msra.mxu0 0.0
  %1364 = vmatprep.subr.mxu0 0.0
  %1365 = vmatpush1.msra.mxu0 0.0
  %1366 = vmatprep.subr.mxu0 0.0
  %1367 = vmatpush1.msra.mxu0 0.0
  %1368 = vmatprep.subr.mxu0 0.0
  %1369 = vmatpush1.msra.mxu0 0.0
  %1370 = vmatprep.subr.mxu0 0.0
  %1371 = vmatpush1.msra.mxu0 0.0
  %1372 = vmatprep.subr.mxu0 0.0
  %1373 = vmatpush1.msra.mxu0 0.0
  %1374 = vmatprep.subr.mxu0 0.0
  %1375 = vmatpush1.msra.mxu0 0.0
  %1376 = vmatprep.subr.mxu0 0.0
  %1377 = vmatpush1.msra.mxu0 0.0
  %1378 = vmatprep.subr.mxu0 0.0
  %1379 = vmatpush1.msra.mxu0 0.0
  %1380 = vmatprep.subr.mxu0 0.0
  %1381 = vmatpush1.msra.mxu0 0.0
  %1382 = vmatprep.subr.mxu0 0.0
  %1383 = vmatpush1.msra.mxu0 0.0
  %1384 = vmatprep.subr.mxu0 0.0
  %1385 = vmatpush1.msra.mxu0 0.0
  %1386 = vmatprep.subr.mxu0 0.0
  %1387 = vmatpush1.msra.mxu0 0.0
  %1388 = vmatprep.subr.mxu0 0.0
  %1389 = vmatpush1.msra.mxu0 0.0
  %1390 = vmatprep.subr.mxu0 0.0
  %1391 = vmatpush1.msra.mxu0 0.0
  %1392 = vmatprep.subr.mxu0 0.0
  %1393 = vmatpush1.msra.mxu0 0.0
  %1394 = vmatprep.subr.mxu0 0.0
  %1395 = vmatpush1.msra.mxu0 0.0
  %1396 = vmatprep.subr.mxu0 0.0
  %1397 = vmatpush1.msra.mxu0 0.0
  %1398 = vmatprep.subr.mxu0 0.0
  %1399 = vmatpush1.msra.mxu0 0.0
  %1400 = vmatprep.mubr.f32.mxu0 0.0
  %1401 = vmatmul.mubr.f32.gmra.mrb[0].mxu0 %v1325
  %v1402 = vpop.f32.mrb[0].mxu0
  %v1403 = vadd.f32 0.0, %v1402
  %v1404 = vpop.f32.mrb[0].mxu0
  %1405 = vmatprep.mubr.f32.mxu0 0.0
  %1406 = vmatmul.mubr.f32.gmra.mrb[0].mxu0 %v1328
  %v1407 = vpop.f32.mrb[0].mxu0
  %v1408 = vadd.f32 0.0, %v1407
  %v1409 = vpop.f32.mrb[0].mxu0
  %1410 = vmatprep.mubr.f32.mxu0 0.0
  %1411 = vmatmul.mubr.f32.gmra.mrb[0].mxu0 %v1331
  %v1412 = vpop.f32.mrb[0].mxu0
  %v1413 = vadd.f32 0.0, %v1412
  %v1414 = vpop.f32.mrb[0].mxu0
  %1415 = vmatprep.mubr.f32.mxu0 0.0
  %1416 = vmatmul.mubr.f32.gmra.mrb[0].mxu0 %v1334
  %v1417 = vpop.f32.mrb[0].mxu0
  %v1418 = vadd.f32 0.0, %v1417
  %v1419 = vpop.f32.mrb[0].mxu0
  %1420 = vdwg.mxu0
  %v1421 = vmul.f32 %v1403, %v283
  %v1422 = vmul.f32 %v1408, %v284
  %v1423 = vmul.f32 %v1413, %v285
  %v1424 = vmul.f32 %v1418, %v286
  %v1425 = vadd.f32 %v1227, %v1421
  %v1426 = vadd.f32 %v1228, %v1422
  %v1427 = vadd.f32 %v1229, %v1423
  %v1428 = vadd.f32 %v1230, %v1424
  %v1429 = vmul.f32 %v1425, 0.125
  %v1430 = vmul.f32 %v1426, 0.125
  %v1431 = vmul.f32 %v1427, 0.125
  %v1432 = vmul.f32 %v1428, 0.125
  %v1433 = vmul.f32 %v1429, 0.5
  %v1434 = vmul.f32 %v1430, 0.5
  %v1435 = vmul.f32 %v1431, 0.5
  %v1436 = vmul.f32 %v1432, 0.5
  %vm1437 = vcmp.ge.f32.partialorder %v1433, 0.5
  %vm1438 = vcmp.ge.f32.partialorder %v1434, 0.5
  %vm1439 = vcmp.ge.f32.partialorder %v1435, 0.5
  %vm1440 = vcmp.ge.f32.partialorder %v1436, 0.5
  %v1441 = vsel %vm1437, 1, 0
  %v1442 = vsel %vm1438, 1, 0
  %v1443 = vsel %vm1439, 1, 0
  %v1444 = vsel %vm1440, 1, 0
  %v1445 = vcvt.s32.f32 %v1441
  %v1446 = vcvt.s32.f32 %v1442
  %v1447 = vcvt.s32.f32 %v1443
  %v1448 = vcvt.s32.f32 %v1444
  %v1449 = vsub.f32 1.0, %v1445
  %v1450 = vsub.f32 1.0, %v1446
  %v1451 = vsub.f32 1.0, %v1447
  %v1452 = vsub.f32 1.0, %v1448
  %v1453 = vmul.f32 %v1433, %v1449
  %v1454 = vmul.f32 %v1434, %v1450
  %v1455 = vmul.f32 %v1435, %v1451
  %v1456 = vmul.f32 %v1436, %v1452
  %1457 = vst [vmem:[#allocation3] sm:$0xff] %v1453
  %1458 = vst [vmem:[#allocation3 + $0x8] sm:$0xff] %v1454
  %1459 = vst [vmem:[#allocation3 + $0x10] sm:$0xff] %v1455
  %1460 = vst [vmem:[#allocation3 + $0x18] sm:$0xff] %v1456
  %v1462 = vsel %vm791, %v311, 0
  %v1465 = vsel %vm791, %v312, 0
  %v1468 = vsel %vm791, %v313, 0
  %v1471 = vsel %vm791, %v314, 0
  %1473 = vmatprep.subr.mxu0 0.0
  %1474 = vmatpush1.msra.mxu0 %v1445
  %1475 = vmatprep.subr.mxu0 0.0
  %1476 = vmatpush1.msra.mxu0 %v1446
  %1477 = vmatprep.subr.mxu0 0.0
  %1478 = vmatpush1.msra.mxu0 %v1447
  %1479 = vmatprep.subr.mxu0 0.0
  %1480 = vmatpush1.msra.mxu0 %v1448
  %1481 = vmatprep.subr.mxu0 0.0
  %1482 = vmatpush1.msra.mxu0 0.0
  %1483 = vmatprep.subr.mxu0 0.0
  %1484 = vmatpush1.msra.mxu0 0.0
  %1485 = vmatprep.subr.mxu0 0.0
  %1486 = vmatpush1.msra.mxu0 0.0
  %1487 = vmatprep.subr.mxu0 0.0
  %1488 = vmatpush1.msra.mxu0 0.0
  %1489 = vmatprep.subr.mxu0 0.0
  %1490 = vmatpush1.msra.mxu0 0.0
  %1491 = vmatprep.subr.mxu0 0.0
  %1492 = vmatpush1.msra.mxu0 0.0
  %1493 = vmatprep.subr.mxu0 0.0
  %1494 = vmatpush1.msra.mxu0 0.0
  %1495 = vmatprep.subr.mxu0 0.0
  %1496 = vmatpush1.msra.mxu0 0.0
  %1497 = vmatprep.subr.mxu0 0.0
  %1498 = vmatpush1.msra.mxu0 0.0
  %1499 = vmatprep.subr.mxu0 0.0
  %1500 = vmatpush1.msra.mxu0 0.0
  %1501 = vmatprep.subr.mxu0 0.0
  %1502 = vmatpush1.msra.mxu0 0.0
  %1503 = vmatprep.subr.mxu0 0.0
  %1504 = vmatpush1.msra.mxu0 0.0
  %1505 = vmatprep.subr.mxu0 0.0
  %1506 = vmatpush1.msra.mxu0 0.0
  %1507 = vmatprep.subr.mxu0 0.0
  %1508 = vmatpush1.msra.mxu0 0.0
  %1509 = vmatprep.subr.mxu0 0.0
  %1510 = vmatpush1.msra.mxu0 0.0
  %1511 = vmatprep.subr.mxu0 0.0
  %1512 = vmatpush1.msra.mxu0 0.0
  %1513 = vmatprep.subr.mxu0 0.0
  %1514 = vmatpush1.msra.mxu0 0.0
  %1515 = vmatprep.subr.mxu0 0.0
  %1516 = vmatpush1.msra.mxu0 0.0
  %1517 = vmatprep.subr.mxu0 0.0
  %1518 = vmatpush1.msra.mxu0 0.0
  %1519 = vmatprep.subr.mxu0 0.0
  %1520 = vmatpush1.msra.mxu0 0.0
  %1521 = vmatprep.subr.mxu0 0.0
  %1522 = vmatpush1.msra.mxu0 0.0
  %1523 = vmatprep.subr.mxu0 0.0
  %1524 = vmatpush1.msra.mxu0 0.0
  %1525 = vmatprep.subr.mxu0 0.0
  %1526 = vmatpush1.msra.mxu0 0.0
  %1527 = vmatprep.subr.mxu0 0.0
  %1528 = vmatpush1.msra.mxu0 0.0
  %1529 = vmatprep.subr.mxu0 0.0
  %1530 = vmatpush1.msra.mxu0 0.0
  %1531 = vmatprep.subr.mxu0 0.0
  %1532 = vmatpush1.msra.mxu0 0.0
  %1533 = vmatprep.subr.mxu0 0.0
  %1534 = vmatpush1.msra.mxu0 0.0
  %1535 = vmatprep.subr.mxu0 0.0
  %1536 = vmatpush1.msra.mxu0 0.0
  %1537 = vmatprep.mubr.f32.mxu0 0.0
  %1538 = vmatmul.mubr.f32.gmra.mrb[0].mxu0 %v1462
  %v1539 = vpop.f32.mrb[0].mxu0
  %v1540 = vadd.f32 %v422, %v1539
  %v1541 = vpop.f32.mrb[0].mxu0
  %1542 = vmatprep.mubr.f32.mxu0 0.0
  %1543 = vmatmul.mubr.f32.gmra.mrb[0].mxu0 %v1465
  %v1544 = vpop.f32.mrb[0].mxu0
  %v1545 = vadd.f32 %v427, %v1544
  %v1546 = vpop.f32.mrb[0].mxu0
  %1547 = vmatprep.mubr.f32.mxu0 0.0
  %1548 = vmatmul.mubr.f32.gmra.mrb[0].mxu0 %v1468
  %v1549 = vpop.f32.mrb[0].mxu0
  %v1550 = vadd.f32 %v432, %v1549
  %v1551 = vpop.f32.mrb[0].mxu0
  %1552 = vmatprep.mubr.f32.mxu0 0.0
  %1553 = vmatmul.mubr.f32.gmra.mrb[0].mxu0 %v1471
  %v1554 = vpop.f32.mrb[0].mxu0
  %v1555 = vadd.f32 %v437, %v1554
  %v1556 = vpop.f32.mrb[0].mxu0
  %1557 = vdwg.mxu0
  %v1558 = vmul.f32 %v1540, 0.5
  %v1559 = vmul.f32 %v1545, 0.5
  %v1560 = vmul.f32 %v1550, 0.5
  %v1561 = vmul.f32 %v1555, 0.5
  %vm1562 = vcmp.ge.f32.partialorder %v1558, 1.0
  %vm1563 = vcmp.ge.f32.partialorder %v1559, 1.0
  %vm1564 = vcmp.ge.f32.partialorder %v1560, 1.0
  %vm1565 = vcmp.ge.f32.partialorder %v1561, 1.0
  %v1566 = vsel %vm1562, 1, 0
  %v1567 = vsel %vm1563, 1, 0
  %v1568 = vsel %vm1564, 1, 0
  %v1569 = vsel %vm1565, 1, 0
  %v1570 = vcvt.s32.f32 %v1566
  %v1571 = vcvt.s32.f32 %v1567
  %v1572 = vcvt.s32.f32 %v1568
  %v1573 = vcvt.s32.f32 %v1569
  %v1574 = vsub.f32 1.0, %v1570
  %v1575 = vsub.f32 1.0, %v1571
  %v1576 = vsub.f32 1.0, %v1572
  %v1577 = vsub.f32 1.0, %v1573
  %v1578 = vmul.f32 %v1558, %v1574
  %v1579 = vmul.f32 %v1559, %v1575
  %v1580 = vmul.f32 %v1560, %v1576
  %v1581 = vmul.f32 %v1561, %v1577
  %1582 = vst [vmem:[#allocation4] sm:$0xff] %v1578
  %1583 = vst [vmem:[#allocation4 + $0x8] sm:$0xff] %v1579
  %1584 = vst [vmem:[#allocation4 + $0x10] sm:$0xff] %v1580
  %1585 = vst [vmem:[#allocation4 + $0x18] sm:$0xff] %v1581
  %v1586 = vadd.f32 %v218, %v1570
  %v1587 = vadd.f32 %v219, %v1571
  %v1588 = vadd.f32 %v220, %v1572
  %v1589 = vadd.f32 %v221, %v1573
  %v1591 = vsel %vm791, %v319, 0
  %v1594 = vsel %vm791, %v320, 0
  %v1597 = vsel %vm791, %v321, 0
  %v1600 = vsel %vm791, %v322, 0
  %v1603 = vsel %vm791, %v323, 0
  %v1606 = vsel %vm791, %v324, 0
  %v1609 = vsel %vm791, %v325, 0
  %v1612 = vsel %vm791, %v326, 0
  %v1615 = vsel %vm791, %v327, 0
  %v1618 = vsel %vm791, %v328, 0
  %v1621 = vsel %vm791, %v329, 0
  %v1624 = vsel %vm791, %v330, 0
  %v1627 = vsel %vm791, %v331, 0
  %v1630 = vsel %vm791, %v332, 0
  %v1633 = vsel %vm791, %v333, 0
  %v1636 = vsel %vm791, %v334, 0
  %1638 = vmatprep.subr.mxu0 0.0
  %1639 = vmatpush1.msra.mxu0 %v1586
  %1640 = vmatprep.subr.mxu0 0.0
  %1641 = vmatpush1.msra.mxu0 %v1587
  %1642 = vmatprep.subr.mxu0 0.0
  %1643 = vmatpush1.msra.mxu0 %v1588
  %1644 = vmatprep.subr.mxu0 0.0
  %1645 = vmatpush1.msra.mxu0 %v1589
  %1646 = vmatprep.subr.mxu0 0.0
  %1647 = vmatpush1.msra.mxu0 0.0
  %1648 = vmatprep.subr.mxu0 0.0
  %1649 = vmatpush1.msra.mxu0 0.0
  %1650 = vmatprep.subr.mxu0 0.0
  %1651 = vmatpush1.msra.mxu0 0.0
  %1652 = vmatprep.subr.mxu0 0.0
  %1653 = vmatpush1.msra.mxu0 0.0
  %1654 = vmatprep.subr.mxu0 0.0
  %1655 = vmatpush1.msra.mxu0 0.0
  %1656 = vmatprep.subr.mxu0 0.0
  %1657 = vmatpush1.msra.mxu0 0.0
  %1658 = vmatprep.subr.mxu0 0.0
  %1659 = vmatpush1.msra.mxu0 0.0
  %1660 = vmatprep.subr.mxu0 0.0
  %1661 = vmatpush1.msra.mxu0 0.0
  %1662 = vmatprep.subr.mxu0 0.0
  %1663 = vmatpush1.msra.mxu0 0.0
  %1664 = vmatprep.subr.mxu0 0.0
  %1665 = vmatpush1.msra.mxu0 0.0
  %1666 = vmatprep.subr.mxu0 0.0
  %1667 = vmatpush1.msra.mxu0 0.0
  %1668 = vmatprep.subr.mxu0 0.0
  %1669 = vmatpush1.msra.mxu0 0.0
  %1670 = vmatprep.subr.mxu0 0.0
  %1671 = vmatpush1.msra.mxu0 0.0
  %1672 = vmatprep.subr.mxu0 0.0
  %1673 = vmatpush1.msra.mxu0 0.0
  %1674 = vmatprep.subr.mxu0 0.0
  %1675 = vmatpush1.msra.mxu0 0.0
  %1676 = vmatprep.subr.mxu0 0.0
  %1677 = vmatpush1.msra.mxu0 0.0
  %1678 = vmatprep.subr.mxu0 0.0
  %1679 = vmatpush1.msra.mxu0 0.0
  %1680 = vmatprep.subr.mxu0 0.0
  %1681 = vmatpush1.msra.mxu0 0.0
  %1682 = vmatprep.subr.mxu0 0.0
  %1683 = vmatpush1.msra.mxu0 0.0
  %1684 = vmatprep.subr.mxu0 0.0
  %1685 = vmatpush1.msra.mxu0 0.0
  %1686 = vmatprep.subr.mxu0 0.0
  %1687 = vmatpush1.msra.mxu0 0.0
  %1688 = vmatprep.subr.mxu0 0.0
  %1689 = vmatpush1.msra.mxu0 0.0
  %1690 = vmatprep.subr.mxu0 0.0
  %1691 = vmatpush1.msra.mxu0 0.0
  %1692 = vmatprep.subr.mxu0 0.0
  %1693 = vmatpush1.msra.mxu0 0.0
  %1694 = vmatprep.subr.mxu0 0.0
  %1695 = vmatpush1.msra.mxu0 0.0
  %1696 = vmatprep.subr.mxu0 0.0
  %1697 = vmatpush1.msra.mxu0 0.0
  %1698 = vmatprep.subr.mxu0 0.0
  %1699 = vmatpush1.msra.mxu0 0.0
  %1700 = vmatprep.subr.mxu0 0.0
  %1701 = vmatpush1.msra.mxu0 0.0
  %1702 = vmatprep.mubr.f32.mxu0 0.0
  %1703 = vmatmul.mubr.f32.gmra.mrb[0].mxu0 %v1591
  %v1704 = vpop.f32.mrb[0].mxu0
  %v1705 = vadd.f32 %v442, %v1704
  %v1706 = vpop.f32.mrb[0].mxu0
  %1707 = vmatprep.mubr.f32.mxu0 0.0
  %1708 = vmatmul.mubr.f32.gmra.mrb[0].mxu0 %v1594
  %v1709 = vpop.f32.mrb[0].mxu0
  %v1710 = vadd.f32 %v447, %v1709
  %v1711 = vpop.f32.mrb[0].mxu0
  %1712 = vmatprep.mubr.f32.mxu0 0.0
  %1713 = vmatmul.mubr.f32.gmra.mrb[0].mxu0 %v1597
  %v1714 = vpop.f32.mrb[0].mxu0
  %v1715 = vadd.f32 %v452, %v1714
  %v1716 = vpop.f32.mrb[0].mxu0
  %1717 = vmatprep.mubr.f32.mxu0 0.0
  %1718 = vmatmul.mubr.f32.gmra.mrb[0].mxu0 %v1600
  %v1719 = vpop.f32.mrb[0].mxu0
  %v1720 = vadd.f32 %v457, %v1719
  %v1721 = vpop.f32.mrb[0].mxu0
  %1722 = vmatprep.mubr.f32.mxu0 0.0
  %1723 = vmatmul.mubr.f32.gmra.mrb[0].mxu0 %v1603
  %v1724 = vpop.f32.mrb[0].mxu0
  %v1725 = vadd.f32 %v462, %v1724
  %v1726 = vpop.f32.mrb[0].mxu0
  %1727 = vmatprep.mubr.f32.mxu0 0.0
  %1728 = vmatmul.mubr.f32.gmra.mrb[0].mxu0 %v1606
  %v1729 = vpop.f32.mrb[0].mxu0
  %v1730 = vadd.f32 %v467, %v1729
  %v1731 = vpop.f32.mrb[0].mxu0
  %1732 = vmatprep.mubr.f32.mxu0 0.0
  %1733 = vmatmul.mubr.f32.gmra.mrb[0].mxu0 %v1609
  %v1734 = vpop.f32.mrb[0].mxu0
  %v1735 = vadd.f32 %v472, %v1734
  %v1736 = vpop.f32.mrb[0].mxu0
  %1737 = vmatprep.mubr.f32.mxu0 0.0
  %1738 = vmatmul.mubr.f32.gmra.mrb[0].mxu0 %v1612
  %v1739 = vpop.f32.mrb[0].mxu0
  %v1740 = vadd.f32 %v477, %v1739
  %v1741 = vpop.f32.mrb[0].mxu0
  %1742 = vmatprep.mubr.f32.mxu0 0.0
  %1743 = vmatmul.mubr.f32.gmra.mrb[0].mxu0 %v1615
  %v1744 = vpop.f32.mrb[0].mxu0
  %v1745 = vadd.f32 %v482, %v1744
  %v1746 = vpop.f32.mrb[0].mxu0
  %1747 = vmatprep.mubr.f32.mxu0 0.0
  %1748 = vmatmul.mubr.f32.gmra.mrb[0].mxu0 %v1618
  %v1749 = vpop.f32.mrb[0].mxu0
  %v1750 = vadd.f32 %v487, %v1749
  %v1751 = vpop.f32.mrb[0].mxu0
  %1752 = vmatprep.mubr.f32.mxu0 0.0
  %1753 = vmatmul.mubr.f32.gmra.mrb[0].mxu0 %v1621
  %v1754 = vpop.f32.mrb[0].mxu0
  %v1755 = vadd.f32 %v492, %v1754
  %v1756 = vpop.f32.mrb[0].mxu0
  %1757 = vmatprep.mubr.f32.mxu0 0.0
  %1758 = vmatmul.mubr.f32.gmra.mrb[0].mxu0 %v1624
  %v1759 = vpop.f32.mrb[0].mxu0
  %v1760 = vadd.f32 %v497, %v1759
  %v1761 = vpop.f32.mrb[0].mxu0
  %1762 = vmatprep.mubr.f32.mxu0 0.0
  %1763 = vmatmul.mubr.f32.gmra.mrb[0].mxu0 %v1627
  %v1764 = vpop.f32.mrb[0].mxu0
  %v1765 = vadd.f32 %v502, %v1764
  %v1766 = vpop.f32.mrb[0].mxu0
  %1767 = vmatprep.mubr.f32.mxu0 0.0
  %1768 = vmatmul.mubr.f32.gmra.mrb[0].mxu0 %v1630
  %v1769 = vpop.f32.mrb[0].mxu0
  %v1770 = vadd.f32 %v507, %v1769
  %v1771 = vpop.f32.mrb[0].mxu0
  %1772 = vmatprep.mubr.f32.mxu0 0.0
  %1773 = vmatmul.mubr.f32.gmra.mrb[0].mxu0 %v1633
  %v1774 = vpop.f32.mrb[0].mxu0
  %v1775 = vadd.f32 %v512, %v1774
  %v1776 = vpop.f32.mrb[0].mxu0
  %1777 = vmatprep.mubr.f32.mxu0 0.0
  %1778 = vmatmul.mubr.f32.gmra.mrb[0].mxu0 %v1636
  %v1779 = vpop.f32.mrb[0].mxu0
  %v1780 = vadd.f32 %v517, %v1779
  %v1781 = vpop.f32.mrb[0].mxu0
  %1782 = vdwg.mxu0
  %v1783 = vmul.f32 %v1705, 0.5
  %v1784 = vmul.f32 %v1710, 0.5
  %v1785 = vmul.f32 %v1715, 0.5
  %v1786 = vmul.f32 %v1720, 0.5
  %v1787 = vmul.f32 %v1725, 0.5
  %v1788 = vmul.f32 %v1730, 0.5
  %v1789 = vmul.f32 %v1735, 0.5
  %v1790 = vmul.f32 %v1740, 0.5
  %v1791 = vmul.f32 %v1745, 0.5
  %v1792 = vmul.f32 %v1750, 0.5
  %v1793 = vmul.f32 %v1755, 0.5
  %v1794 = vmul.f32 %v1760, 0.5
  %v1795 = vmul.f32 %v1765, 0.5
  %v1796 = vmul.f32 %v1770, 0.5
  %v1797 = vmul.f32 %v1775, 0.5
  %v1798 = vmul.f32 %v1780, 0.5
  %vm1799 = vcmp.ge.f32.partialorder %v1783, 1.0
  %vm1800 = vcmp.ge.f32.partialorder %v1784, 1.0
  %vm1801 = vcmp.ge.f32.partialorder %v1785, 1.0
  %vm1802 = vcmp.ge.f32.partialorder %v1786, 1.0
  %vm1803 = vcmp.ge.f32.partialorder %v1787, 1.0
  %vm1804 = vcmp.ge.f32.partialorder %v1788, 1.0
  %vm1805 = vcmp.ge.f32.partialorder %v1789, 1.0
  %vm1806 = vcmp.ge.f32.partialorder %v1790, 1.0
  %vm1807 = vcmp.ge.f32.partialorder %v1791, 1.0
  %vm1808 = vcmp.ge.f32.partialorder %v1792, 1.0
  %vm1809 = vcmp.ge.f32.partialorder %v1793, 1.0
  %vm1810 = vcmp.ge.f32.partialorder %v1794, 1.0
  %vm1811 = vcmp.ge.f32.partialorder %v1795, 1.0
  %vm1812 = vcmp.ge.f32.partialorder %v1796, 1.0
  %vm1813 = vcmp.ge.f32.partialorder %v1797, 1.0
  %vm1814 = vcmp.ge.f32.partialorder %v1798, 1.0
  %v1815 = vsel %vm1799, 1, 0
  %v1816 = vsel %vm1800, 1, 0
  %v1817 = vsel %vm1801, 1, 0
  %v1818 = vsel %vm1802, 1, 0
  %v1819 = vsel %vm1803, 1, 0
  %v1820 = vsel %vm1804, 1, 0
  %v1821 = vsel %vm1805, 1, 0
  %v1822 = vsel %vm1806, 1, 0
  %v1823 = vsel %vm1807, 1, 0
  %v1824 = vsel %vm1808, 1, 0
  %v1825 = vsel %vm1809, 1, 0
  %v1826 = vsel %vm1810, 1, 0
  %v1827 = vsel %vm1811, 1, 0
  %v1828 = vsel %vm1812, 1, 0
  %v1829 = vsel %vm1813, 1, 0
  %v1830 = vsel %vm1814, 1, 0
  %v1831 = vcvt.s32.f32 %v1815
  %v1832 = vcvt.s32.f32 %v1816
  %v1833 = vcvt.s32.f32 %v1817
  %v1834 = vcvt.s32.f32 %v1818
  %v1835 = vcvt.s32.f32 %v1819
  %v1836 = vcvt.s32.f32 %v1820
  %v1837 = vcvt.s32.f32 %v1821
  %v1838 = vcvt.s32.f32 %v1822
  %v1839 = vcvt.s32.f32 %v1823
  %v1840 = vcvt.s32.f32 %v1824
  %v1841 = vcvt.s32.f32 %v1825
  %v1842 = vcvt.s32.f32 %v1826
  %v1843 = vcvt.s32.f32 %v1827
  %v1844 = vcvt.s32.f32 %v1828
  %v1845 = vcvt.s32.f32 %v1829
  %v1846 = vcvt.s32.f32 %v1830
  %v1847 = vsub.f32 1.0, %v1831
  %v1848 = vsub.f32 1.0, %v1832
  %v1849 = vsub.f32 1.0, %v1833
  %v1850 = vsub.f32 1.0, %v1834
  %v1851 = vsub.f32 1.0, %v1835
  %v1852 = vsub.f32 1.0, %v1836
  %v1853 = vsub.f32 1.0, %v1837
  %v1854 = vsub.f32 1.0, %v1838
  %v1855 = vsub.f32 1.0, %v1839
  %v1856 = vsub.f32 1.0, %v1840
  %v1857 = vsub.f32 1.0, %v1841
  %v1858 = vsub.f32 1.0, %v1842
  %v1859 = vsub.f32 1.0, %v1843
  %v1860 = vsub.f32 1.0, %v1844
  %v1861 = vsub.f32 1.0, %v1845
  %v1862 = vsub.f32 1.0, %v1846
  %v1863 = vmul.f32 %v1783, %v1847
  %v1864 = vmul.f32 %v1784, %v1848
  %v1865 = vmul.f32 %v1785, %v1849
  %v1866 = vmul.f32 %v1786, %v1850
  %v1867 = vmul.f32 %v1787, %v1851
  %v1868 = vmul.f32 %v1788, %v1852
  %v1869 = vmul.f32 %v1789, %v1853
  %v1870 = vmul.f32 %v1790, %v1854
  %v1871 = vmul.f32 %v1791, %v1855
  %v1872 = vmul.f32 %v1792, %v1856
  %v1873 = vmul.f32 %v1793, %v1857
  %v1874 = vmul.f32 %v1794, %v1858
  %v1875 = vmul.f32 %v1795, %v1859
  %v1876 = vmul.f32 %v1796, %v1860
  %v1877 = vmul.f32 %v1797, %v1861
  %v1878 = vmul.f32 %v1798, %v1862
  %1879 = vst [vmem:[#allocation5] sm:$0xff] %v1863
  %1880 = vst [vmem:[#allocation5 + $0x8] sm:$0xff] %v1864
  %1881 = vst [vmem:[#allocation5 + $0x10] sm:$0xff] %v1865
  %1882 = vst [vmem:[#allocation5 + $0x18] sm:$0xff] %v1866
  %1883 = vst [vmem:[#allocation5 + $0x20] sm:$0xff] %v1867
  %1884 = vst [vmem:[#allocation5 + $0x28] sm:$0xff] %v1868
  %1885 = vst [vmem:[#allocation5 + $0x30] sm:$0xff] %v1869
  %1886 = vst [vmem:[#allocation5 + $0x38] sm:$0xff] %v1870
  %1887 = vst [vmem:[#allocation5 + $0x40] sm:$0xff] %v1871
  %1888 = vst [vmem:[#allocation5 + $0x48] sm:$0xff] %v1872
  %1889 = vst [vmem:[#allocation5 + $0x50] sm:$0xff] %v1873
  %1890 = vst [vmem:[#allocation5 + $0x58] sm:$0xff] %v1874
  %1891 = vst [vmem:[#allocation5 + $0x60] sm:$0xff] %v1875
  %1892 = vst [vmem:[#allocation5 + $0x68] sm:$0xff] %v1876
  %1893 = vst [vmem:[#allocation5 + $0x70] sm:$0xff] %v1877
  %1894 = vst [vmem:[#allocation5 + $0x78] sm:$0xff] %v1878
  %1895 = vmatprep.subr.mxu0 0.0
  %1896 = vmatpush1.msra.mxu0 %v1831
  %1897 = vmatprep.subr.mxu0 0.0
  %1898 = vmatpush1.msra.mxu0 %v1832
  %1899 = vmatprep.subr.mxu0 0.0
  %1900 = vmatpush1.msra.mxu0 %v1833
  %1901 = vmatprep.subr.mxu0 0.0
  %1902 = vmatpush1.msra.mxu0 %v1834
  %1903 = vmatprep.subr.mxu0 0.0
  %1904 = vmatpush1.msra.mxu0 %v1835
  %1905 = vmatprep.subr.mxu0 0.0
  %1906 = vmatpush1.msra.mxu0 %v1836
  %1907 = vmatprep.subr.mxu0 0.0
  %1908 = vmatpush1.msra.mxu0 %v1837
  %1909 = vmatprep.subr.mxu0 0.0
  %1910 = vmatpush1.msra.mxu0 %v1838
  %1911 = vmatprep.subr.mxu0 0.0
  %1912 = vmatpush1.msra.mxu0 %v1839
  %1913 = vmatprep.subr.mxu0 0.0
  %1914 = vmatpush1.msra.mxu0 %v1840
  %1915 = vmatprep.subr.mxu0 0.0
  %1916 = vmatpush1.msra.mxu0 %v1841
  %1917 = vmatprep.subr.mxu0 0.0
  %1918 = vmatpush1.msra.mxu0 %v1842
  %1919 = vmatprep.subr.mxu0 0.0
  %1920 = vmatpush1.msra.mxu0 %v1843
  %1921 = vmatprep.subr.mxu0 0.0
  %1922 = vmatpush1.msra.mxu0 %v1844
  %1923 = vmatprep.subr.mxu0 0.0
  %1924 = vmatpush1.msra.mxu0 %v1845
  %1925 = vmatprep.subr.mxu0 0.0
  %1926 = vmatpush1.msra.mxu0 %v1846
  %1927 = vmatprep.subr.mxu0 0.0
  %1928 = vmatpush1.msra.mxu0 0.0
  %1929 = vmatprep.subr.mxu0 0.0
  %1930 = vmatpush1.msra.mxu0 0.0
  %1931 = vmatprep.subr.mxu0 0.0
  %1932 = vmatpush1.msra.mxu0 0.0
  %1933 = vmatprep.subr.mxu0 0.0
  %1934 = vmatpush1.msra.mxu0 0.0
  %1935 = vmatprep.subr.mxu0 0.0
  %1936 = vmatpush1.msra.mxu0 0.0
  %1937 = vmatprep.subr.mxu0 0.0
  %1938 = vmatpush1.msra.mxu0 0.0
  %1939 = vmatprep.subr.mxu0 0.0
  %1940 = vmatpush1.msra.mxu0 0.0
  %1941 = vmatprep.subr.mxu0 0.0
  %1942 = vmatpush1.msra.mxu0 0.0
  %1943 = vmatprep.subr.mxu0 0.0
  %1944 = vmatpush1.msra.mxu0 0.0
  %1945 = vmatprep.subr.mxu0 0.0
  %1946 = vmatpush1.msra.mxu0 0.0
  %1947 = vmatprep.subr.mxu0 0.0
  %1948 = vmatpush1.msra.mxu0 0.0
  %1949 = vmatprep.subr.mxu0 0.0
  %1950 = vmatpush1.msra.mxu0 0.0
  %1951 = vmatprep.subr.mxu0 0.0
  %1952 = vmatpush1.msra.mxu0 0.0
  %1953 = vmatprep.subr.mxu0 0.0
  %1954 = vmatpush1.msra.mxu0 0.0
  %1955 = vmatprep.subr.mxu0 0.0
  %1956 = vmatpush1.msra.mxu0 0.0
  %1957 = vmatprep.subr.mxu0 0.0
  %1958 = vmatpush1.msra.mxu0 0.0
  %1959 = vmatprep.mubr.f32.mxu0 0.0
  %1960 = vmatmul.mubr.f32.gmra.mrb[0].mxu0 %v351
  %v1961 = vpop.f32.mrb[0].mxu0
  %v1962 = vadd.f32 %v522, %v1961
  %v1963 = vpop.f32.mrb[0].mxu0
  %1964 = vmatprep.mubr.f32.mxu0 0.0
  %1965 = vmatmul.mubr.f32.gmra.mrb[0].mxu0 %v352
  %v1966 = vpop.f32.mrb[0].mxu0
  %v1967 = vadd.f32 %v527, %v1966
  %v1968 = vpop.f32.mrb[0].mxu0
  %1969 = vmatprep.mubr.f32.mxu0 0.0
  %1970 = vmatmul.mubr.f32.gmra.mrb[0].mxu0 %v353
  %v1971 = vpop.f32.mrb[0].mxu0
  %v1972 = vadd.f32 %v532, %v1971
  %v1973 = vpop.f32.mrb[0].mxu0
  %1974 = vmatprep.mubr.f32.mxu0 0.0
  %1975 = vmatmul.mubr.f32.gmra.mrb[0].mxu0 %v354
  %v1976 = vpop.f32.mrb[0].mxu0
  %v1977 = vadd.f32 %v537, %v1976
  %v1978 = vpop.f32.mrb[0].mxu0
  %1979 = vdwg.mxu0
  %v1980 = vmul.f32 %v1962, 0.5
  %v1981 = vmul.f32 %v1967, 0.5
  %v1982 = vmul.f32 %v1972, 0.5
  %v1983 = vmul.f32 %v1977, 0.5
  %vm1984 = vcmp.ge.f32.partialorder %v1980, 1.0
  %vm1985 = vcmp.ge.f32.partialorder %v1981, 1.0
  %vm1986 = vcmp.ge.f32.partialorder %v1982, 1.0
  %vm1987 = vcmp.ge.f32.partialorder %v1983, 1.0
  %v1988 = vsel %vm1984, 1, 0
  %v1989 = vsel %vm1985, 1, 0
  %v1990 = vsel %vm1986, 1, 0
  %v1991 = vsel %vm1987, 1, 0
  %v1992 = vcvt.s32.f32 %v1988
  %v1993 = vcvt.s32.f32 %v1989
  %v1994 = vcvt.s32.f32 %v1990
  %v1995 = vcvt.s32.f32 %v1991
  %v1996 = vsub.f32 1.0, %v1992
  %v1997 = vsub.f32 1.0, %v1993
  %v1998 = vsub.f32 1.0, %v1994
  %v1999 = vsub.f32 1.0, %v1995
  %v2000 = vmul.f32 %v1980, %v1996
  %v2001 = vmul.f32 %v1981, %v1997
  %v2002 = vmul.f32 %v1982, %v1998
  %v2003 = vmul.f32 %v1983, %v1999
  %2004 = vst [vmem:[#allocation6] sm:$0xff] %v2000
  %2005 = vst [vmem:[#allocation6 + $0x8] sm:$0xff] %v2001
  %2006 = vst [vmem:[#allocation6 + $0x10] sm:$0xff] %v2002
  %2007 = vst [vmem:[#allocation6 + $0x18] sm:$0xff] %v2003
  %v2008 = vadd.f32 %v1586, %v1992
  %v2009 = vadd.f32 %v1587, %v1993
  %v2010 = vadd.f32 %v1588, %v1994
  %v2011 = vadd.f32 %v1589, %v1995
  %v2013 = vsel %vm791, %v539, 0
  %v2016 = vsel %vm791, %v540, 0
  %v2019 = vsel %vm791, %v541, 0
  %v2022 = vsel %vm791, %v542, 0
  %v2025 = vsel %vm791, %v543, 0
  %v2028 = vsel %vm791, %v544, 0
  %v2031 = vsel %vm791, %v545, 0
  %v2034 = vsel %vm791, %v546, 0
  %v2037 = vsel %vm791, %v547, 0
  %v2040 = vsel %vm791, %v548, 0
  %v2043 = vsel %vm791, %v549, 0
  %v2046 = vsel %vm791, %v550, 0
  %2048 = vmatprep.subr.mxu0 0.0
  %2049 = vmatpush1.msra.mxu0 %v2008
  %2050 = vmatprep.subr.mxu0 0.0
  %2051 = vmatpush1.msra.mxu0 %v2009
  %2052 = vmatprep.subr.mxu0 0.0
  %2053 = vmatpush1.msra.mxu0 %v2010
  %2054 = vmatprep.subr.mxu0 0.0
  %2055 = vmatpush1.msra.mxu0 %v2011
  %2056 = vmatprep.subr.mxu0 0.0
  %2057 = vmatpush1.msra.mxu0 0.0
  %2058 = vmatprep.subr.mxu0 0.0
  %2059 = vmatpush1.msra.mxu0 0.0
  %2060 = vmatprep.subr.mxu0 0.0
  %2061 = vmatpush1.msra.mxu0 0.0
  %2062 = vmatprep.subr.mxu0 0.0
  %2063 = vmatpush1.msra.mxu0 0.0
  %2064 = vmatprep.subr.mxu0 0.0
  %2065 = vmatpush1.msra.mxu0 0.0
  %2066 = vmatprep.subr.mxu0 0.0
  %2067 = vmatpush1.msra.mxu0 0.0
  %2068 = vmatprep.subr.mxu0 0.0
  %2069 = vmatpush1.msra.mxu0 0.0
  %2070 = vmatprep.subr.mxu0 0.0
  %2071 = vmatpush1.msra.mxu0 0.0
  %2072 = vmatprep.subr.mxu0 0.0
  %2073 = vmatpush1.msra.mxu0 0.0
  %2074 = vmatprep.subr.mxu0 0.0
  %2075 = vmatpush1.msra.mxu0 0.0
  %2076 = vmatprep.subr.mxu0 0.0
  %2077 = vmatpush1.msra.mxu0 0.0
  %2078 = vmatprep.subr.mxu0 0.0
  %2079 = vmatpush1.msra.mxu0 0.0
  %2080 = vmatprep.subr.mxu0 0.0
  %2081 = vmatpush1.msra.mxu0 0.0
  %2082 = vmatprep.subr.mxu0 0.0
  %2083 = vmatpush1.msra.mxu0 0.0
  %2084 = vmatprep.subr.mxu0 0.0
  %2085 = vmatpush1.msra.mxu0 0.0
  %2086 = vmatprep.subr.mxu0 0.0
  %2087 = vmatpush1.msra.mxu0 0.0
  %2088 = vmatprep.subr.mxu0 0.0
  %2089 = vmatpush1.msra.mxu0 0.0
  %2090 = vmatprep.subr.mxu0 0.0
  %2091 = vmatpush1.msra.mxu0 0.0
  %2092 = vmatprep.subr.mxu0 0.0
  %2093 = vmatpush1.msra.mxu0 0.0
  %2094 = vmatprep.subr.mxu0 0.0
  %2095 = vmatpush1.msra.mxu0 0.0
  %2096 = vmatprep.subr.mxu0 0.0
  %2097 = vmatpush1.msra.mxu0 0.0
  %2098 = vmatprep.subr.mxu0 0.0
  %2099 = vmatpush1.msra.mxu0 0.0
  %2100 = vmatprep.subr.mxu0 0.0
  %2101 = vmatpush1.msra.mxu0 0.0
  %2102 = vmatprep.subr.mxu0 0.0
  %2103 = vmatpush1.msra.mxu0 0.0
  %2104 = vmatprep.subr.mxu0 0.0
  %2105 = vmatpush1.msra.mxu0 0.0
  %2106 = vmatprep.subr.mxu0 0.0
  %2107 = vmatpush1.msra.mxu0 0.0
  %2108 = vmatprep.subr.mxu0 0.0
  %2109 = vmatpush1.msra.mxu0 0.0
  %2110 = vmatprep.subr.mxu0 0.0
  %2111 = vmatpush1.msra.mxu0 0.0
  %2112 = vmatprep.mubr.f32.mxu0 0.0
  %2113 = vmatmul.mubr.f32.gmra.mrb[0].mxu0 %v2013
  %v2114 = vpop.f32.mrb[0].mxu0
  %v2115 = vadd.f32 %v614, %v2114
  %v2116 = vpop.f32.mrb[0].mxu0
  %2117 = vmatprep.mubr.f32.mxu0 0.0
  %2118 = vmatmul.mubr.f32.gmra.mrb[0].mxu0 %v2016
  %v2119 = vpop.f32.mrb[0].mxu0
  %v2120 = vadd.f32 %v619, %v2119
  %v2121 = vpop.f32.mrb[0].mxu0
  %2122 = vmatprep.mubr.f32.mxu0 0.0
  %2123 = vmatmul.mubr.f32.gmra.mrb[0].mxu0 %v2019
  %v2124 = vpop.f32.mrb[0].mxu0
  %v2125 = vadd.f32 %v624, %v2124
  %v2126 = vpop.f32.mrb[0].mxu0
  %2127 = vmatprep.mubr.f32.mxu0 0.0
  %2128 = vmatmul.mubr.f32.gmra.mrb[0].mxu0 %v2022
  %v2129 = vpop.f32.mrb[0].mxu0
  %v2130 = vadd.f32 %v629, %v2129
  %v2131 = vpop.f32.mrb[0].mxu0
  %2132 = vmatprep.mubr.f32.mxu0 0.0
  %2133 = vmatmul.mubr.f32.gmra.mrb[0].mxu0 %v2025
  %v2134 = vpop.f32.mrb[0].mxu0
  %v2135 = vadd.f32 %v634, %v2134
  %v2136 = vpop.f32.mrb[0].mxu0
  %2137 = vmatprep.mubr.f32.mxu0 0.0
  %2138 = vmatmul.mubr.f32.gmra.mrb[0].mxu0 %v2028
  %v2139 = vpop.f32.mrb[0].mxu0
  %v2140 = vadd.f32 %v639, %v2139
  %v2141 = vpop.f32.mrb[0].mxu0
  %2142 = vmatprep.mubr.f32.mxu0 0.0
  %2143 = vmatmul.mubr.f32.gmra.mrb[0].mxu0 %v2031
  %v2144 = vpop.f32.mrb[0].mxu0
  %v2145 = vadd.f32 %v644, %v2144
  %v2146 = vpop.f32.mrb[0].mxu0
  %2147 = vmatprep.mubr.f32.mxu0 0.0
  %2148 = vmatmul.mubr.f32.gmra.mrb[0].mxu0 %v2034
  %v2149 = vpop.f32.mrb[0].mxu0
  %v2150 = vadd.f32 %v649, %v2149
  %v2151 = vpop.f32.mrb[0].mxu0
  %2152 = vmatprep.mubr.f32.mxu0 0.0
  %2153 = vmatmul.mubr.f32.gmra.mrb[0].mxu0 %v2037
  %v2154 = vpop.f32.mrb[0].mxu0
  %v2155 = vadd.f32 %v654, %v2154
  %v2156 = vpop.f32.mrb[0].mxu0
  %2157 = vmatprep.mubr.f32.mxu0 0.0
  %2158 = vmatmul.mubr.f32.gmra.mrb[0].mxu0 %v2040
  %v2159 = vpop.f32.mrb[0].mxu0
  %v2160 = vadd.f32 %v659, %v2159
  %v2161 = vpop.f32.mrb[0].mxu0
  %2162 = vmatprep.mubr.f32.mxu0 0.0
  %2163 = vmatmul.mubr.f32.gmra.mrb[0].mxu0 %v2043
  %v2164 = vpop.f32.mrb[0].mxu0
  %v2165 = vadd.f32 %v664, %v2164
  %v2166 = vpop.f32.mrb[0].mxu0
  %2167 = vmatprep.mubr.f32.mxu0 0.0
  %2168 = vmatmul.mubr.f32.gmra.mrb[0].mxu0 %v2046
  %v2169 = vpop.f32.mrb[0].mxu0
  %v2170 = vadd.f32 %v669, %v2169
  %v2171 = vpop.f32.mrb[0].mxu0
  %2172 = vdwg.mxu0
  %v2173 = vmul.f32 %v2115, 0.5
  %v2174 = vmul.f32 %v2120, 0.5
  %v2175 = vmul.f32 %v2125, 0.5
  %v2176 = vmul.f32 %v2130, 0.5
  %v2177 = vmul.f32 %v2135, 0.5
  %v2178 = vmul.f32 %v2140, 0.5
  %v2179 = vmul.f32 %v2145, 0.5
  %v2180 = vmul.f32 %v2150, 0.5
  %v2181 = vmul.f32 %v2155, 0.5
  %v2182 = vmul.f32 %v2160, 0.5
  %v2183 = vmul.f32 %v2165, 0.5
  %v2184 = vmul.f32 %v2170, 0.5
  %vm2185 = vcmp.ge.f32.partialorder %v2173, 1.0
  %vm2186 = vcmp.ge.f32.partialorder %v2174, 1.0
  %vm2187 = vcmp.ge.f32.partialorder %v2175, 1.0
  %vm2188 = vcmp.ge.f32.partialorder %v2176, 1.0
  %vm2189 = vcmp.ge.f32.partialorder %v2177, 1.0
  %vm2190 = vcmp.ge.f32.partialorder %v2178, 1.0
  %vm2191 = vcmp.ge.f32.partialorder %v2179, 1.0
  %vm2192 = vcmp.ge.f32.partialorder %v2180, 1.0
  %vm2193 = vcmp.ge.f32.partialorder %v2181, 1.0
  %vm2194 = vcmp.ge.f32.partialorder %v2182, 1.0
  %vm2195 = vcmp.ge.f32.partialorder %v2183, 1.0
  %vm2196 = vcmp.ge.f32.partialorder %v2184, 1.0
  %v2197 = vsel %vm2185, 1, 0
  %v2198 = vsel %vm2186, 1, 0
  %v2199 = vsel %vm2187, 1, 0
  %v2200 = vsel %vm2188, 1, 0
  %v2201 = vsel %vm2189, 1, 0
  %v2202 = vsel %vm2190, 1, 0
  %v2203 = vsel %vm2191, 1, 0
  %v2204 = vsel %vm2192, 1, 0
  %v2205 = vsel %vm2193, 1, 0
  %v2206 = vsel %vm2194, 1, 0
  %v2207 = vsel %vm2195, 1, 0
  %v2208 = vsel %vm2196, 1, 0
  %v2209 = vcvt.s32.f32 %v2197
  %v2210 = vcvt.s32.f32 %v2198
  %v2211 = vcvt.s32.f32 %v2199
  %v2212 = vcvt.s32.f32 %v2200
  %v2213 = vcvt.s32.f32 %v2201
  %v2214 = vcvt.s32.f32 %v2202
  %v2215 = vcvt.s32.f32 %v2203
  %v2216 = vcvt.s32.f32 %v2204
  %v2217 = vcvt.s32.f32 %v2205
  %v2218 = vcvt.s32.f32 %v2206
  %v2219 = vcvt.s32.f32 %v2207
  %v2220 = vcvt.s32.f32 %v2208
  %v2221 = vsub.f32 1.0, %v2209
  %v2222 = vsub.f32 1.0, %v2210
  %v2223 = vsub.f32 1.0, %v2211
  %v2224 = vsub.f32 1.0, %v2212
  %v2225 = vsub.f32 1.0, %v2213
  %v2226 = vsub.f32 1.0, %v2214
  %v2227 = vsub.f32 1.0, %v2215
  %v2228 = vsub.f32 1.0, %v2216
  %v2229 = vsub.f32 1.0, %v2217
  %v2230 = vsub.f32 1.0, %v2218
  %v2231 = vsub.f32 1.0, %v2219
  %v2232 = vsub.f32 1.0, %v2220
  %v2233 = vmul.f32 %v2173, %v2221
  %v2234 = vmul.f32 %v2174, %v2222
  %v2235 = vmul.f32 %v2175, %v2223
  %v2236 = vmul.f32 %v2176, %v2224
  %v2237 = vmul.f32 %v2177, %v2225
  %v2238 = vmul.f32 %v2178, %v2226
  %v2239 = vmul.f32 %v2179, %v2227
  %v2240 = vmul.f32 %v2180, %v2228
  %v2241 = vmul.f32 %v2181, %v2229
  %v2242 = vmul.f32 %v2182, %v2230
  %v2243 = vmul.f32 %v2183, %v2231
  %v2244 = vmul.f32 %v2184, %v2232
  %2245 = vst [vmem:[#allocation7] sm:$0xff] %v2233
  %2246 = vst [vmem:[#allocation7 + $0x8] sm:$0xff] %v2234
  %2247 = vst [vmem:[#allocation7 + $0x10] sm:$0xff] %v2235
  %2248 = vst [vmem:[#allocation7 + $0x18] sm:$0xff] %v2236
  %2249 = vst [vmem:[#allocation7 + $0x20] sm:$0xff] %v2237
  %2250 = vst [vmem:[#allocation7 + $0x28] sm:$0xff] %v2238
  %2251 = vst [vmem:[#allocation7 + $0x30] sm:$0xff] %v2239
  %2252 = vst [vmem:[#allocation7 + $0x38] sm:$0xff] %v2240
  %2253 = vst [vmem:[#allocation7 + $0x40] sm:$0xff] %v2241
  %2254 = vst [vmem:[#allocation7 + $0x48] sm:$0xff] %v2242
  %2255 = vst [vmem:[#allocation7 + $0x50] sm:$0xff] %v2243
  %2256 = vst [vmem:[#allocation7 + $0x58] sm:$0xff] %v2244
  %v2257 = vmul.f32 %v2217, %v278
  %v2258 = vmul.f32 %v2218, %v279
  %v2259 = vmul.f32 %v2219, %v280
  %v2260 = vmul.f32 %v2220, %v281
  %2261 = vmatprep.subr.mxu0 0.0
  %2262 = vmatpush1.xpose.msra.mxu0 %v2213
  %2263 = vmatprep.subr.mxu0 0.0
  %2264 = vmatpush1.xpose.msra.mxu0 %v2214
  %2265 = vmatprep.subr.mxu0 0.0
  %2266 = vmatpush1.xpose.msra.mxu0 %v2215
  %2267 = vmatprep.subr.mxu0 0.0
  %2268 = vmatpush1.xpose.msra.mxu0 %v2216
  %2269 = vmatprep.subr.mxu0 0.0
  %2270 = vmatpush1.xpose.msra.mxu0 0.0
  %2271 = vmatprep.subr.mxu0 0.0
  %2272 = vmatpush1.xpose.msra.mxu0 0.0
  %2273 = vmatprep.subr.mxu0 0.0
  %2274 = vmatpush1.xpose.msra.mxu0 0.0
  %2275 = vmatprep.subr.mxu0 0.0
  %2276 = vmatpush1.xpose.msra.mxu0 0.0
  %2277 = vmatprep.subr.mxu0 0.0
  %2278 = vmatpush1.xpose.msra.mxu0 0.0
  %2279 = vmatprep.subr.mxu0 0.0
  %2280 = vmatpush1.xpose.msra.mxu0 0.0
  %2281 = vmatprep.subr.mxu0 0.0
  %2282 = vmatpush1.xpose.msra.mxu0 0.0
  %2283 = vmatprep.subr.mxu0 0.0
  %2284 = vmatpush1.xpose.msra.mxu0 0.0
  %2285 = vmatprep.subr.mxu0 0.0
  %2286 = vmatpush1.xpose.msra.mxu0 0.0
  %2287 = vmatprep.subr.mxu0 0.0
  %2288 = vmatpush1.xpose.msra.mxu0 0.0
  %2289 = vmatprep.subr.mxu0 0.0
  %2290 = vmatpush1.xpose.msra.mxu0 0.0
  %2291 = vmatprep.subr.mxu0 0.0
  %2292 = vmatpush1.xpose.msra.mxu0 0.0
  %2293 = vmatprep.subr.mxu0 0.0
  %2294 = vmatpush1.xpose.msra.mxu0 0.0
  %2295 = vmatprep.subr.mxu0 0.0
  %2296 = vmatpush1.xpose.msra.mxu0 0.0
  %2297 = vmatprep.subr.mxu0 0.0
  %2298 = vmatpush1.xpose.msra.mxu0 0.0
  %2299 = vmatprep.subr.mxu0 0.0
  %2300 = vmatpush1.xpose.msra.mxu0 0.0
  %2301 = vmatprep.subr.mxu0 0.0
  %2302 = vmatpush1.xpose.msra.mxu0 0.0
  %2303 = vmatprep.subr.mxu0 0.0
  %2304 = vmatpush1.xpose.msra.mxu0 0.0
  %2305 = vmatprep.subr.mxu0 0.0
  %2306 = vmatpush1.xpose.msra.mxu0 0.0
  %2307 = vmatprep.subr.mxu0 0.0
  %2308 = vmatpush1.xpose.msra.mxu0 0.0
  %2309 = vmatprep.subr.mxu0 0.0
  %2310 = vmatpush1.xpose.msra.mxu0 0.0
  %2311 = vmatprep.subr.mxu0 0.0
  %2312 = vmatpush1.xpose.msra.mxu0 0.0
  %2313 = vmatprep.subr.mxu0 0.0
  %2314 = vmatpush1.xpose.msra.mxu0 0.0
  %2315 = vmatprep.subr.mxu0 0.0
  %2316 = vmatpush1.xpose.msra.mxu0 0.0
  %2317 = vmatprep.subr.mxu0 0.0
  %2318 = vmatpush1.xpose.msra.mxu0 0.0
  %2319 = vmatprep.subr.mxu0 0.0
  %2320 = vmatpush1.xpose.msra.mxu0 0.0
  %2321 = vmatprep.subr.mxu0 0.0
  %2322 = vmatpush1.xpose.msra.mxu0 0.0
  %2323 = vmatprep.subr.mxu0 0.0
  %2324 = vmatpush1.xpose.msra.mxu0 0.0
  %2325 = vmatprep.mubr.f32.mxu0 0.0
  %2326 = vmatmul.mubr.f32.gmra.mrb[0].mxu0 %v2257
  %v2327 = vpop.f32.mrb[0].mxu0
  %v2328 = vadd.f32 0.0, %v2327
  %v2329 = vpop.f32.mrb[0].mxu0
  %2330 = vmatprep.mubr.f32.mxu0 0.0
  %2331 = vmatmul.mubr.f32.gmra.mrb[0].mxu0 %v2258
  %v2332 = vpop.f32.mrb[0].mxu0
  %v2333 = vadd.f32 0.0, %v2332
  %v2334 = vpop.f32.mrb[0].mxu0
  %2335 = vmatprep.mubr.f32.mxu0 0.0
  %2336 = vmatmul.mubr.f32.gmra.mrb[0].mxu0 %v2259
  %v2337 = vpop.f32.mrb[0].mxu0
  %v2338 = vadd.f32 0.0, %v2337
  %v2339 = vpop.f32.mrb[0].mxu0
  %2340 = vmatprep.mubr.f32.mxu0 0.0
  %2341 = vmatmul.mubr.f32.gmra.mrb[0].mxu0 %v2260
  %v2342 = vpop.f32.mrb[0].mxu0
  %v2343 = vadd.f32 0.0, %v2342
  %v2344 = vpop.f32.mrb[0].mxu0
  %2345 = vdwg.mxu0
  %v2346 = vmul.f32 %v2328, %v274
  %v2347 = vmul.f32 %v2333, %v275
  %v2348 = vmul.f32 %v2338, %v276
  %v2349 = vmul.f32 %v2343, %v277
  %v2351 = vsel %vm791, %v2346, 0
  %v2354 = vsel %vm791, %v2347, 0
  %v2357 = vsel %vm791, %v2348, 0
  %v2360 = vsel %vm791, %v2349, 0
  %2362 = vmatprep.subr.mxu0 0.0
  %2363 = vmatpush1.msra.mxu0 %v2209
  %2364 = vmatprep.subr.mxu0 0.0
  %2365 = vmatpush1.msra.mxu0 %v2210
  %2366 = vmatprep.subr.mxu0 0.0
  %2367 = vmatpush1.msra.mxu0 %v2211
  %2368 = vmatprep.subr.mxu0 0.0
  %2369 = vmatpush1.msra.mxu0 %v2212
  %2370 = vmatprep.subr.mxu0 0.0
  %2371 = vmatpush1.msra.mxu0 0.0
  %2372 = vmatprep.subr.mxu0 0.0
  %2373 = vmatpush1.msra.mxu0 0.0
  %2374 = vmatprep.subr.mxu0 0.0
  %2375 = vmatpush1.msra.mxu0 0.0
  %2376 = vmatprep.subr.mxu0 0.0
  %2377 = vmatpush1.msra.mxu0 0.0
  %2378 = vmatprep.subr.mxu0 0.0
  %2379 = vmatpush1.msra.mxu0 0.0
  %2380 = vmatprep.subr.mxu0 0.0
  %2381 = vmatpush1.msra.mxu0 0.0
  %2382 = vmatprep.subr.mxu0 0.0
  %2383 = vmatpush1.msra.mxu0 0.0
  %2384 = vmatprep.subr.mxu0 0.0
  %2385 = vmatpush1.msra.mxu0 0.0
  %2386 = vmatprep.subr.mxu0 0.0
  %2387 = vmatpush1.msra.mxu0 0.0
  %2388 = vmatprep.subr.mxu0 0.0
  %2389 = vmatpush1.msra.mxu0 0.0
  %2390 = vmatprep.subr.mxu0 0.0
  %2391 = vmatpush1.msra.mxu0 0.0
  %2392 = vmatprep.subr.mxu0 0.0
  %2393 = vmatpush1.msra.mxu0 0.0
  %2394 = vmatprep.subr.mxu0 0.0
  %2395 = vmatpush1.msra.mxu0 0.0
  %2396 = vmatprep.subr.mxu0 0.0
  %2397 = vmatpush1.msra.mxu0 0.0
  %2398 = vmatprep.subr.mxu0 0.0
  %2399 = vmatpush1.msra.mxu0 0.0
  %2400 = vmatprep.subr.mxu0 0.0
  %2401 = vmatpush1.msra.mxu0 0.0
  %2402 = vmatprep.subr.mxu0 0.0
  %2403 = vmatpush1.msra.mxu0 0.0
  %2404 = vmatprep.subr.mxu0 0.0
  %2405 = vmatpush1.msra.mxu0 0.0
  %2406 = vmatprep.subr.mxu0 0.0
  %2407 = vmatpush1.msra.mxu0 0.0
  %2408 = vmatprep.subr.mxu0 0.0
  %2409 = vmatpush1.msra.mxu0 0.0
  %2410 = vmatprep.subr.mxu0 0.0
  %2411 = vmatpush1.msra.mxu0 0.0
  %2412 = vmatprep.subr.mxu0 0.0
  %2413 = vmatpush1.msra.mxu0 0.0
  %2414 = vmatprep.subr.mxu0 0.0
  %2415 = vmatpush1.msra.mxu0 0.0
  %2416 = vmatprep.subr.mxu0 0.0
  %2417 = vmatpush1.msra.mxu0 0.0
  %2418 = vmatprep.subr.mxu0 0.0
  %2419 = vmatpush1.msra.mxu0 0.0
  %2420 = vmatprep.subr.mxu0 0.0
  %2421 = vmatpush1.msra.mxu0 0.0
  %2422 = vmatprep.subr.mxu0 0.0
  %2423 = vmatpush1.msra.mxu0 0.0
  %2424 = vmatprep.subr.mxu0 0.0
  %2425 = vmatpush1.msra.mxu0 0.0
  %2426 = vmatprep.mubr.f32.mxu0 0.0
  %2427 = vmatmul.mubr.f32.gmra.mrb[0].mxu0 %v2351
  %v2428 = vpop.f32.mrb[0].mxu0
  %v2429 = vadd.f32 0.0, %v2428
  %v2430 = vpop.f32.mrb[0].mxu0
  %2431 = vmatprep.mubr.f32.mxu0 0.0
  %2432 = vmatmul.mubr.f32.gmra.mrb[0].mxu0 %v2354
  %v2433 = vpop.f32.mrb[0].mxu0
  %v2434 = vadd.f32 0.0, %v2433
  %v2435 = vpop.f32.mrb[0].mxu0
  %2436 = vmatprep.mubr.f32.mxu0 0.0
  %2437 = vmatmul.mubr.f32.gmra.mrb[0].mxu0 %v2357
  %v2438 = vpop.f32.mrb[0].mxu0
  %v2439 = vadd.f32 0.0, %v2438
  %v2440 = vpop.f32.mrb[0].mxu0
  %2441 = vmatprep.mubr.f32.mxu0 0.0
  %2442 = vmatmul.mubr.f32.gmra.mrb[0].mxu0 %v2360
  %v2443 = vpop.f32.mrb[0].mxu0
  %v2444 = vadd.f32 0.0, %v2443
  %v2445 = vpop.f32.mrb[0].mxu0
  %2446 = vdwg.mxu0
  %v2447 = vmul.f32 %v2429, %v278
  %v2448 = vmul.f32 %v2434, %v279
  %v2449 = vmul.f32 %v2439, %v280
  %v2450 = vmul.f32 %v2444, %v281
  %v2451 = vmul.f32 %v2217, %v283
  %v2452 = vmul.f32 %v2218, %v284
  %v2453 = vmul.f32 %v2219, %v285
  %v2454 = vmul.f32 %v2220, %v286
  %2455 = vmatprep.subr.mxu0 0.0
  %2456 = vmatpush1.xpose.msra.mxu0 %v2213
  %2457 = vmatprep.subr.mxu0 0.0
  %2458 = vmatpush1.xpose.msra.mxu0 %v2214
  %2459 = vmatprep.subr.mxu0 0.0
  %2460 = vmatpush1.xpose.msra.mxu0 %v2215
  %2461 = vmatprep.subr.mxu0 0.0
  %2462 = vmatpush1.xpose.msra.mxu0 %v2216
  %2463 = vmatprep.subr.mxu0 0.0
  %2464 = vmatpush1.xpose.msra.mxu0 0.0
  %2465 = vmatprep.subr.mxu0 0.0
  %2466 = vmatpush1.xpose.msra.mxu0 0.0
  %2467 = vmatprep.subr.mxu0 0.0
  %2468 = vmatpush1.xpose.msra.mxu0 0.0
  %2469 = vmatprep.subr.mxu0 0.0
  %2470 = vmatpush1.xpose.msra.mxu0 0.0
  %2471 = vmatprep.subr.mxu0 0.0
  %2472 = vmatpush1.xpose.msra.mxu0 0.0
  %2473 = vmatprep.subr.mxu0 0.0
  %2474 = vmatpush1.xpose.msra.mxu0 0.0
  %2475 = vmatprep.subr.mxu0 0.0
  %2476 = vmatpush1.xpose.msra.mxu0 0.0
  %2477 = vmatprep.subr.mxu0 0.0
  %2478 = vmatpush1.xpose.msra.mxu0 0.0
  %2479 = vmatprep.subr.mxu0 0.0
  %2480 = vmatpush1.xpose.msra.mxu0 0.0
  %2481 = vmatprep.subr.mxu0 0.0
  %2482 = vmatpush1.xpose.msra.mxu0 0.0
  %2483 = vmatprep.subr.mxu0 0.0
  %2484 = vmatpush1.xpose.msra.mxu0 0.0
  %2485 = vmatprep.subr.mxu0 0.0
  %2486 = vmatpush1.xpose.msra.mxu0 0.0
  %2487 = vmatprep.subr.mxu0 0.0
  %2488 = vmatpush1.xpose.msra.mxu0 0.0
  %2489 = vmatprep.subr.mxu0 0.0
  %2490 = vmatpush1.xpose.msra.mxu0 0.0
  %2491 = vmatprep.subr.mxu0 0.0
  %2492 = vmatpush1.xpose.msra.mxu0 0.0
  %2493 = vmatprep.subr.mxu0 0.0
  %2494 = vmatpush1.xpose.msra.mxu0 0.0
  %2495 = vmatprep.subr.mxu0 0.0
  %2496 = vmatpush1.xpose.msra.mxu0 0.0
  %2497 = vmatprep.subr.mxu0 0.0
  %2498 = vmatpush1.xpose.msra.mxu0 0.0
  %2499 = vmatprep.subr.mxu0 0.0
  %2500 = vmatpush1.xpose.msra.mxu0 0.0
  %2501 = vmatprep.subr.mxu0 0.0
  %2502 = vmatpush1.xpose.msra.mxu0 0.0
  %2503 = vmatprep.subr.mxu0 0.0
  %2504 = vmatpush1.xpose.msra.mxu0 0.0
  %2505 = vmatprep.subr.mxu0 0.0
  %2506 = vmatpush1.xpose.msra.mxu0 0.0
  %2507 = vmatprep.subr.mxu0 0.0
  %2508 = vmatpush1.xpose.msra.mxu0 0.0
  %2509 = vmatprep.subr.mxu0 0.0
  %2510 = vmatpush1.xpose.msra.mxu0 0.0
  %2511 = vmatprep.subr.mxu0 0.0
  %2512 = vmatpush1.xpose.msra.mxu0 0.0
  %2513 = vmatprep.subr.mxu0 0.0
  %2514 = vmatpush1.xpose.msra.mxu0 0.0
  %2515 = vmatprep.subr.mxu0 0.0
  %2516 = vmatpush1.xpose.msra.mxu0 0.0
  %2517 = vmatprep.subr.mxu0 0.0
  %2518 = vmatpush1.xpose.msra.mxu0 0.0
  %2519 = vmatprep.mubr.f32.mxu0 0.0
  %2520 = vmatmul.mubr.f32.gmra.mrb[0].mxu0 %v2451
  %v2521 = vpop.f32.mrb[0].mxu0
  %v2522 = vadd.f32 0.0, %v2521
  %v2523 = vpop.f32.mrb[0].mxu0
  %2524 = vmatprep.mubr.f32.mxu0 0.0
  %2525 = vmatmul.mubr.f32.gmra.mrb[0].mxu0 %v2452
  %v2526 = vpop.f32.mrb[0].mxu0
  %v2527 = vadd.f32 0.0, %v2526
  %v2528 = vpop.f32.mrb[0].mxu0
  %2529 = vmatprep.mubr.f32.mxu0 0.0
  %2530 = vmatmul.mubr.f32.gmra.mrb[0].mxu0 %v2453
  %v2531 = vpop.f32.mrb[0].mxu0
  %v2532 = vadd.f32 0.0, %v2531
  %v2533 = vpop.f32.mrb[0].mxu0
  %2534 = vmatprep.mubr.f32.mxu0 0.0
  %2535 = vmatmul.mubr.f32.gmra.mrb[0].mxu0 %v2454
  %v2536 = vpop.f32.mrb[0].mxu0
  %v2537 = vadd.f32 0.0, %v2536
  %v2538 = vpop.f32.mrb[0].mxu0
  %2539 = vdwg.mxu0
  %v2540 = vmul.f32 %v2522, %v274
  %v2541 = vmul.f32 %v2527, %v275
  %v2542 = vmul.f32 %v2532, %v276
  %v2543 = vmul.f32 %v2537, %v277
  %v2545 = vsel %vm791, %v2540, 0
  %v2548 = vsel %vm791, %v2541, 0
  %v2551 = vsel %vm791, %v2542, 0
  %v2554 = vsel %vm791, %v2543, 0
  %2556 = vmatprep.subr.mxu0 0.0
  %2557 = vmatpush1.msra.mxu0 %v2209
  %2558 = vmatprep.subr.mxu0 0.0
  %2559 = vmatpush1.msra.mxu0 %v2210
  %2560 = vmatprep.subr.mxu0 0.0
  %2561 = vmatpush1.msra.mxu0 %v2211
  %2562 = vmatprep.subr.mxu0 0.0
  %2563 = vmatpush1.msra.mxu0 %v2212
  %2564 = vmatprep.subr.mxu0 0.0
  %2565 = vmatpush1.msra.mxu0 0.0
  %2566 = vmatprep.subr.mxu0 0.0
  %2567 = vmatpush1.msra.mxu0 0.0
  %2568 = vmatprep.subr.mxu0 0.0
  %2569 = vmatpush1.msra.mxu0 0.0
  %2570 = vmatprep.subr.mxu0 0.0
  %2571 = vmatpush1.msra.mxu0 0.0
  %2572 = vmatprep.subr.mxu0 0.0
  %2573 = vmatpush1.msra.mxu0 0.0
  %2574 = vmatprep.subr.mxu0 0.0
  %2575 = vmatpush1.msra.mxu0 0.0
  %2576 = vmatprep.subr.mxu0 0.0
  %2577 = vmatpush1.msra.mxu0 0.0
  %2578 = vmatprep.subr.mxu0 0.0
  %2579 = vmatpush1.msra.mxu0 0.0
  %2580 = vmatprep.subr.mxu0 0.0
  %2581 = vmatpush1.msra.mxu0 0.0
  %2582 = vmatprep.subr.mxu0 0.0
  %2583 = vmatpush1.msra.mxu0 0.0
  %2584 = vmatprep.subr.mxu0 0.0
  %2585 = vmatpush1.msra.mxu0 0.0
  %2586 = vmatprep.subr.mxu0 0.0
  %2587 = vmatpush1.msra.mxu0 0.0
  %2588 = vmatprep.subr.mxu0 0.0
  %2589 = vmatpush1.msra.mxu0 0.0
  %2590 = vmatprep.subr.mxu0 0.0
  %2591 = vmatpush1.msra.mxu0 0.0
  %2592 = vmatprep.subr.mxu0 0.0
  %2593 = vmatpush1.msra.mxu0 0.0
  %2594 = vmatprep.subr.mxu0 0.0
  %2595 = vmatpush1.msra.mxu0 0.0
  %2596 = vmatprep.subr.mxu0 0.0
  %2597 = vmatpush1.msra.mxu0 0.0
  %2598 = vmatprep.subr.mxu0 0.0
  %2599 = vmatpush1.msra.mxu0 0.0
  %2600 = vmatprep.subr.mxu0 0.0
  %2601 = vmatpush1.msra.mxu0 0.0
  %2602 = vmatprep.subr.mxu0 0.0
  %2603 = vmatpush1.msra.mxu0 0.0
  %2604 = vmatprep.subr.mxu0 0.0
  %2605 = vmatpush1.msra.mxu0 0.0
  %2606 = vmatprep.subr.mxu0 0.0
  %2607 = vmatpush1.msra.mxu0 0.0
  %2608 = vmatprep.subr.mxu0 0.0
  %2609 = vmatpush1.msra.mxu0 0.0
  %2610 = vmatprep.subr.mxu0 0.0
  %2611 = vmatpush1.msra.mxu0 0.0
  %2612 = vmatprep.subr.mxu0 0.0
  %2613 = vmatpush1.msra.mxu0 0.0
  %2614 = vmatprep.subr.mxu0 0.0
  %2615 = vmatpush1.msra.mxu0 0.0
  %2616 = vmatprep.subr.mxu0 0.0
  %2617 = vmatpush1.msra.mxu0 0.0
  %2618 = vmatprep.subr.mxu0 0.0
  %2619 = vmatpush1.msra.mxu0 0.0
  %2620 = vmatprep.mubr.f32.mxu0 0.0
  %2621 = vmatmul.mubr.f32.gmra.mrb[0].mxu0 %v2545
  %v2622 = vpop.f32.mrb[0].mxu0
  %v2623 = vadd.f32 0.0, %v2622
  %v2624 = vpop.f32.mrb[0].mxu0
  %2625 = vmatprep.mubr.f32.mxu0 0.0
  %2626 = vmatmul.mubr.f32.gmra.mrb[0].mxu0 %v2548
  %v2627 = vpop.f32.mrb[0].mxu0
  %v2628 = vadd.f32 0.0, %v2627
  %v2629 = vpop.f32.mrb[0].mxu0
  %2630 = vmatprep.mubr.f32.mxu0 0.0
  %2631 = vmatmul.mubr.f32.gmra.mrb[0].mxu0 %v2551
  %v2632 = vpop.f32.mrb[0].mxu0
  %v2633 = vadd.f32 0.0, %v2632
  %v2634 = vpop.f32.mrb[0].mxu0
  %2635 = vmatprep.mubr.f32.mxu0 0.0
  %2636 = vmatmul.mubr.f32.gmra.mrb[0].mxu0 %v2554
  %v2637 = vpop.f32.mrb[0].mxu0
  %v2638 = vadd.f32 0.0, %v2637
  %v2639 = vpop.f32.mrb[0].mxu0
  %2640 = vdwg.mxu0
  %v2641 = vmul.f32 %v2623, %v283
  %v2642 = vmul.f32 %v2628, %v284
  %v2643 = vmul.f32 %v2633, %v285
  %v2644 = vmul.f32 %v2638, %v286
  %v2645 = vadd.f32 %v2447, %v2641
  %v2646 = vadd.f32 %v2448, %v2642
  %v2647 = vadd.f32 %v2449, %v2643
  %v2648 = vadd.f32 %v2450, %v2644
  %v2649 = vmul.f32 %v2645, 0.125
  %v2650 = vmul.f32 %v2646, 0.125
  %v2651 = vmul.f32 %v2647, 0.125
  %v2652 = vmul.f32 %v2648, 0.125
  %v2653 = vmul.f32 %v2649, 0.5
  %v2654 = vmul.f32 %v2650, 0.5
  %v2655 = vmul.f32 %v2651, 0.5
  %v2656 = vmul.f32 %v2652, 0.5
  %vm2657 = vcmp.ge.f32.partialorder %v2653, 0.5
  %vm2658 = vcmp.ge.f32.partialorder %v2654, 0.5
  %vm2659 = vcmp.ge.f32.partialorder %v2655, 0.5
  %vm2660 = vcmp.ge.f32.partialorder %v2656, 0.5
  %v2661 = vsel %vm2657, 1, 0
  %v2662 = vsel %vm2658, 1, 0
  %v2663 = vsel %vm2659, 1, 0
  %v2664 = vsel %vm2660, 1, 0
  %v2665 = vcvt.s32.f32 %v2661
  %v2666 = vcvt.s32.f32 %v2662
  %v2667 = vcvt.s32.f32 %v2663
  %v2668 = vcvt.s32.f32 %v2664
  %v2669 = vsub.f32 1.0, %v2665
  %v2670 = vsub.f32 1.0, %v2666
  %v2671 = vsub.f32 1.0, %v2667
  %v2672 = vsub.f32 1.0, %v2668
  %v2673 = vmul.f32 %v2653, %v2669
  %v2674 = vmul.f32 %v2654, %v2670
  %v2675 = vmul.f32 %v2655, %v2671
  %v2676 = vmul.f32 %v2656, %v2672
  %2677 = vst [vmem:[#allocation8] sm:$0xff] %v2673
  %2678 = vst [vmem:[#allocation8 + $0x8] sm:$0xff] %v2674
  %2679 = vst [vmem:[#allocation8 + $0x10] sm:$0xff] %v2675
  %2680 = vst [vmem:[#allocation8 + $0x18] sm:$0xff] %v2676
  %v2682 = vsel %vm791, %v563, 0
  %v2685 = vsel %vm791, %v564, 0
  %v2688 = vsel %vm791, %v565, 0
  %v2691 = vsel %vm791, %v566, 0
  %2693 = vmatprep.subr.mxu0 0.0
  %2694 = vmatpush1.msra.mxu0 %v2665
  %2695 = vmatprep.subr.mxu0 0.0
  %2696 = vmatpush1.msra.mxu0 %v2666
  %2697 = vmatprep.subr.mxu0 0.0
  %2698 = vmatpush1.msra.mxu0 %v2667
  %2699 = vmatprep.subr.mxu0 0.0
  %2700 = vmatpush1.msra.mxu0 %v2668
  %2701 = vmatprep.subr.mxu0 0.0
  %2702 = vmatpush1.msra.mxu0 0.0
  %2703 = vmatprep.subr.mxu0 0.0
  %2704 = vmatpush1.msra.mxu0 0.0
  %2705 = vmatprep.subr.mxu0 0.0
  %2706 = vmatpush1.msra.mxu0 0.0
  %2707 = vmatprep.subr.mxu0 0.0
  %2708 = vmatpush1.msra.mxu0 0.0
  %2709 = vmatprep.subr.mxu0 0.0
  %2710 = vmatpush1.msra.mxu0 0.0
  %2711 = vmatprep.subr.mxu0 0.0
  %2712 = vmatpush1.msra.mxu0 0.0
  %2713 = vmatprep.subr.mxu0 0.0
  %2714 = vmatpush1.msra.mxu0 0.0
  %2715 = vmatprep.subr.mxu0 0.0
  %2716 = vmatpush1.msra.mxu0 0.0
  %2717 = vmatprep.subr.mxu0 0.0
  %2718 = vmatpush1.msra.mxu0 0.0
  %2719 = vmatprep.subr.mxu0 0.0
  %2720 = vmatpush1.msra.mxu0 0.0
  %2721 = vmatprep.subr.mxu0 0.0
  %2722 = vmatpush1.msra.mxu0 0.0
  %2723 = vmatprep.subr.mxu0 0.0
  %2724 = vmatpush1.msra.mxu0 0.0
  %2725 = vmatprep.subr.mxu0 0.0
  %2726 = vmatpush1.msra.mxu0 0.0
  %2727 = vmatprep.subr.mxu0 0.0
  %2728 = vmatpush1.msra.mxu0 0.0
  %2729 = vmatprep.subr.mxu0 0.0
  %2730 = vmatpush1.msra.mxu0 0.0
  %2731 = vmatprep.subr.mxu0 0.0
  %2732 = vmatpush1.msra.mxu0 0.0
  %2733 = vmatprep.subr.mxu0 0.0
  %2734 = vmatpush1.msra.mxu0 0.0
  %2735 = vmatprep.subr.mxu0 0.0
  %2736 = vmatpush1.msra.mxu0 0.0
  %2737 = vmatprep.subr.mxu0 0.0
  %2738 = vmatpush1.msra.mxu0 0.0
  %2739 = vmatprep.subr.mxu0 0.0
  %2740 = vmatpush1.msra.mxu0 0.0
  %2741 = vmatprep.subr.mxu0 0.0
  %2742 = vmatpush1.msra.mxu0 0.0
  %2743 = vmatprep.subr.mxu0 0.0
  %2744 = vmatpush1.msra.mxu0 0.0
  %2745 = vmatprep.subr.mxu0 0.0
  %2746 = vmatpush1.msra.mxu0 0.0
  %2747 = vmatprep.subr.mxu0 0.0
  %2748 = vmatpush1.msra.mxu0 0.0
  %2749 = vmatprep.subr.mxu0 0.0
  %2750 = vmatpush1.msra.mxu0 0.0
  %2751 = vmatprep.subr.mxu0 0.0
  %2752 = vmatpush1.msra.mxu0 0.0
  %2753 = vmatprep.subr.mxu0 0.0
  %2754 = vmatpush1.msra.mxu0 0.0
  %2755 = vmatprep.subr.mxu0 0.0
  %2756 = vmatpush1.msra.mxu0 0.0
  %2757 = vmatprep.mubr.f32.mxu0 0.0
  %2758 = vmatmul.mubr.f32.gmra.mrb[0].mxu0 %v2682
  %v2759 = vpop.f32.mrb[0].mxu0
  %v2760 = vadd.f32 %v674, %v2759
  %v2761 = vpop.f32.mrb[0].mxu0
  %2762 = vmatprep.mubr.f32.mxu0 0.0
  %2763 = vmatmul.mubr.f32.gmra.mrb[0].mxu0 %v2685
  %v2764 = vpop.f32.mrb[0].mxu0
  %v2765 = vadd.f32 %v679, %v2764
  %v2766 = vpop.f32.mrb[0].mxu0
  %2767 = vmatprep.mubr.f32.mxu0 0.0
  %2768 = vmatmul.mubr.f32.gmra.mrb[0].mxu0 %v2688
  %v2769 = vpop.f32.mrb[0].mxu0
  %v2770 = vadd.f32 %v684, %v2769
  %v2771 = vpop.f32.mrb[0].mxu0
  %2772 = vmatprep.mubr.f32.mxu0 0.0
  %2773 = vmatmul.mubr.f32.gmra.mrb[0].mxu0 %v2691
  %v2774 = vpop.f32.mrb[0].mxu0
  %v2775 = vadd.f32 %v689, %v2774
  %v2776 = vpop.f32.mrb[0].mxu0
  %2777 = vdwg.mxu0
  %v2778 = vmul.f32 %v2760, 0.5
  %v2779 = vmul.f32 %v2765, 0.5
  %v2780 = vmul.f32 %v2770, 0.5
  %v2781 = vmul.f32 %v2775, 0.5
  %vm2782 = vcmp.ge.f32.partialorder %v2778, 1.0
  %vm2783 = vcmp.ge.f32.partialorder %v2779, 1.0
  %vm2784 = vcmp.ge.f32.partialorder %v2780, 1.0
  %vm2785 = vcmp.ge.f32.partialorder %v2781, 1.0
  %v2786 = vsel %vm2782, 1, 0
  %v2787 = vsel %vm2783, 1, 0
  %v2788 = vsel %vm2784, 1, 0
  %v2789 = vsel %vm2785, 1, 0
  %v2790 = vcvt.s32.f32 %v2786
  %v2791 = vcvt.s32.f32 %v2787
  %v2792 = vcvt.s32.f32 %v2788
  %v2793 = vcvt.s32.f32 %v2789
  %v2794 = vsub.f32 1.0, %v2790
  %v2795 = vsub.f32 1.0, %v2791
  %v2796 = vsub.f32 1.0, %v2792
  %v2797 = vsub.f32 1.0, %v2793
  %v2798 = vmul.f32 %v2778, %v2794
  %v2799 = vmul.f32 %v2779, %v2795
  %v2800 = vmul.f32 %v2780, %v2796
  %v2801 = vmul.f32 %v2781, %v2797
  %2802 = vst [vmem:[#allocation9] sm:$0xff] %v2798
  %2803 = vst [vmem:[#allocation9 + $0x8] sm:$0xff] %v2799
  %2804 = vst [vmem:[#allocation9 + $0x10] sm:$0xff] %v2800
  %2805 = vst [vmem:[#allocation9 + $0x18] sm:$0xff] %v2801
  %v2806 = vadd.f32 %v2008, %v2790
  %v2807 = vadd.f32 %v2009, %v2791
  %v2808 = vadd.f32 %v2010, %v2792
  %v2809 = vadd.f32 %v2011, %v2793
  %v2811 = vsel %vm791, %v571, 0
  %v2814 = vsel %vm791, %v572, 0
  %v2817 = vsel %vm791, %v573, 0
  %v2820 = vsel %vm791, %v574, 0
  %v2823 = vsel %vm791, %v575, 0
  %v2826 = vsel %vm791, %v576, 0
  %v2829 = vsel %vm791, %v577, 0
  %v2832 = vsel %vm791, %v578, 0
  %v2835 = vsel %vm791, %v579, 0
  %v2838 = vsel %vm791, %v580, 0
  %v2841 = vsel %vm791, %v581, 0
  %v2844 = vsel %vm791, %v582, 0
  %v2847 = vsel %vm791, %v583, 0
  %v2850 = vsel %vm791, %v584, 0
  %v2853 = vsel %vm791, %v585, 0
  %v2856 = vsel %vm791, %v586, 0
  %2858 = vmatprep.subr.mxu0 0.0
  %2859 = vmatpush1.msra.mxu0 %v2806
  %2860 = vmatprep.subr.mxu0 0.0
  %2861 = vmatpush1.msra.mxu0 %v2807
  %2862 = vmatprep.subr.mxu0 0.0
  %2863 = vmatpush1.msra.mxu0 %v2808
  %2864 = vmatprep.subr.mxu0 0.0
  %2865 = vmatpush1.msra.mxu0 %v2809
  %2866 = vmatprep.subr.mxu0 0.0
  %2867 = vmatpush1.msra.mxu0 0.0
  %2868 = vmatprep.subr.mxu0 0.0
  %2869 = vmatpush1.msra.mxu0 0.0
  %2870 = vmatprep.subr.mxu0 0.0
  %2871 = vmatpush1.msra.mxu0 0.0
  %2872 = vmatprep.subr.mxu0 0.0
  %2873 = vmatpush1.msra.mxu0 0.0
  %2874 = vmatprep.subr.mxu0 0.0
  %2875 = vmatpush1.msra.mxu0 0.0
  %2876 = vmatprep.subr.mxu0 0.0
  %2877 = vmatpush1.msra.mxu0 0.0
  %2878 = vmatprep.subr.mxu0 0.0
  %2879 = vmatpush1.msra.mxu0 0.0
  %2880 = vmatprep.subr.mxu0 0.0
  %2881 = vmatpush1.msra.mxu0 0.0
  %2882 = vmatprep.subr.mxu0 0.0
  %2883 = vmatpush1.msra.mxu0 0.0
  %2884 = vmatprep.subr.mxu0 0.0
  %2885 = vmatpush1.msra.mxu0 0.0
  %2886 = vmatprep.subr.mxu0 0.0
  %2887 = vmatpush1.msra.mxu0 0.0
  %2888 = vmatprep.subr.mxu0 0.0
  %2889 = vmatpush1.msra.mxu0 0.0
  %2890 = vmatprep.subr.mxu0 0.0
  %2891 = vmatpush1.msra.mxu0 0.0
  %2892 = vmatprep.subr.mxu0 0.0
  %2893 = vmatpush1.msra.mxu0 0.0
  %2894 = vmatprep.subr.mxu0 0.0
  %2895 = vmatpush1.msra.mxu0 0.0
  %2896 = vmatprep.subr.mxu0 0.0
  %2897 = vmatpush1.msra.mxu0 0.0
  %2898 = vmatprep.subr.mxu0 0.0
  %2899 = vmatpush1.msra.mxu0 0.0
  %2900 = vmatprep.subr.mxu0 0.0
  %2901 = vmatpush1.msra.mxu0 0.0
  %2902 = vmatprep.subr.mxu0 0.0
  %2903 = vmatpush1.msra.mxu0 0.0
  %2904 = vmatprep.subr.mxu0 0.0
  %2905 = vmatpush1.msra.mxu0 0.0
  %2906 = vmatprep.subr.mxu0 0.0
  %2907 = vmatpush1.msra.mxu0 0.0
  %2908 = vmatprep.subr.mxu0 0.0
  %2909 = vmatpush1.msra.mxu0 0.0
  %2910 = vmatprep.subr.mxu0 0.0
  %2911 = vmatpush1.msra.mxu0 0.0
  %2912 = vmatprep.subr.mxu0 0.0
  %2913 = vmatpush1.msra.mxu0 0.0
  %2914 = vmatprep.subr.mxu0 0.0
  %2915 = vmatpush1.msra.mxu0 0.0
  %2916 = vmatprep.subr.mxu0 0.0
  %2917 = vmatpush1.msra.mxu0 0.0
  %2918 = vmatprep.subr.mxu0 0.0
  %2919 = vmatpush1.msra.mxu0 0.0
  %2920 = vmatprep.subr.mxu0 0.0
  %2921 = vmatpush1.msra.mxu0 0.0
  %2922 = vmatprep.mubr.f32.mxu0 0.0
  %2923 = vmatmul.mubr.f32.gmra.mrb[0].mxu0 %v2811
  %v2924 = vpop.f32.mrb[0].mxu0
  %v2925 = vadd.f32 %v694, %v2924
  %v2926 = vpop.f32.mrb[0].mxu0
  %2927 = vmatprep.mubr.f32.mxu0 0.0
  %2928 = vmatmul.mubr.f32.gmra.mrb[0].mxu0 %v2814
  %v2929 = vpop.f32.mrb[0].mxu0
  %v2930 = vadd.f32 %v699, %v2929
  %v2931 = vpop.f32.mrb[0].mxu0
  %2932 = vmatprep.mubr.f32.mxu0 0.0
  %2933 = vmatmul.mubr.f32.gmra.mrb[0].mxu0 %v2817
  %v2934 = vpop.f32.mrb[0].mxu0
  %v2935 = vadd.f32 %v704, %v2934
  %v2936 = vpop.f32.mrb[0].mxu0
  %2937 = vmatprep.mubr.f32.mxu0 0.0
  %2938 = vmatmul.mubr.f32.gmra.mrb[0].mxu0 %v2820
  %v2939 = vpop.f32.mrb[0].mxu0
  %v2940 = vadd.f32 %v709, %v2939
  %v2941 = vpop.f32.mrb[0].mxu0
  %2942 = vmatprep.mubr.f32.mxu0 0.0
  %2943 = vmatmul.mubr.f32.gmra.mrb[0].mxu0 %v2823
  %v2944 = vpop.f32.mrb[0].mxu0
  %v2945 = vadd.f32 %v714, %v2944
  %v2946 = vpop.f32.mrb[0].mxu0
  %2947 = vmatprep.mubr.f32.mxu0 0.0
  %2948 = vmatmul.mubr.f32.gmra.mrb[0].mxu0 %v2826
  %v2949 = vpop.f32.mrb[0].mxu0
  %v2950 = vadd.f32 %v719, %v2949
  %v2951 = vpop.f32.mrb[0].mxu0
  %2952 = vmatprep.mubr.f32.mxu0 0.0
  %2953 = vmatmul.mubr.f32.gmra.mrb[0].mxu0 %v2829
  %v2954 = vpop.f32.mrb[0].mxu0
  %v2955 = vadd.f32 %v724, %v2954
  %v2956 = vpop.f32.mrb[0].mxu0
  %2957 = vmatprep.mubr.f32.mxu0 0.0
  %2958 = vmatmul.mubr.f32.gmra.mrb[0].mxu0 %v2832
  %v2959 = vpop.f32.mrb[0].mxu0
  %v2960 = vadd.f32 %v729, %v2959
  %v2961 = vpop.f32.mrb[0].mxu0
  %2962 = vmatprep.mubr.f32.mxu0 0.0
  %2963 = vmatmul.mubr.f32.gmra.mrb[0].mxu0 %v2835
  %v2964 = vpop.f32.mrb[0].mxu0
  %v2965 = vadd.f32 %v734, %v2964
  %v2966 = vpop.f32.mrb[0].mxu0
  %2967 = vmatprep.mubr.f32.mxu0 0.0
  %2968 = vmatmul.mubr.f32.gmra.mrb[0].mxu0 %v2838
  %v2969 = vpop.f32.mrb[0].mxu0
  %v2970 = vadd.f32 %v739, %v2969
  %v2971 = vpop.f32.mrb[0].mxu0
  %2972 = vmatprep.mubr.f32.mxu0 0.0
  %2973 = vmatmul.mubr.f32.gmra.mrb[0].mxu0 %v2841
  %v2974 = vpop.f32.mrb[0].mxu0
  %v2975 = vadd.f32 %v744, %v2974
  %v2976 = vpop.f32.mrb[0].mxu0
  %2977 = vmatprep.mubr.f32.mxu0 0.0
  %2978 = vmatmul.mubr.f32.gmra.mrb[0].mxu0 %v2844
  %v2979 = vpop.f32.mrb[0].mxu0
  %v2980 = vadd.f32 %v749, %v2979
  %v2981 = vpop.f32.mrb[0].mxu0
  %2982 = vmatprep.mubr.f32.mxu0 0.0
  %2983 = vmatmul.mubr.f32.gmra.mrb[0].mxu0 %v2847
  %v2984 = vpop.f32.mrb[0].mxu0
  %v2985 = vadd.f32 %v754, %v2984
  %v2986 = vpop.f32.mrb[0].mxu0
  %2987 = vmatprep.mubr.f32.mxu0 0.0
  %2988 = vmatmul.mubr.f32.gmra.mrb[0].mxu0 %v2850
  %v2989 = vpop.f32.mrb[0].mxu0
  %v2990 = vadd.f32 %v759, %v2989
  %v2991 = vpop.f32.mrb[0].mxu0
  %2992 = vmatprep.mubr.f32.mxu0 0.0
  %2993 = vmatmul.mubr.f32.gmra.mrb[0].mxu0 %v2853
  %v2994 = vpop.f32.mrb[0].mxu0
  %v2995 = vadd.f32 %v764, %v2994
  %v2996 = vpop.f32.mrb[0].mxu0
  %2997 = vmatprep.mubr.f32.mxu0 0.0
  %2998 = vmatmul.mubr.f32.gmra.mrb[0].mxu0 %v2856
  %v2999 = vpop.f32.mrb[0].mxu0
  %v3000 = vadd.f32 %v769, %v2999
  %v3001 = vpop.f32.mrb[0].mxu0
  %3002 = vdwg.mxu0
  %v3003 = vmul.f32 %v2925, 0.5
  %v3004 = vmul.f32 %v2930, 0.5
  %v3005 = vmul.f32 %v2935, 0.5
  %v3006 = vmul.f32 %v2940, 0.5
  %v3007 = vmul.f32 %v2945, 0.5
  %v3008 = vmul.f32 %v2950, 0.5
  %v3009 = vmul.f32 %v2955, 0.5
  %v3010 = vmul.f32 %v2960, 0.5
  %v3011 = vmul.f32 %v2965, 0.5
  %v3012 = vmul.f32 %v2970, 0.5
  %v3013 = vmul.f32 %v2975, 0.5
  %v3014 = vmul.f32 %v2980, 0.5
  %v3015 = vmul.f32 %v2985, 0.5
  %v3016 = vmul.f32 %v2990, 0.5
  %v3017 = vmul.f32 %v2995, 0.5
  %v3018 = vmul.f32 %v3000, 0.5
  %vm3019 = vcmp.ge.f32.partialorder %v3003, 1.0
  %vm3020 = vcmp.ge.f32.partialorder %v3004, 1.0
  %vm3021 = vcmp.ge.f32.partialorder %v3005, 1.0
  %vm3022 = vcmp.ge.f32.partialorder %v3006, 1.0
  %vm3023 = vcmp.ge.f32.partialorder %v3007, 1.0
  %vm3024 = vcmp.ge.f32.partialorder %v3008, 1.0
  %vm3025 = vcmp.ge.f32.partialorder %v3009, 1.0
  %vm3026 = vcmp.ge.f32.partialorder %v3010, 1.0
  %vm3027 = vcmp.ge.f32.partialorder %v3011, 1.0
  %vm3028 = vcmp.ge.f32.partialorder %v3012, 1.0
  %vm3029 = vcmp.ge.f32.partialorder %v3013, 1.0
  %vm3030 = vcmp.ge.f32.partialorder %v3014, 1.0
  %vm3031 = vcmp.ge.f32.partialorder %v3015, 1.0
  %vm3032 = vcmp.ge.f32.partialorder %v3016, 1.0
  %vm3033 = vcmp.ge.f32.partialorder %v3017, 1.0
  %vm3034 = vcmp.ge.f32.partialorder %v3018, 1.0
  %v3035 = vsel %vm3019, 1, 0
  %v3036 = vsel %vm3020, 1, 0
  %v3037 = vsel %vm3021, 1, 0
  %v3038 = vsel %vm3022, 1, 0
  %v3039 = vsel %vm3023, 1, 0
  %v3040 = vsel %vm3024, 1, 0
  %v3041 = vsel %vm3025, 1, 0
  %v3042 = vsel %vm3026, 1, 0
  %v3043 = vsel %vm3027, 1, 0
  %v3044 = vsel %vm3028, 1, 0
  %v3045 = vsel %vm3029, 1, 0
  %v3046 = vsel %vm3030, 1, 0
  %v3047 = vsel %vm3031, 1, 0
  %v3048 = vsel %vm3032, 1, 0
  %v3049 = vsel %vm3033, 1, 0
  %v3050 = vsel %vm3034, 1, 0
  %v3051 = vcvt.s32.f32 %v3035
  %v3052 = vcvt.s32.f32 %v3036
  %v3053 = vcvt.s32.f32 %v3037
  %v3054 = vcvt.s32.f32 %v3038
  %v3055 = vcvt.s32.f32 %v3039
  %v3056 = vcvt.s32.f32 %v3040
  %v3057 = vcvt.s32.f32 %v3041
  %v3058 = vcvt.s32.f32 %v3042
  %v3059 = vcvt.s32.f32 %v3043
  %v3060 = vcvt.s32.f32 %v3044
  %v3061 = vcvt.s32.f32 %v3045
  %v3062 = vcvt.s32.f32 %v3046
  %v3063 = vcvt.s32.f32 %v3047
  %v3064 = vcvt.s32.f32 %v3048
  %v3065 = vcvt.s32.f32 %v3049
  %v3066 = vcvt.s32.f32 %v3050
  %v3067 = vsub.f32 1.0, %v3051
  %v3068 = vsub.f32 1.0, %v3052
  %v3069 = vsub.f32 1.0, %v3053
  %v3070 = vsub.f32 1.0, %v3054
  %v3071 = vsub.f32 1.0, %v3055
  %v3072 = vsub.f32 1.0, %v3056
  %v3073 = vsub.f32 1.0, %v3057
  %v3074 = vsub.f32 1.0, %v3058
  %v3075 = vsub.f32 1.0, %v3059
  %v3076 = vsub.f32 1.0, %v3060
  %v3077 = vsub.f32 1.0, %v3061
  %v3078 = vsub.f32 1.0, %v3062
  %v3079 = vsub.f32 1.0, %v3063
  %v3080 = vsub.f32 1.0, %v3064
  %v3081 = vsub.f32 1.0, %v3065
  %v3082 = vsub.f32 1.0, %v3066
  %v3083 = vmul.f32 %v3003, %v3067
  %v3084 = vmul.f32 %v3004, %v3068
  %v3085 = vmul.f32 %v3005, %v3069
  %v3086 = vmul.f32 %v3006, %v3070
  %v3087 = vmul.f32 %v3007, %v3071
  %v3088 = vmul.f32 %v3008, %v3072
  %v3089 = vmul.f32 %v3009, %v3073
  %v3090 = vmul.f32 %v3010, %v3074
  %v3091 = vmul.f32 %v3011, %v3075
  %v3092 = vmul.f32 %v3012, %v3076
  %v3093 = vmul.f32 %v3013, %v3077
  %v3094 = vmul.f32 %v3014, %v3078
  %v3095 = vmul.f32 %v3015, %v3079
  %v3096 = vmul.f32 %v3016, %v3080
  %v3097 = vmul.f32 %v3017, %v3081
  %v3098 = vmul.f32 %v3018, %v3082
  %3099 = vst [vmem:[#allocation10] sm:$0xff] %v3083
  %3100 = vst [vmem:[#allocation10 + $0x8] sm:$0xff] %v3084
  %3101 = vst [vmem:[#allocation10 + $0x10] sm:$0xff] %v3085
  %3102 = vst [vmem:[#allocation10 + $0x18] sm:$0xff] %v3086
  %3103 = vst [vmem:[#allocation10 + $0x20] sm:$0xff] %v3087
  %3104 = vst [vmem:[#allocation10 + $0x28] sm:$0xff] %v3088
  %3105 = vst [vmem:[#allocation10 + $0x30] sm:$0xff] %v3089
  %3106 = vst [vmem:[#allocation10 + $0x38] sm:$0xff] %v3090
  %3107 = vst [vmem:[#allocation10 + $0x40] sm:$0xff] %v3091
  %3108 = vst [vmem:[#allocation10 + $0x48] sm:$0xff] %v3092
  %3109 = vst [vmem:[#allocation10 + $0x50] sm:$0xff] %v3093
  %3110 = vst [vmem:[#allocation10 + $0x58] sm:$0xff] %v3094
  %3111 = vst [vmem:[#allocation10 + $0x60] sm:$0xff] %v3095
  %3112 = vst [vmem:[#allocation10 + $0x68] sm:$0xff] %v3096
  %3113 = vst [vmem:[#allocation10 + $0x70] sm:$0xff] %v3097
  %3114 = vst [vmem:[#allocation10 + $0x78] sm:$0xff] %v3098
  %3115 = vmatprep.subr.mxu0 0.0
  %3116 = vmatpush1.msra.mxu0 %v3051
  %3117 = vmatprep.subr.mxu0 0.0
  %3118 = vmatpush1.msra.mxu0 %v3052
  %3119 = vmatprep.subr.mxu0 0.0
  %3120 = vmatpush1.msra.mxu0 %v3053
  %3121 = vmatprep.subr.mxu0 0.0
  %3122 = vmatpush1.msra.mxu0 %v3054
  %3123 = vmatprep.subr.mxu0 0.0
  %3124 = vmatpush1.msra.mxu0 %v3055
  %3125 = vmatprep.subr.mxu0 0.0
  %3126 = vmatpush1.msra.mxu0 %v3056
  %3127 = vmatprep.subr.mxu0 0.0
  %3128 = vmatpush1.msra.mxu0 %v3057
  %3129 = vmatprep.subr.mxu0 0.0
  %3130 = vmatpush1.msra.mxu0 %v3058
  %3131 = vmatprep.subr.mxu0 0.0
  %3132 = vmatpush1.msra.mxu0 %v3059
  %3133 = vmatprep.subr.mxu0 0.0
  %3134 = vmatpush1.msra.mxu0 %v3060
  %3135 = vmatprep.subr.mxu0 0.0
  %3136 = vmatpush1.msra.mxu0 %v3061
  %3137 = vmatprep.subr.mxu0 0.0
  %3138 = vmatpush1.msra.mxu0 %v3062
  %3139 = vmatprep.subr.mxu0 0.0
  %3140 = vmatpush1.msra.mxu0 %v3063
  %3141 = vmatprep.subr.mxu0 0.0
  %3142 = vmatpush1.msra.mxu0 %v3064
  %3143 = vmatprep.subr.mxu0 0.0
  %3144 = vmatpush1.msra.mxu0 %v3065
  %3145 = vmatprep.subr.mxu0 0.0
  %3146 = vmatpush1.msra.mxu0 %v3066
  %3147 = vmatprep.subr.mxu0 0.0
  %3148 = vmatpush1.msra.mxu0 0.0
  %3149 = vmatprep.subr.mxu0 0.0
  %3150 = vmatpush1.msra.mxu0 0.0
  %3151 = vmatprep.subr.mxu0 0.0
  %3152 = vmatpush1.msra.mxu0 0.0
  %3153 = vmatprep.subr.mxu0 0.0
  %3154 = vmatpush1.msra.mxu0 0.0
  %3155 = vmatprep.subr.mxu0 0.0
  %3156 = vmatpush1.msra.mxu0 0.0
  %3157 = vmatprep.subr.mxu0 0.0
  %3158 = vmatpush1.msra.mxu0 0.0
  %3159 = vmatprep.subr.mxu0 0.0
  %3160 = vmatpush1.msra.mxu0 0.0
  %3161 = vmatprep.subr.mxu0 0.0
  %3162 = vmatpush1.msra.mxu0 0.0
  %3163 = vmatprep.subr.mxu0 0.0
  %3164 = vmatpush1.msra.mxu0 0.0
  %3165 = vmatprep.subr.mxu0 0.0
  %3166 = vmatpush1.msra.mxu0 0.0
  %3167 = vmatprep.subr.mxu0 0.0
  %3168 = vmatpush1.msra.mxu0 0.0
  %3169 = vmatprep.subr.mxu0 0.0
  %3170 = vmatpush1.msra.mxu0 0.0
  %3171 = vmatprep.subr.mxu0 0.0
  %3172 = vmatpush1.msra.mxu0 0.0
  %3173 = vmatprep.subr.mxu0 0.0
  %3174 = vmatpush1.msra.mxu0 0.0
  %3175 = vmatprep.subr.mxu0 0.0
  %3176 = vmatpush1.msra.mxu0 0.0
  %3177 = vmatprep.subr.mxu0 0.0
  %3178 = vmatpush1.msra.mxu0 0.0
  %3179 = vmatprep.mubr.f32.mxu0 0.0
  %3180 = vmatmul.mubr.f32.gmra.mrb[0].mxu0 %v603
  %v3181 = vpop.f32.mrb[0].mxu0
  %v3182 = vadd.f32 %v774, %v3181
  %v3183 = vpop.f32.mrb[0].mxu0
  %3184 = vmatprep.mubr.f32.mxu0 0.0
  %3185 = vmatmul.mubr.f32.gmra.mrb[0].mxu0 %v604
  %v3186 = vpop.f32.mrb[0].mxu0
  %v3187 = vadd.f32 %v779, %v3186
  %v3188 = vpop.f32.mrb[0].mxu0
  %3189 = vmatprep.mubr.f32.mxu0 0.0
  %3190 = vmatmul.mubr.f32.gmra.mrb[0].mxu0 %v605
  %v3191 = vpop.f32.mrb[0].mxu0
  %v3192 = vadd.f32 %v784, %v3191
  %v3193 = vpop.f32.mrb[0].mxu0
  %3194 = vmatprep.mubr.f32.mxu0 0.0
  %3195 = vmatmul.mubr.f32.gmra.mrb[0].mxu0 %v606
  %v3196 = vpop.f32.mrb[0].mxu0
  %v3197 = vadd.f32 %v789, %v3196
  %v3198 = vpop.f32.mrb[0].mxu0
  %3199 = vdwg.mxu0
  %v3200 = vmul.f32 %v3182, 0.5
  %v3201 = vmul.f32 %v3187, 0.5
  %v3202 = vmul.f32 %v3192, 0.5
  %v3203 = vmul.f32 %v3197, 0.5
  %vm3204 = vcmp.ge.f32.partialorder %v3200, 1.0
  %vm3205 = vcmp.ge.f32.partialorder %v3201, 1.0
  %vm3206 = vcmp.ge.f32.partialorder %v3202, 1.0
  %vm3207 = vcmp.ge.f32.partialorder %v3203, 1.0
  %v3208 = vsel %vm3204, 1, 0
  %v3209 = vsel %vm3205, 1, 0
  %v3210 = vsel %vm3206, 1, 0
  %v3211 = vsel %vm3207, 1, 0
  %v3212 = vcvt.s32.f32 %v3208
  %v3213 = vcvt.s32.f32 %v3209
  %v3214 = vcvt.s32.f32 %v3210
  %v3215 = vcvt.s32.f32 %v3211
  %v3216 = vsub.f32 1.0, %v3212
  %v3217 = vsub.f32 1.0, %v3213
  %v3218 = vsub.f32 1.0, %v3214
  %v3219 = vsub.f32 1.0, %v3215
  %v3220 = vmul.f32 %v3200, %v3216
  %v3221 = vmul.f32 %v3201, %v3217
  %v3222 = vmul.f32 %v3202, %v3218
  %v3223 = vmul.f32 %v3203, %v3219
  %3224 = vst [vmem:[#allocation11] sm:$0xff] %v3220
  %3225 = vst [vmem:[#allocation11 + $0x8] sm:$0xff] %v3221
  %3226 = vst [vmem:[#allocation11 + $0x10] sm:$0xff] %v3222
  %3227 = vst [vmem:[#allocation11 + $0x18] sm:$0xff] %v3223
  %v3228 = vadd.f32 %v2806, %v3212
  %v3229 = vadd.f32 %v2807, %v3213
  %v3230 = vadd.f32 %v2808, %v3214
  %v3231 = vadd.f32 %v2809, %v3215
  %3232 = vmatprep.subr.mxu0 0.0
  %3233 = vmatpush1.msra.mxu0 %v230
  %3234 = vmatprep.subr.mxu0 0.0
  %3235 = vmatpush1.msra.mxu0 %v231
  %3236 = vmatprep.subr.mxu0 0.0
  %3237 = vmatpush1.msra.mxu0 %v232
  %3238 = vmatprep.subr.mxu0 0.0
  %3239 = vmatpush1.msra.mxu0 %v233
  %3240 = vmatprep.subr.mxu0 0.0
  %3241 = vmatpush1.msra.mxu0 0.0
  %3242 = vmatprep.subr.mxu0 0.0
  %3243 = vmatpush1.msra.mxu0 0.0
  %3244 = vmatprep.subr.mxu0 0.0
  %3245 = vmatpush1.msra.mxu0 0.0
  %3246 = vmatprep.subr.mxu0 0.0
  %3247 = vmatpush1.msra.mxu0 0.0
  %3248 = vmatprep.subr.mxu0 0.0
  %3249 = vmatpush1.msra.mxu0 0.0
  %3250 = vmatprep.subr.mxu0 0.0
  %3251 = vmatpush1.msra.mxu0 0.0
  %3252 = vmatprep.subr.mxu0 0.0
  %3253 = vmatpush1.msra.mxu0 0.0
  %3254 = vmatprep.subr.mxu0 0.0
  %3255 = vmatpush1.msra.mxu0 0.0
  %3256 = vmatprep.subr.mxu0 0.0
  %3257 = vmatpush1.msra.mxu0 0.0
  %3258 = vmatprep.subr.mxu0 0.0
  %3259 = vmatpush1.msra.mxu0 0.0
  %3260 = vmatprep.subr.mxu0 0.0
  %3261 = vmatpush1.msra.mxu0 0.0
  %3262 = vmatprep.subr.mxu0 0.0
  %3263 = vmatpush1.msra.mxu0 0.0
  %3264 = vmatprep.subr.mxu0 0.0
  %3265 = vmatpush1.msra.mxu0 0.0
  %3266 = vmatprep.subr.mxu0 0.0
  %3267 = vmatpush1.msra.mxu0 0.0
  %3268 = vmatprep.subr.mxu0 0.0
  %3269 = vmatpush1.msra.mxu0 0.0
  %3270 = vmatprep.subr.mxu0 0.0
  %3271 = vmatpush1.msra.mxu0 0.0
  %3272 = vmatprep.subr.mxu0 0.0
  %3273 = vmatpush1.msra.mxu0 0.0
  %3274 = vmatprep.subr.mxu0 0.0
  %3275 = vmatpush1.msra.mxu0 0.0
  %3276 = vmatprep.subr.mxu0 0.0
  %3277 = vmatpush1.msra.mxu0 0.0
  %3278 = vmatprep.subr.mxu0 0.0
  %3279 = vmatpush1.msra.mxu0 0.0
  %3280 = vmatprep.subr.mxu0 0.0
  %3281 = vmatpush1.msra.mxu0 0.0
  %3282 = vmatprep.subr.mxu0 0.0
  %3283 = vmatpush1.msra.mxu0 0.0
  %3284 = vmatprep.subr.mxu0 0.0
  %3285 = vmatpush1.msra.mxu0 0.0
  %3286 = vmatprep.subr.mxu0 0.0
  %3287 = vmatpush1.msra.mxu0 0.0
  %3288 = vmatprep.subr.mxu0 0.0
  %3289 = vmatpush1.msra.mxu0 0.0
  %3290 = vmatprep.subr.mxu0 0.0
  %3291 = vmatpush1.msra.mxu0 0.0
  %3292 = vmatprep.subr.mxu0 0.0
  %3293 = vmatpush1.msra.mxu0 0.0
  %3294 = vmatprep.subr.mxu0 0.0
  %3295 = vmatpush1.msra.mxu0 0.0
  %3296 = vmatprep.mubr.f32.mxu0 0.0
  %3297 = vmatmul.mubr.f32.gmra.mrb[0].mxu0 %v793
  %v3298 = vpop.f32.mrb[0].mxu0
  %v3299 = vadd.f32 %v362, %v3298
  %v3300 = vpop.f32.mrb[0].mxu0
  %3301 = vmatprep.mubr.f32.mxu0 0.0
  %3302 = vmatmul.mubr.f32.gmra.mrb[0].mxu0 %v796
  %v3303 = vpop.f32.mrb[0].mxu0
  %v3304 = vadd.f32 %v367, %v3303
  %v3305 = vpop.f32.mrb[0].mxu0
  %3306 = vmatprep.mubr.f32.mxu0 0.0
  %3307 = vmatmul.mubr.f32.gmra.mrb[0].mxu0 %v799
  %v3308 = vpop.f32.mrb[0].mxu0
  %v3309 = vadd.f32 %v372, %v3308
  %v3310 = vpop.f32.mrb[0].mxu0
  %3311 = vmatprep.mubr.f32.mxu0 0.0
  %3312 = vmatmul.mubr.f32.gmra.mrb[0].mxu0 %v802
  %v3313 = vpop.f32.mrb[0].mxu0
  %v3314 = vadd.f32 %v377, %v3313
  %v3315 = vpop.f32.mrb[0].mxu0
  %3316 = vmatprep.mubr.f32.mxu0 0.0
  %3317 = vmatmul.mubr.f32.gmra.mrb[0].mxu0 %v805
  %v3318 = vpop.f32.mrb[0].mxu0
  %v3319 = vadd.f32 %v382, %v3318
  %v3320 = vpop.f32.mrb[0].mxu0
  %3321 = vmatprep.mubr.f32.mxu0 0.0
  %3322 = vmatmul.mubr.f32.gmra.mrb[0].mxu0 %v808
  %v3323 = vpop.f32.mrb[0].mxu0
  %v3324 = vadd.f32 %v387, %v3323
  %v3325 = vpop.f32.mrb[0].mxu0
  %3326 = vmatprep.mubr.f32.mxu0 0.0
  %3327 = vmatmul.mubr.f32.gmra.mrb[0].mxu0 %v811
  %v3328 = vpop.f32.mrb[0].mxu0
  %v3329 = vadd.f32 %v392, %v3328
  %v3330 = vpop.f32.mrb[0].mxu0
  %3331 = vmatprep.mubr.f32.mxu0 0.0
  %3332 = vmatmul.mubr.f32.gmra.mrb[0].mxu0 %v814
  %v3333 = vpop.f32.mrb[0].mxu0
  %v3334 = vadd.f32 %v397, %v3333
  %v3335 = vpop.f32.mrb[0].mxu0
  %3336 = vmatprep.mubr.f32.mxu0 0.0
  %3337 = vmatmul.mubr.f32.gmra.mrb[0].mxu0 %v817
  %v3338 = vpop.f32.mrb[0].mxu0
  %v3339 = vadd.f32 %v402, %v3338
  %v3340 = vpop.f32.mrb[0].mxu0
  %3341 = vmatprep.mubr.f32.mxu0 0.0
  %3342 = vmatmul.mubr.f32.gmra.mrb[0].mxu0 %v820
  %v3343 = vpop.f32.mrb[0].mxu0
  %v3344 = vadd.f32 %v407, %v3343
  %v3345 = vpop.f32.mrb[0].mxu0
  %3346 = vmatprep.mubr.f32.mxu0 0.0
  %3347 = vmatmul.mubr.f32.gmra.mrb[0].mxu0 %v823
  %v3348 = vpop.f32.mrb[0].mxu0
  %v3349 = vadd.f32 %v412, %v3348
  %v3350 = vpop.f32.mrb[0].mxu0
  %3351 = vmatprep.mubr.f32.mxu0 0.0
  %3352 = vmatmul.mubr.f32.gmra.mrb[0].mxu0 %v826
  %v3353 = vpop.f32.mrb[0].mxu0
  %v3354 = vadd.f32 %v417, %v3353
  %v3355 = vpop.f32.mrb[0].mxu0
  %3356 = vdwg.mxu0
  %v3357 = vld [vmem:[#allocation2] sm:$0xff]
  %v3358 = vld [vmem:[#allocation2 + $0x8] sm:$0xff]
  %v3359 = vld [vmem:[#allocation2 + $0x10] sm:$0xff]
  %v3360 = vld [vmem:[#allocation2 + $0x18] sm:$0xff]
  %v3361 = vld [vmem:[#allocation2 + $0x20] sm:$0xff]
  %v3362 = vld [vmem:[#allocation2 + $0x28] sm:$0xff]
  %v3363 = vld [vmem:[#allocation2 + $0x30] sm:$0xff]
  %v3364 = vld [vmem:[#allocation2 + $0x38] sm:$0xff]
  %v3365 = vld [vmem:[#allocation2 + $0x40] sm:$0xff]
  %v3366 = vld [vmem:[#allocation2 + $0x48] sm:$0xff]
  %v3367 = vld [vmem:[#allocation2 + $0x50] sm:$0xff]
  %v3368 = vld [vmem:[#allocation2 + $0x58] sm:$0xff]
  %v3369 = vsub.f32 %v3299, %v3357
  %v3370 = vsub.f32 %v3304, %v3358
  %v3371 = vsub.f32 %v3309, %v3359
  %v3372 = vsub.f32 %v3314, %v3360
  %v3373 = vsub.f32 %v3319, %v3361
  %v3374 = vsub.f32 %v3324, %v3362
  %v3375 = vsub.f32 %v3329, %v3363
  %v3376 = vsub.f32 %v3334, %v3364
  %v3377 = vsub.f32 %v3339, %v3365
  %v3378 = vsub.f32 %v3344, %v3366
  %v3379 = vsub.f32 %v3349, %v3367
  %v3380 = vsub.f32 %v3354, %v3368
  %v3381 = vmul.f32 %v3369, 0.5
  %v3382 = vmul.f32 %v3370, 0.5
  %v3383 = vmul.f32 %v3371, 0.5
  %v3384 = vmul.f32 %v3372, 0.5
  %v3385 = vmul.f32 %v3373, 0.5
  %v3386 = vmul.f32 %v3374, 0.5
  %v3387 = vmul.f32 %v3375, 0.5
  %v3388 = vmul.f32 %v3376, 0.5
  %v3389 = vmul.f32 %v3377, 0.5
  %v3390 = vmul.f32 %v3378, 0.5
  %v3391 = vmul.f32 %v3379, 0.5
  %v3392 = vmul.f32 %v3380, 0.5
  %v3393 = vadd.f32 %v3357, %v3381
  %v3394 = vadd.f32 %v3358, %v3382
  %v3395 = vadd.f32 %v3359, %v3383
  %v3396 = vadd.f32 %v3360, %v3384
  %v3397 = vadd.f32 %v3361, %v3385
  %v3398 = vadd.f32 %v3362, %v3386
  %v3399 = vadd.f32 %v3363, %v3387
  %v3400 = vadd.f32 %v3364, %v3388
  %v3401 = vadd.f32 %v3365, %v3389
  %v3402 = vadd.f32 %v3366, %v3390
  %v3403 = vadd.f32 %v3367, %v3391
  %v3404 = vadd.f32 %v3368, %v3392
  %vm3405 = vcmp.ge.f32.partialorder %v3393, 1.0
  %vm3406 = vcmp.ge.f32.partialorder %v3394, 1.0
  %vm3407 = vcmp.ge.f32.partialorder %v3395, 1.0
  %vm3408 = vcmp.ge.f32.partialorder %v3396, 1.0
  %vm3409 = vcmp.ge.f32.partialorder %v3397, 1.0
  %vm3410 = vcmp.ge.f32.partialorder %v3398, 1.0
  %vm3411 = vcmp.ge.f32.partialorder %v3399, 1.0
  %vm3412 = vcmp.ge.f32.partialorder %v3400, 1.0
  %vm3413 = vcmp.ge.f32.partialorder %v3401, 1.0
  %vm3414 = vcmp.ge.f32.partialorder %v3402, 1.0
  %vm3415 = vcmp.ge.f32.partialorder %v3403, 1.0
  %vm3416 = vcmp.ge.f32.partialorder %v3404, 1.0
  %v3417 = vsel %vm3405, 1, 0
  %v3418 = vsel %vm3406, 1, 0
  %v3419 = vsel %vm3407, 1, 0
  %v3420 = vsel %vm3408, 1, 0
  %v3421 = vsel %vm3409, 1, 0
  %v3422 = vsel %vm3410, 1, 0
  %v3423 = vsel %vm3411, 1, 0
  %v3424 = vsel %vm3412, 1, 0
  %v3425 = vsel %vm3413, 1, 0
  %v3426 = vsel %vm3414, 1, 0
  %v3427 = vsel %vm3415, 1, 0
  %v3428 = vsel %vm3416, 1, 0
  %v3429 = vcvt.s32.f32 %v3417
  %v3430 = vcvt.s32.f32 %v3418
  %v3431 = vcvt.s32.f32 %v3419
  %v3432 = vcvt.s32.f32 %v3420
  %v3433 = vcvt.s32.f32 %v3421
  %v3434 = vcvt.s32.f32 %v3422
  %v3435 = vcvt.s32.f32 %v3423
  %v3436 = vcvt.s32.f32 %v3424
  %v3437 = vcvt.s32.f32 %v3425
  %v3438 = vcvt.s32.f32 %v3426
  %v3439 = vcvt.s32.f32 %v3427
  %v3440 = vcvt.s32.f32 %v3428
  %v3441 = vsub.f32 1.0, %v3429
  %v3442 = vsub.f32 1.0, %v3430
  %v3443 = vsub.f32 1.0, %v3431
  %v3444 = vsub.f32 1.0, %v3432
  %v3445 = vsub.f32 1.0, %v3433
  %v3446 = vsub.f32 1.0, %v3434
  %v3447 = vsub.f32 1.0, %v3435
  %v3448 = vsub.f32 1.0, %v3436
  %v3449 = vsub.f32 1.0, %v3437
  %v3450 = vsub.f32 1.0, %v3438
  %v3451 = vsub.f32 1.0, %v3439
  %v3452 = vsub.f32 1.0, %v3440
  %v3453 = vmul.f32 %v3393, %v3441
  %v3454 = vmul.f32 %v3394, %v3442
  %v3455 = vmul.f32 %v3395, %v3443
  %v3456 = vmul.f32 %v3396, %v3444
  %v3457 = vmul.f32 %v3397, %v3445
  %v3458 = vmul.f32 %v3398, %v3446
  %v3459 = vmul.f32 %v3399, %v3447
  %v3460 = vmul.f32 %v3400, %v3448
  %v3461 = vmul.f32 %v3401, %v3449
  %v3462 = vmul.f32 %v3402, %v3450
  %v3463 = vmul.f32 %v3403, %v3451
  %v3464 = vmul.f32 %v3404, %v3452
  %3465 = vst [vmem:[#allocation2] sm:$0xff] %v3453
  %3466 = vst [vmem:[#allocation2 + $0x8] sm:$0xff] %v3454
  %3467 = vst [vmem:[#allocation2 + $0x10] sm:$0xff] %v3455
  %3468 = vst [vmem:[#allocation2 + $0x18] sm:$0xff] %v3456
  %3469 = vst [vmem:[#allocation2 + $0x20] sm:$0xff] %v3457
  %3470 = vst [vmem:[#allocation2 + $0x28] sm:$0xff] %v3458
  %3471 = vst [vmem:[#allocation2 + $0x30] sm:$0xff] %v3459
  %3472 = vst [vmem:[#allocation2 + $0x38] sm:$0xff] %v3460
  %3473 = vst [vmem:[#allocation2 + $0x40] sm:$0xff] %v3461
  %3474 = vst [vmem:[#allocation2 + $0x48] sm:$0xff] %v3462
  %3475 = vst [vmem:[#allocation2 + $0x50] sm:$0xff] %v3463
  %3476 = vst [vmem:[#allocation2 + $0x58] sm:$0xff] %v3464
  %v3477 = vmul.f32 %v3437, %v278
  %v3478 = vmul.f32 %v3438, %v279
  %v3479 = vmul.f32 %v3439, %v280
  %v3480 = vmul.f32 %v3440, %v281
  %3481 = vmatprep.subr.mxu0 0.0
  %3482 = vmatpush1.xpose.msra.mxu0 %v3433
  %3483 = vmatprep.subr.mxu0 0.0
  %3484 = vmatpush1.xpose.msra.mxu0 %v3434
  %3485 = vmatprep.subr.mxu0 0.0
  %3486 = vmatpush1.xpose.msra.mxu0 %v3435
  %3487 = vmatprep.subr.mxu0 0.0
  %3488 = vmatpush1.xpose.msra.mxu0 %v3436
  %3489 = vmatprep.subr.mxu0 0.0
  %3490 = vmatpush1.xpose.msra.mxu0 0.0
  %3491 = vmatprep.subr.mxu0 0.0
  %3492 = vmatpush1.xpose.msra.mxu0 0.0
  %3493 = vmatprep.subr.mxu0 0.0
  %3494 = vmatpush1.xpose.msra.mxu0 0.0
  %3495 = vmatprep.subr.mxu0 0.0
  %3496 = vmatpush1.xpose.msra.mxu0 0.0
  %3497 = vmatprep.subr.mxu0 0.0
  %3498 = vmatpush1.xpose.msra.mxu0 0.0
  %3499 = vmatprep.subr.mxu0 0.0
  %3500 = vmatpush1.xpose.msra.mxu0 0.0
  %3501 = vmatprep.subr.mxu0 0.0
  %3502 = vmatpush1.xpose.msra.mxu0 0.0
  %3503 = vmatprep.subr.mxu0 0.0
  %3504 = vmatpush1.xpose.msra.mxu0 0.0
  %3505 = vmatprep.subr.mxu0 0.0
  %3506 = vmatpush1.xpose.msra.mxu0 0.0
  %3507 = vmatprep.subr.mxu0 0.0
  %3508 = vmatpush1.xpose.msra.mxu0 0.0
  %3509 = vmatprep.subr.mxu0 0.0
  %3510 = vmatpush1.xpose.msra.mxu0 0.0
  %3511 = vmatprep.subr.mxu0 0.0
  %3512 = vmatpush1.xpose.msra.mxu0 0.0
  %3513 = vmatprep.subr.mxu0 0.0
  %3514 = vmatpush1.xpose.msra.mxu0 0.0
  %3515 = vmatprep.subr.mxu0 0.0
  %3516 = vmatpush1.xpose.msra.mxu0 0.0
  %3517 = vmatprep.subr.mxu0 0.0
  %3518 = vmatpush1.xpose.msra.mxu0 0.0
  %3519 = vmatprep.subr.mxu0 0.0
  %3520 = vmatpush1.xpose.msra.mxu0 0.0
  %3521 = vmatprep.subr.mxu0 0.0
  %3522 = vmatpush1.xpose.msra.mxu0 0.0
  %3523 = vmatprep.subr.mxu0 0.0
  %3524 = vmatpush1.xpose.msra.mxu0 0.0
  %3525 = vmatprep.subr.mxu0 0.0
  %3526 = vmatpush1.xpose.msra.mxu0 0.0
  %3527 = vmatprep.subr.mxu0 0.0
  %3528 = vmatpush1.xpose.msra.mxu0 0.0
  %3529 = vmatprep.subr.mxu0 0.0
  %3530 = vmatpush1.xpose.msra.mxu0 0.0
  %3531 = vmatprep.subr.mxu0 0.0
  %3532 = vmatpush1.xpose.msra.mxu0 0.0
  %3533 = vmatprep.subr.mxu0 0.0
  %3534 = vmatpush1.xpose.msra.mxu0 0.0
  %3535 = vmatprep.subr.mxu0 0.0
  %3536 = vmatpush1.xpose.msra.mxu0 0.0
  %3537 = vmatprep.subr.mxu0 0.0
  %3538 = vmatpush1.xpose.msra.mxu0 0.0
  %3539 = vmatprep.subr.mxu0 0.0
  %3540 = vmatpush1.xpose.msra.mxu0 0.0
  %3541 = vmatprep.subr.mxu0 0.0
  %3542 = vmatpush1.xpose.msra.mxu0 0.0
  %3543 = vmatprep.subr.mxu0 0.0
  %3544 = vmatpush1.xpose.msra.mxu0 0.0
  %3545 = vmatprep.mubr.f32.mxu0 0.0
  %3546 = vmatmul.mubr.f32.gmra.mrb[0].mxu0 %v3477
  %v3547 = vpop.f32.mrb[0].mxu0
  %v3548 = vadd.f32 0.0, %v3547
  %v3549 = vpop.f32.mrb[0].mxu0
  %3550 = vmatprep.mubr.f32.mxu0 0.0
  %3551 = vmatmul.mubr.f32.gmra.mrb[0].mxu0 %v3478
  %v3552 = vpop.f32.mrb[0].mxu0
  %v3553 = vadd.f32 0.0, %v3552
  %v3554 = vpop.f32.mrb[0].mxu0
  %3555 = vmatprep.mubr.f32.mxu0 0.0
  %3556 = vmatmul.mubr.f32.gmra.mrb[0].mxu0 %v3479
  %v3557 = vpop.f32.mrb[0].mxu0
  %v3558 = vadd.f32 0.0, %v3557
  %v3559 = vpop.f32.mrb[0].mxu0
  %3560 = vmatprep.mubr.f32.mxu0 0.0
  %3561 = vmatmul.mubr.f32.gmra.mrb[0].mxu0 %v3480
  %v3562 = vpop.f32.mrb[0].mxu0
  %v3563 = vadd.f32 0.0, %v3562
  %v3564 = vpop.f32.mrb[0].mxu0
  %3565 = vdwg.mxu0
  %v3566 = vmul.f32 %v3548, %v274
  %v3567 = vmul.f32 %v3553, %v275
  %v3568 = vmul.f32 %v3558, %v276
  %v3569 = vmul.f32 %v3563, %v277
  %v3571 = vsel %vm791, %v3566, 0
  %v3574 = vsel %vm791, %v3567, 0
  %v3577 = vsel %vm791, %v3568, 0
  %v3580 = vsel %vm791, %v3569, 0
  %3582 = vmatprep.subr.mxu0 0.0
  %3583 = vmatpush1.msra.mxu0 %v3429
  %3584 = vmatprep.subr.mxu0 0.0
  %3585 = vmatpush1.msra.mxu0 %v3430
  %3586 = vmatprep.subr.mxu0 0.0
  %3587 = vmatpush1.msra.mxu0 %v3431
  %3588 = vmatprep.subr.mxu0 0.0
  %3589 = vmatpush1.msra.mxu0 %v3432
  %3590 = vmatprep.subr.mxu0 0.0
  %3591 = vmatpush1.msra.mxu0 0.0
  %3592 = vmatprep.subr.mxu0 0.0
  %3593 = vmatpush1.msra.mxu0 0.0
  %3594 = vmatprep.subr.mxu0 0.0
  %3595 = vmatpush1.msra.mxu0 0.0
  %3596 = vmatprep.subr.mxu0 0.0
  %3597 = vmatpush1.msra.mxu0 0.0
  %3598 = vmatprep.subr.mxu0 0.0
  %3599 = vmatpush1.msra.mxu0 0.0
  %3600 = vmatprep.subr.mxu0 0.0
  %3601 = vmatpush1.msra.mxu0 0.0
  %3602 = vmatprep.subr.mxu0 0.0
  %3603 = vmatpush1.msra.mxu0 0.0
  %3604 = vmatprep.subr.mxu0 0.0
  %3605 = vmatpush1.msra.mxu0 0.0
  %3606 = vmatprep.subr.mxu0 0.0
  %3607 = vmatpush1.msra.mxu0 0.0
  %3608 = vmatprep.subr.mxu0 0.0
  %3609 = vmatpush1.msra.mxu0 0.0
  %3610 = vmatprep.subr.mxu0 0.0
  %3611 = vmatpush1.msra.mxu0 0.0
  %3612 = vmatprep.subr.mxu0 0.0
  %3613 = vmatpush1.msra.mxu0 0.0
  %3614 = vmatprep.subr.mxu0 0.0
  %3615 = vmatpush1.msra.mxu0 0.0
  %3616 = vmatprep.subr.mxu0 0.0
  %3617 = vmatpush1.msra.mxu0 0.0
  %3618 = vmatprep.subr.mxu0 0.0
  %3619 = vmatpush1.msra.mxu0 0.0
  %3620 = vmatprep.subr.mxu0 0.0
  %3621 = vmatpush1.msra.mxu0 0.0
  %3622 = vmatprep.subr.mxu0 0.0
  %3623 = vmatpush1.msra.mxu0 0.0
  %3624 = vmatprep.subr.mxu0 0.0
  %3625 = vmatpush1.msra.mxu0 0.0
  %3626 = vmatprep.subr.mxu0 0.0
  %3627 = vmatpush1.msra.mxu0 0.0
  %3628 = vmatprep.subr.mxu0 0.0
  %3629 = vmatpush1.msra.mxu0 0.0
  %3630 = vmatprep.subr.mxu0 0.0
  %3631 = vmatpush1.msra.mxu0 0.0
  %3632 = vmatprep.subr.mxu0 0.0
  %3633 = vmatpush1.msra.mxu0 0.0
  %3634 = vmatprep.subr.mxu0 0.0
  %3635 = vmatpush1.msra.mxu0 0.0
  %3636 = vmatprep.subr.mxu0 0.0
  %3637 = vmatpush1.msra.mxu0 0.0
  %3638 = vmatprep.subr.mxu0 0.0
  %3639 = vmatpush1.msra.mxu0 0.0
  %3640 = vmatprep.subr.mxu0 0.0
  %3641 = vmatpush1.msra.mxu0 0.0
  %3642 = vmatprep.subr.mxu0 0.0
  %3643 = vmatpush1.msra.mxu0 0.0
  %3644 = vmatprep.subr.mxu0 0.0
  %3645 = vmatpush1.msra.mxu0 0.0
  %3646 = vmatprep.mubr.f32.mxu0 0.0
  %3647 = vmatmul.mubr.f32.gmra.mrb[0].mxu0 %v3571
  %v3648 = vpop.f32.mrb[0].mxu0
  %v3649 = vadd.f32 0.0, %v3648
  %v3650 = vpop.f32.mrb[0].mxu0
  %3651 = vmatprep.mubr.f32.mxu0 0.0
  %3652 = vmatmul.mubr.f32.gmra.mrb[0].mxu0 %v3574
  %v3653 = vpop.f32.mrb[0].mxu0
  %v3654 = vadd.f32 0.0, %v3653
  %v3655 = vpop.f32.mrb[0].mxu0
  %3656 = vmatprep.mubr.f32.mxu0 0.0
  %3657 = vmatmul.mubr.f32.gmra.mrb[0].mxu0 %v3577
  %v3658 = vpop.f32.mrb[0].mxu0
  %v3659 = vadd.f32 0.0, %v3658
  %v3660 = vpop.f32.mrb[0].mxu0
  %3661 = vmatprep.mubr.f32.mxu0 0.0
  %3662 = vmatmul.mubr.f32.gmra.mrb[0].mxu0 %v3580
  %v3663 = vpop.f32.mrb[0].mxu0
  %v3664 = vadd.f32 0.0, %v3663
  %v3665 = vpop.f32.mrb[0].mxu0
  %3666 = vdwg.mxu0
  %v3667 = vmul.f32 %v3649, %v278
  %v3668 = vmul.f32 %v3654, %v279
  %v3669 = vmul.f32 %v3659, %v280
  %v3670 = vmul.f32 %v3664, %v281
  %v3671 = vmul.f32 %v3437, %v283
  %v3672 = vmul.f32 %v3438, %v284
  %v3673 = vmul.f32 %v3439, %v285
  %v3674 = vmul.f32 %v3440, %v286
  %3675 = vmatprep.subr.mxu0 0.0
  %3676 = vmatpush1.xpose.msra.mxu0 %v3433
  %3677 = vmatprep.subr.mxu0 0.0
  %3678 = vmatpush1.xpose.msra.mxu0 %v3434
  %3679 = vmatprep.subr.mxu0 0.0
  %3680 = vmatpush1.xpose.msra.mxu0 %v3435
  %3681 = vmatprep.subr.mxu0 0.0
  %3682 = vmatpush1.xpose.msra.mxu0 %v3436
  %3683 = vmatprep.subr.mxu0 0.0
  %3684 = vmatpush1.xpose.msra.mxu0 0.0
  %3685 = vmatprep.subr.mxu0 0.0
  %3686 = vmatpush1.xpose.msra.mxu0 0.0
  %3687 = vmatprep.subr.mxu0 0.0
  %3688 = vmatpush1.xpose.msra.mxu0 0.0
  %3689 = vmatprep.subr.mxu0 0.0
  %3690 = vmatpush1.xpose.msra.mxu0 0.0
  %3691 = vmatprep.subr.mxu0 0.0
  %3692 = vmatpush1.xpose.msra.mxu0 0.0
  %3693 = vmatprep.subr.mxu0 0.0
  %3694 = vmatpush1.xpose.msra.mxu0 0.0
  %3695 = vmatprep.subr.mxu0 0.0
  %3696 = vmatpush1.xpose.msra.mxu0 0.0
  %3697 = vmatprep.subr.mxu0 0.0
  %3698 = vmatpush1.xpose.msra.mxu0 0.0
  %3699 = vmatprep.subr.mxu0 0.0
  %3700 = vmatpush1.xpose.msra.mxu0 0.0
  %3701 = vmatprep.subr.mxu0 0.0
  %3702 = vmatpush1.xpose.msra.mxu0 0.0
  %3703 = vmatprep.subr.mxu0 0.0
  %3704 = vmatpush1.xpose.msra.mxu0 0.0
  %3705 = vmatprep.subr.mxu0 0.0
  %3706 = vmatpush1.xpose.msra.mxu0 0.0
  %3707 = vmatprep.subr.mxu0 0.0
  %3708 = vmatpush1.xpose.msra.mxu0 0.0
  %3709 = vmatprep.subr.mxu0 0.0
  %3710 = vmatpush1.xpose.msra.mxu0 0.0
  %3711 = vmatprep.subr.mxu0 0.0
  %3712 = vmatpush1.xpose.msra.mxu0 0.0
  %3713 = vmatprep.subr.mxu0 0.0
  %3714 = vmatpush1.xpose.msra.mxu0 0.0
  %3715 = vmatprep.subr.mxu0 0.0
  %3716 = vmatpush1.xpose.msra.mxu0 0.0
  %3717 = vmatprep.subr.mxu0 0.0
  %3718 = vmatpush1.xpose.msra.mxu0 0.0
  %3719 = vmatprep.subr.mxu0 0.0
  %3720 = vmatpush1.xpose.msra.mxu0 0.0
  %3721 = vmatprep.subr.mxu0 0.0
  %3722 = vmatpush1.xpose.msra.mxu0 0.0
  %3723 = vmatprep.subr.mxu0 0.0
  %3724 = vmatpush1.xpose.msra.mxu0 0.0
  %3725 = vmatprep.subr.mxu0 0.0
  %3726 = vmatpush1.xpose.msra.mxu0 0.0
  %3727 = vmatprep.subr.mxu0 0.0
  %3728 = vmatpush1.xpose.msra.mxu0 0.0
  %3729 = vmatprep.subr.mxu0 0.0
  %3730 = vmatpush1.xpose.msra.mxu0 0.0
  %3731 = vmatprep.subr.mxu0 0.0
  %3732 = vmatpush1.xpose.msra.mxu0 0.0
  %3733 = vmatprep.subr.mxu0 0.0
  %3734 = vmatpush1.xpose.msra.mxu0 0.0
  %3735 = vmatprep.subr.mxu0 0.0
  %3736 = vmatpush1.xpose.msra.mxu0 0.0
  %3737 = vmatprep.subr.mxu0 0.0
  %3738 = vmatpush1.xpose.msra.mxu0 0.0
  %3739 = vmatprep.mubr.f32.mxu0 0.0
  %3740 = vmatmul.mubr.f32.gmra.mrb[0].mxu0 %v3671
  %v3741 = vpop.f32.mrb[0].mxu0
  %v3742 = vadd.f32 0.0, %v3741
  %v3743 = vpop.f32.mrb[0].mxu0
  %3744 = vmatprep.mubr.f32.mxu0 0.0
  %3745 = vmatmul.mubr.f32.gmra.mrb[0].mxu0 %v3672
  %v3746 = vpop.f32.mrb[0].mxu0
  %v3747 = vadd.f32 0.0, %v3746
  %v3748 = vpop.f32.mrb[0].mxu0
  %3749 = vmatprep.mubr.f32.mxu0 0.0
  %3750 = vmatmul.mubr.f32.gmra.mrb[0].mxu0 %v3673
  %v3751 = vpop.f32.mrb[0].mxu0
  %v3752 = vadd.f32 0.0, %v3751
  %v3753 = vpop.f32.mrb[0].mxu0
  %3754 = vmatprep.mubr.f32.mxu0 0.0
  %3755 = vmatmul.mubr.f32.gmra.mrb[0].mxu0 %v3674
  %v3756 = vpop.f32.mrb[0].mxu0
  %v3757 = vadd.f32 0.0, %v3756
  %v3758 = vpop.f32.mrb[0].mxu0
  %3759 = vdwg.mxu0
  %v3760 = vmul.f32 %v3742, %v274
  %v3761 = vmul.f32 %v3747, %v275
  %v3762 = vmul.f32 %v3752, %v276
  %v3763 = vmul.f32 %v3757, %v277
  %v3765 = vsel %vm791, %v3760, 0
  %v3768 = vsel %vm791, %v3761, 0
  %v3771 = vsel %vm791, %v3762, 0
  %v3774 = vsel %vm791, %v3763, 0
  %3776 = vmatprep.subr.mxu0 0.0
  %3777 = vmatpush1.msra.mxu0 %v3429
  %3778 = vmatprep.subr.mxu0 0.0
  %3779 = vmatpush1.msra.mxu0 %v3430
  %3780 = vmatprep.subr.mxu0 0.0
  %3781 = vmatpush1.msra.mxu0 %v3431
  %3782 = vmatprep.subr.mxu0 0.0
  %3783 = vmatpush1.msra.mxu0 %v3432
  %3784 = vmatprep.subr.mxu0 0.0
  %3785 = vmatpush1.msra.mxu0 0.0
  %3786 = vmatprep.subr.mxu0 0.0
  %3787 = vmatpush1.msra.mxu0 0.0
  %3788 = vmatprep.subr.mxu0 0.0
  %3789 = vmatpush1.msra.mxu0 0.0
  %3790 = vmatprep.subr.mxu0 0.0
  %3791 = vmatpush1.msra.mxu0 0.0
  %3792 = vmatprep.subr.mxu0 0.0
  %3793 = vmatpush1.msra.mxu0 0.0
  %3794 = vmatprep.subr.mxu0 0.0
  %3795 = vmatpush1.msra.mxu0 0.0
  %3796 = vmatprep.subr.mxu0 0.0
  %3797 = vmatpush1.msra.mxu0 0.0
  %3798 = vmatprep.subr.mxu0 0.0
  %3799 = vmatpush1.msra.mxu0 0.0
  %3800 = vmatprep.subr.mxu0 0.0
  %3801 = vmatpush1.msra.mxu0 0.0
  %3802 = vmatprep.subr.mxu0 0.0
  %3803 = vmatpush1.msra.mxu0 0.0
  %3804 = vmatprep.subr.mxu0 0.0
  %3805 = vmatpush1.msra.mxu0 0.0
  %3806 = vmatprep.subr.mxu0 0.0
  %3807 = vmatpush1.msra.mxu0 0.0
  %3808 = vmatprep.subr.mxu0 0.0
  %3809 = vmatpush1.msra.mxu0 0.0
  %3810 = vmatprep.subr.mxu0 0.0
  %3811 = vmatpush1.msra.mxu0 0.0
  %3812 = vmatprep.subr.mxu0 0.0
  %3813 = vmatpush1.msra.mxu0 0.0
  %3814 = vmatprep.subr.mxu0 0.0
  %3815 = vmatpush1.msra.mxu0 0.0
  %3816 = vmatprep.subr.mxu0 0.0
  %3817 = vmatpush1.msra.mxu0 0.0
  %3818 = vmatprep.subr.mxu0 0.0
  %3819 = vmatpush1.msra.mxu0 0.0
  %3820 = vmatprep.subr.mxu0 0.0
  %3821 = vmatpush1.msra.mxu0 0.0
  %3822 = vmatprep.subr.mxu0 0.0
  %3823 = vmatpush1.msra.mxu0 0.0
  %3824 = vmatprep.subr.mxu0 0.0
  %3825 = vmatpush1.msra.mxu0 0.0
  %3826 = vmatprep.subr.mxu0 0.0
  %3827 = vmatpush1.msra.mxu0 0.0
  %3828 = vmatprep.subr.mxu0 0.0
  %3829 = vmatpush1.msra.mxu0 0.0
  %3830 = vmatprep.subr.mxu0 0.0
  %3831 = vmatpush1.msra.mxu0 0.0
  %3832 = vmatprep.subr.mxu0 0.0
  %3833 = vmatpush1.msra.mxu0 0.0
  %3834 = vmatprep.subr.mxu0 0.0
  %3835 = vmatpush1.msra.mxu0 0.0
  %3836 = vmatprep.subr.mxu0 0.0
  %3837 = vmatpush1.msra.mxu0 0.0
  %3838 = vmatprep.subr.mxu0 0.0
  %3839 = vmatpush1.msra.mxu0 0.0
  %3840 = vmatprep.mubr.f32.mxu0 0.0
  %3841 = vmatmul.mubr.f32.gmra.mrb[0].mxu0 %v3765
  %v3842 = vpop.f32.mrb[0].mxu0
  %v3843 = vadd.f32 0.0, %v3842
  %v3844 = vpop.f32.mrb[0].mxu0
  %3845 = vmatprep.mubr.f32.mxu0 0.0
  %3846 = vmatmul.mubr.f32.gmra.mrb[0].mxu0 %v3768
  %v3847 = vpop.f32.mrb[0].mxu0
  %v3848 = vadd.f32 0.0, %v3847
  %v3849 = vpop.f32.mrb[0].mxu0
  %3850 = vmatprep.mubr.f32.mxu0 0.0
  %3851 = vmatmul.mubr.f32.gmra.mrb[0].mxu0 %v3771
  %v3852 = vpop.f32.mrb[0].mxu0
  %v3853 = vadd.f32 0.0, %v3852
  %v3854 = vpop.f32.mrb[0].mxu0
  %3855 = vmatprep.mubr.f32.mxu0 0.0
  %3856 = vmatmul.mubr.f32.gmra.mrb[0].mxu0 %v3774
  %v3857 = vpop.f32.mrb[0].mxu0
  %v3858 = vadd.f32 0.0, %v3857
  %v3859 = vpop.f32.mrb[0].mxu0
  %3860 = vdwg.mxu0
  %v3861 = vmul.f32 %v3843, %v283
  %v3862 = vmul.f32 %v3848, %v284
  %v3863 = vmul.f32 %v3853, %v285
  %v3864 = vmul.f32 %v3858, %v286
  %v3865 = vadd.f32 %v3667, %v3861
  %v3866 = vadd.f32 %v3668, %v3862
  %v3867 = vadd.f32 %v3669, %v3863
  %v3868 = vadd.f32 %v3670, %v3864
  %v3869 = vmul.f32 %v3865, 0.125
  %v3870 = vmul.f32 %v3866, 0.125
  %v3871 = vmul.f32 %v3867, 0.125
  %v3872 = vmul.f32 %v3868, 0.125
  %v3873 = vld [vmem:[#allocation3] sm:$0xff]
  %v3874 = vld [vmem:[#allocation3 + $0x8] sm:$0xff]
  %v3875 = vld [vmem:[#allocation3 + $0x10] sm:$0xff]
  %v3876 = vld [vmem:[#allocation3 + $0x18] sm:$0xff]
  %v3877 = vsub.f32 %v3869, %v3873
  %v3878 = vsub.f32 %v3870, %v3874
  %v3879 = vsub.f32 %v3871, %v3875
  %v3880 = vsub.f32 %v3872, %v3876
  %v3881 = vmul.f32 %v3877, 0.5
  %v3882 = vmul.f32 %v3878, 0.5
  %v3883 = vmul.f32 %v3879, 0.5
  %v3884 = vmul.f32 %v3880, 0.5
  %v3885 = vadd.f32 %v3873, %v3881
  %v3886 = vadd.f32 %v3874, %v3882
  %v3887 = vadd.f32 %v3875, %v3883
  %v3888 = vadd.f32 %v3876, %v3884
  %vm3889 = vcmp.ge.f32.partialorder %v3885, 0.5
  %vm3890 = vcmp.ge.f32.partialorder %v3886, 0.5
  %vm3891 = vcmp.ge.f32.partialorder %v3887, 0.5
  %vm3892 = vcmp.ge.f32.partialorder %v3888, 0.5
  %v3893 = vsel %vm3889, 1, 0
  %v3894 = vsel %vm3890, 1, 0
  %v3895 = vsel %vm3891, 1, 0
  %v3896 = vsel %vm3892, 1, 0
  %v3897 = vcvt.s32.f32 %v3893
  %v3898 = vcvt.s32.f32 %v3894
  %v3899 = vcvt.s32.f32 %v3895
  %v3900 = vcvt.s32.f32 %v3896
  %v3901 = vsub.f32 1.0, %v3897
  %v3902 = vsub.f32 1.0, %v3898
  %v3903 = vsub.f32 1.0, %v3899
  %v3904 = vsub.f32 1.0, %v3900
  %v3905 = vmul.f32 %v3885, %v3901
  %v3906 = vmul.f32 %v3886, %v3902
  %v3907 = vmul.f32 %v3887, %v3903
  %v3908 = vmul.f32 %v3888, %v3904
  %3909 = vst [vmem:[#allocation3] sm:$0xff] %v3905
  %3910 = vst [vmem:[#allocation3 + $0x8] sm:$0xff] %v3906
  %3911 = vst [vmem:[#allocation3 + $0x10] sm:$0xff] %v3907
  %3912 = vst [vmem:[#allocation3 + $0x18] sm:$0xff] %v3908
  %3913 = vmatprep.subr.mxu0 0.0
  %3914 = vmatpush1.msra.mxu0 %v3897
  %3915 = vmatprep.subr.mxu0 0.0
  %3916 = vmatpush1.msra.mxu0 %v3898
  %3917 = vmatprep.subr.mxu0 0.0
  %3918 = vmatpush1.msra.mxu0 %v3899
  %3919 = vmatprep.subr.mxu0 0.0
  %3920 = vmatpush1.msra.mxu0 %v3900
  %3921 = vmatprep.subr.mxu0 0.0
  %3922 = vmatpush1.msra.mxu0 0.0
  %3923 = vmatprep.subr.mxu0 0.0
  %3924 = vmatpush1.msra.mxu0 0.0
  %3925 = vmatprep.subr.mxu0 0.0
  %3926 = vmatpush1.msra.mxu0 0.0
  %3927 = vmatprep.subr.mxu0 0.0
  %3928 = vmatpush1.msra.mxu0 0.0
  %3929 = vmatprep.subr.mxu0 0.0
  %3930 = vmatpush1.msra.mxu0 0.0
  %3931 = vmatprep.subr.mxu0 0.0
  %3932 = vmatpush1.msra.mxu0 0.0
  %3933 = vmatprep.subr.mxu0 0.0
  %3934 = vmatpush1.msra.mxu0 0.0
  %3935 = vmatprep.subr.mxu0 0.0
  %3936 = vmatpush1.msra.mxu0 0.0
  %3937 = vmatprep.subr.mxu0 0.0
  %3938 = vmatpush1.msra.mxu0 0.0
  %3939 = vmatprep.subr.mxu0 0.0
  %3940 = vmatpush1.msra.mxu0 0.0
  %3941 = vmatprep.subr.mxu0 0.0
  %3942 = vmatpush1.msra.mxu0 0.0
  %3943 = vmatprep.subr.mxu0 0.0
  %3944 = vmatpush1.msra.mxu0 0.0
  %3945 = vmatprep.subr.mxu0 0.0
  %3946 = vmatpush1.msra.mxu0 0.0
  %3947 = vmatprep.subr.mxu0 0.0
  %3948 = vmatpush1.msra.mxu0 0.0
  %3949 = vmatprep.subr.mxu0 0.0
  %3950 = vmatpush1.msra.mxu0 0.0
  %3951 = vmatprep.subr.mxu0 0.0
  %3952 = vmatpush1.msra.mxu0 0.0
  %3953 = vmatprep.subr.mxu0 0.0
  %3954 = vmatpush1.msra.mxu0 0.0
  %3955 = vmatprep.subr.mxu0 0.0
  %3956 = vmatpush1.msra.mxu0 0.0
  %3957 = vmatprep.subr.mxu0 0.0
  %3958 = vmatpush1.msra.mxu0 0.0
  %3959 = vmatprep.subr.mxu0 0.0
  %3960 = vmatpush1.msra.mxu0 0.0
  %3961 = vmatprep.subr.mxu0 0.0
  %3962 = vmatpush1.msra.mxu0 0.0
  %3963 = vmatprep.subr.mxu0 0.0
  %3964 = vmatpush1.msra.mxu0 0.0
  %3965 = vmatprep.subr.mxu0 0.0
  %3966 = vmatpush1.msra.mxu0 0.0
  %3967 = vmatprep.subr.mxu0 0.0
  %3968 = vmatpush1.msra.mxu0 0.0
  %3969 = vmatprep.subr.mxu0 0.0
  %3970 = vmatpush1.msra.mxu0 0.0
  %3971 = vmatprep.subr.mxu0 0.0
  %3972 = vmatpush1.msra.mxu0 0.0
  %3973 = vmatprep.subr.mxu0 0.0
  %3974 = vmatpush1.msra.mxu0 0.0
  %3975 = vmatprep.subr.mxu0 0.0
  %3976 = vmatpush1.msra.mxu0 0.0
  %3977 = vmatprep.mubr.f32.mxu0 0.0
  %3978 = vmatmul.mubr.f32.gmra.mrb[0].mxu0 %v1462
  %v3979 = vpop.f32.mrb[0].mxu0
  %v3980 = vadd.f32 %v422, %v3979
  %v3981 = vpop.f32.mrb[0].mxu0
  %3982 = vmatprep.mubr.f32.mxu0 0.0
  %3983 = vmatmul.mubr.f32.gmra.mrb[0].mxu0 %v1465
  %v3984 = vpop.f32.mrb[0].mxu0
  %v3985 = vadd.f32 %v427, %v3984
  %v3986 = vpop.f32.mrb[0].mxu0
  %3987 = vmatprep.mubr.f32.mxu0 0.0
  %3988 = vmatmul.mubr.f32.gmra.mrb[0].mxu0 %v1468
  %v3989 = vpop.f32.mrb[0].mxu0
  %v3990 = vadd.f32 %v432, %v3989
  %v3991 = vpop.f32.mrb[0].mxu0
  %3992 = vmatprep.mubr.f32.mxu0 0.0
  %3993 = vmatmul.mubr.f32.gmra.mrb[0].mxu0 %v1471
  %v3994 = vpop.f32.mrb[0].mxu0
  %v3995 = vadd.f32 %v437, %v3994
  %v3996 = vpop.f32.mrb[0].mxu0
  %3997 = vdwg.mxu0
  %v3998 = vld [vmem:[#allocation4] sm:$0xff]
  %v3999 = vld [vmem:[#allocation4 + $0x8] sm:$0xff]
  %v4000 = vld [vmem:[#allocation4 + $0x10] sm:$0xff]
  %v4001 = vld [vmem:[#allocation4 + $0x18] sm:$0xff]
  %v4002 = vsub.f32 %v3980, %v3998
  %v4003 = vsub.f32 %v3985, %v3999
  %v4004 = vsub.f32 %v3990, %v4000
  %v4005 = vsub.f32 %v3995, %v4001
  %v4006 = vmul.f32 %v4002, 0.5
  %v4007 = vmul.f32 %v4003, 0.5
  %v4008 = vmul.f32 %v4004, 0.5
  %v4009 = vmul.f32 %v4005, 0.5
  %v4010 = vadd.f32 %v3998, %v4006
  %v4011 = vadd.f32 %v3999, %v4007
  %v4012 = vadd.f32 %v4000, %v4008
  %v4013 = vadd.f32 %v4001, %v4009
  %vm4014 = vcmp.ge.f32.partialorder %v4010, 1.0
  %vm4015 = vcmp.ge.f32.partialorder %v4011, 1.0
  %vm4016 = vcmp.ge.f32.partialorder %v4012, 1.0
  %vm4017 = vcmp.ge.f32.partialorder %v4013, 1.0
  %v4018 = vsel %vm4014, 1, 0
  %v4019 = vsel %vm4015, 1, 0
  %v4020 = vsel %vm4016, 1, 0
  %v4021 = vsel %vm4017, 1, 0
  %v4022 = vcvt.s32.f32 %v4018
  %v4023 = vcvt.s32.f32 %v4019
  %v4024 = vcvt.s32.f32 %v4020
  %v4025 = vcvt.s32.f32 %v4021
  %v4026 = vsub.f32 1.0, %v4022
  %v4027 = vsub.f32 1.0, %v4023
  %v4028 = vsub.f32 1.0, %v4024
  %v4029 = vsub.f32 1.0, %v4025
  %v4030 = vmul.f32 %v4010, %v4026
  %v4031 = vmul.f32 %v4011, %v4027
  %v4032 = vmul.f32 %v4012, %v4028
  %v4033 = vmul.f32 %v4013, %v4029
  %4034 = vst [vmem:[#allocation4] sm:$0xff] %v4030
  %4035 = vst [vmem:[#allocation4 + $0x8] sm:$0xff] %v4031
  %4036 = vst [vmem:[#allocation4 + $0x10] sm:$0xff] %v4032
  %4037 = vst [vmem:[#allocation4 + $0x18] sm:$0xff] %v4033
  %v4038 = vadd.f32 %v230, %v4022
  %v4039 = vadd.f32 %v231, %v4023
  %v4040 = vadd.f32 %v232, %v4024
  %v4041 = vadd.f32 %v233, %v4025
  %4042 = vmatprep.subr.mxu0 0.0
  %4043 = vmatpush1.msra.mxu0 %v4038
  %4044 = vmatprep.subr.mxu0 0.0
  %4045 = vmatpush1.msra.mxu0 %v4039
  %4046 = vmatprep.subr.mxu0 0.0
  %4047 = vmatpush1.msra.mxu0 %v4040
  %4048 = vmatprep.subr.mxu0 0.0
  %4049 = vmatpush1.msra.mxu0 %v4041
  %4050 = vmatprep.subr.mxu0 0.0
  %4051 = vmatpush1.msra.mxu0 0.0
  %4052 = vmatprep.subr.mxu0 0.0
  %4053 = vmatpush1.msra.mxu0 0.0
  %4054 = vmatprep.subr.mxu0 0.0
  %4055 = vmatpush1.msra.mxu0 0.0
  %4056 = vmatprep.subr.mxu0 0.0
  %4057 = vmatpush1.msra.mxu0 0.0
  %4058 = vmatprep.subr.mxu0 0.0
  %4059 = vmatpush1.msra.mxu0 0.0
  %4060 = vmatprep.subr.mxu0 0.0
  %4061 = vmatpush1.msra.mxu0 0.0
  %4062 = vmatprep.subr.mxu0 0.0
  %4063 = vmatpush1.msra.mxu0 0.0
  %4064 = vmatprep.subr.mxu0 0.0
  %4065 = vmatpush1.msra.mxu0 0.0
  %4066 = vmatprep.subr.mxu0 0.0
  %4067 = vmatpush1.msra.mxu0 0.0
  %4068 = vmatprep.subr.mxu0 0.0
  %4069 = vmatpush1.msra.mxu0 0.0
  %4070 = vmatprep.subr.mxu0 0.0
  %4071 = vmatpush1.msra.mxu0 0.0
  %4072 = vmatprep.subr.mxu0 0.0
  %4073 = vmatpush1.msra.mxu0 0.0
  %4074 = vmatprep.subr.mxu0 0.0
  %4075 = vmatpush1.msra.mxu0 0.0
  %4076 = vmatprep.subr.mxu0 0.0
  %4077 = vmatpush1.msra.mxu0 0.0
  %4078 = vmatprep.subr.mxu0 0.0
  %4079 = vmatpush1.msra.mxu0 0.0
  %4080 = vmatprep.subr.mxu0 0.0
  %4081 = vmatpush1.msra.mxu0 0.0
  %4082 = vmatprep.subr.mxu0 0.0
  %4083 = vmatpush1.msra.mxu0 0.0
  %4084 = vmatprep.subr.mxu0 0.0
  %4085 = vmatpush1.msra.mxu0 0.0
  %4086 = vmatprep.subr.mxu0 0.0
  %4087 = vmatpush1.msra.mxu0 0.0
  %4088 = vmatprep.subr.mxu0 0.0
  %4089 = vmatpush1.msra.mxu0 0.0
  %4090 = vmatprep.subr.mxu0 0.0
  %4091 = vmatpush1.msra.mxu0 0.0
  %4092 = vmatprep.subr.mxu0 0.0
  %4093 = vmatpush1.msra.mxu0 0.0
  %4094 = vmatprep.subr.mxu0 0.0
  %4095 = vmatpush1.msra.mxu0 0.0
  %4096 = vmatprep.subr.mxu0 0.0
  %4097 = vmatpush1.msra.mxu0 0.0
  %4098 = vmatprep.subr.mxu0 0.0
  %4099 = vmatpush1.msra.mxu0 0.0
  %4100 = vmatprep.subr.mxu0 0.0
  %4101 = vmatpush1.msra.mxu0 0.0
  %4102 = vmatprep.subr.mxu0 0.0
  %4103 = vmatpush1.msra.mxu0 0.0
  %4104 = vmatprep.subr.mxu0 0.0
  %4105 = vmatpush1.msra.mxu0 0.0
  %4106 = vmatprep.mubr.f32.mxu0 0.0
  %4107 = vmatmul.mubr.f32.gmra.mrb[0].mxu0 %v1591
  %v4108 = vpop.f32.mrb[0].mxu0
  %v4109 = vadd.f32 %v442, %v4108
  %v4110 = vpop.f32.mrb[0].mxu0
  %4111 = vmatprep.mubr.f32.mxu0 0.0
  %4112 = vmatmul.mubr.f32.gmra.mrb[0].mxu0 %v1594
  %v4113 = vpop.f32.mrb[0].mxu0
  %v4114 = vadd.f32 %v447, %v4113
  %v4115 = vpop.f32.mrb[0].mxu0
  %4116 = vmatprep.mubr.f32.mxu0 0.0
  %4117 = vmatmul.mubr.f32.gmra.mrb[0].mxu0 %v1597
  %v4118 = vpop.f32.mrb[0].mxu0
  %v4119 = vadd.f32 %v452, %v4118
  %v4120 = vpop.f32.mrb[0].mxu0
  %4121 = vmatprep.mubr.f32.mxu0 0.0
  %4122 = vmatmul.mubr.f32.gmra.mrb[0].mxu0 %v1600
  %v4123 = vpop.f32.mrb[0].mxu0
  %v4124 = vadd.f32 %v457, %v4123
  %v4125 = vpop.f32.mrb[0].mxu0
  %4126 = vmatprep.mubr.f32.mxu0 0.0
  %4127 = vmatmul.mubr.f32.gmra.mrb[0].mxu0 %v1603
  %v4128 = vpop.f32.mrb[0].mxu0
  %v4129 = vadd.f32 %v462, %v4128
  %v4130 = vpop.f32.mrb[0].mxu0
  %4131 = vmatprep.mubr.f32.mxu0 0.0
  %4132 = vmatmul.mubr.f32.gmra.mrb[0].mxu0 %v1606
  %v4133 = vpop.f32.mrb[0].mxu0
  %v4134 = vadd.f32 %v467, %v4133
  %v4135 = vpop.f32.mrb[0].mxu0
  %4136 = vmatprep.mubr.f32.mxu0 0.0
  %4137 = vmatmul.mubr.f32.gmra.mrb[0].mxu0 %v1609
  %v4138 = vpop.f32.mrb[0].mxu0
  %v4139 = vadd.f32 %v472, %v4138
  %v4140 = vpop.f32.mrb[0].mxu0
  %4141 = vmatprep.mubr.f32.mxu0 0.0
  %4142 = vmatmul.mubr.f32.gmra.mrb[0].mxu0 %v1612
  %v4143 = vpop.f32.mrb[0].mxu0
  %v4144 = vadd.f32 %v477, %v4143
  %v4145 = vpop.f32.mrb[0].mxu0
  %4146 = vmatprep.mubr.f32.mxu0 0.0
  %4147 = vmatmul.mubr.f32.gmra.mrb[0].mxu0 %v1615
  %v4148 = vpop.f32.mrb[0].mxu0
  %v4149 = vadd.f32 %v482, %v4148
  %v4150 = vpop.f32.mrb[0].mxu0
  %4151 = vmatprep.mubr.f32.mxu0 0.0
  %4152 = vmatmul.mubr.f32.gmra.mrb[0].mxu0 %v1618
  %v4153 = vpop.f32.mrb[0].mxu0
  %v4154 = vadd.f32 %v487, %v4153
  %v4155 = vpop.f32.mrb[0].mxu0
  %4156 = vmatprep.mubr.f32.mxu0 0.0
  %4157 = vmatmul.mubr.f32.gmra.mrb[0].mxu0 %v1621
  %v4158 = vpop.f32.mrb[0].mxu0
  %v4159 = vadd.f32 %v492, %v4158
  %v4160 = vpop.f32.mrb[0].mxu0
  %4161 = vmatprep.mubr.f32.mxu0 0.0
  %4162 = vmatmul.mubr.f32.gmra.mrb[0].mxu0 %v1624
  %v4163 = vpop.f32.mrb[0].mxu0
  %v4164 = vadd.f32 %v497, %v4163
  %v4165 = vpop.f32.mrb[0].mxu0
  %4166 = vmatprep.mubr.f32.mxu0 0.0
  %4167 = vmatmul.mubr.f32.gmra.mrb[0].mxu0 %v1627
  %v4168 = vpop.f32.mrb[0].mxu0
  %v4169 = vadd.f32 %v502, %v4168
  %v4170 = vpop.f32.mrb[0].mxu0
  %4171 = vmatprep.mubr.f32.mxu0 0.0
  %4172 = vmatmul.mubr.f32.gmra.mrb[0].mxu0 %v1630
  %v4173 = vpop.f32.mrb[0].mxu0
  %v4174 = vadd.f32 %v507, %v4173
  %v4175 = vpop.f32.mrb[0].mxu0
  %4176 = vmatprep.mubr.f32.mxu0 0.0
  %4177 = vmatmul.mubr.f32.gmra.mrb[0].mxu0 %v1633
  %v4178 = vpop.f32.mrb[0].mxu0
  %v4179 = vadd.f32 %v512, %v4178
  %v4180 = vpop.f32.mrb[0].mxu0
  %4181 = vmatprep.mubr.f32.mxu0 0.0
  %4182 = vmatmul.mubr.f32.gmra.mrb[0].mxu0 %v1636
  %v4183 = vpop.f32.mrb[0].mxu0
  %v4184 = vadd.f32 %v517, %v4183
  %v4185 = vpop.f32.mrb[0].mxu0
  %4186 = vdwg.mxu0
  %v4187 = vld [vmem:[#allocation5] sm:$0xff]
  %v4188 = vld [vmem:[#allocation5 + $0x8] sm:$0xff]
  %v4189 = vld [vmem:[#allocation5 + $0x10] sm:$0xff]
  %v4190 = vld [vmem:[#allocation5 + $0x18] sm:$0xff]
  %v4191 = vld [vmem:[#allocation5 + $0x20] sm:$0xff]
  %v4192 = vld [vmem:[#allocation5 + $0x28] sm:$0xff]
  %v4193 = vld [vmem:[#allocation5 + $0x30] sm:$0xff]
  %v4194 = vld [vmem:[#allocation5 + $0x38] sm:$0xff]
  %v4195 = vld [vmem:[#allocation5 + $0x40] sm:$0xff]
  %v4196 = vld [vmem:[#allocation5 + $0x48] sm:$0xff]
  %v4197 = vld [vmem:[#allocation5 + $0x50] sm:$0xff]
  %v4198 = vld [vmem:[#allocation5 + $0x58] sm:$0xff]
  %v4199 = vld [vmem:[#allocation5 + $0x60] sm:$0xff]
  %v4200 = vld [vmem:[#allocation5 + $0x68] sm:$0xff]
  %v4201 = vld [vmem:[#allocation5 + $0x70] sm:$0xff]
  %v4202 = vld [vmem:[#allocation5 + $0x78] sm:$0xff]
  %v4203 = vsub.f32 %v4109, %v4187
  %v4204 = vsub.f32 %v4114, %v4188
  %v4205 = vsub.f32 %v4119, %v4189
  %v4206 = vsub.f32 %v4124, %v4190
  %v4207 = vsub.f32 %v4129, %v4191
  %v4208 = vsub.f32 %v4134, %v4192
  %v4209 = vsub.f32 %v4139, %v4193
  %v4210 = vsub.f32 %v4144, %v4194
  %v4211 = vsub.f32 %v4149, %v4195
  %v4212 = vsub.f32 %v4154, %v4196
  %v4213 = vsub.f32 %v4159, %v4197
  %v4214 = vsub.f32 %v4164, %v4198
  %v4215 = vsub.f32 %v4169, %v4199
  %v4216 = vsub.f32 %v4174, %v4200
  %v4217 = vsub.f32 %v4179, %v4201
  %v4218 = vsub.f32 %v4184, %v4202
  %v4219 = vmul.f32 %v4203, 0.5
  %v4220 = vmul.f32 %v4204, 0.5
  %v4221 = vmul.f32 %v4205, 0.5
  %v4222 = vmul.f32 %v4206, 0.5
  %v4223 = vmul.f32 %v4207, 0.5
  %v4224 = vmul.f32 %v4208, 0.5
  %v4225 = vmul.f32 %v4209, 0.5
  %v4226 = vmul.f32 %v4210, 0.5
  %v4227 = vmul.f32 %v4211, 0.5
  %v4228 = vmul.f32 %v4212, 0.5
  %v4229 = vmul.f32 %v4213, 0.5
  %v4230 = vmul.f32 %v4214, 0.5
  %v4231 = vmul.f32 %v4215, 0.5
  %v4232 = vmul.f32 %v4216, 0.5
  %v4233 = vmul.f32 %v4217, 0.5
  %v4234 = vmul.f32 %v4218, 0.5
  %v4235 = vadd.f32 %v4187, %v4219
  %v4236 = vadd.f32 %v4188, %v4220
  %v4237 = vadd.f32 %v4189, %v4221
  %v4238 = vadd.f32 %v4190, %v4222
  %v4239 = vadd.f32 %v4191, %v4223
  %v4240 = vadd.f32 %v4192, %v4224
  %v4241 = vadd.f32 %v4193, %v4225
  %v4242 = vadd.f32 %v4194, %v4226
  %v4243 = vadd.f32 %v4195, %v4227
  %v4244 = vadd.f32 %v4196, %v4228
  %v4245 = vadd.f32 %v4197, %v4229
  %v4246 = vadd.f32 %v4198, %v4230
  %v4247 = vadd.f32 %v4199, %v4231
  %v4248 = vadd.f32 %v4200, %v4232
  %v4249 = vadd.f32 %v4201, %v4233
  %v4250 = vadd.f32 %v4202, %v4234
  %vm4251 = vcmp.ge.f32.partialorder %v4235, 1.0
  %vm4252 = vcmp.ge.f32.partialorder %v4236, 1.0
  %vm4253 = vcmp.ge.f32.partialorder %v4237, 1.0
  %vm4254 = vcmp.ge.f32.partialorder %v4238, 1.0
  %vm4255 = vcmp.ge.f32.partialorder %v4239, 1.0
  %vm4256 = vcmp.ge.f32.partialorder %v4240, 1.0
  %vm4257 = vcmp.ge.f32.partialorder %v4241, 1.0
  %vm4258 = vcmp.ge.f32.partialorder %v4242, 1.0
  %vm4259 = vcmp.ge.f32.partialorder %v4243, 1.0
  %vm4260 = vcmp.ge.f32.partialorder %v4244, 1.0
  %vm4261 = vcmp.ge.f32.partialorder %v4245, 1.0
  %vm4262 = vcmp.ge.f32.partialorder %v4246, 1.0
  %vm4263 = vcmp.ge.f32.partialorder %v4247, 1.0
  %vm4264 = vcmp.ge.f32.partialorder %v4248, 1.0
  %vm4265 = vcmp.ge.f32.partialorder %v4249, 1.0
  %vm4266 = vcmp.ge.f32.partialorder %v4250, 1.0
  %v4267 = vsel %vm4251, 1, 0
  %v4268 = vsel %vm4252, 1, 0
  %v4269 = vsel %vm4253, 1, 0
  %v4270 = vsel %vm4254, 1, 0
  %v4271 = vsel %vm4255, 1, 0
  %v4272 = vsel %vm4256, 1, 0
  %v4273 = vsel %vm4257, 1, 0
  %v4274 = vsel %vm4258, 1, 0
  %v4275 = vsel %vm4259, 1, 0
  %v4276 = vsel %vm4260, 1, 0
  %v4277 = vsel %vm4261, 1, 0
  %v4278 = vsel %vm4262, 1, 0
  %v4279 = vsel %vm4263, 1, 0
  %v4280 = vsel %vm4264, 1, 0
  %v4281 = vsel %vm4265, 1, 0
  %v4282 = vsel %vm4266, 1, 0
  %v4283 = vcvt.s32.f32 %v4267
  %v4284 = vcvt.s32.f32 %v4268
  %v4285 = vcvt.s32.f32 %v4269
  %v4286 = vcvt.s32.f32 %v4270
  %v4287 = vcvt.s32.f32 %v4271
  %v4288 = vcvt.s32.f32 %v4272
  %v4289 = vcvt.s32.f32 %v4273
  %v4290 = vcvt.s32.f32 %v4274
  %v4291 = vcvt.s32.f32 %v4275
  %v4292 = vcvt.s32.f32 %v4276
  %v4293 = vcvt.s32.f32 %v4277
  %v4294 = vcvt.s32.f32 %v4278
  %v4295 = vcvt.s32.f32 %v4279
  %v4296 = vcvt.s32.f32 %v4280
  %v4297 = vcvt.s32.f32 %v4281
  %v4298 = vcvt.s32.f32 %v4282
  %v4299 = vsub.f32 1.0, %v4283
  %v4300 = vsub.f32 1.0, %v4284
  %v4301 = vsub.f32 1.0, %v4285
  %v4302 = vsub.f32 1.0, %v4286
  %v4303 = vsub.f32 1.0, %v4287
  %v4304 = vsub.f32 1.0, %v4288
  %v4305 = vsub.f32 1.0, %v4289
  %v4306 = vsub.f32 1.0, %v4290
  %v4307 = vsub.f32 1.0, %v4291
  %v4308 = vsub.f32 1.0, %v4292
  %v4309 = vsub.f32 1.0, %v4293
  %v4310 = vsub.f32 1.0, %v4294
  %v4311 = vsub.f32 1.0, %v4295
  %v4312 = vsub.f32 1.0, %v4296
  %v4313 = vsub.f32 1.0, %v4297
  %v4314 = vsub.f32 1.0, %v4298
  %v4315 = vmul.f32 %v4235, %v4299
  %v4316 = vmul.f32 %v4236, %v4300
  %v4317 = vmul.f32 %v4237, %v4301
  %v4318 = vmul.f32 %v4238, %v4302
  %v4319 = vmul.f32 %v4239, %v4303
  %v4320 = vmul.f32 %v4240, %v4304
  %v4321 = vmul.f32 %v4241, %v4305
  %v4322 = vmul.f32 %v4242, %v4306
  %v4323 = vmul.f32 %v4243, %v4307
  %v4324 = vmul.f32 %v4244, %v4308
  %v4325 = vmul.f32 %v4245, %v4309
  %v4326 = vmul.f32 %v4246, %v4310
  %v4327 = vmul.f32 %v4247, %v4311
  %v4328 = vmul.f32 %v4248, %v4312
  %v4329 = vmul.f32 %v4249, %v4313
  %v4330 = vmul.f32 %v4250, %v4314
  %4331 = vst [vmem:[#allocation5] sm:$0xff] %v4315
  %4332 = vst [vmem:[#allocation5 + $0x8] sm:$0xff] %v4316
  %4333 = vst [vmem:[#allocation5 + $0x10] sm:$0xff] %v4317
  %4334 = vst [vmem:[#allocation5 + $0x18] sm:$0xff] %v4318
  %4335 = vst [vmem:[#allocation5 + $0x20] sm:$0xff] %v4319
  %4336 = vst [vmem:[#allocation5 + $0x28] sm:$0xff] %v4320
  %4337 = vst [vmem:[#allocation5 + $0x30] sm:$0xff] %v4321
  %4338 = vst [vmem:[#allocation5 + $0x38] sm:$0xff] %v4322
  %4339 = vst [vmem:[#allocation5 + $0x40] sm:$0xff] %v4323
  %4340 = vst [vmem:[#allocation5 + $0x48] sm:$0xff] %v4324
  %4341 = vst [vmem:[#allocation5 + $0x50] sm:$0xff] %v4325
  %4342 = vst [vmem:[#allocation5 + $0x58] sm:$0xff] %v4326
  %4343 = vst [vmem:[#allocation5 + $0x60] sm:$0xff] %v4327
  %4344 = vst [vmem:[#allocation5 + $0x68] sm:$0xff] %v4328
  %4345 = vst [vmem:[#allocation5 + $0x70] sm:$0xff] %v4329
  %4346 = vst [vmem:[#allocation5 + $0x78] sm:$0xff] %v4330
  %4347 = vmatprep.subr.mxu0 0.0
  %4348 = vmatpush1.msra.mxu0 %v4283
  %4349 = vmatprep.subr.mxu0 0.0
  %4350 = vmatpush1.msra.mxu0 %v4284
  %4351 = vmatprep.subr.mxu0 0.0
  %4352 = vmatpush1.msra.mxu0 %v4285
  %4353 = vmatprep.subr.mxu0 0.0
  %4354 = vmatpush1.msra.mxu0 %v4286
  %4355 = vmatprep.subr.mxu0 0.0
  %4356 = vmatpush1.msra.mxu0 %v4287
  %4357 = vmatprep.subr.mxu0 0.0
  %4358 = vmatpush1.msra.mxu0 %v4288
  %4359 = vmatprep.subr.mxu0 0.0
  %4360 = vmatpush1.msra.mxu0 %v4289
  %4361 = vmatprep.subr.mxu0 0.0
  %4362 = vmatpush1.msra.mxu0 %v4290
  %4363 = vmatprep.subr.mxu0 0.0
  %4364 = vmatpush1.msra.mxu0 %v4291
  %4365 = vmatprep.subr.mxu0 0.0
  %4366 = vmatpush1.msra.mxu0 %v4292
  %4367 = vmatprep.subr.mxu0 0.0
  %4368 = vmatpush1.msra.mxu0 %v4293
  %4369 = vmatprep.subr.mxu0 0.0
  %4370 = vmatpush1.msra.mxu0 %v4294
  %4371 = vmatprep.subr.mxu0 0.0
  %4372 = vmatpush1.msra.mxu0 %v4295
  %4373 = vmatprep.subr.mxu0 0.0
  %4374 = vmatpush1.msra.mxu0 %v4296
  %4375 = vmatprep.subr.mxu0 0.0
  %4376 = vmatpush1.msra.mxu0 %v4297
  %4377 = vmatprep.subr.mxu0 0.0
  %4378 = vmatpush1.msra.mxu0 %v4298
  %4379 = vmatprep.subr.mxu0 0.0
  %4380 = vmatpush1.msra.mxu0 0.0
  %4381 = vmatprep.subr.mxu0 0.0
  %4382 = vmatpush1.msra.mxu0 0.0
  %4383 = vmatprep.subr.mxu0 0.0
  %4384 = vmatpush1.msra.mxu0 0.0
  %4385 = vmatprep.subr.mxu0 0.0
  %4386 = vmatpush1.msra.mxu0 0.0
  %4387 = vmatprep.subr.mxu0 0.0
  %4388 = vmatpush1.msra.mxu0 0.0
  %4389 = vmatprep.subr.mxu0 0.0
  %4390 = vmatpush1.msra.mxu0 0.0
  %4391 = vmatprep.subr.mxu0 0.0
  %4392 = vmatpush1.msra.mxu0 0.0
  %4393 = vmatprep.subr.mxu0 0.0
  %4394 = vmatpush1.msra.mxu0 0.0
  %4395 = vmatprep.subr.mxu0 0.0
  %4396 = vmatpush1.msra.mxu0 0.0
  %4397 = vmatprep.subr.mxu0 0.0
  %4398 = vmatpush1.msra.mxu0 0.0
  %4399 = vmatprep.subr.mxu0 0.0
  %4400 = vmatpush1.msra.mxu0 0.0
  %4401 = vmatprep.subr.mxu0 0.0
  %4402 = vmatpush1.msra.mxu0 0.0
  %4403 = vmatprep.subr.mxu0 0.0
  %4404 = vmatpush1.msra.mxu0 0.0
  %4405 = vmatprep.subr.mxu0 0.0
  %4406 = vmatpush1.msra.mxu0 0.0
  %4407 = vmatprep.subr.mxu0 0.0
  %4408 = vmatpush1.msra.mxu0 0.0
  %4409 = vmatprep.subr.mxu0 0.0
  %4410 = vmatpush1.msra.mxu0 0.0
  %4411 = vmatprep.mubr.f32.mxu0 0.0
  %4412 = vmatmul.mubr.f32.gmra.mrb[0].mxu0 %v351
  %v4413 = vpop.f32.mrb[0].mxu0
  %v4414 = vadd.f32 %v522, %v4413
  %v4415 = vpop.f32.mrb[0].mxu0
  %4416 = vmatprep.mubr.f32.mxu0 0.0
  %4417 = vmatmul.mubr.f32.gmra.mrb[0].mxu0 %v352
  %v4418 = vpop.f32.mrb[0].mxu0
  %v4419 = vadd.f32 %v527, %v4418
  %v4420 = vpop.f32.mrb[0].mxu0
  %4421 = vmatprep.mubr.f32.mxu0 0.0
  %4422 = vmatmul.mubr.f32.gmra.mrb[0].mxu0 %v353
  %v4423 = vpop.f32.mrb[0].mxu0
  %v4424 = vadd.f32 %v532, %v4423
  %v4425 = vpop.f32.mrb[0].mxu0
  %4426 = vmatprep.mubr.f32.mxu0 0.0
  %4427 = vmatmul.mubr.f32.gmra.mrb[0].mxu0 %v354
  %v4428 = vpop.f32.mrb[0].mxu0
  %v4429 = vadd.f32 %v537, %v4428
  %v4430 = vpop.f32.mrb[0].mxu0
  %4431 = vdwg.mxu0
  %v4432 = vld [vmem:[#allocation6] sm:$0xff]
  %v4433 = vld [vmem:[#allocation6 + $0x8] sm:$0xff]
  %v4434 = vld [vmem:[#allocation6 + $0x10] sm:$0xff]
  %v4435 = vld [vmem:[#allocation6 + $0x18] sm:$0xff]
  %v4436 = vsub.f32 %v4414, %v4432
  %v4437 = vsub.f32 %v4419, %v4433
  %v4438 = vsub.f32 %v4424, %v4434
  %v4439 = vsub.f32 %v4429, %v4435
  %v4440 = vmul.f32 %v4436, 0.5
  %v4441 = vmul.f32 %v4437, 0.5
  %v4442 = vmul.f32 %v4438, 0.5
  %v4443 = vmul.f32 %v4439, 0.5
  %v4444 = vadd.f32 %v4432, %v4440
  %v4445 = vadd.f32 %v4433, %v4441
  %v4446 = vadd.f32 %v4434, %v4442
  %v4447 = vadd.f32 %v4435, %v4443
  %vm4448 = vcmp.ge.f32.partialorder %v4444, 1.0
  %vm4449 = vcmp.ge.f32.partialorder %v4445, 1.0
  %vm4450 = vcmp.ge.f32.partialorder %v4446, 1.0
  %vm4451 = vcmp.ge.f32.partialorder %v4447, 1.0
  %v4452 = vsel %vm4448, 1, 0
  %v4453 = vsel %vm4449, 1, 0
  %v4454 = vsel %vm4450, 1, 0
  %v4455 = vsel %vm4451, 1, 0
  %v4456 = vcvt.s32.f32 %v4452
  %v4457 = vcvt.s32.f32 %v4453
  %v4458 = vcvt.s32.f32 %v4454
  %v4459 = vcvt.s32.f32 %v4455
  %v4460 = vsub.f32 1.0, %v4456
  %v4461 = vsub.f32 1.0, %v4457
  %v4462 = vsub.f32 1.0, %v4458
  %v4463 = vsub.f32 1.0, %v4459
  %v4464 = vmul.f32 %v4444, %v4460
  %v4465 = vmul.f32 %v4445, %v4461
  %v4466 = vmul.f32 %v4446, %v4462
  %v4467 = vmul.f32 %v4447, %v4463
  %4468 = vst [vmem:[#allocation6] sm:$0xff] %v4464
  %4469 = vst [vmem:[#allocation6 + $0x8] sm:$0xff] %v4465
  %4470 = vst [vmem:[#allocation6 + $0x10] sm:$0xff] %v4466
  %4471 = vst [vmem:[#allocation6 + $0x18] sm:$0xff] %v4467
  %v4472 = vadd.f32 %v4038, %v4456
  %v4473 = vadd.f32 %v4039, %v4457
  %v4474 = vadd.f32 %v4040, %v4458
  %v4475 = vadd.f32 %v4041, %v4459
  %4476 = vmatprep.subr.mxu0 0.0
  %4477 = vmatpush1.msra.mxu0 %v4472
  %4478 = vmatprep.subr.mxu0 0.0
  %4479 = vmatpush1.msra.mxu0 %v4473
  %4480 = vmatprep.subr.mxu0 0.0
  %4481 = vmatpush1.msra.mxu0 %v4474
  %4482 = vmatprep.subr.mxu0 0.0
  %4483 = vmatpush1.msra.mxu0 %v4475
  %4484 = vmatprep.subr.mxu0 0.0
  %4485 = vmatpush1.msra.mxu0 0.0
  %4486 = vmatprep.subr.mxu0 0.0
  %4487 = vmatpush1.msra.mxu0 0.0
  %4488 = vmatprep.subr.mxu0 0.0
  %4489 = vmatpush1.msra.mxu0 0.0
  %4490 = vmatprep.subr.mxu0 0.0
  %4491 = vmatpush1.msra.mxu0 0.0
  %4492 = vmatprep.subr.mxu0 0.0
  %4493 = vmatpush1.msra.mxu0 0.0
  %4494 = vmatprep.subr.mxu0 0.0
  %4495 = vmatpush1.msra.mxu0 0.0
  %4496 = vmatprep.subr.mxu0 0.0
  %4497 = vmatpush1.msra.mxu0 0.0
  %4498 = vmatprep.subr.mxu0 0.0
  %4499 = vmatpush1.msra.mxu0 0.0
  %4500 = vmatprep.subr.mxu0 0.0
  %4501 = vmatpush1.msra.mxu0 0.0
  %4502 = vmatprep.subr.mxu0 0.0
  %4503 = vmatpush1.msra.mxu0 0.0
  %4504 = vmatprep.subr.mxu0 0.0
  %4505 = vmatpush1.msra.mxu0 0.0
  %4506 = vmatprep.subr.mxu0 0.0
  %4507 = vmatpush1.msra.mxu0 0.0
  %4508 = vmatprep.subr.mxu0 0.0
  %4509 = vmatpush1.msra.mxu0 0.0
  %4510 = vmatprep.subr.mxu0 0.0
  %4511 = vmatpush1.msra.mxu0 0.0
  %4512 = vmatprep.subr.mxu0 0.0
  %4513 = vmatpush1.msra.mxu0 0.0
  %4514 = vmatprep.subr.mxu0 0.0
  %4515 = vmatpush1.msra.mxu0 0.0
  %4516 = vmatprep.subr.mxu0 0.0
  %4517 = vmatpush1.msra.mxu0 0.0
  %4518 = vmatprep.subr.mxu0 0.0
  %4519 = vmatpush1.msra.mxu0 0.0
  %4520 = vmatprep.subr.mxu0 0.0
  %4521 = vmatpush1.msra.mxu0 0.0
  %4522 = vmatprep.subr.mxu0 0.0
  %4523 = vmatpush1.msra.mxu0 0.0
  %4524 = vmatprep.subr.mxu0 0.0
  %4525 = vmatpush1.msra.mxu0 0.0
  %4526 = vmatprep.subr.mxu0 0.0
  %4527 = vmatpush1.msra.mxu0 0.0
  %4528 = vmatprep.subr.mxu0 0.0
  %4529 = vmatpush1.msra.mxu0 0.0
  %4530 = vmatprep.subr.mxu0 0.0
  %4531 = vmatpush1.msra.mxu0 0.0
  %4532 = vmatprep.subr.mxu0 0.0
  %4533 = vmatpush1.msra.mxu0 0.0
  %4534 = vmatprep.subr.mxu0 0.0
  %4535 = vmatpush1.msra.mxu0 0.0
  %4536 = vmatprep.subr.mxu0 0.0
  %4537 = vmatpush1.msra.mxu0 0.0
  %4538 = vmatprep.subr.mxu0 0.0
  %4539 = vmatpush1.msra.mxu0 0.0
  %4540 = vmatprep.mubr.f32.mxu0 0.0
  %4541 = vmatmul.mubr.f32.gmra.mrb[0].mxu0 %v2013
  %v4542 = vpop.f32.mrb[0].mxu0
  %v4543 = vadd.f32 %v614, %v4542
  %v4544 = vpop.f32.mrb[0].mxu0
  %4545 = vmatprep.mubr.f32.mxu0 0.0
  %4546 = vmatmul.mubr.f32.gmra.mrb[0].mxu0 %v2016
  %v4547 = vpop.f32.mrb[0].mxu0
  %v4548 = vadd.f32 %v619, %v4547
  %v4549 = vpop.f32.mrb[0].mxu0
  %4550 = vmatprep.mubr.f32.mxu0 0.0
  %4551 = vmatmul.mubr.f32.gmra.mrb[0].mxu0 %v2019
  %v4552 = vpop.f32.mrb[0].mxu0
  %v4553 = vadd.f32 %v624, %v4552
  %v4554 = vpop.f32.mrb[0].mxu0
  %4555 = vmatprep.mubr.f32.mxu0 0.0
  %4556 = vmatmul.mubr.f32.gmra.mrb[0].mxu0 %v2022
  %v4557 = vpop.f32.mrb[0].mxu0
  %v4558 = vadd.f32 %v629, %v4557
  %v4559 = vpop.f32.mrb[0].mxu0
  %4560 = vmatprep.mubr.f32.mxu0 0.0
  %4561 = vmatmul.mubr.f32.gmra.mrb[0].mxu0 %v2025
  %v4562 = vpop.f32.mrb[0].mxu0
  %v4563 = vadd.f32 %v634, %v4562
  %v4564 = vpop.f32.mrb[0].mxu0
  %4565 = vmatprep.mubr.f32.mxu0 0.0
  %4566 = vmatmul.mubr.f32.gmra.mrb[0].mxu0 %v2028
  %v4567 = vpop.f32.mrb[0].mxu0
  %v4568 = vadd.f32 %v639, %v4567
  %v4569 = vpop.f32.mrb[0].mxu0
  %4570 = vmatprep.mubr.f32.mxu0 0.0
  %4571 = vmatmul.mubr.f32.gmra.mrb[0].mxu0 %v2031
  %v4572 = vpop.f32.mrb[0].mxu0
  %v4573 = vadd.f32 %v644, %v4572
  %v4574 = vpop.f32.mrb[0].mxu0
  %4575 = vmatprep.mubr.f32.mxu0 0.0
  %4576 = vmatmul.mubr.f32.gmra.mrb[0].mxu0 %v2034
  %v4577 = vpop.f32.mrb[0].mxu0
  %v4578 = vadd.f32 %v649, %v4577
  %v4579 = vpop.f32.mrb[0].mxu0
  %4580 = vmatprep.mubr.f32.mxu0 0.0
  %4581 = vmatmul.mubr.f32.gmra.mrb[0].mxu0 %v2037
  %v4582 = vpop.f32.mrb[0].mxu0
  %v4583 = vadd.f32 %v654, %v4582
  %v4584 = vpop.f32.mrb[0].mxu0
  %4585 = vmatprep.mubr.f32.mxu0 0.0
  %4586 = vmatmul.mubr.f32.gmra.mrb[0].mxu0 %v2040
  %v4587 = vpop.f32.mrb[0].mxu0
  %v4588 = vadd.f32 %v659, %v4587
  %v4589 = vpop.f32.mrb[0].mxu0
  %4590 = vmatprep.mubr.f32.mxu0 0.0
  %4591 = vmatmul.mubr.f32.gmra.mrb[0].mxu0 %v2043
  %v4592 = vpop.f32.mrb[0].mxu0
  %v4593 = vadd.f32 %v664, %v4592
  %v4594 = vpop.f32.mrb[0].mxu0
  %4595 = vmatprep.mubr.f32.mxu0 0.0
  %4596 = vmatmul.mubr.f32.gmra.mrb[0].mxu0 %v2046
  %v4597 = vpop.f32.mrb[0].mxu0
  %v4598 = vadd.f32 %v669, %v4597
  %v4599 = vpop.f32.mrb[0].mxu0
  %4600 = vdwg.mxu0
  %v4601 = vld [vmem:[#allocation7] sm:$0xff]
  %v4602 = vld [vmem:[#allocation7 + $0x8] sm:$0xff]
  %v4603 = vld [vmem:[#allocation7 + $0x10] sm:$0xff]
  %v4604 = vld [vmem:[#allocation7 + $0x18] sm:$0xff]
  %v4605 = vld [vmem:[#allocation7 + $0x20] sm:$0xff]
  %v4606 = vld [vmem:[#allocation7 + $0x28] sm:$0xff]
  %v4607 = vld [vmem:[#allocation7 + $0x30] sm:$0xff]
  %v4608 = vld [vmem:[#allocation7 + $0x38] sm:$0xff]
  %v4609 = vld [vmem:[#allocation7 + $0x40] sm:$0xff]
  %v4610 = vld [vmem:[#allocation7 + $0x48] sm:$0xff]
  %v4611 = vld [vmem:[#allocation7 + $0x50] sm:$0xff]
  %v4612 = vld [vmem:[#allocation7 + $0x58] sm:$0xff]
  %v4613 = vsub.f32 %v4543, %v4601
  %v4614 = vsub.f32 %v4548, %v4602
  %v4615 = vsub.f32 %v4553, %v4603
  %v4616 = vsub.f32 %v4558, %v4604
  %v4617 = vsub.f32 %v4563, %v4605
  %v4618 = vsub.f32 %v4568, %v4606
  %v4619 = vsub.f32 %v4573, %v4607
  %v4620 = vsub.f32 %v4578, %v4608
  %v4621 = vsub.f32 %v4583, %v4609
  %v4622 = vsub.f32 %v4588, %v4610
  %v4623 = vsub.f32 %v4593, %v4611
  %v4624 = vsub.f32 %v4598, %v4612
  %v4625 = vmul.f32 %v4613, 0.5
  %v4626 = vmul.f32 %v4614, 0.5
  %v4627 = vmul.f32 %v4615, 0.5
  %v4628 = vmul.f32 %v4616, 0.5
  %v4629 = vmul.f32 %v4617, 0.5
  %v4630 = vmul.f32 %v4618, 0.5
  %v4631 = vmul.f32 %v4619, 0.5
  %v4632 = vmul.f32 %v4620, 0.5
  %v4633 = vmul.f32 %v4621, 0.5
  %v4634 = vmul.f32 %v4622, 0.5
  %v4635 = vmul.f32 %v4623, 0.5
  %v4636 = vmul.f32 %v4624, 0.5
  %v4637 = vadd.f32 %v4601, %v4625
  %v4638 = vadd.f32 %v4602, %v4626
  %v4639 = vadd.f32 %v4603, %v4627
  %v4640 = vadd.f32 %v4604, %v4628
  %v4641 = vadd.f32 %v4605, %v4629
  %v4642 = vadd.f32 %v4606, %v4630
  %v4643 = vadd.f32 %v4607, %v4631
  %v4644 = vadd.f32 %v4608, %v4632
  %v4645 = vadd.f32 %v4609, %v4633
  %v4646 = vadd.f32 %v4610, %v4634
  %v4647 = vadd.f32 %v4611, %v4635
  %v4648 = vadd.f32 %v4612, %v4636
  %vm4649 = vcmp.ge.f32.partialorder %v4637, 1.0
  %vm4650 = vcmp.ge.f32.partialorder %v4638, 1.0
  %vm4651 = vcmp.ge.f32.partialorder %v4639, 1.0
  %vm4652 = vcmp.ge.f32.partialorder %v4640, 1.0
  %vm4653 = vcmp.ge.f32.partialorder %v4641, 1.0
  %vm4654 = vcmp.ge.f32.partialorder %v4642, 1.0
  %vm4655 = vcmp.ge.f32.partialorder %v4643, 1.0
  %vm4656 = vcmp.ge.f32.partialorder %v4644, 1.0
  %vm4657 = vcmp.ge.f32.partialorder %v4645, 1.0
  %vm4658 = vcmp.ge.f32.partialorder %v4646, 1.0
  %vm4659 = vcmp.ge.f32.partialorder %v4647, 1.0
  %vm4660 = vcmp.ge.f32.partialorder %v4648, 1.0
  %v4661 = vsel %vm4649, 1, 0
  %v4662 = vsel %vm4650, 1, 0
  %v4663 = vsel %vm4651, 1, 0
  %v4664 = vsel %vm4652, 1, 0
  %v4665 = vsel %vm4653, 1, 0
  %v4666 = vsel %vm4654, 1, 0
  %v4667 = vsel %vm4655, 1, 0
  %v4668 = vsel %vm4656, 1, 0
  %v4669 = vsel %vm4657, 1, 0
  %v4670 = vsel %vm4658, 1, 0
  %v4671 = vsel %vm4659, 1, 0
  %v4672 = vsel %vm4660, 1, 0
  %v4673 = vcvt.s32.f32 %v4661
  %v4674 = vcvt.s32.f32 %v4662
  %v4675 = vcvt.s32.f32 %v4663
  %v4676 = vcvt.s32.f32 %v4664
  %v4677 = vcvt.s32.f32 %v4665
  %v4678 = vcvt.s32.f32 %v4666
  %v4679 = vcvt.s32.f32 %v4667
  %v4680 = vcvt.s32.f32 %v4668
  %v4681 = vcvt.s32.f32 %v4669
  %v4682 = vcvt.s32.f32 %v4670
  %v4683 = vcvt.s32.f32 %v4671
  %v4684 = vcvt.s32.f32 %v4672
  %v4685 = vsub.f32 1.0, %v4673
  %v4686 = vsub.f32 1.0, %v4674
  %v4687 = vsub.f32 1.0, %v4675
  %v4688 = vsub.f32 1.0, %v4676
  %v4689 = vsub.f32 1.0, %v4677
  %v4690 = vsub.f32 1.0, %v4678
  %v4691 = vsub.f32 1.0, %v4679
  %v4692 = vsub.f32 1.0, %v4680
  %v4693 = vsub.f32 1.0, %v4681
  %v4694 = vsub.f32 1.0, %v4682
  %v4695 = vsub.f32 1.0, %v4683
  %v4696 = vsub.f32 1.0, %v4684
  %v4697 = vmul.f32 %v4637, %v4685
  %v4698 = vmul.f32 %v4638, %v4686
  %v4699 = vmul.f32 %v4639, %v4687
  %v4700 = vmul.f32 %v4640, %v4688
  %v4701 = vmul.f32 %v4641, %v4689
  %v4702 = vmul.f32 %v4642, %v4690
  %v4703 = vmul.f32 %v4643, %v4691
  %v4704 = vmul.f32 %v4644, %v4692
  %v4705 = vmul.f32 %v4645, %v4693
  %v4706 = vmul.f32 %v4646, %v4694
  %v4707 = vmul.f32 %v4647, %v4695
  %v4708 = vmul.f32 %v4648, %v4696
  %4709 = vst [vmem:[#allocation7] sm:$0xff] %v4697
  %4710 = vst [vmem:[#allocation7 + $0x8] sm:$0xff] %v4698
  %4711 = vst [vmem:[#allocation7 + $0x10] sm:$0xff] %v4699
  %4712 = vst [vmem:[#allocation7 + $0x18] sm:$0xff] %v4700
  %4713 = vst [vmem:[#allocation7 + $0x20] sm:$0xff] %v4701
  %4714 = vst [vmem:[#allocation7 + $0x28] sm:$0xff] %v4702
  %4715 = vst [vmem:[#allocation7 + $0x30] sm:$0xff] %v4703
  %4716 = vst [vmem:[#allocation7 + $0x38] sm:$0xff] %v4704
  %4717 = vst [vmem:[#allocation7 + $0x40] sm:$0xff] %v4705
  %4718 = vst [vmem:[#allocation7 + $0x48] sm:$0xff] %v4706
  %4719 = vst [vmem:[#allocation7 + $0x50] sm:$0xff] %v4707
  %4720 = vst [vmem:[#allocation7 + $0x58] sm:$0xff] %v4708
  %v4721 = vmul.f32 %v4681, %v278
  %v4722 = vmul.f32 %v4682, %v279
  %v4723 = vmul.f32 %v4683, %v280
  %v4724 = vmul.f32 %v4684, %v281
  %4725 = vmatprep.subr.mxu0 0.0
  %4726 = vmatpush1.xpose.msra.mxu0 %v4677
  %4727 = vmatprep.subr.mxu0 0.0
  %4728 = vmatpush1.xpose.msra.mxu0 %v4678
  %4729 = vmatprep.subr.mxu0 0.0
  %4730 = vmatpush1.xpose.msra.mxu0 %v4679
  %4731 = vmatprep.subr.mxu0 0.0
  %4732 = vmatpush1.xpose.msra.mxu0 %v4680
  %4733 = vmatprep.subr.mxu0 0.0
  %4734 = vmatpush1.xpose.msra.mxu0 0.0
  %4735 = vmatprep.subr.mxu0 0.0
  %4736 = vmatpush1.xpose.msra.mxu0 0.0
  %4737 = vmatprep.subr.mxu0 0.0
  %4738 = vmatpush1.xpose.msra.mxu0 0.0
  %4739 = vmatprep.subr.mxu0 0.0
  %4740 = vmatpush1.xpose.msra.mxu0 0.0
  %4741 = vmatprep.subr.mxu0 0.0
  %4742 = vmatpush1.xpose.msra.mxu0 0.0
  %4743 = vmatprep.subr.mxu0 0.0
  %4744 = vmatpush1.xpose.msra.mxu0 0.0
  %4745 = vmatprep.subr.mxu0 0.0
  %4746 = vmatpush1.xpose.msra.mxu0 0.0
  %4747 = vmatprep.subr.mxu0 0.0
  %4748 = vmatpush1.xpose.msra.mxu0 0.0
  %4749 = vmatprep.subr.mxu0 0.0
  %4750 = vmatpush1.xpose.msra.mxu0 0.0
  %4751 = vmatprep.subr.mxu0 0.0
  %4752 = vmatpush1.xpose.msra.mxu0 0.0
  %4753 = vmatprep.subr.mxu0 0.0
  %4754 = vmatpush1.xpose.msra.mxu0 0.0
  %4755 = vmatprep.subr.mxu0 0.0
  %4756 = vmatpush1.xpose.msra.mxu0 0.0
  %4757 = vmatprep.subr.mxu0 0.0
  %4758 = vmatpush1.xpose.msra.mxu0 0.0
  %4759 = vmatprep.subr.mxu0 0.0
  %4760 = vmatpush1.xpose.msra.mxu0 0.0
  %4761 = vmatprep.subr.mxu0 0.0
  %4762 = vmatpush1.xpose.msra.mxu0 0.0
  %4763 = vmatprep.subr.mxu0 0.0
  %4764 = vmatpush1.xpose.msra.mxu0 0.0
  %4765 = vmatprep.subr.mxu0 0.0
  %4766 = vmatpush1.xpose.msra.mxu0 0.0
  %4767 = vmatprep.subr.mxu0 0.0
  %4768 = vmatpush1.xpose.msra.mxu0 0.0
  %4769 = vmatprep.subr.mxu0 0.0
  %4770 = vmatpush1.xpose.msra.mxu0 0.0
  %4771 = vmatprep.subr.mxu0 0.0
  %4772 = vmatpush1.xpose.msra.mxu0 0.0
  %4773 = vmatprep.subr.mxu0 0.0
  %4774 = vmatpush1.xpose.msra.mxu0 0.0
  %4775 = vmatprep.subr.mxu0 0.0
  %4776 = vmatpush1.xpose.msra.mxu0 0.0
  %4777 = vmatprep.subr.mxu0 0.0
  %4778 = vmatpush1.xpose.msra.mxu0 0.0
  %4779 = vmatprep.subr.mxu0 0.0
  %4780 = vmatpush1.xpose.msra.mxu0 0.0
  %4781 = vmatprep.subr.mxu0 0.0
  %4782 = vmatpush1.xpose.msra.mxu0 0.0
  %4783 = vmatprep.subr.mxu0 0.0
  %4784 = vmatpush1.xpose.msra.mxu0 0.0
  %4785 = vmatprep.subr.mxu0 0.0
  %4786 = vmatpush1.xpose.msra.mxu0 0.0
  %4787 = vmatprep.subr.mxu0 0.0
  %4788 = vmatpush1.xpose.msra.mxu0 0.0
  %4789 = vmatprep.mubr.f32.mxu0 0.0
  %4790 = vmatmul.mubr.f32.gmra.mrb[0].mxu0 %v4721
  %v4791 = vpop.f32.mrb[0].mxu0
  %v4792 = vadd.f32 0.0, %v4791
  %v4793 = vpop.f32.mrb[0].mxu0
  %4794 = vmatprep.mubr.f32.mxu0 0.0
  %4795 = vmatmul.mubr.f32.gmra.mrb[0].mxu0 %v4722
  %v4796 = vpop.f32.mrb[0].mxu0
  %v4797 = vadd.f32 0.0, %v4796
  %v4798 = vpop.f32.mrb[0].mxu0
  %4799 = vmatprep.mubr.f32.mxu0 0.0
  %4800 = vmatmul.mubr.f32.gmra.mrb[0].mxu0 %v4723
  %v4801 = vpop.f32.mrb[0].mxu0
  %v4802 = vadd.f32 0.0, %v4801
  %v4803 = vpop.f32.mrb[0].mxu0
  %4804 = vmatprep.mubr.f32.mxu0 0.0
  %4805 = vmatmul.mubr.f32.gmra.mrb[0].mxu0 %v4724
  %v4806 = vpop.f32.mrb[0].mxu0
  %v4807 = vadd.f32 0.0, %v4806
  %v4808 = vpop.f32.mrb[0].mxu0
  %4809 = vdwg.mxu0
  %v4810 = vmul.f32 %v4792, %v274
  %v4811 = vmul.f32 %v4797, %v275
  %v4812 = vmul.f32 %v4802, %v276
  %v4813 = vmul.f32 %v4807, %v277
  %v4815 = vsel %vm791, %v4810, 0
  %v4818 = vsel %vm791, %v4811, 0
  %v4821 = vsel %vm791, %v4812, 0
  %v4824 = vsel %vm791, %v4813, 0
  %4826 = vmatprep.subr.mxu0 0.0
  %4827 = vmatpush1.msra.mxu0 %v4673
  %4828 = vmatprep.subr.mxu0 0.0
  %4829 = vmatpush1.msra.mxu0 %v4674
  %4830 = vmatprep.subr.mxu0 0.0
  %4831 = vmatpush1.msra.mxu0 %v4675
  %4832 = vmatprep.subr.mxu0 0.0
  %4833 = vmatpush1.msra.mxu0 %v4676
  %4834 = vmatprep.subr.mxu0 0.0
  %4835 = vmatpush1.msra.mxu0 0.0
  %4836 = vmatprep.subr.mxu0 0.0
  %4837 = vmatpush1.msra.mxu0 0.0
  %4838 = vmatprep.subr.mxu0 0.0
  %4839 = vmatpush1.msra.mxu0 0.0
  %4840 = vmatprep.subr.mxu0 0.0
  %4841 = vmatpush1.msra.mxu0 0.0
  %4842 = vmatprep.subr.mxu0 0.0
  %4843 = vmatpush1.msra.mxu0 0.0
  %4844 = vmatprep.subr.mxu0 0.0
  %4845 = vmatpush1.msra.mxu0 0.0
  %4846 = vmatprep.subr.mxu0 0.0
  %4847 = vmatpush1.msra.mxu0 0.0
  %4848 = vmatprep.subr.mxu0 0.0
  %4849 = vmatpush1.msra.mxu0 0.0
  %4850 = vmatprep.subr.mxu0 0.0
  %4851 = vmatpush1.msra.mxu0 0.0
  %4852 = vmatprep.subr.mxu0 0.0
  %4853 = vmatpush1.msra.mxu0 0.0
  %4854 = vmatprep.subr.mxu0 0.0
  %4855 = vmatpush1.msra.mxu0 0.0
  %4856 = vmatprep.subr.mxu0 0.0
  %4857 = vmatpush1.msra.mxu0 0.0
  %4858 = vmatprep.subr.mxu0 0.0
  %4859 = vmatpush1.msra.mxu0 0.0
  %4860 = vmatprep.subr.mxu0 0.0
  %4861 = vmatpush1.msra.mxu0 0.0
  %4862 = vmatprep.subr.mxu0 0.0
  %4863 = vmatpush1.msra.mxu0 0.0
  %4864 = vmatprep.subr.mxu0 0.0
  %4865 = vmatpush1.msra.mxu0 0.0
  %4866 = vmatprep.subr.mxu0 0.0
  %4867 = vmatpush1.msra.mxu0 0.0
  %4868 = vmatprep.subr.mxu0 0.0
  %4869 = vmatpush1.msra.mxu0 0.0
  %4870 = vmatprep.subr.mxu0 0.0
  %4871 = vmatpush1.msra.mxu0 0.0
  %4872 = vmatprep.subr.mxu0 0.0
  %4873 = vmatpush1.msra.mxu0 0.0
  %4874 = vmatprep.subr.mxu0 0.0
  %4875 = vmatpush1.msra.mxu0 0.0
  %4876 = vmatprep.subr.mxu0 0.0
  %4877 = vmatpush1.msra.mxu0 0.0
  %4878 = vmatprep.subr.mxu0 0.0
  %4879 = vmatpush1.msra.mxu0 0.0
  %4880 = vmatprep.subr.mxu0 0.0
  %4881 = vmatpush1.msra.mxu0 0.0
  %4882 = vmatprep.subr.mxu0 0.0
  %4883 = vmatpush1.msra.mxu0 0.0
  %4884 = vmatprep.subr.mxu0 0.0
  %4885 = vmatpush1.msra.mxu0 0.0
  %4886 = vmatprep.subr.mxu0 0.0
  %4887 = vmatpush1.msra.mxu0 0.0
  %4888 = vmatprep.subr.mxu0 0.0
  %4889 = vmatpush1.msra.mxu0 0.0
  %4890 = vmatprep.mubr.f32.mxu0 0.0
  %4891 = vmatmul.mubr.f32.gmra.mrb[0].mxu0 %v4815
  %v4892 = vpop.f32.mrb[0].mxu0
  %v4893 = vadd.f32 0.0, %v4892
  %v4894 = vpop.f32.mrb[0].mxu0
  %4895 = vmatprep.mubr.f32.mxu0 0.0
  %4896 = vmatmul.mubr.f32.gmra.mrb[0].mxu0 %v4818
  %v4897 = vpop.f32.mrb[0].mxu0
  %v4898 = vadd.f32 0.0, %v4897
  %v4899 = vpop.f32.mrb[0].mxu0
  %4900 = vmatprep.mubr.f32.mxu0 0.0
  %4901 = vmatmul.mubr.f32.gmra.mrb[0].mxu0 %v4821
  %v4902 = vpop.f32.mrb[0].mxu0
  %v4903 = vadd.f32 0.0, %v4902
  %v4904 = vpop.f32.mrb[0].mxu0
  %4905 = vmatprep.mubr.f32.mxu0 0.0
  %4906 = vmatmul.mubr.f32.gmra.mrb[0].mxu0 %v4824
  %v4907 = vpop.f32.mrb[0].mxu0
  %v4908 = vadd.f32 0.0, %v4907
  %v4909 = vpop.f32.mrb[0].mxu0
  %4910 = vdwg.mxu0
  %v4911 = vmul.f32 %v4893, %v278
  %v4912 = vmul.f32 %v4898, %v279
  %v4913 = vmul.f32 %v4903, %v280
  %v4914 = vmul.f32 %v4908, %v281
  %v4915 = vmul.f32 %v4681, %v283
  %v4916 = vmul.f32 %v4682, %v284
  %v4917 = vmul.f32 %v4683, %v285
  %v4918 = vmul.f32 %v4684, %v286
  %4919 = vmatprep.subr.mxu0 0.0
  %4920 = vmatpush1.xpose.msra.mxu0 %v4677
  %4921 = vmatprep.subr.mxu0 0.0
  %4922 = vmatpush1.xpose.msra.mxu0 %v4678
  %4923 = vmatprep.subr.mxu0 0.0
  %4924 = vmatpush1.xpose.msra.mxu0 %v4679
  %4925 = vmatprep.subr.mxu0 0.0
  %4926 = vmatpush1.xpose.msra.mxu0 %v4680
  %4927 = vmatprep.subr.mxu0 0.0
  %4928 = vmatpush1.xpose.msra.mxu0 0.0
  %4929 = vmatprep.subr.mxu0 0.0
  %4930 = vmatpush1.xpose.msra.mxu0 0.0
  %4931 = vmatprep.subr.mxu0 0.0
  %4932 = vmatpush1.xpose.msra.mxu0 0.0
  %4933 = vmatprep.subr.mxu0 0.0
  %4934 = vmatpush1.xpose.msra.mxu0 0.0
  %4935 = vmatprep.subr.mxu0 0.0
  %4936 = vmatpush1.xpose.msra.mxu0 0.0
  %4937 = vmatprep.subr.mxu0 0.0
  %4938 = vmatpush1.xpose.msra.mxu0 0.0
  %4939 = vmatprep.subr.mxu0 0.0
  %4940 = vmatpush1.xpose.msra.mxu0 0.0
  %4941 = vmatprep.subr.mxu0 0.0
  %4942 = vmatpush1.xpose.msra.mxu0 0.0
  %4943 = vmatprep.subr.mxu0 0.0
  %4944 = vmatpush1.xpose.msra.mxu0 0.0
  %4945 = vmatprep.subr.mxu0 0.0
  %4946 = vmatpush1.xpose.msra.mxu0 0.0
  %4947 = vmatprep.subr.mxu0 0.0
  %4948 = vmatpush1.xpose.msra.mxu0 0.0
  %4949 = vmatprep.subr.mxu0 0.0
  %4950 = vmatpush1.xpose.msra.mxu0 0.0
  %4951 = vmatprep.subr.mxu0 0.0
  %4952 = vmatpush1.xpose.msra.mxu0 0.0
  %4953 = vmatprep.subr.mxu0 0.0
  %4954 = vmatpush1.xpose.msra.mxu0 0.0
  %4955 = vmatprep.subr.mxu0 0.0
  %4956 = vmatpush1.xpose.msra.mxu0 0.0
  %4957 = vmatprep.subr.mxu0 0.0
  %4958 = vmatpush1.xpose.msra.mxu0 0.0
  %4959 = vmatprep.subr.mxu0 0.0
  %4960 = vmatpush1.xpose.msra.mxu0 0.0
  %4961 = vmatprep.subr.mxu0 0.0
  %4962 = vmatpush1.xpose.msra.mxu0 0.0
  %4963 = vmatprep.subr.mxu0 0.0
  %4964 = vmatpush1.xpose.msra.mxu0 0.0
  %4965 = vmatprep.subr.mxu0 0.0
  %4966 = vmatpush1.xpose.msra.mxu0 0.0
  %4967 = vmatprep.subr.mxu0 0.0
  %4968 = vmatpush1.xpose.msra.mxu0 0.0
  %4969 = vmatprep.subr.mxu0 0.0
  %4970 = vmatpush1.xpose.msra.mxu0 0.0
  %4971 = vmatprep.subr.mxu0 0.0
  %4972 = vmatpush1.xpose.msra.mxu0 0.0
  %4973 = vmatprep.subr.mxu0 0.0
  %4974 = vmatpush1.xpose.msra.mxu0 0.0
  %4975 = vmatprep.subr.mxu0 0.0
  %4976 = vmatpush1.xpose.msra.mxu0 0.0
  %4977 = vmatprep.subr.mxu0 0.0
  %4978 = vmatpush1.xpose.msra.mxu0 0.0
  %4979 = vmatprep.subr.mxu0 0.0
  %4980 = vmatpush1.xpose.msra.mxu0 0.0
  %4981 = vmatprep.subr.mxu0 0.0
  %4982 = vmatpush1.xpose.msra.mxu0 0.0
  %4983 = vmatprep.mubr.f32.mxu0 0.0
  %4984 = vmatmul.mubr.f32.gmra.mrb[0].mxu0 %v4915
  %v4985 = vpop.f32.mrb[0].mxu0
  %v4986 = vadd.f32 0.0, %v4985
  %v4987 = vpop.f32.mrb[0].mxu0
  %4988 = vmatprep.mubr.f32.mxu0 0.0
  %4989 = vmatmul.mubr.f32.gmra.mrb[0].mxu0 %v4916
  %v4990 = vpop.f32.mrb[0].mxu0
  %v4991 = vadd.f32 0.0, %v4990
  %v4992 = vpop.f32.mrb[0].mxu0
  %4993 = vmatprep.mubr.f32.mxu0 0.0
  %4994 = vmatmul.mubr.f32.gmra.mrb[0].mxu0 %v4917
  %v4995 = vpop.f32.mrb[0].mxu0
  %v4996 = vadd.f32 0.0, %v4995
  %v4997 = vpop.f32.mrb[0].mxu0
  %4998 = vmatprep.mubr.f32.mxu0 0.0
  %4999 = vmatmul.mubr.f32.gmra.mrb[0].mxu0 %v4918
  %v5000 = vpop.f32.mrb[0].mxu0
  %v5001 = vadd.f32 0.0, %v5000
  %v5002 = vpop.f32.mrb[0].mxu0
  %5003 = vdwg.mxu0
  %v5004 = vmul.f32 %v4986, %v274
  %v5005 = vmul.f32 %v4991, %v275
  %v5006 = vmul.f32 %v4996, %v276
  %v5007 = vmul.f32 %v5001, %v277
  %v5009 = vsel %vm791, %v5004, 0
  %v5012 = vsel %vm791, %v5005, 0
  %v5015 = vsel %vm791, %v5006, 0
  %v5018 = vsel %vm791, %v5007, 0
  %5020 = vmatprep.subr.mxu0 0.0
  %5021 = vmatpush1.msra.mxu0 %v4673
  %5022 = vmatprep.subr.mxu0 0.0
  %5023 = vmatpush1.msra.mxu0 %v4674
  %5024 = vmatprep.subr.mxu0 0.0
  %5025 = vmatpush1.msra.mxu0 %v4675
  %5026 = vmatprep.subr.mxu0 0.0
  %5027 = vmatpush1.msra.mxu0 %v4676
  %5028 = vmatprep.subr.mxu0 0.0
  %5029 = vmatpush1.msra.mxu0 0.0
  %5030 = vmatprep.subr.mxu0 0.0
  %5031 = vmatpush1.msra.mxu0 0.0
  %5032 = vmatprep.subr.mxu0 0.0
  %5033 = vmatpush1.msra.mxu0 0.0
  %5034 = vmatprep.subr.mxu0 0.0
  %5035 = vmatpush1.msra.mxu0 0.0
  %5036 = vmatprep.subr.mxu0 0.0
  %5037 = vmatpush1.msra.mxu0 0.0
  %5038 = vmatprep.subr.mxu0 0.0
  %5039 = vmatpush1.msra.mxu0 0.0
  %5040 = vmatprep.subr.mxu0 0.0
  %5041 = vmatpush1.msra.mxu0 0.0
  %5042 = vmatprep.subr.mxu0 0.0
  %5043 = vmatpush1.msra.mxu0 0.0
  %5044 = vmatprep.subr.mxu0 0.0
  %5045 = vmatpush1.msra.mxu0 0.0
  %5046 = vmatprep.subr.mxu0 0.0
  %5047 = vmatpush1.msra.mxu0 0.0
  %5048 = vmatprep.subr.mxu0 0.0
  %5049 = vmatpush1.msra.mxu0 0.0
  %5050 = vmatprep.subr.mxu0 0.0
  %5051 = vmatpush1.msra.mxu0 0.0
  %5052 = vmatprep.subr.mxu0 0.0
  %5053 = vmatpush1.msra.mxu0 0.0
  %5054 = vmatprep.subr.mxu0 0.0
  %5055 = vmatpush1.msra.mxu0 0.0
  %5056 = vmatprep.subr.mxu0 0.0
  %5057 = vmatpush1.msra.mxu0 0.0
  %5058 = vmatprep.subr.mxu0 0.0
  %5059 = vmatpush1.msra.mxu0 0.0
  %5060 = vmatprep.subr.mxu0 0.0
  %5061 = vmatpush1.msra.mxu0 0.0
  %5062 = vmatprep.subr.mxu0 0.0
  %5063 = vmatpush1.msra.mxu0 0.0
  %5064 = vmatprep.subr.mxu0 0.0
  %5065 = vmatpush1.msra.mxu0 0.0
  %5066 = vmatprep.subr.mxu0 0.0
  %5067 = vmatpush1.msra.mxu0 0.0
  %5068 = vmatprep.subr.mxu0 0.0
  %5069 = vmatpush1.msra.mxu0 0.0
  %5070 = vmatprep.subr.mxu0 0.0
  %5071 = vmatpush1.msra.mxu0 0.0
  %5072 = vmatprep.subr.mxu0 0.0
  %5073 = vmatpush1.msra.mxu0 0.0
  %5074 = vmatprep.subr.mxu0 0.0
  %5075 = vmatpush1.msra.mxu0 0.0
  %5076 = vmatprep.subr.mxu0 0.0
  %5077 = vmatpush1.msra.mxu0 0.0
  %5078 = vmatprep.subr.mxu0 0.0
  %5079 = vmatpush1.msra.mxu0 0.0
  %5080 = vmatprep.subr.mxu0 0.0
  %5081 = vmatpush1.msra.mxu0 0.0
  %5082 = vmatprep.subr.mxu0 0.0
  %5083 = vmatpush1.msra.mxu0 0.0
  %5084 = vmatprep.mubr.f32.mxu0 0.0
  %5085 = vmatmul.mubr.f32.gmra.mrb[0].mxu0 %v5009
  %v5086 = vpop.f32.mrb[0].mxu0
  %v5087 = vadd.f32 0.0, %v5086
  %v5088 = vpop.f32.mrb[0].mxu0
  %5089 = vmatprep.mubr.f32.mxu0 0.0
  %5090 = vmatmul.mubr.f32.gmra.mrb[0].mxu0 %v5012
  %v5091 = vpop.f32.mrb[0].mxu0
  %v5092 = vadd.f32 0.0, %v5091
  %v5093 = vpop.f32.mrb[0].mxu0
  %5094 = vmatprep.mubr.f32.mxu0 0.0
  %5095 = vmatmul.mubr.f32.gmra.mrb[0].mxu0 %v5015
  %v5096 = vpop.f32.mrb[0].mxu0
  %v5097 = vadd.f32 0.0, %v5096
  %v5098 = vpop.f32.mrb[0].mxu0
  %5099 = vmatprep.mubr.f32.mxu0 0.0
  %5100 = vmatmul.mubr.f32.gmra.mrb[0].mxu0 %v5018
  %v5101 = vpop.f32.mrb[0].mxu0
  %v5102 = vadd.f32 0.0, %v5101
  %v5103 = vpop.f32.mrb[0].mxu0
  %5104 = vdwg.mxu0
  %v5105 = vmul.f32 %v5087, %v283
  %v5106 = vmul.f32 %v5092, %v284
  %v5107 = vmul.f32 %v5097, %v285
  %v5108 = vmul.f32 %v5102, %v286
  %v5109 = vadd.f32 %v4911, %v5105
  %v5110 = vadd.f32 %v4912, %v5106
  %v5111 = vadd.f32 %v4913, %v5107
  %v5112 = vadd.f32 %v4914, %v5108
  %v5113 = vmul.f32 %v5109, 0.125
  %v5114 = vmul.f32 %v5110, 0.125
  %v5115 = vmul.f32 %v5111, 0.125
  %v5116 = vmul.f32 %v5112, 0.125
  %v5117 = vld [vmem:[#allocation8] sm:$0xff]
  %v5118 = vld [vmem:[#allocation8 + $0x8] sm:$0xff]
  %v5119 = vld [vmem:[#allocation8 + $0x10] sm:$0xff]
  %v5120 = vld [vmem:[#allocation8 + $0x18] sm:$0xff]
  %v5121 = vsub.f32 %v5113, %v5117
  %v5122 = vsub.f32 %v5114, %v5118
  %v5123 = vsub.f32 %v5115, %v5119
  %v5124 = vsub.f32 %v5116, %v5120
  %v5125 = vmul.f32 %v5121, 0.5
  %v5126 = vmul.f32 %v5122, 0.5
  %v5127 = vmul.f32 %v5123, 0.5
  %v5128 = vmul.f32 %v5124, 0.5
  %v5129 = vadd.f32 %v5117, %v5125
  %v5130 = vadd.f32 %v5118, %v5126
  %v5131 = vadd.f32 %v5119, %v5127
  %v5132 = vadd.f32 %v5120, %v5128
  %vm5133 = vcmp.ge.f32.partialorder %v5129, 0.5
  %vm5134 = vcmp.ge.f32.partialorder %v5130, 0.5
  %vm5135 = vcmp.ge.f32.partialorder %v5131, 0.5
  %vm5136 = vcmp.ge.f32.partialorder %v5132, 0.5
  %v5137 = vsel %vm5133, 1, 0
  %v5138 = vsel %vm5134, 1, 0
  %v5139 = vsel %vm5135, 1, 0
  %v5140 = vsel %vm5136, 1, 0
  %v5141 = vcvt.s32.f32 %v5137
  %v5142 = vcvt.s32.f32 %v5138
  %v5143 = vcvt.s32.f32 %v5139
  %v5144 = vcvt.s32.f32 %v5140
  %v5145 = vsub.f32 1.0, %v5141
  %v5146 = vsub.f32 1.0, %v5142
  %v5147 = vsub.f32 1.0, %v5143
  %v5148 = vsub.f32 1.0, %v5144
  %v5149 = vmul.f32 %v5129, %v5145
  %v5150 = vmul.f32 %v5130, %v5146
  %v5151 = vmul.f32 %v5131, %v5147
  %v5152 = vmul.f32 %v5132, %v5148
  %5153 = vst [vmem:[#allocation8] sm:$0xff] %v5149
  %5154 = vst [vmem:[#allocation8 + $0x8] sm:$0xff] %v5150
  %5155 = vst [vmem:[#allocation8 + $0x10] sm:$0xff] %v5151
  %5156 = vst [vmem:[#allocation8 + $0x18] sm:$0xff] %v5152
  %5157 = vmatprep.subr.mxu0 0.0
  %5158 = vmatpush1.msra.mxu0 %v5141
  %5159 = vmatprep.subr.mxu0 0.0
  %5160 = vmatpush1.msra.mxu0 %v5142
  %5161 = vmatprep.subr.mxu0 0.0
  %5162 = vmatpush1.msra.mxu0 %v5143
  %5163 = vmatprep.subr.mxu0 0.0
  %5164 = vmatpush1.msra.mxu0 %v5144
  %5165 = vmatprep.subr.mxu0 0.0
  %5166 = vmatpush1.msra.mxu0 0.0
  %5167 = vmatprep.subr.mxu0 0.0
  %5168 = vmatpush1.msra.mxu0 0.0
  %5169 = vmatprep.subr.mxu0 0.0
  %5170 = vmatpush1.msra.mxu0 0.0
  %5171 = vmatprep.subr.mxu0 0.0
  %5172 = vmatpush1.msra.mxu0 0.0
  %5173 = vmatprep.subr.mxu0 0.0
  %5174 = vmatpush1.msra.mxu0 0.0
  %5175 = vmatprep.subr.mxu0 0.0
  %5176 = vmatpush1.msra.mxu0 0.0
  %5177 = vmatprep.subr.mxu0 0.0
  %5178 = vmatpush1.msra.mxu0 0.0
  %5179 = vmatprep.subr.mxu0 0.0
  %5180 = vmatpush1.msra.mxu0 0.0
  %5181 = vmatprep.subr.mxu0 0.0
  %5182 = vmatpush1.msra.mxu0 0.0
  %5183 = vmatprep.subr.mxu0 0.0
  %5184 = vmatpush1.msra.mxu0 0.0
  %5185 = vmatprep.subr.mxu0 0.0
  %5186 = vmatpush1.msra.mxu0 0.0
  %5187 = vmatprep.subr.mxu0 0.0
  %5188 = vmatpush1.msra.mxu0 0.0
  %5189 = vmatprep.subr.mxu0 0.0
  %5190 = vmatpush1.msra.mxu0 0.0
  %5191 = vmatprep.subr.mxu0 0.0
  %5192 = vmatpush1.msra.mxu0 0.0
  %5193 = vmatprep.subr.mxu0 0.0
  %5194 = vmatpush1.msra.mxu0 0.0
  %5195 = vmatprep.subr.mxu0 0.0
  %5196 = vmatpush1.msra.mxu0 0.0
  %5197 = vmatprep.subr.mxu0 0.0
  %5198 = vmatpush1.msra.mxu0 0.0
  %5199 = vmatprep.subr.mxu0 0.0
  %5200 = vmatpush1.msra.mxu0 0.0
  %5201 = vmatprep.subr.mxu0 0.0
  %5202 = vmatpush1.msra.mxu0 0.0
  %5203 = vmatprep.subr.mxu0 0.0
  %5204 = vmatpush1.msra.mxu0 0.0
  %5205 = vmatprep.subr.mxu0 0.0
  %5206 = vmatpush1.msra.mxu0 0.0
  %5207 = vmatprep.subr.mxu0 0.0
  %5208 = vmatpush1.msra.mxu0 0.0
  %5209 = vmatprep.subr.mxu0 0.0
  %5210 = vmatpush1.msra.mxu0 0.0
  %5211 = vmatprep.subr.mxu0 0.0
  %5212 = vmatpush1.msra.mxu0 0.0
  %5213 = vmatprep.subr.mxu0 0.0
  %5214 = vmatpush1.msra.mxu0 0.0
  %5215 = vmatprep.subr.mxu0 0.0
  %5216 = vmatpush1.msra.mxu0 0.0
  %5217 = vmatprep.subr.mxu0 0.0
  %5218 = vmatpush1.msra.mxu0 0.0
  %5219 = vmatprep.subr.mxu0 0.0
  %5220 = vmatpush1.msra.mxu0 0.0
  %5221 = vmatprep.mubr.f32.mxu0 0.0
  %5222 = vmatmul.mubr.f32.gmra.mrb[0].mxu0 %v2682
  %v5223 = vpop.f32.mrb[0].mxu0
  %v5224 = vadd.f32 %v674, %v5223
  %v5225 = vpop.f32.mrb[0].mxu0
  %5226 = vmatprep.mubr.f32.mxu0 0.0
  %5227 = vmatmul.mubr.f32.gmra.mrb[0].mxu0 %v2685
  %v5228 = vpop.f32.mrb[0].mxu0
  %v5229 = vadd.f32 %v679, %v5228
  %v5230 = vpop.f32.mrb[0].mxu0
  %5231 = vmatprep.mubr.f32.mxu0 0.0
  %5232 = vmatmul.mubr.f32.gmra.mrb[0].mxu0 %v2688
  %v5233 = vpop.f32.mrb[0].mxu0
  %v5234 = vadd.f32 %v684, %v5233
  %v5235 = vpop.f32.mrb[0].mxu0
  %5236 = vmatprep.mubr.f32.mxu0 0.0
  %5237 = vmatmul.mubr.f32.gmra.mrb[0].mxu0 %v2691
  %v5238 = vpop.f32.mrb[0].mxu0
  %v5239 = vadd.f32 %v689, %v5238
  %v5240 = vpop.f32.mrb[0].mxu0
  %5241 = vdwg.mxu0
  %v5242 = vld [vmem:[#allocation9] sm:$0xff]
  %v5243 = vld [vmem:[#allocation9 + $0x8] sm:$0xff]
  %v5244 = vld [vmem:[#allocation9 + $0x10] sm:$0xff]
  %v5245 = vld [vmem:[#allocation9 + $0x18] sm:$0xff]
  %v5246 = vsub.f32 %v5224, %v5242
  %v5247 = vsub.f32 %v5229, %v5243
  %v5248 = vsub.f32 %v5234, %v5244
  %v5249 = vsub.f32 %v5239, %v5245
  %v5250 = vmul.f32 %v5246, 0.5
  %v5251 = vmul.f32 %v5247, 0.5
  %v5252 = vmul.f32 %v5248, 0.5
  %v5253 = vmul.f32 %v5249, 0.5
  %v5254 = vadd.f32 %v5242, %v5250
  %v5255 = vadd.f32 %v5243, %v5251
  %v5256 = vadd.f32 %v5244, %v5252
  %v5257 = vadd.f32 %v5245, %v5253
  %vm5258 = vcmp.ge.f32.partialorder %v5254, 1.0
  %vm5259 = vcmp.ge.f32.partialorder %v5255, 1.0
  %vm5260 = vcmp.ge.f32.partialorder %v5256, 1.0
  %vm5261 = vcmp.ge.f32.partialorder %v5257, 1.0
  %v5262 = vsel %vm5258, 1, 0
  %v5263 = vsel %vm5259, 1, 0
  %v5264 = vsel %vm5260, 1, 0
  %v5265 = vsel %vm5261, 1, 0
  %v5266 = vcvt.s32.f32 %v5262
  %v5267 = vcvt.s32.f32 %v5263
  %v5268 = vcvt.s32.f32 %v5264
  %v5269 = vcvt.s32.f32 %v5265
  %v5270 = vsub.f32 1.0, %v5266
  %v5271 = vsub.f32 1.0, %v5267
  %v5272 = vsub.f32 1.0, %v5268
  %v5273 = vsub.f32 1.0, %v5269
  %v5274 = vmul.f32 %v5254, %v5270
  %v5275 = vmul.f32 %v5255, %v5271
  %v5276 = vmul.f32 %v5256, %v5272
  %v5277 = vmul.f32 %v5257, %v5273
  %5278 = vst [vmem:[#allocation9] sm:$0xff] %v5274
  %5279 = vst [vmem:[#allocation9 + $0x8] sm:$0xff] %v5275
  %5280 = vst [vmem:[#allocation9 + $0x10] sm:$0xff] %v5276
  %5281 = vst [vmem:[#allocation9 + $0x18] sm:$0xff] %v5277
  %v5282 = vadd.f32 %v4472, %v5266
  %v5283 = vadd.f32 %v4473, %v5267
  %v5284 = vadd.f32 %v4474, %v5268
  %v5285 = vadd.f32 %v4475, %v5269
  %5286 = vmatprep.subr.mxu0 0.0
  %5287 = vmatpush1.msra.mxu0 %v5282
  %5288 = vmatprep.subr.mxu0 0.0
  %5289 = vmatpush1.msra.mxu0 %v5283
  %5290 = vmatprep.subr.mxu0 0.0
  %5291 = vmatpush1.msra.mxu0 %v5284
  %5292 = vmatprep.subr.mxu0 0.0
  %5293 = vmatpush1.msra.mxu0 %v5285
  %5294 = vmatprep.subr.mxu0 0.0
  %5295 = vmatpush1.msra.mxu0 0.0
  %5296 = vmatprep.subr.mxu0 0.0
  %5297 = vmatpush1.msra.mxu0 0.0
  %5298 = vmatprep.subr.mxu0 0.0
  %5299 = vmatpush1.msra.mxu0 0.0
  %5300 = vmatprep.subr.mxu0 0.0
  %5301 = vmatpush1.msra.mxu0 0.0
  %5302 = vmatprep.subr.mxu0 0.0
  %5303 = vmatpush1.msra.mxu0 0.0
  %5304 = vmatprep.subr.mxu0 0.0
  %5305 = vmatpush1.msra.mxu0 0.0
  %5306 = vmatprep.subr.mxu0 0.0
  %5307 = vmatpush1.msra.mxu0 0.0
  %5308 = vmatprep.subr.mxu0 0.0
  %5309 = vmatpush1.msra.mxu0 0.0
  %5310 = vmatprep.subr.mxu0 0.0
  %5311 = vmatpush1.msra.mxu0 0.0
  %5312 = vmatprep.subr.mxu0 0.0
  %5313 = vmatpush1.msra.mxu0 0.0
  %5314 = vmatprep.subr.mxu0 0.0
  %5315 = vmatpush1.msra.mxu0 0.0
  %5316 = vmatprep.subr.mxu0 0.0
  %5317 = vmatpush1.msra.mxu0 0.0
  %5318 = vmatprep.subr.mxu0 0.0
  %5319 = vmatpush1.msra.mxu0 0.0
  %5320 = vmatprep.subr.mxu0 0.0
  %5321 = vmatpush1.msra.mxu0 0.0
  %5322 = vmatprep.subr.mxu0 0.0
  %5323 = vmatpush1.msra.mxu0 0.0
  %5324 = vmatprep.subr.mxu0 0.0
  %5325 = vmatpush1.msra.mxu0 0.0
  %5326 = vmatprep.subr.mxu0 0.0
  %5327 = vmatpush1.msra.mxu0 0.0
  %5328 = vmatprep.subr.mxu0 0.0
  %5329 = vmatpush1.msra.mxu0 0.0
  %5330 = vmatprep.subr.mxu0 0.0
  %5331 = vmatpush1.msra.mxu0 0.0
  %5332 = vmatprep.subr.mxu0 0.0
  %5333 = vmatpush1.msra.mxu0 0.0
  %5334 = vmatprep.subr.mxu0 0.0
  %5335 = vmatpush1.msra.mxu0 0.0
  %5336 = vmatprep.subr.mxu0 0.0
  %5337 = vmatpush1.msra.mxu0 0.0
  %5338 = vmatprep.subr.mxu0 0.0
  %5339 = vmatpush1.msra.mxu0 0.0
  %5340 = vmatprep.subr.mxu0 0.0
  %5341 = vmatpush1.msra.mxu0 0.0
  %5342 = vmatprep.subr.mxu0 0.0
  %5343 = vmatpush1.msra.mxu0 0.0
  %5344 = vmatprep.subr.mxu0 0.0
  %5345 = vmatpush1.msra.mxu0 0.0
  %5346 = vmatprep.subr.mxu0 0.0
  %5347 = vmatpush1.msra.mxu0 0.0
  %5348 = vmatprep.subr.mxu0 0.0
  %5349 = vmatpush1.msra.mxu0 0.0
  %5350 = vmatprep.mubr.f32.mxu0 0.0
  %5351 = vmatmul.mubr.f32.gmra.mrb[0].mxu0 %v2811
  %v5352 = vpop.f32.mrb[0].mxu0
  %v5353 = vadd.f32 %v694, %v5352
  %v5354 = vpop.f32.mrb[0].mxu0
  %5355 = vmatprep.mubr.f32.mxu0 0.0
  %5356 = vmatmul.mubr.f32.gmra.mrb[0].mxu0 %v2814
  %v5357 = vpop.f32.mrb[0].mxu0
  %v5358 = vadd.f32 %v699, %v5357
  %v5359 = vpop.f32.mrb[0].mxu0
  %5360 = vmatprep.mubr.f32.mxu0 0.0
  %5361 = vmatmul.mubr.f32.gmra.mrb[0].mxu0 %v2817
  %v5362 = vpop.f32.mrb[0].mxu0
  %v5363 = vadd.f32 %v704, %v5362
  %v5364 = vpop.f32.mrb[0].mxu0
  %5365 = vmatprep.mubr.f32.mxu0 0.0
  %5366 = vmatmul.mubr.f32.gmra.mrb[0].mxu0 %v2820
  %v5367 = vpop.f32.mrb[0].mxu0
  %v5368 = vadd.f32 %v709, %v5367
  %v5369 = vpop.f32.mrb[0].mxu0
  %5370 = vmatprep.mubr.f32.mxu0 0.0
  %5371 = vmatmul.mubr.f32.gmra.mrb[0].mxu0 %v2823
  %v5372 = vpop.f32.mrb[0].mxu0
  %v5373 = vadd.f32 %v714, %v5372
  %v5374 = vpop.f32.mrb[0].mxu0
  %5375 = vmatprep.mubr.f32.mxu0 0.0
  %5376 = vmatmul.mubr.f32.gmra.mrb[0].mxu0 %v2826
  %v5377 = vpop.f32.mrb[0].mxu0
  %v5378 = vadd.f32 %v719, %v5377
  %v5379 = vpop.f32.mrb[0].mxu0
  %5380 = vmatprep.mubr.f32.mxu0 0.0
  %5381 = vmatmul.mubr.f32.gmra.mrb[0].mxu0 %v2829
  %v5382 = vpop.f32.mrb[0].mxu0
  %v5383 = vadd.f32 %v724, %v5382
  %v5384 = vpop.f32.mrb[0].mxu0
  %5385 = vmatprep.mubr.f32.mxu0 0.0
  %5386 = vmatmul.mubr.f32.gmra.mrb[0].mxu0 %v2832
  %v5387 = vpop.f32.mrb[0].mxu0
  %v5388 = vadd.f32 %v729, %v5387
  %v5389 = vpop.f32.mrb[0].mxu0
  %5390 = vmatprep.mubr.f32.mxu0 0.0
  %5391 = vmatmul.mubr.f32.gmra.mrb[0].mxu0 %v2835
  %v5392 = vpop.f32.mrb[0].mxu0
  %v5393 = vadd.f32 %v734, %v5392
  %v5394 = vpop.f32.mrb[0].mxu0
  %5395 = vmatprep.mubr.f32.mxu0 0.0
  %5396 = vmatmul.mubr.f32.gmra.mrb[0].mxu0 %v2838
  %v5397 = vpop.f32.mrb[0].mxu0
  %v5398 = vadd.f32 %v739, %v5397
  %v5399 = vpop.f32.mrb[0].mxu0
  %5400 = vmatprep.mubr.f32.mxu0 0.0
  %5401 = vmatmul.mubr.f32.gmra.mrb[0].mxu0 %v2841
  %v5402 = vpop.f32.mrb[0].mxu0
  %v5403 = vadd.f32 %v744, %v5402
  %v5404 = vpop.f32.mrb[0].mxu0
  %5405 = vmatprep.mubr.f32.mxu0 0.0
  %5406 = vmatmul.mubr.f32.gmra.mrb[0].mxu0 %v2844
  %v5407 = vpop.f32.mrb[0].mxu0
  %v5408 = vadd.f32 %v749, %v5407
  %v5409 = vpop.f32.mrb[0].mxu0
  %5410 = vmatprep.mubr.f32.mxu0 0.0
  %5411 = vmatmul.mubr.f32.gmra.mrb[0].mxu0 %v2847
  %v5412 = vpop.f32.mrb[0].mxu0
  %v5413 = vadd.f32 %v754, %v5412
  %v5414 = vpop.f32.mrb[0].mxu0
  %5415 = vmatprep.mubr.f32.mxu0 0.0
  %5416 = vmatmul.mubr.f32.gmra.mrb[0].mxu0 %v2850
  %v5417 = vpop.f32.mrb[0].mxu0
  %v5418 = vadd.f32 %v759, %v5417
  %v5419 = vpop.f32.mrb[0].mxu0
  %5420 = vmatprep.mubr.f32.mxu0 0.0
  %5421 = vmatmul.mubr.f32.gmra.mrb[0].mxu0 %v2853
  %v5422 = vpop.f32.mrb[0].mxu0
  %v5423 = vadd.f32 %v764, %v5422
  %v5424 = vpop.f32.mrb[0].mxu0
  %5425 = vmatprep.mubr.f32.mxu0 0.0
  %5426 = vmatmul.mubr.f32.gmra.mrb[0].mxu0 %v2856
  %v5427 = vpop.f32.mrb[0].mxu0
  %v5428 = vadd.f32 %v769, %v5427
  %v5429 = vpop.f32.mrb[0].mxu0
  %5430 = vdwg.mxu0
  %v5431 = vld [vmem:[#allocation10] sm:$0xff]
  %v5432 = vld [vmem:[#allocation10 + $0x8] sm:$0xff]
  %v5433 = vld [vmem:[#allocation10 + $0x10] sm:$0xff]
  %v5434 = vld [vmem:[#allocation10 + $0x18] sm:$0xff]
  %v5435 = vld [vmem:[#allocation10 + $0x20] sm:$0xff]
  %v5436 = vld [vmem:[#allocation10 + $0x28] sm:$0xff]
  %v5437 = vld [vmem:[#allocation10 + $0x30] sm:$0xff]
  %v5438 = vld [vmem:[#allocation10 + $0x38] sm:$0xff]
  %v5439 = vld [vmem:[#allocation10 + $0x40] sm:$0xff]
  %v5440 = vld [vmem:[#allocation10 + $0x48] sm:$0xff]
  %v5441 = vld [vmem:[#allocation10 + $0x50] sm:$0xff]
  %v5442 = vld [vmem:[#allocation10 + $0x58] sm:$0xff]
  %v5443 = vld [vmem:[#allocation10 + $0x60] sm:$0xff]
  %v5444 = vld [vmem:[#allocation10 + $0x68] sm:$0xff]
  %v5445 = vld [vmem:[#allocation10 + $0x70] sm:$0xff]
  %v5446 = vld [vmem:[#allocation10 + $0x78] sm:$0xff]
  %v5447 = vsub.f32 %v5353, %v5431
  %v5448 = vsub.f32 %v5358, %v5432
  %v5449 = vsub.f32 %v5363, %v5433
  %v5450 = vsub.f32 %v5368, %v5434
  %v5451 = vsub.f32 %v5373, %v5435
  %v5452 = vsub.f32 %v5378, %v5436
  %v5453 = vsub.f32 %v5383, %v5437
  %v5454 = vsub.f32 %v5388, %v5438
  %v5455 = vsub.f32 %v5393, %v5439
  %v5456 = vsub.f32 %v5398, %v5440
  %v5457 = vsub.f32 %v5403, %v5441
  %v5458 = vsub.f32 %v5408, %v5442
  %v5459 = vsub.f32 %v5413, %v5443
  %v5460 = vsub.f32 %v5418, %v5444
  %v5461 = vsub.f32 %v5423, %v5445
  %v5462 = vsub.f32 %v5428, %v5446
  %v5463 = vmul.f32 %v5447, 0.5
  %v5464 = vmul.f32 %v5448, 0.5
  %v5465 = vmul.f32 %v5449, 0.5
  %v5466 = vmul.f32 %v5450, 0.5
  %v5467 = vmul.f32 %v5451, 0.5
  %v5468 = vmul.f32 %v5452, 0.5
  %v5469 = vmul.f32 %v5453, 0.5
  %v5470 = vmul.f32 %v5454, 0.5
  %v5471 = vmul.f32 %v5455, 0.5
  %v5472 = vmul.f32 %v5456, 0.5
  %v5473 = vmul.f32 %v5457, 0.5
  %v5474 = vmul.f32 %v5458, 0.5
  %v5475 = vmul.f32 %v5459, 0.5
  %v5476 = vmul.f32 %v5460, 0.5
  %v5477 = vmul.f32 %v5461, 0.5
  %v5478 = vmul.f32 %v5462, 0.5
  %v5479 = vadd.f32 %v5431, %v5463
  %v5480 = vadd.f32 %v5432, %v5464
  %v5481 = vadd.f32 %v5433, %v5465
  %v5482 = vadd.f32 %v5434, %v5466
  %v5483 = vadd.f32 %v5435, %v5467
  %v5484 = vadd.f32 %v5436, %v5468
  %v5485 = vadd.f32 %v5437, %v5469
  %v5486 = vadd.f32 %v5438, %v5470
  %v5487 = vadd.f32 %v5439, %v5471
  %v5488 = vadd.f32 %v5440, %v5472
  %v5489 = vadd.f32 %v5441, %v5473
  %v5490 = vadd.f32 %v5442, %v5474
  %v5491 = vadd.f32 %v5443, %v5475
  %v5492 = vadd.f32 %v5444, %v5476
  %v5493 = vadd.f32 %v5445, %v5477
  %v5494 = vadd.f32 %v5446, %v5478
  %vm5495 = vcmp.ge.f32.partialorder %v5479, 1.0
  %vm5496 = vcmp.ge.f32.partialorder %v5480, 1.0
  %vm5497 = vcmp.ge.f32.partialorder %v5481, 1.0
  %vm5498 = vcmp.ge.f32.partialorder %v5482, 1.0
  %vm5499 = vcmp.ge.f32.partialorder %v5483, 1.0
  %vm5500 = vcmp.ge.f32.partialorder %v5484, 1.0
  %vm5501 = vcmp.ge.f32.partialorder %v5485, 1.0
  %vm5502 = vcmp.ge.f32.partialorder %v5486, 1.0
  %vm5503 = vcmp.ge.f32.partialorder %v5487, 1.0
  %vm5504 = vcmp.ge.f32.partialorder %v5488, 1.0
  %vm5505 = vcmp.ge.f32.partialorder %v5489, 1.0
  %vm5506 = vcmp.ge.f32.partialorder %v5490, 1.0
  %vm5507 = vcmp.ge.f32.partialorder %v5491, 1.0
  %vm5508 = vcmp.ge.f32.partialorder %v5492, 1.0
  %vm5509 = vcmp.ge.f32.partialorder %v5493, 1.0
  %vm5510 = vcmp.ge.f32.partialorder %v5494, 1.0
  %v5511 = vsel %vm5495, 1, 0
  %v5512 = vsel %vm5496, 1, 0
  %v5513 = vsel %vm5497, 1, 0
  %v5514 = vsel %vm5498, 1, 0
  %v5515 = vsel %vm5499, 1, 0
  %v5516 = vsel %vm5500, 1, 0
  %v5517 = vsel %vm5501, 1, 0
  %v5518 = vsel %vm5502, 1, 0
  %v5519 = vsel %vm5503, 1, 0
  %v5520 = vsel %vm5504, 1, 0
  %v5521 = vsel %vm5505, 1, 0
  %v5522 = vsel %vm5506, 1, 0
  %v5523 = vsel %vm5507, 1, 0
  %v5524 = vsel %vm5508, 1, 0
  %v5525 = vsel %vm5509, 1, 0
  %v5526 = vsel %vm5510, 1, 0
  %v5527 = vcvt.s32.f32 %v5511
  %v5528 = vcvt.s32.f32 %v5512
  %v5529 = vcvt.s32.f32 %v5513
  %v5530 = vcvt.s32.f32 %v5514
  %v5531 = vcvt.s32.f32 %v5515
  %v5532 = vcvt.s32.f32 %v5516
  %v5533 = vcvt.s32.f32 %v5517
  %v5534 = vcvt.s32.f32 %v5518
  %v5535 = vcvt.s32.f32 %v5519
  %v5536 = vcvt.s32.f32 %v5520
  %v5537 = vcvt.s32.f32 %v5521
  %v5538 = vcvt.s32.f32 %v5522
  %v5539 = vcvt.s32.f32 %v5523
  %v5540 = vcvt.s32.f32 %v5524
  %v5541 = vcvt.s32.f32 %v5525
  %v5542 = vcvt.s32.f32 %v5526
  %v5543 = vsub.f32 1.0, %v5527
  %v5544 = vsub.f32 1.0, %v5528
  %v5545 = vsub.f32 1.0, %v5529
  %v5546 = vsub.f32 1.0, %v5530
  %v5547 = vsub.f32 1.0, %v5531
  %v5548 = vsub.f32 1.0, %v5532
  %v5549 = vsub.f32 1.0, %v5533
  %v5550 = vsub.f32 1.0, %v5534
  %v5551 = vsub.f32 1.0, %v5535
  %v5552 = vsub.f32 1.0, %v5536
  %v5553 = vsub.f32 1.0, %v5537
  %v5554 = vsub.f32 1.0, %v5538
  %v5555 = vsub.f32 1.0, %v5539
  %v5556 = vsub.f32 1.0, %v5540
  %v5557 = vsub.f32 1.0, %v5541
  %v5558 = vsub.f32 1.0, %v5542
  %v5559 = vmul.f32 %v5479, %v5543
  %v5560 = vmul.f32 %v5480, %v5544
  %v5561 = vmul.f32 %v5481, %v5545
  %v5562 = vmul.f32 %v5482, %v5546
  %v5563 = vmul.f32 %v5483, %v5547
  %v5564 = vmul.f32 %v5484, %v5548
  %v5565 = vmul.f32 %v5485, %v5549
  %v5566 = vmul.f32 %v5486, %v5550
  %v5567 = vmul.f32 %v5487, %v5551
  %v5568 = vmul.f32 %v5488, %v5552
  %v5569 = vmul.f32 %v5489, %v5553
  %v5570 = vmul.f32 %v5490, %v5554
  %v5571 = vmul.f32 %v5491, %v5555
  %v5572 = vmul.f32 %v5492, %v5556
  %v5573 = vmul.f32 %v5493, %v5557
  %v5574 = vmul.f32 %v5494, %v5558
  %5575 = vst [vmem:[#allocation10] sm:$0xff] %v5559
  %5576 = vst [vmem:[#allocation10 + $0x8] sm:$0xff] %v5560
  %5577 = vst [vmem:[#allocation10 + $0x10] sm:$0xff] %v5561
  %5578 = vst [vmem:[#allocation10 + $0x18] sm:$0xff] %v5562
  %5579 = vst [vmem:[#allocation10 + $0x20] sm:$0xff] %v5563
  %5580 = vst [vmem:[#allocation10 + $0x28] sm:$0xff] %v5564
  %5581 = vst [vmem:[#allocation10 + $0x30] sm:$0xff] %v5565
  %5582 = vst [vmem:[#allocation10 + $0x38] sm:$0xff] %v5566
  %5583 = vst [vmem:[#allocation10 + $0x40] sm:$0xff] %v5567
  %5584 = vst [vmem:[#allocation10 + $0x48] sm:$0xff] %v5568
  %5585 = vst [vmem:[#allocation10 + $0x50] sm:$0xff] %v5569
  %5586 = vst [vmem:[#allocation10 + $0x58] sm:$0xff] %v5570
  %5587 = vst [vmem:[#allocation10 + $0x60] sm:$0xff] %v5571
  %5588 = vst [vmem:[#allocation10 + $0x68] sm:$0xff] %v5572
  %5589 = vst [vmem:[#allocation10 + $0x70] sm:$0xff] %v5573
  %5590 = vst [vmem:[#allocation10 + $0x78] sm:$0xff] %v5574
  %5591 = vmatprep.subr.mxu0 0.0
  %5592 = vmatpush1.msra.mxu0 %v5527
  %5593 = vmatprep.subr.mxu0 0.0
  %5594 = vmatpush1.msra.mxu0 %v5528
  %5595 = vmatprep.subr.mxu0 0.0
  %5596 = vmatpush1.msra.mxu0 %v5529
  %5597 = vmatprep.subr.mxu0 0.0
  %5598 = vmatpush1.msra.mxu0 %v5530
  %5599 = vmatprep.subr.mxu0 0.0
  %5600 = vmatpush1.msra.mxu0 %v5531
  %5601 = vmatprep.subr.mxu0 0.0
  %5602 = vmatpush1.msra.mxu0 %v5532
  %5603 = vmatprep.subr.mxu0 0.0
  %5604 = vmatpush1.msra.mxu0 %v5533
  %5605 = vmatprep.subr.mxu0 0.0
  %5606 = vmatpush1.msra.mxu0 %v5534
  %5607 = vmatprep.subr.mxu0 0.0
  %5608 = vmatpush1.msra.mxu0 %v5535
  %5609 = vmatprep.subr.mxu0 0.0
  %5610 = vmatpush1.msra.mxu0 %v5536
  %5611 = vmatprep.subr.mxu0 0.0
  %5612 = vmatpush1.msra.mxu0 %v5537
  %5613 = vmatprep.subr.mxu0 0.0
  %5614 = vmatpush1.msra.mxu0 %v5538
  %5615 = vmatprep.subr.mxu0 0.0
  %5616 = vmatpush1.msra.mxu0 %v5539
  %5617 = vmatprep.subr.mxu0 0.0
  %5618 = vmatpush1.msra.mxu0 %v5540
  %5619 = vmatprep.subr.mxu0 0.0
  %5620 = vmatpush1.msra.mxu0 %v5541
  %5621 = vmatprep.subr.mxu0 0.0
  %5622 = vmatpush1.msra.mxu0 %v5542
  %5623 = vmatprep.subr.mxu0 0.0
  %5624 = vmatpush1.msra.mxu0 0.0
  %5625 = vmatprep.subr.mxu0 0.0
  %5626 = vmatpush1.msra.mxu0 0.0
  %5627 = vmatprep.subr.mxu0 0.0
  %5628 = vmatpush1.msra.mxu0 0.0
  %5629 = vmatprep.subr.mxu0 0.0
  %5630 = vmatpush1.msra.mxu0 0.0
  %5631 = vmatprep.subr.mxu0 0.0
  %5632 = vmatpush1.msra.mxu0 0.0
  %5633 = vmatprep.subr.mxu0 0.0
  %5634 = vmatpush1.msra.mxu0 0.0
  %5635 = vmatprep.subr.mxu0 0.0
  %5636 = vmatpush1.msra.mxu0 0.0
  %5637 = vmatprep.subr.mxu0 0.0
  %5638 = vmatpush1.msra.mxu0 0.0
  %5639 = vmatprep.subr.mxu0 0.0
  %5640 = vmatpush1.msra.mxu0 0.0
  %5641 = vmatprep.subr.mxu0 0.0
  %5642 = vmatpush1.msra.mxu0 0.0
  %5643 = vmatprep.subr.mxu0 0.0
  %5644 = vmatpush1.msra.mxu0 0.0
  %5645 = vmatprep.subr.mxu0 0.0
  %5646 = vmatpush1.msra.mxu0 0.0
  %5647 = vmatprep.subr.mxu0 0.0
  %5648 = vmatpush1.msra.mxu0 0.0
  %5649 = vmatprep.subr.mxu0 0.0
  %5650 = vmatpush1.msra.mxu0 0.0
  %5651 = vmatprep.subr.mxu0 0.0
  %5652 = vmatpush1.msra.mxu0 0.0
  %5653 = vmatprep.subr.mxu0 0.0
  %5654 = vmatpush1.msra.mxu0 0.0
  %5655 = vmatprep.mubr.f32.mxu0 0.0
  %5656 = vmatmul.mubr.f32.gmra.mrb[0].mxu0 %v603
  %v5657 = vpop.f32.mrb[0].mxu0
  %v5658 = vadd.f32 %v774, %v5657
  %v5659 = vpop.f32.mrb[0].mxu0
  %5660 = vmatprep.mubr.f32.mxu0 0.0
  %5661 = vmatmul.mubr.f32.gmra.mrb[0].mxu0 %v604
  %v5662 = vpop.f32.mrb[0].mxu0
  %v5663 = vadd.f32 %v779, %v5662
  %v5664 = vpop.f32.mrb[0].mxu0
  %5665 = vmatprep.mubr.f32.mxu0 0.0
  %5666 = vmatmul.mubr.f32.gmra.mrb[0].mxu0 %v605
  %v5667 = vpop.f32.mrb[0].mxu0
  %v5668 = vadd.f32 %v784, %v5667
  %v5669 = vpop.f32.mrb[0].mxu0
  %5670 = vmatprep.mubr.f32.mxu0 0.0
  %5671 = vmatmul.mubr.f32.gmra.mrb[0].mxu0 %v606
  %v5672 = vpop.f32.mrb[0].mxu0
  %v5673 = vadd.f32 %v789, %v5672
  %v5674 = vpop.f32.mrb[0].mxu0
  %5675 = vdwg.mxu0
  %v5676 = vld [vmem:[#allocation11] sm:$0xff]
  %v5677 = vld [vmem:[#allocation11 + $0x8] sm:$0xff]
  %v5678 = vld [vmem:[#allocation11 + $0x10] sm:$0xff]
  %v5679 = vld [vmem:[#allocation11 + $0x18] sm:$0xff]
  %v5680 = vsub.f32 %v5658, %v5676
  %v5681 = vsub.f32 %v5663, %v5677
  %v5682 = vsub.f32 %v5668, %v5678
  %v5683 = vsub.f32 %v5673, %v5679
  %v5684 = vmul.f32 %v5680, 0.5
  %v5685 = vmul.f32 %v5681, 0.5
  %v5686 = vmul.f32 %v5682, 0.5
  %v5687 = vmul.f32 %v5683, 0.5
  %v5688 = vadd.f32 %v5676, %v5684
  %v5689 = vadd.f32 %v5677, %v5685
  %v5690 = vadd.f32 %v5678, %v5686
  %v5691 = vadd.f32 %v5679, %v5687
  %vm5692 = vcmp.ge.f32.partialorder %v5688, 1.0
  %vm5693 = vcmp.ge.f32.partialorder %v5689, 1.0
  %vm5694 = vcmp.ge.f32.partialorder %v5690, 1.0
  %vm5695 = vcmp.ge.f32.partialorder %v5691, 1.0
  %v5696 = vsel %vm5692, 1, 0
  %v5697 = vsel %vm5693, 1, 0
  %v5698 = vsel %vm5694, 1, 0
  %v5699 = vsel %vm5695, 1, 0
  %v5700 = vcvt.s32.f32 %v5696
  %v5701 = vcvt.s32.f32 %v5697
  %v5702 = vcvt.s32.f32 %v5698
  %v5703 = vcvt.s32.f32 %v5699
  %v5704 = vsub.f32 1.0, %v5700
  %v5705 = vsub.f32 1.0, %v5701
  %v5706 = vsub.f32 1.0, %v5702
  %v5707 = vsub.f32 1.0, %v5703
  %v5708 = vmul.f32 %v5688, %v5704
  %v5709 = vmul.f32 %v5689, %v5705
  %v5710 = vmul.f32 %v5690, %v5706
  %v5711 = vmul.f32 %v5691, %v5707
  %5712 = vst [vmem:[#allocation11] sm:$0xff] %v5708
  %5713 = vst [vmem:[#allocation11 + $0x8] sm:$0xff] %v5709
  %5714 = vst [vmem:[#allocation11 + $0x10] sm:$0xff] %v5710
  %5715 = vst [vmem:[#allocation11 + $0x18] sm:$0xff] %v5711
  %v5716 = vadd.f32 %v5282, %v5700
  %v5717 = vadd.f32 %v5283, %v5701
  %v5718 = vadd.f32 %v5284, %v5702
  %v5719 = vadd.f32 %v5285, %v5703
  %v5720 = vadd.f32 %v3228, %v5716
  %v5721 = vadd.f32 %v3229, %v5717
  %v5722 = vadd.f32 %v3230, %v5718
  %v5723 = vadd.f32 %v3231, %v5719
  %5724 = vmatprep.subr.mxu0 0.0
  %5725 = vmatpush1.msra.mxu0 %v242
  %5726 = vmatprep.subr.mxu0 0.0
  %5727 = vmatpush1.msra.mxu0 %v243
  %5728 = vmatprep.subr.mxu0 0.0
  %5729 = vmatpush1.msra.mxu0 %v244
  %5730 = vmatprep.subr.mxu0 0.0
  %5731 = vmatpush1.msra.mxu0 %v245
  %5732 = vmatprep.subr.mxu0 0.0
  %5733 = vmatpush1.msra.mxu0 0.0
  %5734 = vmatprep.subr.mxu0 0.0
  %5735 = vmatpush1.msra.mxu0 0.0
  %5736 = vmatprep.subr.mxu0 0.0
  %5737 = vmatpush1.msra.mxu0 0.0
  %5738 = vmatprep.subr.mxu0 0.0
  %5739 = vmatpush1.msra.mxu0 0.0
  %5740 = vmatprep.subr.mxu0 0.0
  %5741 = vmatpush1.msra.mxu0 0.0
  %5742 = vmatprep.subr.mxu0 0.0
  %5743 = vmatpush1.msra.mxu0 0.0
  %5744 = vmatprep.subr.mxu0 0.0
  %5745 = vmatpush1.msra.mxu0 0.0
  %5746 = vmatprep.subr.mxu0 0.0
  %5747 = vmatpush1.msra.mxu0 0.0
  %5748 = vmatprep.subr.mxu0 0.0
  %5749 = vmatpush1.msra.mxu0 0.0
  %5750 = vmatprep.subr.mxu0 0.0
  %5751 = vmatpush1.msra.mxu0 0.0
  %5752 = vmatprep.subr.mxu0 0.0
  %5753 = vmatpush1.msra.mxu0 0.0
  %5754 = vmatprep.subr.mxu0 0.0
  %5755 = vmatpush1.msra.mxu0 0.0
  %5756 = vmatprep.subr.mxu0 0.0
  %5757 = vmatpush1.msra.mxu0 0.0
  %5758 = vmatprep.subr.mxu0 0.0
  %5759 = vmatpush1.msra.mxu0 0.0
  %5760 = vmatprep.subr.mxu0 0.0
  %5761 = vmatpush1.msra.mxu0 0.0
  %5762 = vmatprep.subr.mxu0 0.0
  %5763 = vmatpush1.msra.mxu0 0.0
  %5764 = vmatprep.subr.mxu0 0.0
  %5765 = vmatpush1.msra.mxu0 0.0
  %5766 = vmatprep.subr.mxu0 0.0
  %5767 = vmatpush1.msra.mxu0 0.0
  %5768 = vmatprep.subr.mxu0 0.0
  %5769 = vmatpush1.msra.mxu0 0.0
  %5770 = vmatprep.subr.mxu0 0.0
  %5771 = vmatpush1.msra.mxu0 0.0
  %5772 = vmatprep.subr.mxu0 0.0
  %5773 = vmatpush1.msra.mxu0 0.0
  %5774 = vmatprep.subr.mxu0 0.0
  %5775 = vmatpush1.msra.mxu0 0.0
  %5776 = vmatprep.subr.mxu0 0.0
  %5777 = vmatpush1.msra.mxu0 0.0
  %5778 = vmatprep.subr.mxu0 0.0
  %5779 = vmatpush1.msra.mxu0 0.0
  %5780 = vmatprep.subr.mxu0 0.0
  %5781 = vmatpush1.msra.mxu0 0.0
  %5782 = vmatprep.subr.mxu0 0.0
  %5783 = vmatpush1.msra.mxu0 0.0
  %5784 = vmatprep.subr.mxu0 0.0
  %5785 = vmatpush1.msra.mxu0 0.0
  %5786 = vmatprep.subr.mxu0 0.0
  %5787 = vmatpush1.msra.mxu0 0.0
  %5788 = vmatprep.mubr.f32.mxu0 0.0
  %5789 = vmatmul.mubr.f32.gmra.mrb[0].mxu0 %v793
  %v5790 = vpop.f32.mrb[0].mxu0
  %v5791 = vadd.f32 %v362, %v5790
  %v5792 = vpop.f32.mrb[0].mxu0
  %5793 = vmatprep.mubr.f32.mxu0 0.0
  %5794 = vmatmul.mubr.f32.gmra.mrb[0].mxu0 %v796
  %v5795 = vpop.f32.mrb[0].mxu0
  %v5796 = vadd.f32 %v367, %v5795
  %v5797 = vpop.f32.mrb[0].mxu0
  %5798 = vmatprep.mubr.f32.mxu0 0.0
  %5799 = vmatmul.mubr.f32.gmra.mrb[0].mxu0 %v799
  %v5800 = vpop.f32.mrb[0].mxu0
  %v5801 = vadd.f32 %v372, %v5800
  %v5802 = vpop.f32.mrb[0].mxu0
  %5803 = vmatprep.mubr.f32.mxu0 0.0
  %5804 = vmatmul.mubr.f32.gmra.mrb[0].mxu0 %v802
  %v5805 = vpop.f32.mrb[0].mxu0
  %v5806 = vadd.f32 %v377, %v5805
  %v5807 = vpop.f32.mrb[0].mxu0
  %5808 = vmatprep.mubr.f32.mxu0 0.0
  %5809 = vmatmul.mubr.f32.gmra.mrb[0].mxu0 %v805
  %v5810 = vpop.f32.mrb[0].mxu0
  %v5811 = vadd.f32 %v382, %v5810
  %v5812 = vpop.f32.mrb[0].mxu0
  %5813 = vmatprep.mubr.f32.mxu0 0.0
  %5814 = vmatmul.mubr.f32.gmra.mrb[0].mxu0 %v808
  %v5815 = vpop.f32.mrb[0].mxu0
  %v5816 = vadd.f32 %v387, %v5815
  %v5817 = vpop.f32.mrb[0].mxu0
  %5818 = vmatprep.mubr.f32.mxu0 0.0
  %5819 = vmatmul.mubr.f32.gmra.mrb[0].mxu0 %v811
  %v5820 = vpop.f32.mrb[0].mxu0
  %v5821 = vadd.f32 %v392, %v5820
  %v5822 = vpop.f32.mrb[0].mxu0
  %5823 = vmatprep.mubr.f32.mxu0 0.0
  %5824 = vmatmul.mubr.f32.gmra.mrb[0].mxu0 %v814
  %v5825 = vpop.f32.mrb[0].mxu0
  %v5826 = vadd.f32 %v397, %v5825
  %v5827 = vpop.f32.mrb[0].mxu0
  %5828 = vmatprep.mubr.f32.mxu0 0.0
  %5829 = vmatmul.mubr.f32.gmra.mrb[0].mxu0 %v817
  %v5830 = vpop.f32.mrb[0].mxu0
  %v5831 = vadd.f32 %v402, %v5830
  %v5832 = vpop.f32.mrb[0].mxu0
  %5833 = vmatprep.mubr.f32.mxu0 0.0
  %5834 = vmatmul.mubr.f32.gmra.mrb[0].mxu0 %v820
  %v5835 = vpop.f32.mrb[0].mxu0
  %v5836 = vadd.f32 %v407, %v5835
  %v5837 = vpop.f32.mrb[0].mxu0
  %5838 = vmatprep.mubr.f32.mxu0 0.0
  %5839 = vmatmul.mubr.f32.gmra.mrb[0].mxu0 %v823
  %v5840 = vpop.f32.mrb[0].mxu0
  %v5841 = vadd.f32 %v412, %v5840
  %v5842 = vpop.f32.mrb[0].mxu0
  %5843 = vmatprep.mubr.f32.mxu0 0.0
  %5844 = vmatmul.mubr.f32.gmra.mrb[0].mxu0 %v826
  %v5845 = vpop.f32.mrb[0].mxu0
  %v5846 = vadd.f32 %v417, %v5845
  %v5847 = vpop.f32.mrb[0].mxu0
  %5848 = vdwg.mxu0
  %v5849 = vld [vmem:[#allocation2] sm:$0xff]
  %v5850 = vld [vmem:[#allocation2 + $0x8] sm:$0xff]
  %v5851 = vld [vmem:[#allocation2 + $0x10] sm:$0xff]
  %v5852 = vld [vmem:[#allocation2 + $0x18] sm:$0xff]
  %v5853 = vld [vmem:[#allocation2 + $0x20] sm:$0xff]
  %v5854 = vld [vmem:[#allocation2 + $0x28] sm:$0xff]
  %v5855 = vld [vmem:[#allocation2 + $0x30] sm:$0xff]
  %v5856 = vld [vmem:[#allocation2 + $0x38] sm:$0xff]
  %v5857 = vld [vmem:[#allocation2 + $0x40] sm:$0xff]
  %v5858 = vld [vmem:[#allocation2 + $0x48] sm:$0xff]
  %v5859 = vld [vmem:[#allocation2 + $0x50] sm:$0xff]
  %v5860 = vld [vmem:[#allocation2 + $0x58] sm:$0xff]
  %v5861 = vsub.f32 %v5791, %v5849
  %v5862 = vsub.f32 %v5796, %v5850
  %v5863 = vsub.f32 %v5801, %v5851
  %v5864 = vsub.f32 %v5806, %v5852
  %v5865 = vsub.f32 %v5811, %v5853
  %v5866 = vsub.f32 %v5816, %v5854
  %v5867 = vsub.f32 %v5821, %v5855
  %v5868 = vsub.f32 %v5826, %v5856
  %v5869 = vsub.f32 %v5831, %v5857
  %v5870 = vsub.f32 %v5836, %v5858
  %v5871 = vsub.f32 %v5841, %v5859
  %v5872 = vsub.f32 %v5846, %v5860
  %v5873 = vmul.f32 %v5861, 0.5
  %v5874 = vmul.f32 %v5862, 0.5
  %v5875 = vmul.f32 %v5863, 0.5
  %v5876 = vmul.f32 %v5864, 0.5
  %v5877 = vmul.f32 %v5865, 0.5
  %v5878 = vmul.f32 %v5866, 0.5
  %v5879 = vmul.f32 %v5867, 0.5
  %v5880 = vmul.f32 %v5868, 0.5
  %v5881 = vmul.f32 %v5869, 0.5
  %v5882 = vmul.f32 %v5870, 0.5
  %v5883 = vmul.f32 %v5871, 0.5
  %v5884 = vmul.f32 %v5872, 0.5
  %v5885 = vadd.f32 %v5849, %v5873
  %v5886 = vadd.f32 %v5850, %v5874
  %v5887 = vadd.f32 %v5851, %v5875
  %v5888 = vadd.f32 %v5852, %v5876
  %v5889 = vadd.f32 %v5853, %v5877
  %v5890 = vadd.f32 %v5854, %v5878
  %v5891 = vadd.f32 %v5855, %v5879
  %v5892 = vadd.f32 %v5856, %v5880
  %v5893 = vadd.f32 %v5857, %v5881
  %v5894 = vadd.f32 %v5858, %v5882
  %v5895 = vadd.f32 %v5859, %v5883
  %v5896 = vadd.f32 %v5860, %v5884
  %vm5897 = vcmp.ge.f32.partialorder %v5885, 1.0
  %vm5898 = vcmp.ge.f32.partialorder %v5886, 1.0
  %vm5899 = vcmp.ge.f32.partialorder %v5887, 1.0
  %vm5900 = vcmp.ge.f32.partialorder %v5888, 1.0
  %vm5901 = vcmp.ge.f32.partialorder %v5889, 1.0
  %vm5902 = vcmp.ge.f32.partialorder %v5890, 1.0
  %vm5903 = vcmp.ge.f32.partialorder %v5891, 1.0
  %vm5904 = vcmp.ge.f32.partialorder %v5892, 1.0
  %vm5905 = vcmp.ge.f32.partialorder %v5893, 1.0
  %vm5906 = vcmp.ge.f32.partialorder %v5894, 1.0
  %vm5907 = vcmp.ge.f32.partialorder %v5895, 1.0
  %vm5908 = vcmp.ge.f32.partialorder %v5896, 1.0
  %v5909 = vsel %vm5897, 1, 0
  %v5910 = vsel %vm5898, 1, 0
  %v5911 = vsel %vm5899, 1, 0
  %v5912 = vsel %vm5900, 1, 0
  %v5913 = vsel %vm5901, 1, 0
  %v5914 = vsel %vm5902, 1, 0
  %v5915 = vsel %vm5903, 1, 0
  %v5916 = vsel %vm5904, 1, 0
  %v5917 = vsel %vm5905, 1, 0
  %v5918 = vsel %vm5906, 1, 0
  %v5919 = vsel %vm5907, 1, 0
  %v5920 = vsel %vm5908, 1, 0
  %v5921 = vcvt.s32.f32 %v5909
  %v5922 = vcvt.s32.f32 %v5910
  %v5923 = vcvt.s32.f32 %v5911
  %v5924 = vcvt.s32.f32 %v5912
  %v5925 = vcvt.s32.f32 %v5913
  %v5926 = vcvt.s32.f32 %v5914
  %v5927 = vcvt.s32.f32 %v5915
  %v5928 = vcvt.s32.f32 %v5916
  %v5929 = vcvt.s32.f32 %v5917
  %v5930 = vcvt.s32.f32 %v5918
  %v5931 = vcvt.s32.f32 %v5919
  %v5932 = vcvt.s32.f32 %v5920
  %v5933 = vsub.f32 1.0, %v5921
  %v5934 = vsub.f32 1.0, %v5922
  %v5935 = vsub.f32 1.0, %v5923
  %v5936 = vsub.f32 1.0, %v5924
  %v5937 = vsub.f32 1.0, %v5925
  %v5938 = vsub.f32 1.0, %v5926
  %v5939 = vsub.f32 1.0, %v5927
  %v5940 = vsub.f32 1.0, %v5928
  %v5941 = vsub.f32 1.0, %v5929
  %v5942 = vsub.f32 1.0, %v5930
  %v5943 = vsub.f32 1.0, %v5931
  %v5944 = vsub.f32 1.0, %v5932
  %v5945 = vmul.f32 %v5885, %v5933
  %v5946 = vmul.f32 %v5886, %v5934
  %v5947 = vmul.f32 %v5887, %v5935
  %v5948 = vmul.f32 %v5888, %v5936
  %v5949 = vmul.f32 %v5889, %v5937
  %v5950 = vmul.f32 %v5890, %v5938
  %v5951 = vmul.f32 %v5891, %v5939
  %v5952 = vmul.f32 %v5892, %v5940
  %v5953 = vmul.f32 %v5893, %v5941
  %v5954 = vmul.f32 %v5894, %v5942
  %v5955 = vmul.f32 %v5895, %v5943
  %v5956 = vmul.f32 %v5896, %v5944
  %5957 = vst [vmem:[#allocation2] sm:$0xff] %v5945
  %5958 = vst [vmem:[#allocation2 + $0x8] sm:$0xff] %v5946
  %5959 = vst [vmem:[#allocation2 + $0x10] sm:$0xff] %v5947
  %5960 = vst [vmem:[#allocation2 + $0x18] sm:$0xff] %v5948
  %5961 = vst [vmem:[#allocation2 + $0x20] sm:$0xff] %v5949
  %5962 = vst [vmem:[#allocation2 + $0x28] sm:$0xff] %v5950
  %5963 = vst [vmem:[#allocation2 + $0x30] sm:$0xff] %v5951
  %5964 = vst [vmem:[#allocation2 + $0x38] sm:$0xff] %v5952
  %5965 = vst [vmem:[#allocation2 + $0x40] sm:$0xff] %v5953
  %5966 = vst [vmem:[#allocation2 + $0x48] sm:$0xff] %v5954
  %5967 = vst [vmem:[#allocation2 + $0x50] sm:$0xff] %v5955
  %5968 = vst [vmem:[#allocation2 + $0x58] sm:$0xff] %v5956
  %v5969 = vmul.f32 %v5929, %v278
  %v5970 = vmul.f32 %v5930, %v279
  %v5971 = vmul.f32 %v5931, %v280
  %v5972 = vmul.f32 %v5932, %v281
  %5973 = vmatprep.subr.mxu0 0.0
  %5974 = vmatpush1.xpose.msra.mxu0 %v5925
  %5975 = vmatprep.subr.mxu0 0.0
  %5976 = vmatpush1.xpose.msra.mxu0 %v5926
  %5977 = vmatprep.subr.mxu0 0.0
  %5978 = vmatpush1.xpose.msra.mxu0 %v5927
  %5979 = vmatprep.subr.mxu0 0.0
  %5980 = vmatpush1.xpose.msra.mxu0 %v5928
  %5981 = vmatprep.subr.mxu0 0.0
  %5982 = vmatpush1.xpose.msra.mxu0 0.0
  %5983 = vmatprep.subr.mxu0 0.0
  %5984 = vmatpush1.xpose.msra.mxu0 0.0
  %5985 = vmatprep.subr.mxu0 0.0
  %5986 = vmatpush1.xpose.msra.mxu0 0.0
  %5987 = vmatprep.subr.mxu0 0.0
  %5988 = vmatpush1.xpose.msra.mxu0 0.0
  %5989 = vmatprep.subr.mxu0 0.0
  %5990 = vmatpush1.xpose.msra.mxu0 0.0
  %5991 = vmatprep.subr.mxu0 0.0
  %5992 = vmatpush1.xpose.msra.mxu0 0.0
  %5993 = vmatprep.subr.mxu0 0.0
  %5994 = vmatpush1.xpose.msra.mxu0 0.0
  %5995 = vmatprep.subr.mxu0 0.0
  %5996 = vmatpush1.xpose.msra.mxu0 0.0
  %5997 = vmatprep.subr.mxu0 0.0
  %5998 = vmatpush1.xpose.msra.mxu0 0.0
  %5999 = vmatprep.subr.mxu0 0.0
  %6000 = vmatpush1.xpose.msra.mxu0 0.0
  %6001 = vmatprep.subr.mxu0 0.0
  %6002 = vmatpush1.xpose.msra.mxu0 0.0
  %6003 = vmatprep.subr.mxu0 0.0
  %6004 = vmatpush1.xpose.msra.mxu0 0.0
  %6005 = vmatprep.subr.mxu0 0.0
  %6006 = vmatpush1.xpose.msra.mxu0 0.0
  %6007 = vmatprep.subr.mxu0 0.0
  %6008 = vmatpush1.xpose.msra.mxu0 0.0
  %6009 = vmatprep.subr.mxu0 0.0
  %6010 = vmatpush1.xpose.msra.mxu0 0.0
  %6011 = vmatprep.subr.mxu0 0.0
  %6012 = vmatpush1.xpose.msra.mxu0 0.0
  %6013 = vmatprep.subr.mxu0 0.0
  %6014 = vmatpush1.xpose.msra.mxu0 0.0
  %6015 = vmatprep.subr.mxu0 0.0
  %6016 = vmatpush1.xpose.msra.mxu0 0.0
  %6017 = vmatprep.subr.mxu0 0.0
  %6018 = vmatpush1.xpose.msra.mxu0 0.0
  %6019 = vmatprep.subr.mxu0 0.0
  %6020 = vmatpush1.xpose.msra.mxu0 0.0
  %6021 = vmatprep.subr.mxu0 0.0
  %6022 = vmatpush1.xpose.msra.mxu0 0.0
  %6023 = vmatprep.subr.mxu0 0.0
  %6024 = vmatpush1.xpose.msra.mxu0 0.0
  %6025 = vmatprep.subr.mxu0 0.0
  %6026 = vmatpush1.xpose.msra.mxu0 0.0
  %6027 = vmatprep.subr.mxu0 0.0
  %6028 = vmatpush1.xpose.msra.mxu0 0.0
  %6029 = vmatprep.subr.mxu0 0.0
  %6030 = vmatpush1.xpose.msra.mxu0 0.0
  %6031 = vmatprep.subr.mxu0 0.0
  %6032 = vmatpush1.xpose.msra.mxu0 0.0
  %6033 = vmatprep.subr.mxu0 0.0
  %6034 = vmatpush1.xpose.msra.mxu0 0.0
  %6035 = vmatprep.subr.mxu0 0.0
  %6036 = vmatpush1.xpose.msra.mxu0 0.0
  %6037 = vmatprep.mubr.f32.mxu0 0.0
  %6038 = vmatmul.mubr.f32.gmra.mrb[0].mxu0 %v5969
  %v6039 = vpop.f32.mrb[0].mxu0
  %v6040 = vadd.f32 0.0, %v6039
  %v6041 = vpop.f32.mrb[0].mxu0
  %6042 = vmatprep.mubr.f32.mxu0 0.0
  %6043 = vmatmul.mubr.f32.gmra.mrb[0].mxu0 %v5970
  %v6044 = vpop.f32.mrb[0].mxu0
  %v6045 = vadd.f32 0.0, %v6044
  %v6046 = vpop.f32.mrb[0].mxu0
  %6047 = vmatprep.mubr.f32.mxu0 0.0
  %6048 = vmatmul.mubr.f32.gmra.mrb[0].mxu0 %v5971
  %v6049 = vpop.f32.mrb[0].mxu0
  %v6050 = vadd.f32 0.0, %v6049
  %v6051 = vpop.f32.mrb[0].mxu0
  %6052 = vmatprep.mubr.f32.mxu0 0.0
  %6053 = vmatmul.mubr.f32.gmra.mrb[0].mxu0 %v5972
  %v6054 = vpop.f32.mrb[0].mxu0
  %v6055 = vadd.f32 0.0, %v6054
  %v6056 = vpop.f32.mrb[0].mxu0
  %6057 = vdwg.mxu0
  %v6058 = vmul.f32 %v6040, %v274
  %v6059 = vmul.f32 %v6045, %v275
  %v6060 = vmul.f32 %v6050, %v276
  %v6061 = vmul.f32 %v6055, %v277
  %v6063 = vsel %vm791, %v6058, 0
  %v6066 = vsel %vm791, %v6059, 0
  %v6069 = vsel %vm791, %v6060, 0
  %v6072 = vsel %vm791, %v6061, 0
  %6074 = vmatprep.subr.mxu0 0.0
  %6075 = vmatpush1.msra.mxu0 %v5921
  %6076 = vmatprep.subr.mxu0 0.0
  %6077 = vmatpush1.msra.mxu0 %v5922
  %6078 = vmatprep.subr.mxu0 0.0
  %6079 = vmatpush1.msra.mxu0 %v5923
  %6080 = vmatprep.subr.mxu0 0.0
  %6081 = vmatpush1.msra.mxu0 %v5924
  %6082 = vmatprep.subr.mxu0 0.0
  %6083 = vmatpush1.msra.mxu0 0.0
  %6084 = vmatprep.subr.mxu0 0.0
  %6085 = vmatpush1.msra.mxu0 0.0
  %6086 = vmatprep.subr.mxu0 0.0
  %6087 = vmatpush1.msra.mxu0 0.0
  %6088 = vmatprep.subr.mxu0 0.0
  %6089 = vmatpush1.msra.mxu0 0.0
  %6090 = vmatprep.subr.mxu0 0.0
  %6091 = vmatpush1.msra.mxu0 0.0
  %6092 = vmatprep.subr.mxu0 0.0
  %6093 = vmatpush1.msra.mxu0 0.0
  %6094 = vmatprep.subr.mxu0 0.0
  %6095 = vmatpush1.msra.mxu0 0.0
  %6096 = vmatprep.subr.mxu0 0.0
  %6097 = vmatpush1.msra.mxu0 0.0
  %6098 = vmatprep.subr.mxu0 0.0
  %6099 = vmatpush1.msra.mxu0 0.0
  %6100 = vmatprep.subr.mxu0 0.0
  %6101 = vmatpush1.msra.mxu0 0.0
  %6102 = vmatprep.subr.mxu0 0.0
  %6103 = vmatpush1.msra.mxu0 0.0
  %6104 = vmatprep.subr.mxu0 0.0
  %6105 = vmatpush1.msra.mxu0 0.0
  %6106 = vmatprep.subr.mxu0 0.0
  %6107 = vmatpush1.msra.mxu0 0.0
  %6108 = vmatprep.subr.mxu0 0.0
  %6109 = vmatpush1.msra.mxu0 0.0
  %6110 = vmatprep.subr.mxu0 0.0
  %6111 = vmatpush1.msra.mxu0 0.0
  %6112 = vmatprep.subr.mxu0 0.0
  %6113 = vmatpush1.msra.mxu0 0.0
  %6114 = vmatprep.subr.mxu0 0.0
  %6115 = vmatpush1.msra.mxu0 0.0
  %6116 = vmatprep.subr.mxu0 0.0
  %6117 = vmatpush1.msra.mxu0 0.0
  %6118 = vmatprep.subr.mxu0 0.0
  %6119 = vmatpush1.msra.mxu0 0.0
  %6120 = vmatprep.subr.mxu0 0.0
  %6121 = vmatpush1.msra.mxu0 0.0
  %6122 = vmatprep.subr.mxu0 0.0
  %6123 = vmatpush1.msra.mxu0 0.0
  %6124 = vmatprep.subr.mxu0 0.0
  %6125 = vmatpush1.msra.mxu0 0.0
  %6126 = vmatprep.subr.mxu0 0.0
  %6127 = vmatpush1.msra.mxu0 0.0
  %6128 = vmatprep.subr.mxu0 0.0
  %6129 = vmatpush1.msra.mxu0 0.0
  %6130 = vmatprep.subr.mxu0 0.0
  %6131 = vmatpush1.msra.mxu0 0.0
  %6132 = vmatprep.subr.mxu0 0.0
  %6133 = vmatpush1.msra.mxu0 0.0
  %6134 = vmatprep.subr.mxu0 0.0
  %6135 = vmatpush1.msra.mxu0 0.0
  %6136 = vmatprep.subr.mxu0 0.0
  %6137 = vmatpush1.msra.mxu0 0.0
  %6138 = vmatprep.mubr.f32.mxu0 0.0
  %6139 = vmatmul.mubr.f32.gmra.mrb[0].mxu0 %v6063
  %v6140 = vpop.f32.mrb[0].mxu0
  %v6141 = vadd.f32 0.0, %v6140
  %v6142 = vpop.f32.mrb[0].mxu0
  %6143 = vmatprep.mubr.f32.mxu0 0.0
  %6144 = vmatmul.mubr.f32.gmra.mrb[0].mxu0 %v6066
  %v6145 = vpop.f32.mrb[0].mxu0
  %v6146 = vadd.f32 0.0, %v6145
  %v6147 = vpop.f32.mrb[0].mxu0
  %6148 = vmatprep.mubr.f32.mxu0 0.0
  %6149 = vmatmul.mubr.f32.gmra.mrb[0].mxu0 %v6069
  %v6150 = vpop.f32.mrb[0].mxu0
  %v6151 = vadd.f32 0.0, %v6150
  %v6152 = vpop.f32.mrb[0].mxu0
  %6153 = vmatprep.mubr.f32.mxu0 0.0
  %6154 = vmatmul.mubr.f32.gmra.mrb[0].mxu0 %v6072
  %v6155 = vpop.f32.mrb[0].mxu0
  %v6156 = vadd.f32 0.0, %v6155
  %v6157 = vpop.f32.mrb[0].mxu0
  %6158 = vdwg.mxu0
  %v6159 = vmul.f32 %v6141, %v278
  %v6160 = vmul.f32 %v6146, %v279
  %v6161 = vmul.f32 %v6151, %v280
  %v6162 = vmul.f32 %v6156, %v281
  %v6163 = vmul.f32 %v5929, %v283
  %v6164 = vmul.f32 %v5930, %v284
  %v6165 = vmul.f32 %v5931, %v285
  %v6166 = vmul.f32 %v5932, %v286
  %6167 = vmatprep.subr.mxu0 0.0
  %6168 = vmatpush1.xpose.msra.mxu0 %v5925
  %6169 = vmatprep.subr.mxu0 0.0
  %6170 = vmatpush1.xpose.msra.mxu0 %v5926
  %6171 = vmatprep.subr.mxu0 0.0
  %6172 = vmatpush1.xpose.msra.mxu0 %v5927
  %6173 = vmatprep.subr.mxu0 0.0
  %6174 = vmatpush1.xpose.msra.mxu0 %v5928
  %6175 = vmatprep.subr.mxu0 0.0
  %6176 = vmatpush1.xpose.msra.mxu0 0.0
  %6177 = vmatprep.subr.mxu0 0.0
  %6178 = vmatpush1.xpose.msra.mxu0 0.0
  %6179 = vmatprep.subr.mxu0 0.0
  %6180 = vmatpush1.xpose.msra.mxu0 0.0
  %6181 = vmatprep.subr.mxu0 0.0
  %6182 = vmatpush1.xpose.msra.mxu0 0.0
  %6183 = vmatprep.subr.mxu0 0.0
  %6184 = vmatpush1.xpose.msra.mxu0 0.0
  %6185 = vmatprep.subr.mxu0 0.0
  %6186 = vmatpush1.xpose.msra.mxu0 0.0
  %6187 = vmatprep.subr.mxu0 0.0
  %6188 = vmatpush1.xpose.msra.mxu0 0.0
  %6189 = vmatprep.subr.mxu0 0.0
  %6190 = vmatpush1.xpose.msra.mxu0 0.0
  %6191 = vmatprep.subr.mxu0 0.0
  %6192 = vmatpush1.xpose.msra.mxu0 0.0
  %6193 = vmatprep.subr.mxu0 0.0
  %6194 = vmatpush1.xpose.msra.mxu0 0.0
  %6195 = vmatprep.subr.mxu0 0.0
  %6196 = vmatpush1.xpose.msra.mxu0 0.0
  %6197 = vmatprep.subr.mxu0 0.0
  %6198 = vmatpush1.xpose.msra.mxu0 0.0
  %6199 = vmatprep.subr.mxu0 0.0
  %6200 = vmatpush1.xpose.msra.mxu0 0.0
  %6201 = vmatprep.subr.mxu0 0.0
  %6202 = vmatpush1.xpose.msra.mxu0 0.0
  %6203 = vmatprep.subr.mxu0 0.0
  %6204 = vmatpush1.xpose.msra.mxu0 0.0
  %6205 = vmatprep.subr.mxu0 0.0
  %6206 = vmatpush1.xpose.msra.mxu0 0.0
  %6207 = vmatprep.subr.mxu0 0.0
  %6208 = vmatpush1.xpose.msra.mxu0 0.0
  %6209 = vmatprep.subr.mxu0 0.0
  %6210 = vmatpush1.xpose.msra.mxu0 0.0
  %6211 = vmatprep.subr.mxu0 0.0
  %6212 = vmatpush1.xpose.msra.mxu0 0.0
  %6213 = vmatprep.subr.mxu0 0.0
  %6214 = vmatpush1.xpose.msra.mxu0 0.0
  %6215 = vmatprep.subr.mxu0 0.0
  %6216 = vmatpush1.xpose.msra.mxu0 0.0
  %6217 = vmatprep.subr.mxu0 0.0
  %6218 = vmatpush1.xpose.msra.mxu0 0.0
  %6219 = vmatprep.subr.mxu0 0.0
  %6220 = vmatpush1.xpose.msra.mxu0 0.0
  %6221 = vmatprep.subr.mxu0 0.0
  %6222 = vmatpush1.xpose.msra.mxu0 0.0
  %6223 = vmatprep.subr.mxu0 0.0
  %6224 = vmatpush1.xpose.msra.mxu0 0.0
  %6225 = vmatprep.subr.mxu0 0.0
  %6226 = vmatpush1.xpose.msra.mxu0 0.0
  %6227 = vmatprep.subr.mxu0 0.0
  %6228 = vmatpush1.xpose.msra.mxu0 0.0
  %6229 = vmatprep.subr.mxu0 0.0
  %6230 = vmatpush1.xpose.msra.mxu0 0.0
  %6231 = vmatprep.mubr.f32.mxu0 0.0
  %6232 = vmatmul.mubr.f32.gmra.mrb[0].mxu0 %v6163
  %v6233 = vpop.f32.mrb[0].mxu0
  %v6234 = vadd.f32 0.0, %v6233
  %v6235 = vpop.f32.mrb[0].mxu0
  %6236 = vmatprep.mubr.f32.mxu0 0.0
  %6237 = vmatmul.mubr.f32.gmra.mrb[0].mxu0 %v6164
  %v6238 = vpop.f32.mrb[0].mxu0
  %v6239 = vadd.f32 0.0, %v6238
  %v6240 = vpop.f32.mrb[0].mxu0
  %6241 = vmatprep.mubr.f32.mxu0 0.0
  %6242 = vmatmul.mubr.f32.gmra.mrb[0].mxu0 %v6165
  %v6243 = vpop.f32.mrb[0].mxu0
  %v6244 = vadd.f32 0.0, %v6243
  %v6245 = vpop.f32.mrb[0].mxu0
  %6246 = vmatprep.mubr.f32.mxu0 0.0
  %6247 = vmatmul.mubr.f32.gmra.mrb[0].mxu0 %v6166
  %v6248 = vpop.f32.mrb[0].mxu0
  %v6249 = vadd.f32 0.0, %v6248
  %v6250 = vpop.f32.mrb[0].mxu0
  %6251 = vdwg.mxu0
  %v6252 = vmul.f32 %v6234, %v274
  %v6253 = vmul.f32 %v6239, %v275
  %v6254 = vmul.f32 %v6244, %v276
  %v6255 = vmul.f32 %v6249, %v277
  %v6257 = vsel %vm791, %v6252, 0
  %v6260 = vsel %vm791, %v6253, 0
  %v6263 = vsel %vm791, %v6254, 0
  %v6266 = vsel %vm791, %v6255, 0
  %6268 = vmatprep.subr.mxu0 0.0
  %6269 = vmatpush1.msra.mxu0 %v5921
  %6270 = vmatprep.subr.mxu0 0.0
  %6271 = vmatpush1.msra.mxu0 %v5922
  %6272 = vmatprep.subr.mxu0 0.0
  %6273 = vmatpush1.msra.mxu0 %v5923
  %6274 = vmatprep.subr.mxu0 0.0
  %6275 = vmatpush1.msra.mxu0 %v5924
  %6276 = vmatprep.subr.mxu0 0.0
  %6277 = vmatpush1.msra.mxu0 0.0
  %6278 = vmatprep.subr.mxu0 0.0
  %6279 = vmatpush1.msra.mxu0 0.0
  %6280 = vmatprep.subr.mxu0 0.0
  %6281 = vmatpush1.msra.mxu0 0.0
  %6282 = vmatprep.subr.mxu0 0.0
  %6283 = vmatpush1.msra.mxu0 0.0
  %6284 = vmatprep.subr.mxu0 0.0
  %6285 = vmatpush1.msra.mxu0 0.0
  %6286 = vmatprep.subr.mxu0 0.0
  %6287 = vmatpush1.msra.mxu0 0.0
  %6288 = vmatprep.subr.mxu0 0.0
  %6289 = vmatpush1.msra.mxu0 0.0
  %6290 = vmatprep.subr.mxu0 0.0
  %6291 = vmatpush1.msra.mxu0 0.0
  %6292 = vmatprep.subr.mxu0 0.0
  %6293 = vmatpush1.msra.mxu0 0.0
  %6294 = vmatprep.subr.mxu0 0.0
  %6295 = vmatpush1.msra.mxu0 0.0
  %6296 = vmatprep.subr.mxu0 0.0
  %6297 = vmatpush1.msra.mxu0 0.0
  %6298 = vmatprep.subr.mxu0 0.0
  %6299 = vmatpush1.msra.mxu0 0.0
  %6300 = vmatprep.subr.mxu0 0.0
  %6301 = vmatpush1.msra.mxu0 0.0
  %6302 = vmatprep.subr.mxu0 0.0
  %6303 = vmatpush1.msra.mxu0 0.0
  %6304 = vmatprep.subr.mxu0 0.0
  %6305 = vmatpush1.msra.mxu0 0.0
  %6306 = vmatprep.subr.mxu0 0.0
  %6307 = vmatpush1.msra.mxu0 0.0
  %6308 = vmatprep.subr.mxu0 0.0
  %6309 = vmatpush1.msra.mxu0 0.0
  %6310 = vmatprep.subr.mxu0 0.0
  %6311 = vmatpush1.msra.mxu0 0.0
  %6312 = vmatprep.subr.mxu0 0.0
  %6313 = vmatpush1.msra.mxu0 0.0
  %6314 = vmatprep.subr.mxu0 0.0
  %6315 = vmatpush1.msra.mxu0 0.0
  %6316 = vmatprep.subr.mxu0 0.0
  %6317 = vmatpush1.msra.mxu0 0.0
  %6318 = vmatprep.subr.mxu0 0.0
  %6319 = vmatpush1.msra.mxu0 0.0
  %6320 = vmatprep.subr.mxu0 0.0
  %6321 = vmatpush1.msra.mxu0 0.0
  %6322 = vmatprep.subr.mxu0 0.0
  %6323 = vmatpush1.msra.mxu0 0.0
  %6324 = vmatprep.subr.mxu0 0.0
  %6325 = vmatpush1.msra.mxu0 0.0
  %6326 = vmatprep.subr.mxu0 0.0
  %6327 = vmatpush1.msra.mxu0 0.0
  %6328 = vmatprep.subr.mxu0 0.0
  %6329 = vmatpush1.msra.mxu0 0.0
  %6330 = vmatprep.subr.mxu0 0.0
  %6331 = vmatpush1.msra.mxu0 0.0
  %6332 = vmatprep.mubr.f32.mxu0 0.0
  %6333 = vmatmul.mubr.f32.gmra.mrb[0].mxu0 %v6257
  %v6334 = vpop.f32.mrb[0].mxu0
  %v6335 = vadd.f32 0.0, %v6334
  %v6336 = vpop.f32.mrb[0].mxu0
  %6337 = vmatprep.mubr.f32.mxu0 0.0
  %6338 = vmatmul.mubr.f32.gmra.mrb[0].mxu0 %v6260
  %v6339 = vpop.f32.mrb[0].mxu0
  %v6340 = vadd.f32 0.0, %v6339
  %v6341 = vpop.f32.mrb[0].mxu0
  %6342 = vmatprep.mubr.f32.mxu0 0.0
  %6343 = vmatmul.mubr.f32.gmra.mrb[0].mxu0 %v6263
  %v6344 = vpop.f32.mrb[0].mxu0
  %v6345 = vadd.f32 0.0, %v6344
  %v6346 = vpop.f32.mrb[0].mxu0
  %6347 = vmatprep.mubr.f32.mxu0 0.0
  %6348 = vmatmul.mubr.f32.gmra.mrb[0].mxu0 %v6266
  %v6349 = vpop.f32.mrb[0].mxu0
  %v6350 = vadd.f32 0.0, %v6349
  %v6351 = vpop.f32.mrb[0].mxu0
  %6352 = vdwg.mxu0
  %v6353 = vmul.f32 %v6335, %v283
  %v6354 = vmul.f32 %v6340, %v284
  %v6355 = vmul.f32 %v6345, %v285
  %v6356 = vmul.f32 %v6350, %v286
  %v6357 = vadd.f32 %v6159, %v6353
  %v6358 = vadd.f32 %v6160, %v6354
  %v6359 = vadd.f32 %v6161, %v6355
  %v6360 = vadd.f32 %v6162, %v6356
  %v6361 = vmul.f32 %v6357, 0.125
  %v6362 = vmul.f32 %v6358, 0.125
  %v6363 = vmul.f32 %v6359, 0.125
  %v6364 = vmul.f32 %v6360, 0.125
  %v6365 = vld [vmem:[#allocation3] sm:$0xff]
  %v6366 = vld [vmem:[#allocation3 + $0x8] sm:$0xff]
  %v6367 = vld [vmem:[#allocation3 + $0x10] sm:$0xff]
  %v6368 = vld [vmem:[#allocation3 + $0x18] sm:$0xff]
  %v6369 = vsub.f32 %v6361, %v6365
  %v6370 = vsub.f32 %v6362, %v6366
  %v6371 = vsub.f32 %v6363, %v6367
  %v6372 = vsub.f32 %v6364, %v6368
  %v6373 = vmul.f32 %v6369, 0.5
  %v6374 = vmul.f32 %v6370, 0.5
  %v6375 = vmul.f32 %v6371, 0.5
  %v6376 = vmul.f32 %v6372, 0.5
  %v6377 = vadd.f32 %v6365, %v6373
  %v6378 = vadd.f32 %v6366, %v6374
  %v6379 = vadd.f32 %v6367, %v6375
  %v6380 = vadd.f32 %v6368, %v6376
  %vm6381 = vcmp.ge.f32.partialorder %v6377, 0.5
  %vm6382 = vcmp.ge.f32.partialorder %v6378, 0.5
  %vm6383 = vcmp.ge.f32.partialorder %v6379, 0.5
  %vm6384 = vcmp.ge.f32.partialorder %v6380, 0.5
  %v6385 = vsel %vm6381, 1, 0
  %v6386 = vsel %vm6382, 1, 0
  %v6387 = vsel %vm6383, 1, 0
  %v6388 = vsel %vm6384, 1, 0
  %v6389 = vcvt.s32.f32 %v6385
  %v6390 = vcvt.s32.f32 %v6386
  %v6391 = vcvt.s32.f32 %v6387
  %v6392 = vcvt.s32.f32 %v6388
  %v6393 = vsub.f32 1.0, %v6389
  %v6394 = vsub.f32 1.0, %v6390
  %v6395 = vsub.f32 1.0, %v6391
  %v6396 = vsub.f32 1.0, %v6392
  %v6397 = vmul.f32 %v6377, %v6393
  %v6398 = vmul.f32 %v6378, %v6394
  %v6399 = vmul.f32 %v6379, %v6395
  %v6400 = vmul.f32 %v6380, %v6396
  %6401 = vst [vmem:[#allocation3] sm:$0xff] %v6397
  %6402 = vst [vmem:[#allocation3 + $0x8] sm:$0xff] %v6398
  %6403 = vst [vmem:[#allocation3 + $0x10] sm:$0xff] %v6399
  %6404 = vst [vmem:[#allocation3 + $0x18] sm:$0xff] %v6400
  %6405 = vmatprep.subr.mxu0 0.0
  %6406 = vmatpush1.msra.mxu0 %v6389
  %6407 = vmatprep.subr.mxu0 0.0
  %6408 = vmatpush1.msra.mxu0 %v6390
  %6409 = vmatprep.subr.mxu0 0.0
  %6410 = vmatpush1.msra.mxu0 %v6391
  %6411 = vmatprep.subr.mxu0 0.0
  %6412 = vmatpush1.msra.mxu0 %v6392
  %6413 = vmatprep.subr.mxu0 0.0
  %6414 = vmatpush1.msra.mxu0 0.0
  %6415 = vmatprep.subr.mxu0 0.0
  %6416 = vmatpush1.msra.mxu0 0.0
  %6417 = vmatprep.subr.mxu0 0.0
  %6418 = vmatpush1.msra.mxu0 0.0
  %6419 = vmatprep.subr.mxu0 0.0
  %6420 = vmatpush1.msra.mxu0 0.0
  %6421 = vmatprep.subr.mxu0 0.0
  %6422 = vmatpush1.msra.mxu0 0.0
  %6423 = vmatprep.subr.mxu0 0.0
  %6424 = vmatpush1.msra.mxu0 0.0
  %6425 = vmatprep.subr.mxu0 0.0
  %6426 = vmatpush1.msra.mxu0 0.0
  %6427 = vmatprep.subr.mxu0 0.0
  %6428 = vmatpush1.msra.mxu0 0.0
  %6429 = vmatprep.subr.mxu0 0.0
  %6430 = vmatpush1.msra.mxu0 0.0
  %6431 = vmatprep.subr.mxu0 0.0
  %6432 = vmatpush1.msra.mxu0 0.0
  %6433 = vmatprep.subr.mxu0 0.0
  %6434 = vmatpush1.msra.mxu0 0.0
  %6435 = vmatprep.subr.mxu0 0.0
  %6436 = vmatpush1.msra.mxu0 0.0
  %6437 = vmatprep.subr.mxu0 0.0
  %6438 = vmatpush1.msra.mxu0 0.0
  %6439 = vmatprep.subr.mxu0 0.0
  %6440 = vmatpush1.msra.mxu0 0.0
  %6441 = vmatprep.subr.mxu0 0.0
  %6442 = vmatpush1.msra.mxu0 0.0
  %6443 = vmatprep.subr.mxu0 0.0
  %6444 = vmatpush1.msra.mxu0 0.0
  %6445 = vmatprep.subr.mxu0 0.0
  %6446 = vmatpush1.msra.mxu0 0.0
  %6447 = vmatprep.subr.mxu0 0.0
  %6448 = vmatpush1.msra.mxu0 0.0
  %6449 = vmatprep.subr.mxu0 0.0
  %6450 = vmatpush1.msra.mxu0 0.0
  %6451 = vmatprep.subr.mxu0 0.0
  %6452 = vmatpush1.msra.mxu0 0.0
  %6453 = vmatprep.subr.mxu0 0.0
  %6454 = vmatpush1.msra.mxu0 0.0
  %6455 = vmatprep.subr.mxu0 0.0
  %6456 = vmatpush1.msra.mxu0 0.0
  %6457 = vmatprep.subr.mxu0 0.0
  %6458 = vmatpush1.msra.mxu0 0.0
  %6459 = vmatprep.subr.mxu0 0.0
  %6460 = vmatpush1.msra.mxu0 0.0
  %6461 = vmatprep.subr.mxu0 0.0
  %6462 = vmatpush1.msra.mxu0 0.0
  %6463 = vmatprep.subr.mxu0 0.0
  %6464 = vmatpush1.msra.mxu0 0.0
  %6465 = vmatprep.subr.mxu0 0.0
  %6466 = vmatpush1.msra.mxu0 0.0
  %6467 = vmatprep.subr.mxu0 0.0
  %6468 = vmatpush1.msra.mxu0 0.0
  %6469 = vmatprep.mubr.f32.mxu0 0.0
  %6470 = vmatmul.mubr.f32.gmra.mrb[0].mxu0 %v1462
  %v6471 = vpop.f32.mrb[0].mxu0
  %v6472 = vadd.f32 %v422, %v6471
  %v6473 = vpop.f32.mrb[0].mxu0
  %6474 = vmatprep.mubr.f32.mxu0 0.0
  %6475 = vmatmul.mubr.f32.gmra.mrb[0].mxu0 %v1465
  %v6476 = vpop.f32.mrb[0].mxu0
  %v6477 = vadd.f32 %v427, %v6476
  %v6478 = vpop.f32.mrb[0].mxu0
  %6479 = vmatprep.mubr.f32.mxu0 0.0
  %6480 = vmatmul.mubr.f32.gmra.mrb[0].mxu0 %v1468
  %v6481 = vpop.f32.mrb[0].mxu0
  %v6482 = vadd.f32 %v432, %v6481
  %v6483 = vpop.f32.mrb[0].mxu0
  %6484 = vmatprep.mubr.f32.mxu0 0.0
  %6485 = vmatmul.mubr.f32.gmra.mrb[0].mxu0 %v1471
  %v6486 = vpop.f32.mrb[0].mxu0
  %v6487 = vadd.f32 %v437, %v6486
  %v6488 = vpop.f32.mrb[0].mxu0
  %6489 = vdwg.mxu0
  %v6490 = vld [vmem:[#allocation4] sm:$0xff]
  %v6491 = vld [vmem:[#allocation4 + $0x8] sm:$0xff]
  %v6492 = vld [vmem:[#allocation4 + $0x10] sm:$0xff]
  %v6493 = vld [vmem:[#allocation4 + $0x18] sm:$0xff]
  %v6494 = vsub.f32 %v6472, %v6490
  %v6495 = vsub.f32 %v6477, %v6491
  %v6496 = vsub.f32 %v6482, %v6492
  %v6497 = vsub.f32 %v6487, %v6493
  %v6498 = vmul.f32 %v6494, 0.5
  %v6499 = vmul.f32 %v6495, 0.5
  %v6500 = vmul.f32 %v6496, 0.5
  %v6501 = vmul.f32 %v6497, 0.5
  %v6502 = vadd.f32 %v6490, %v6498
  %v6503 = vadd.f32 %v6491, %v6499
  %v6504 = vadd.f32 %v6492, %v6500
  %v6505 = vadd.f32 %v6493, %v6501
  %vm6506 = vcmp.ge.f32.partialorder %v6502, 1.0
  %vm6507 = vcmp.ge.f32.partialorder %v6503, 1.0
  %vm6508 = vcmp.ge.f32.partialorder %v6504, 1.0
  %vm6509 = vcmp.ge.f32.partialorder %v6505, 1.0
  %v6510 = vsel %vm6506, 1, 0
  %v6511 = vsel %vm6507, 1, 0
  %v6512 = vsel %vm6508, 1, 0
  %v6513 = vsel %vm6509, 1, 0
  %v6514 = vcvt.s32.f32 %v6510
  %v6515 = vcvt.s32.f32 %v6511
  %v6516 = vcvt.s32.f32 %v6512
  %v6517 = vcvt.s32.f32 %v6513
  %v6518 = vsub.f32 1.0, %v6514
  %v6519 = vsub.f32 1.0, %v6515
  %v6520 = vsub.f32 1.0, %v6516
  %v6521 = vsub.f32 1.0, %v6517
  %v6522 = vmul.f32 %v6502, %v6518
  %v6523 = vmul.f32 %v6503, %v6519
  %v6524 = vmul.f32 %v6504, %v6520
  %v6525 = vmul.f32 %v6505, %v6521
  %6526 = vst [vmem:[#allocation4] sm:$0xff] %v6522
  %6527 = vst [vmem:[#allocation4 + $0x8] sm:$0xff] %v6523
  %6528 = vst [vmem:[#allocation4 + $0x10] sm:$0xff] %v6524
  %6529 = vst [vmem:[#allocation4 + $0x18] sm:$0xff] %v6525
  %v6530 = vadd.f32 %v242, %v6514
  %v6531 = vadd.f32 %v243, %v6515
  %v6532 = vadd.f32 %v244, %v6516
  %v6533 = vadd.f32 %v245, %v6517
  %6534 = vmatprep.subr.mxu0 0.0
  %6535 = vmatpush1.msra.mxu0 %v6530
  %6536 = vmatprep.subr.mxu0 0.0
  %6537 = vmatpush1.msra.mxu0 %v6531
  %6538 = vmatprep.subr.mxu0 0.0
  %6539 = vmatpush1.msra.mxu0 %v6532
  %6540 = vmatprep.subr.mxu0 0.0
  %6541 = vmatpush1.msra.mxu0 %v6533
  %6542 = vmatprep.subr.mxu0 0.0
  %6543 = vmatpush1.msra.mxu0 0.0
  %6544 = vmatprep.subr.mxu0 0.0
  %6545 = vmatpush1.msra.mxu0 0.0
  %6546 = vmatprep.subr.mxu0 0.0
  %6547 = vmatpush1.msra.mxu0 0.0
  %6548 = vmatprep.subr.mxu0 0.0
  %6549 = vmatpush1.msra.mxu0 0.0
  %6550 = vmatprep.subr.mxu0 0.0
  %6551 = vmatpush1.msra.mxu0 0.0
  %6552 = vmatprep.subr.mxu0 0.0
  %6553 = vmatpush1.msra.mxu0 0.0
  %6554 = vmatprep.subr.mxu0 0.0
  %6555 = vmatpush1.msra.mxu0 0.0
  %6556 = vmatprep.subr.mxu0 0.0
  %6557 = vmatpush1.msra.mxu0 0.0
  %6558 = vmatprep.subr.mxu0 0.0
  %6559 = vmatpush1.msra.mxu0 0.0
  %6560 = vmatprep.subr.mxu0 0.0
  %6561 = vmatpush1.msra.mxu0 0.0
  %6562 = vmatprep.subr.mxu0 0.0
  %6563 = vmatpush1.msra.mxu0 0.0
  %6564 = vmatprep.subr.mxu0 0.0
  %6565 = vmatpush1.msra.mxu0 0.0
  %6566 = vmatprep.subr.mxu0 0.0
  %6567 = vmatpush1.msra.mxu0 0.0
  %6568 = vmatprep.subr.mxu0 0.0
  %6569 = vmatpush1.msra.mxu0 0.0
  %6570 = vmatprep.subr.mxu0 0.0
  %6571 = vmatpush1.msra.mxu0 0.0
  %6572 = vmatprep.subr.mxu0 0.0
  %6573 = vmatpush1.msra.mxu0 0.0
  %6574 = vmatprep.subr.mxu0 0.0
  %6575 = vmatpush1.msra.mxu0 0.0
  %6576 = vmatprep.subr.mxu0 0.0
  %6577 = vmatpush1.msra.mxu0 0.0
  %6578 = vmatprep.subr.mxu0 0.0
  %6579 = vmatpush1.msra.mxu0 0.0
  %6580 = vmatprep.subr.mxu0 0.0
  %6581 = vmatpush1.msra.mxu0 0.0
  %6582 = vmatprep.subr.mxu0 0.0
  %6583 = vmatpush1.msra.mxu0 0.0
  %6584 = vmatprep.subr.mxu0 0.0
  %6585 = vmatpush1.msra.mxu0 0.0
  %6586 = vmatprep.subr.mxu0 0.0
  %6587 = vmatpush1.msra.mxu0 0.0
  %6588 = vmatprep.subr.mxu0 0.0
  %6589 = vmatpush1.msra.mxu0 0.0
  %6590 = vmatprep.subr.mxu0 0.0
  %6591 = vmatpush1.msra.mxu0 0.0
  %6592 = vmatprep.subr.mxu0 0.0
  %6593 = vmatpush1.msra.mxu0 0.0
  %6594 = vmatprep.subr.mxu0 0.0
  %6595 = vmatpush1.msra.mxu0 0.0
  %6596 = vmatprep.subr.mxu0 0.0
  %6597 = vmatpush1.msra.mxu0 0.0
  %6598 = vmatprep.mubr.f32.mxu0 0.0
  %6599 = vmatmul.mubr.f32.gmra.mrb[0].mxu0 %v1591
  %v6600 = vpop.f32.mrb[0].mxu0
  %v6601 = vadd.f32 %v442, %v6600
  %v6602 = vpop.f32.mrb[0].mxu0
  %6603 = vmatprep.mubr.f32.mxu0 0.0
  %6604 = vmatmul.mubr.f32.gmra.mrb[0].mxu0 %v1594
  %v6605 = vpop.f32.mrb[0].mxu0
  %v6606 = vadd.f32 %v447, %v6605
  %v6607 = vpop.f32.mrb[0].mxu0
  %6608 = vmatprep.mubr.f32.mxu0 0.0
  %6609 = vmatmul.mubr.f32.gmra.mrb[0].mxu0 %v1597
  %v6610 = vpop.f32.mrb[0].mxu0
  %v6611 = vadd.f32 %v452, %v6610
  %v6612 = vpop.f32.mrb[0].mxu0
  %6613 = vmatprep.mubr.f32.mxu0 0.0
  %6614 = vmatmul.mubr.f32.gmra.mrb[0].mxu0 %v1600
  %v6615 = vpop.f32.mrb[0].mxu0
  %v6616 = vadd.f32 %v457, %v6615
  %v6617 = vpop.f32.mrb[0].mxu0
  %6618 = vmatprep.mubr.f32.mxu0 0.0
  %6619 = vmatmul.mubr.f32.gmra.mrb[0].mxu0 %v1603
  %v6620 = vpop.f32.mrb[0].mxu0
  %v6621 = vadd.f32 %v462, %v6620
  %v6622 = vpop.f32.mrb[0].mxu0
  %6623 = vmatprep.mubr.f32.mxu0 0.0
  %6624 = vmatmul.mubr.f32.gmra.mrb[0].mxu0 %v1606
  %v6625 = vpop.f32.mrb[0].mxu0
  %v6626 = vadd.f32 %v467, %v6625
  %v6627 = vpop.f32.mrb[0].mxu0
  %6628 = vmatprep.mubr.f32.mxu0 0.0
  %6629 = vmatmul.mubr.f32.gmra.mrb[0].mxu0 %v1609
  %v6630 = vpop.f32.mrb[0].mxu0
  %v6631 = vadd.f32 %v472, %v6630
  %v6632 = vpop.f32.mrb[0].mxu0
  %6633 = vmatprep.mubr.f32.mxu0 0.0
  %6634 = vmatmul.mubr.f32.gmra.mrb[0].mxu0 %v1612
  %v6635 = vpop.f32.mrb[0].mxu0
  %v6636 = vadd.f32 %v477, %v6635
  %v6637 = vpop.f32.mrb[0].mxu0
  %6638 = vmatprep.mubr.f32.mxu0 0.0
  %6639 = vmatmul.mubr.f32.gmra.mrb[0].mxu0 %v1615
  %v6640 = vpop.f32.mrb[0].mxu0
  %v6641 = vadd.f32 %v482, %v6640
  %v6642 = vpop.f32.mrb[0].mxu0
  %6643 = vmatprep.mubr.f32.mxu0 0.0
  %6644 = vmatmul.mubr.f32.gmra.mrb[0].mxu0 %v1618
  %v6645 = vpop.f32.mrb[0].mxu0
  %v6646 = vadd.f32 %v487, %v6645
  %v6647 = vpop.f32.mrb[0].mxu0
  %6648 = vmatprep.mubr.f32.mxu0 0.0
  %6649 = vmatmul.mubr.f32.gmra.mrb[0].mxu0 %v1621
  %v6650 = vpop.f32.mrb[0].mxu0
  %v6651 = vadd.f32 %v492, %v6650
  %v6652 = vpop.f32.mrb[0].mxu0
  %6653 = vmatprep.mubr.f32.mxu0 0.0
  %6654 = vmatmul.mubr.f32.gmra.mrb[0].mxu0 %v1624
  %v6655 = vpop.f32.mrb[0].mxu0
  %v6656 = vadd.f32 %v497, %v6655
  %v6657 = vpop.f32.mrb[0].mxu0
  %6658 = vmatprep.mubr.f32.mxu0 0.0
  %6659 = vmatmul.mubr.f32.gmra.mrb[0].mxu0 %v1627
  %v6660 = vpop.f32.mrb[0].mxu0
  %v6661 = vadd.f32 %v502, %v6660
  %v6662 = vpop.f32.mrb[0].mxu0
  %6663 = vmatprep.mubr.f32.mxu0 0.0
  %6664 = vmatmul.mubr.f32.gmra.mrb[0].mxu0 %v1630
  %v6665 = vpop.f32.mrb[0].mxu0
  %v6666 = vadd.f32 %v507, %v6665
  %v6667 = vpop.f32.mrb[0].mxu0
  %6668 = vmatprep.mubr.f32.mxu0 0.0
  %6669 = vmatmul.mubr.f32.gmra.mrb[0].mxu0 %v1633
  %v6670 = vpop.f32.mrb[0].mxu0
  %v6671 = vadd.f32 %v512, %v6670
  %v6672 = vpop.f32.mrb[0].mxu0
  %6673 = vmatprep.mubr.f32.mxu0 0.0
  %6674 = vmatmul.mubr.f32.gmra.mrb[0].mxu0 %v1636
  %v6675 = vpop.f32.mrb[0].mxu0
  %v6676 = vadd.f32 %v517, %v6675
  %v6677 = vpop.f32.mrb[0].mxu0
  %6678 = vdwg.mxu0
  %v6679 = vld [vmem:[#allocation5] sm:$0xff]
  %v6680 = vld [vmem:[#allocation5 + $0x8] sm:$0xff]
  %v6681 = vld [vmem:[#allocation5 + $0x10] sm:$0xff]
  %v6682 = vld [vmem:[#allocation5 + $0x18] sm:$0xff]
  %v6683 = vld [vmem:[#allocation5 + $0x20] sm:$0xff]
  %v6684 = vld [vmem:[#allocation5 + $0x28] sm:$0xff]
  %v6685 = vld [vmem:[#allocation5 + $0x30] sm:$0xff]
  %v6686 = vld [vmem:[#allocation5 + $0x38] sm:$0xff]
  %v6687 = vld [vmem:[#allocation5 + $0x40] sm:$0xff]
  %v6688 = vld [vmem:[#allocation5 + $0x48] sm:$0xff]
  %v6689 = vld [vmem:[#allocation5 + $0x50] sm:$0xff]
  %v6690 = vld [vmem:[#allocation5 + $0x58] sm:$0xff]
  %v6691 = vld [vmem:[#allocation5 + $0x60] sm:$0xff]
  %v6692 = vld [vmem:[#allocation5 + $0x68] sm:$0xff]
  %v6693 = vld [vmem:[#allocation5 + $0x70] sm:$0xff]
  %v6694 = vld [vmem:[#allocation5 + $0x78] sm:$0xff]
  %v6695 = vsub.f32 %v6601, %v6679
  %v6696 = vsub.f32 %v6606, %v6680
  %v6697 = vsub.f32 %v6611, %v6681
  %v6698 = vsub.f32 %v6616, %v6682
  %v6699 = vsub.f32 %v6621, %v6683
  %v6700 = vsub.f32 %v6626, %v6684
  %v6701 = vsub.f32 %v6631, %v6685
  %v6702 = vsub.f32 %v6636, %v6686
  %v6703 = vsub.f32 %v6641, %v6687
  %v6704 = vsub.f32 %v6646, %v6688
  %v6705 = vsub.f32 %v6651, %v6689
  %v6706 = vsub.f32 %v6656, %v6690
  %v6707 = vsub.f32 %v6661, %v6691
  %v6708 = vsub.f32 %v6666, %v6692
  %v6709 = vsub.f32 %v6671, %v6693
  %v6710 = vsub.f32 %v6676, %v6694
  %v6711 = vmul.f32 %v6695, 0.5
  %v6712 = vmul.f32 %v6696, 0.5
  %v6713 = vmul.f32 %v6697, 0.5
  %v6714 = vmul.f32 %v6698, 0.5
  %v6715 = vmul.f32 %v6699, 0.5
  %v6716 = vmul.f32 %v6700, 0.5
  %v6717 = vmul.f32 %v6701, 0.5
  %v6718 = vmul.f32 %v6702, 0.5
  %v6719 = vmul.f32 %v6703, 0.5
  %v6720 = vmul.f32 %v6704, 0.5
  %v6721 = vmul.f32 %v6705, 0.5
  %v6722 = vmul.f32 %v6706, 0.5
  %v6723 = vmul.f32 %v6707, 0.5
  %v6724 = vmul.f32 %v6708, 0.5
  %v6725 = vmul.f32 %v6709, 0.5
  %v6726 = vmul.f32 %v6710, 0.5
  %v6727 = vadd.f32 %v6679, %v6711
  %v6728 = vadd.f32 %v6680, %v6712
  %v6729 = vadd.f32 %v6681, %v6713
  %v6730 = vadd.f32 %v6682, %v6714
  %v6731 = vadd.f32 %v6683, %v6715
  %v6732 = vadd.f32 %v6684, %v6716
  %v6733 = vadd.f32 %v6685, %v6717
  %v6734 = vadd.f32 %v6686, %v6718
  %v6735 = vadd.f32 %v6687, %v6719
  %v6736 = vadd.f32 %v6688, %v6720
  %v6737 = vadd.f32 %v6689, %v6721
  %v6738 = vadd.f32 %v6690, %v6722
  %v6739 = vadd.f32 %v6691, %v6723
  %v6740 = vadd.f32 %v6692, %v6724
  %v6741 = vadd.f32 %v6693, %v6725
  %v6742 = vadd.f32 %v6694, %v6726
  %vm6743 = vcmp.ge.f32.partialorder %v6727, 1.0
  %vm6744 = vcmp.ge.f32.partialorder %v6728, 1.0
  %vm6745 = vcmp.ge.f32.partialorder %v6729, 1.0
  %vm6746 = vcmp.ge.f32.partialorder %v6730, 1.0
  %vm6747 = vcmp.ge.f32.partialorder %v6731, 1.0
  %vm6748 = vcmp.ge.f32.partialorder %v6732, 1.0
  %vm6749 = vcmp.ge.f32.partialorder %v6733, 1.0
  %vm6750 = vcmp.ge.f32.partialorder %v6734, 1.0
  %vm6751 = vcmp.ge.f32.partialorder %v6735, 1.0
  %vm6752 = vcmp.ge.f32.partialorder %v6736, 1.0
  %vm6753 = vcmp.ge.f32.partialorder %v6737, 1.0
  %vm6754 = vcmp.ge.f32.partialorder %v6738, 1.0
  %vm6755 = vcmp.ge.f32.partialorder %v6739, 1.0
  %vm6756 = vcmp.ge.f32.partialorder %v6740, 1.0
  %vm6757 = vcmp.ge.f32.partialorder %v6741, 1.0
  %vm6758 = vcmp.ge.f32.partialorder %v6742, 1.0
  %v6759 = vsel %vm6743, 1, 0
  %v6760 = vsel %vm6744, 1, 0
  %v6761 = vsel %vm6745, 1, 0
  %v6762 = vsel %vm6746, 1, 0
  %v6763 = vsel %vm6747, 1, 0
  %v6764 = vsel %vm6748, 1, 0
  %v6765 = vsel %vm6749, 1, 0
  %v6766 = vsel %vm6750, 1, 0
  %v6767 = vsel %vm6751, 1, 0
  %v6768 = vsel %vm6752, 1, 0
  %v6769 = vsel %vm6753, 1, 0
  %v6770 = vsel %vm6754, 1, 0
  %v6771 = vsel %vm6755, 1, 0
  %v6772 = vsel %vm6756, 1, 0
  %v6773 = vsel %vm6757, 1, 0
  %v6774 = vsel %vm6758, 1, 0
  %v6775 = vcvt.s32.f32 %v6759
  %v6776 = vcvt.s32.f32 %v6760
  %v6777 = vcvt.s32.f32 %v6761
  %v6778 = vcvt.s32.f32 %v6762
  %v6779 = vcvt.s32.f32 %v6763
  %v6780 = vcvt.s32.f32 %v6764
  %v6781 = vcvt.s32.f32 %v6765
  %v6782 = vcvt.s32.f32 %v6766
  %v6783 = vcvt.s32.f32 %v6767
  %v6784 = vcvt.s32.f32 %v6768
  %v6785 = vcvt.s32.f32 %v6769
  %v6786 = vcvt.s32.f32 %v6770
  %v6787 = vcvt.s32.f32 %v6771
  %v6788 = vcvt.s32.f32 %v6772
  %v6789 = vcvt.s32.f32 %v6773
  %v6790 = vcvt.s32.f32 %v6774
  %v6791 = vsub.f32 1.0, %v6775
  %v6792 = vsub.f32 1.0, %v6776
  %v6793 = vsub.f32 1.0, %v6777
  %v6794 = vsub.f32 1.0, %v6778
  %v6795 = vsub.f32 1.0, %v6779
  %v6796 = vsub.f32 1.0, %v6780
  %v6797 = vsub.f32 1.0, %v6781
  %v6798 = vsub.f32 1.0, %v6782
  %v6799 = vsub.f32 1.0, %v6783
  %v6800 = vsub.f32 1.0, %v6784
  %v6801 = vsub.f32 1.0, %v6785
  %v6802 = vsub.f32 1.0, %v6786
  %v6803 = vsub.f32 1.0, %v6787
  %v6804 = vsub.f32 1.0, %v6788
  %v6805 = vsub.f32 1.0, %v6789
  %v6806 = vsub.f32 1.0, %v6790
  %v6807 = vmul.f32 %v6727, %v6791
  %v6808 = vmul.f32 %v6728, %v6792
  %v6809 = vmul.f32 %v6729, %v6793
  %v6810 = vmul.f32 %v6730, %v6794
  %v6811 = vmul.f32 %v6731, %v6795
  %v6812 = vmul.f32 %v6732, %v6796
  %v6813 = vmul.f32 %v6733, %v6797
  %v6814 = vmul.f32 %v6734, %v6798
  %v6815 = vmul.f32 %v6735, %v6799
  %v6816 = vmul.f32 %v6736, %v6800
  %v6817 = vmul.f32 %v6737, %v6801
  %v6818 = vmul.f32 %v6738, %v6802
  %v6819 = vmul.f32 %v6739, %v6803
  %v6820 = vmul.f32 %v6740, %v6804
  %v6821 = vmul.f32 %v6741, %v6805
  %v6822 = vmul.f32 %v6742, %v6806
  %6823 = vst [vmem:[#allocation5] sm:$0xff] %v6807
  %6824 = vst [vmem:[#allocation5 + $0x8] sm:$0xff] %v6808
  %6825 = vst [vmem:[#allocation5 + $0x10] sm:$0xff] %v6809
  %6826 = vst [vmem:[#allocation5 + $0x18] sm:$0xff] %v6810
  %6827 = vst [vmem:[#allocation5 + $0x20] sm:$0xff] %v6811
  %6828 = vst [vmem:[#allocation5 + $0x28] sm:$0xff] %v6812
  %6829 = vst [vmem:[#allocation5 + $0x30] sm:$0xff] %v6813
  %6830 = vst [vmem:[#allocation5 + $0x38] sm:$0xff] %v6814
  %6831 = vst [vmem:[#allocation5 + $0x40] sm:$0xff] %v6815
  %6832 = vst [vmem:[#allocation5 + $0x48] sm:$0xff] %v6816
  %6833 = vst [vmem:[#allocation5 + $0x50] sm:$0xff] %v6817
  %6834 = vst [vmem:[#allocation5 + $0x58] sm:$0xff] %v6818
  %6835 = vst [vmem:[#allocation5 + $0x60] sm:$0xff] %v6819
  %6836 = vst [vmem:[#allocation5 + $0x68] sm:$0xff] %v6820
  %6837 = vst [vmem:[#allocation5 + $0x70] sm:$0xff] %v6821
  %6838 = vst [vmem:[#allocation5 + $0x78] sm:$0xff] %v6822
  %6839 = vmatprep.subr.mxu0 0.0
  %6840 = vmatpush1.msra.mxu0 %v6775
  %6841 = vmatprep.subr.mxu0 0.0
  %6842 = vmatpush1.msra.mxu0 %v6776
  %6843 = vmatprep.subr.mxu0 0.0
  %6844 = vmatpush1.msra.mxu0 %v6777
  %6845 = vmatprep.subr.mxu0 0.0
  %6846 = vmatpush1.msra.mxu0 %v6778
  %6847 = vmatprep.subr.mxu0 0.0
  %6848 = vmatpush1.msra.mxu0 %v6779
  %6849 = vmatprep.subr.mxu0 0.0
  %6850 = vmatpush1.msra.mxu0 %v6780
  %6851 = vmatprep.subr.mxu0 0.0
  %6852 = vmatpush1.msra.mxu0 %v6781
  %6853 = vmatprep.subr.mxu0 0.0
  %6854 = vmatpush1.msra.mxu0 %v6782
  %6855 = vmatprep.subr.mxu0 0.0
  %6856 = vmatpush1.msra.mxu0 %v6783
  %6857 = vmatprep.subr.mxu0 0.0
  %6858 = vmatpush1.msra.mxu0 %v6784
  %6859 = vmatprep.subr.mxu0 0.0
  %6860 = vmatpush1.msra.mxu0 %v6785
  %6861 = vmatprep.subr.mxu0 0.0
  %6862 = vmatpush1.msra.mxu0 %v6786
  %6863 = vmatprep.subr.mxu0 0.0
  %6864 = vmatpush1.msra.mxu0 %v6787
  %6865 = vmatprep.subr.mxu0 0.0
  %6866 = vmatpush1.msra.mxu0 %v6788
  %6867 = vmatprep.subr.mxu0 0.0
  %6868 = vmatpush1.msra.mxu0 %v6789
  %6869 = vmatprep.subr.mxu0 0.0
  %6870 = vmatpush1.msra.mxu0 %v6790
  %6871 = vmatprep.subr.mxu0 0.0
  %6872 = vmatpush1.msra.mxu0 0.0
  %6873 = vmatprep.subr.mxu0 0.0
  %6874 = vmatpush1.msra.mxu0 0.0
  %6875 = vmatprep.subr.mxu0 0.0
  %6876 = vmatpush1.msra.mxu0 0.0
  %6877 = vmatprep.subr.mxu0 0.0
  %6878 = vmatpush1.msra.mxu0 0.0
  %6879 = vmatprep.subr.mxu0 0.0
  %6880 = vmatpush1.msra.mxu0 0.0
  %6881 = vmatprep.subr.mxu0 0.0
  %6882 = vmatpush1.msra.mxu0 0.0
  %6883 = vmatprep.subr.mxu0 0.0
  %6884 = vmatpush1.msra.mxu0 0.0
  %6885 = vmatprep.subr.mxu0 0.0
  %6886 = vmatpush1.msra.mxu0 0.0
  %6887 = vmatprep.subr.mxu0 0.0
  %6888 = vmatpush1.msra.mxu0 0.0
  %6889 = vmatprep.subr.mxu0 0.0
  %6890 = vmatpush1.msra.mxu0 0.0
  %6891 = vmatprep.subr.mxu0 0.0
  %6892 = vmatpush1.msra.mxu0 0.0
  %6893 = vmatprep.subr.mxu0 0.0
  %6894 = vmatpush1.msra.mxu0 0.0
  %6895 = vmatprep.subr.mxu0 0.0
  %6896 = vmatpush1.msra.mxu0 0.0
  %6897 = vmatprep.subr.mxu0 0.0
  %6898 = vmatpush1.msra.mxu0 0.0
  %6899 = vmatprep.subr.mxu0 0.0
  %6900 = vmatpush1.msra.mxu0 0.0
  %6901 = vmatprep.subr.mxu0 0.0
  %6902 = vmatpush1.msra.mxu0 0.0
  %6903 = vmatprep.mubr.f32.mxu0 0.0
  %6904 = vmatmul.mubr.f32.gmra.mrb[0].mxu0 %v351
  %v6905 = vpop.f32.mrb[0].mxu0
  %v6906 = vadd.f32 %v522, %v6905
  %v6907 = vpop.f32.mrb[0].mxu0
  %6908 = vmatprep.mubr.f32.mxu0 0.0
  %6909 = vmatmul.mubr.f32.gmra.mrb[0].mxu0 %v352
  %v6910 = vpop.f32.mrb[0].mxu0
  %v6911 = vadd.f32 %v527, %v6910
  %v6912 = vpop.f32.mrb[0].mxu0
  %6913 = vmatprep.mubr.f32.mxu0 0.0
  %6914 = vmatmul.mubr.f32.gmra.mrb[0].mxu0 %v353
  %v6915 = vpop.f32.mrb[0].mxu0
  %v6916 = vadd.f32 %v532, %v6915
  %v6917 = vpop.f32.mrb[0].mxu0
  %6918 = vmatprep.mubr.f32.mxu0 0.0
  %6919 = vmatmul.mubr.f32.gmra.mrb[0].mxu0 %v354
  %v6920 = vpop.f32.mrb[0].mxu0
  %v6921 = vadd.f32 %v537, %v6920
  %v6922 = vpop.f32.mrb[0].mxu0
  %6923 = vdwg.mxu0
  %v6924 = vld [vmem:[#allocation6] sm:$0xff]
  %v6925 = vld [vmem:[#allocation6 + $0x8] sm:$0xff]
  %v6926 = vld [vmem:[#allocation6 + $0x10] sm:$0xff]
  %v6927 = vld [vmem:[#allocation6 + $0x18] sm:$0xff]
  %v6928 = vsub.f32 %v6906, %v6924
  %v6929 = vsub.f32 %v6911, %v6925
  %v6930 = vsub.f32 %v6916, %v6926
  %v6931 = vsub.f32 %v6921, %v6927
  %v6932 = vmul.f32 %v6928, 0.5
  %v6933 = vmul.f32 %v6929, 0.5
  %v6934 = vmul.f32 %v6930, 0.5
  %v6935 = vmul.f32 %v6931, 0.5
  %v6936 = vadd.f32 %v6924, %v6932
  %v6937 = vadd.f32 %v6925, %v6933
  %v6938 = vadd.f32 %v6926, %v6934
  %v6939 = vadd.f32 %v6927, %v6935
  %vm6940 = vcmp.ge.f32.partialorder %v6936, 1.0
  %vm6941 = vcmp.ge.f32.partialorder %v6937, 1.0
  %vm6942 = vcmp.ge.f32.partialorder %v6938, 1.0
  %vm6943 = vcmp.ge.f32.partialorder %v6939, 1.0
  %v6944 = vsel %vm6940, 1, 0
  %v6945 = vsel %vm6941, 1, 0
  %v6946 = vsel %vm6942, 1, 0
  %v6947 = vsel %vm6943, 1, 0
  %v6948 = vcvt.s32.f32 %v6944
  %v6949 = vcvt.s32.f32 %v6945
  %v6950 = vcvt.s32.f32 %v6946
  %v6951 = vcvt.s32.f32 %v6947
  %v6952 = vsub.f32 1.0, %v6948
  %v6953 = vsub.f32 1.0, %v6949
  %v6954 = vsub.f32 1.0, %v6950
  %v6955 = vsub.f32 1.0, %v6951
  %v6956 = vmul.f32 %v6936, %v6952
  %v6957 = vmul.f32 %v6937, %v6953
  %v6958 = vmul.f32 %v6938, %v6954
  %v6959 = vmul.f32 %v6939, %v6955
  %6960 = vst [vmem:[#allocation6] sm:$0xff] %v6956
  %6961 = vst [vmem:[#allocation6 + $0x8] sm:$0xff] %v6957
  %6962 = vst [vmem:[#allocation6 + $0x10] sm:$0xff] %v6958
  %6963 = vst [vmem:[#allocation6 + $0x18] sm:$0xff] %v6959
  %v6964 = vadd.f32 %v6530, %v6948
  %v6965 = vadd.f32 %v6531, %v6949
  %v6966 = vadd.f32 %v6532, %v6950
  %v6967 = vadd.f32 %v6533, %v6951
  %6968 = vmatprep.subr.mxu0 0.0
  %6969 = vmatpush1.msra.mxu0 %v6964
  %6970 = vmatprep.subr.mxu0 0.0
  %6971 = vmatpush1.msra.mxu0 %v6965
  %6972 = vmatprep.subr.mxu0 0.0
  %6973 = vmatpush1.msra.mxu0 %v6966
  %6974 = vmatprep.subr.mxu0 0.0
  %6975 = vmatpush1.msra.mxu0 %v6967
  %6976 = vmatprep.subr.mxu0 0.0
  %6977 = vmatpush1.msra.mxu0 0.0
  %6978 = vmatprep.subr.mxu0 0.0
  %6979 = vmatpush1.msra.mxu0 0.0
  %6980 = vmatprep.subr.mxu0 0.0
  %6981 = vmatpush1.msra.mxu0 0.0
  %6982 = vmatprep.subr.mxu0 0.0
  %6983 = vmatpush1.msra.mxu0 0.0
  %6984 = vmatprep.subr.mxu0 0.0
  %6985 = vmatpush1.msra.mxu0 0.0
  %6986 = vmatprep.subr.mxu0 0.0
  %6987 = vmatpush1.msra.mxu0 0.0
  %6988 = vmatprep.subr.mxu0 0.0
  %6989 = vmatpush1.msra.mxu0 0.0
  %6990 = vmatprep.subr.mxu0 0.0
  %6991 = vmatpush1.msra.mxu0 0.0
  %6992 = vmatprep.subr.mxu0 0.0
  %6993 = vmatpush1.msra.mxu0 0.0
  %6994 = vmatprep.subr.mxu0 0.0
  %6995 = vmatpush1.msra.mxu0 0.0
  %6996 = vmatprep.subr.mxu0 0.0
  %6997 = vmatpush1.msra.mxu0 0.0
  %6998 = vmatprep.subr.mxu0 0.0
  %6999 = vmatpush1.msra.mxu0 0.0
  %7000 = vmatprep.subr.mxu0 0.0
  %7001 = vmatpush1.msra.mxu0 0.0
  %7002 = vmatprep.subr.mxu0 0.0
  %7003 = vmatpush1.msra.mxu0 0.0
  %7004 = vmatprep.subr.mxu0 0.0
  %7005 = vmatpush1.msra.mxu0 0.0
  %7006 = vmatprep.subr.mxu0 0.0
  %7007 = vmatpush1.msra.mxu0 0.0
  %7008 = vmatprep.subr.mxu0 0.0
  %7009 = vmatpush1.msra.mxu0 0.0
  %7010 = vmatprep.subr.mxu0 0.0
  %7011 = vmatpush1.msra.mxu0 0.0
  %7012 = vmatprep.subr.mxu0 0.0
  %7013 = vmatpush1.msra.mxu0 0.0
  %7014 = vmatprep.subr.mxu0 0.0
  %7015 = vmatpush1.msra.mxu0 0.0
  %7016 = vmatprep.subr.mxu0 0.0
  %7017 = vmatpush1.msra.mxu0 0.0
  %7018 = vmatprep.subr.mxu0 0.0
  %7019 = vmatpush1.msra.mxu0 0.0
  %7020 = vmatprep.subr.mxu0 0.0
  %7021 = vmatpush1.msra.mxu0 0.0
  %7022 = vmatprep.subr.mxu0 0.0
  %7023 = vmatpush1.msra.mxu0 0.0
  %7024 = vmatprep.subr.mxu0 0.0
  %7025 = vmatpush1.msra.mxu0 0.0
  %7026 = vmatprep.subr.mxu0 0.0
  %7027 = vmatpush1.msra.mxu0 0.0
  %7028 = vmatprep.subr.mxu0 0.0
  %7029 = vmatpush1.msra.mxu0 0.0
  %7030 = vmatprep.subr.mxu0 0.0
  %7031 = vmatpush1.msra.mxu0 0.0
  %7032 = vmatprep.mubr.f32.mxu0 0.0
  %7033 = vmatmul.mubr.f32.gmra.mrb[0].mxu0 %v2013
  %v7034 = vpop.f32.mrb[0].mxu0
  %v7035 = vadd.f32 %v614, %v7034
  %v7036 = vpop.f32.mrb[0].mxu0
  %7037 = vmatprep.mubr.f32.mxu0 0.0
  %7038 = vmatmul.mubr.f32.gmra.mrb[0].mxu0 %v2016
  %v7039 = vpop.f32.mrb[0].mxu0
  %v7040 = vadd.f32 %v619, %v7039
  %v7041 = vpop.f32.mrb[0].mxu0
  %7042 = vmatprep.mubr.f32.mxu0 0.0
  %7043 = vmatmul.mubr.f32.gmra.mrb[0].mxu0 %v2019
  %v7044 = vpop.f32.mrb[0].mxu0
  %v7045 = vadd.f32 %v624, %v7044
  %v7046 = vpop.f32.mrb[0].mxu0
  %7047 = vmatprep.mubr.f32.mxu0 0.0
  %7048 = vmatmul.mubr.f32.gmra.mrb[0].mxu0 %v2022
  %v7049 = vpop.f32.mrb[0].mxu0
  %v7050 = vadd.f32 %v629, %v7049
  %v7051 = vpop.f32.mrb[0].mxu0
  %7052 = vmatprep.mubr.f32.mxu0 0.0
  %7053 = vmatmul.mubr.f32.gmra.mrb[0].mxu0 %v2025
  %v7054 = vpop.f32.mrb[0].mxu0
  %v7055 = vadd.f32 %v634, %v7054
  %v7056 = vpop.f32.mrb[0].mxu0
  %7057 = vmatprep.mubr.f32.mxu0 0.0
  %7058 = vmatmul.mubr.f32.gmra.mrb[0].mxu0 %v2028
  %v7059 = vpop.f32.mrb[0].mxu0
  %v7060 = vadd.f32 %v639, %v7059
  %v7061 = vpop.f32.mrb[0].mxu0
  %7062 = vmatprep.mubr.f32.mxu0 0.0
  %7063 = vmatmul.mubr.f32.gmra.mrb[0].mxu0 %v2031
  %v7064 = vpop.f32.mrb[0].mxu0
  %v7065 = vadd.f32 %v644, %v7064
  %v7066 = vpop.f32.mrb[0].mxu0
  %7067 = vmatprep.mubr.f32.mxu0 0.0
  %7068 = vmatmul.mubr.f32.gmra.mrb[0].mxu0 %v2034
  %v7069 = vpop.f32.mrb[0].mxu0
  %v7070 = vadd.f32 %v649, %v7069
  %v7071 = vpop.f32.mrb[0].mxu0
  %7072 = vmatprep.mubr.f32.mxu0 0.0
  %7073 = vmatmul.mubr.f32.gmra.mrb[0].mxu0 %v2037
  %v7074 = vpop.f32.mrb[0].mxu0
  %v7075 = vadd.f32 %v654, %v7074
  %v7076 = vpop.f32.mrb[0].mxu0
  %7077 = vmatprep.mubr.f32.mxu0 0.0
  %7078 = vmatmul.mubr.f32.gmra.mrb[0].mxu0 %v2040
  %v7079 = vpop.f32.mrb[0].mxu0
  %v7080 = vadd.f32 %v659, %v7079
  %v7081 = vpop.f32.mrb[0].mxu0
  %7082 = vmatprep.mubr.f32.mxu0 0.0
  %7083 = vmatmul.mubr.f32.gmra.mrb[0].mxu0 %v2043
  %v7084 = vpop.f32.mrb[0].mxu0
  %v7085 = vadd.f32 %v664, %v7084
  %v7086 = vpop.f32.mrb[0].mxu0
  %7087 = vmatprep.mubr.f32.mxu0 0.0
  %7088 = vmatmul.mubr.f32.gmra.mrb[0].mxu0 %v2046
  %v7089 = vpop.f32.mrb[0].mxu0
  %v7090 = vadd.f32 %v669, %v7089
  %v7091 = vpop.f32.mrb[0].mxu0
  %7092 = vdwg.mxu0
  %v7093 = vld [vmem:[#allocation7] sm:$0xff]
  %v7094 = vld [vmem:[#allocation7 + $0x8] sm:$0xff]
  %v7095 = vld [vmem:[#allocation7 + $0x10] sm:$0xff]
  %v7096 = vld [vmem:[#allocation7 + $0x18] sm:$0xff]
  %v7097 = vld [vmem:[#allocation7 + $0x20] sm:$0xff]
  %v7098 = vld [vmem:[#allocation7 + $0x28] sm:$0xff]
  %v7099 = vld [vmem:[#allocation7 + $0x30] sm:$0xff]
  %v7100 = vld [vmem:[#allocation7 + $0x38] sm:$0xff]
  %v7101 = vld [vmem:[#allocation7 + $0x40] sm:$0xff]
  %v7102 = vld [vmem:[#allocation7 + $0x48] sm:$0xff]
  %v7103 = vld [vmem:[#allocation7 + $0x50] sm:$0xff]
  %v7104 = vld [vmem:[#allocation7 + $0x58] sm:$0xff]
  %v7105 = vsub.f32 %v7035, %v7093
  %v7106 = vsub.f32 %v7040, %v7094
  %v7107 = vsub.f32 %v7045, %v7095
  %v7108 = vsub.f32 %v7050, %v7096
  %v7109 = vsub.f32 %v7055, %v7097
  %v7110 = vsub.f32 %v7060, %v7098
  %v7111 = vsub.f32 %v7065, %v7099
  %v7112 = vsub.f32 %v7070, %v7100
  %v7113 = vsub.f32 %v7075, %v7101
  %v7114 = vsub.f32 %v7080, %v7102
  %v7115 = vsub.f32 %v7085, %v7103
  %v7116 = vsub.f32 %v7090, %v7104
  %v7117 = vmul.f32 %v7105, 0.5
  %v7118 = vmul.f32 %v7106, 0.5
  %v7119 = vmul.f32 %v7107, 0.5
  %v7120 = vmul.f32 %v7108, 0.5
  %v7121 = vmul.f32 %v7109, 0.5
  %v7122 = vmul.f32 %v7110, 0.5
  %v7123 = vmul.f32 %v7111, 0.5
  %v7124 = vmul.f32 %v7112, 0.5
  %v7125 = vmul.f32 %v7113, 0.5
  %v7126 = vmul.f32 %v7114, 0.5
  %v7127 = vmul.f32 %v7115, 0.5
  %v7128 = vmul.f32 %v7116, 0.5
  %v7129 = vadd.f32 %v7093, %v7117
  %v7130 = vadd.f32 %v7094, %v7118
  %v7131 = vadd.f32 %v7095, %v7119
  %v7132 = vadd.f32 %v7096, %v7120
  %v7133 = vadd.f32 %v7097, %v7121
  %v7134 = vadd.f32 %v7098, %v7122
  %v7135 = vadd.f32 %v7099, %v7123
  %v7136 = vadd.f32 %v7100, %v7124
  %v7137 = vadd.f32 %v7101, %v7125
  %v7138 = vadd.f32 %v7102, %v7126
  %v7139 = vadd.f32 %v7103, %v7127
  %v7140 = vadd.f32 %v7104, %v7128
  %vm7141 = vcmp.ge.f32.partialorder %v7129, 1.0
  %vm7142 = vcmp.ge.f32.partialorder %v7130, 1.0
  %vm7143 = vcmp.ge.f32.partialorder %v7131, 1.0
  %vm7144 = vcmp.ge.f32.partialorder %v7132, 1.0
  %vm7145 = vcmp.ge.f32.partialorder %v7133, 1.0
  %vm7146 = vcmp.ge.f32.partialorder %v7134, 1.0
  %vm7147 = vcmp.ge.f32.partialorder %v7135, 1.0
  %vm7148 = vcmp.ge.f32.partialorder %v7136, 1.0
  %vm7149 = vcmp.ge.f32.partialorder %v7137, 1.0
  %vm7150 = vcmp.ge.f32.partialorder %v7138, 1.0
  %vm7151 = vcmp.ge.f32.partialorder %v7139, 1.0
  %vm7152 = vcmp.ge.f32.partialorder %v7140, 1.0
  %v7153 = vsel %vm7141, 1, 0
  %v7154 = vsel %vm7142, 1, 0
  %v7155 = vsel %vm7143, 1, 0
  %v7156 = vsel %vm7144, 1, 0
  %v7157 = vsel %vm7145, 1, 0
  %v7158 = vsel %vm7146, 1, 0
  %v7159 = vsel %vm7147, 1, 0
  %v7160 = vsel %vm7148, 1, 0
  %v7161 = vsel %vm7149, 1, 0
  %v7162 = vsel %vm7150, 1, 0
  %v7163 = vsel %vm7151, 1, 0
  %v7164 = vsel %vm7152, 1, 0
  %v7165 = vcvt.s32.f32 %v7153
  %v7166 = vcvt.s32.f32 %v7154
  %v7167 = vcvt.s32.f32 %v7155
  %v7168 = vcvt.s32.f32 %v7156
  %v7169 = vcvt.s32.f32 %v7157
  %v7170 = vcvt.s32.f32 %v7158
  %v7171 = vcvt.s32.f32 %v7159
  %v7172 = vcvt.s32.f32 %v7160
  %v7173 = vcvt.s32.f32 %v7161
  %v7174 = vcvt.s32.f32 %v7162
  %v7175 = vcvt.s32.f32 %v7163
  %v7176 = vcvt.s32.f32 %v7164
  %v7177 = vsub.f32 1.0, %v7165
  %v7178 = vsub.f32 1.0, %v7166
  %v7179 = vsub.f32 1.0, %v7167
  %v7180 = vsub.f32 1.0, %v7168
  %v7181 = vsub.f32 1.0, %v7169
  %v7182 = vsub.f32 1.0, %v7170
  %v7183 = vsub.f32 1.0, %v7171
  %v7184 = vsub.f32 1.0, %v7172
  %v7185 = vsub.f32 1.0, %v7173
  %v7186 = vsub.f32 1.0, %v7174
  %v7187 = vsub.f32 1.0, %v7175
  %v7188 = vsub.f32 1.0, %v7176
  %v7189 = vmul.f32 %v7129, %v7177
  %v7190 = vmul.f32 %v7130, %v7178
  %v7191 = vmul.f32 %v7131, %v7179
  %v7192 = vmul.f32 %v7132, %v7180
  %v7193 = vmul.f32 %v7133, %v7181
  %v7194 = vmul.f32 %v7134, %v7182
  %v7195 = vmul.f32 %v7135, %v7183
  %v7196 = vmul.f32 %v7136, %v7184
  %v7197 = vmul.f32 %v7137, %v7185
  %v7198 = vmul.f32 %v7138, %v7186
  %v7199 = vmul.f32 %v7139, %v7187
  %v7200 = vmul.f32 %v7140, %v7188
  %7201 = vst [vmem:[#allocation7] sm:$0xff] %v7189
  %7202 = vst [vmem:[#allocation7 + $0x8] sm:$0xff] %v7190
  %7203 = vst [vmem:[#allocation7 + $0x10] sm:$0xff] %v7191
  %7204 = vst [vmem:[#allocation7 + $0x18] sm:$0xff] %v7192
  %7205 = vst [vmem:[#allocation7 + $0x20] sm:$0xff] %v7193
  %7206 = vst [vmem:[#allocation7 + $0x28] sm:$0xff] %v7194
  %7207 = vst [vmem:[#allocation7 + $0x30] sm:$0xff] %v7195
  %7208 = vst [vmem:[#allocation7 + $0x38] sm:$0xff] %v7196
  %7209 = vst [vmem:[#allocation7 + $0x40] sm:$0xff] %v7197
  %7210 = vst [vmem:[#allocation7 + $0x48] sm:$0xff] %v7198
  %7211 = vst [vmem:[#allocation7 + $0x50] sm:$0xff] %v7199
  %7212 = vst [vmem:[#allocation7 + $0x58] sm:$0xff] %v7200
  %v7213 = vmul.f32 %v7173, %v278
  %v7214 = vmul.f32 %v7174, %v279
  %v7215 = vmul.f32 %v7175, %v280
  %v7216 = vmul.f32 %v7176, %v281
  %7217 = vmatprep.subr.mxu0 0.0
  %7218 = vmatpush1.xpose.msra.mxu0 %v7169
  %7219 = vmatprep.subr.mxu0 0.0
  %7220 = vmatpush1.xpose.msra.mxu0 %v7170
  %7221 = vmatprep.subr.mxu0 0.0
  %7222 = vmatpush1.xpose.msra.mxu0 %v7171
  %7223 = vmatprep.subr.mxu0 0.0
  %7224 = vmatpush1.xpose.msra.mxu0 %v7172
  %7225 = vmatprep.subr.mxu0 0.0
  %7226 = vmatpush1.xpose.msra.mxu0 0.0
  %7227 = vmatprep.subr.mxu0 0.0
  %7228 = vmatpush1.xpose.msra.mxu0 0.0
  %7229 = vmatprep.subr.mxu0 0.0
  %7230 = vmatpush1.xpose.msra.mxu0 0.0
  %7231 = vmatprep.subr.mxu0 0.0
  %7232 = vmatpush1.xpose.msra.mxu0 0.0
  %7233 = vmatprep.subr.mxu0 0.0
  %7234 = vmatpush1.xpose.msra.mxu0 0.0
  %7235 = vmatprep.subr.mxu0 0.0
  %7236 = vmatpush1.xpose.msra.mxu0 0.0
  %7237 = vmatprep.subr.mxu0 0.0
  %7238 = vmatpush1.xpose.msra.mxu0 0.0
  %7239 = vmatprep.subr.mxu0 0.0
  %7240 = vmatpush1.xpose.msra.mxu0 0.0
  %7241 = vmatprep.subr.mxu0 0.0
  %7242 = vmatpush1.xpose.msra.mxu0 0.0
  %7243 = vmatprep.subr.mxu0 0.0
  %7244 = vmatpush1.xpose.msra.mxu0 0.0
  %7245 = vmatprep.subr.mxu0 0.0
  %7246 = vmatpush1.xpose.msra.mxu0 0.0
  %7247 = vmatprep.subr.mxu0 0.0
  %7248 = vmatpush1.xpose.msra.mxu0 0.0
  %7249 = vmatprep.subr.mxu0 0.0
  %7250 = vmatpush1.xpose.msra.mxu0 0.0
  %7251 = vmatprep.subr.mxu0 0.0
  %7252 = vmatpush1.xpose.msra.mxu0 0.0
  %7253 = vmatprep.subr.mxu0 0.0
  %7254 = vmatpush1.xpose.msra.mxu0 0.0
  %7255 = vmatprep.subr.mxu0 0.0
  %7256 = vmatpush1.xpose.msra.mxu0 0.0
  %7257 = vmatprep.subr.mxu0 0.0
  %7258 = vmatpush1.xpose.msra.mxu0 0.0
  %7259 = vmatprep.subr.mxu0 0.0
  %7260 = vmatpush1.xpose.msra.mxu0 0.0
  %7261 = vmatprep.subr.mxu0 0.0
  %7262 = vmatpush1.xpose.msra.mxu0 0.0
  %7263 = vmatprep.subr.mxu0 0.0
  %7264 = vmatpush1.xpose.msra.mxu0 0.0
  %7265 = vmatprep.subr.mxu0 0.0
  %7266 = vmatpush1.xpose.msra.mxu0 0.0
  %7267 = vmatprep.subr.mxu0 0.0
  %7268 = vmatpush1.xpose.msra.mxu0 0.0
  %7269 = vmatprep.subr.mxu0 0.0
  %7270 = vmatpush1.xpose.msra.mxu0 0.0
  %7271 = vmatprep.subr.mxu0 0.0
  %7272 = vmatpush1.xpose.msra.mxu0 0.0
  %7273 = vmatprep.subr.mxu0 0.0
  %7274 = vmatpush1.xpose.msra.mxu0 0.0
  %7275 = vmatprep.subr.mxu0 0.0
  %7276 = vmatpush1.xpose.msra.mxu0 0.0
  %7277 = vmatprep.subr.mxu0 0.0
  %7278 = vmatpush1.xpose.msra.mxu0 0.0
  %7279 = vmatprep.subr.mxu0 0.0
  %7280 = vmatpush1.xpose.msra.mxu0 0.0
  %7281 = vmatprep.mubr.f32.mxu0 0.0
  %7282 = vmatmul.mubr.f32.gmra.mrb[0].mxu0 %v7213
  %v7283 = vpop.f32.mrb[0].mxu0
  %v7284 = vadd.f32 0.0, %v7283
  %v7285 = vpop.f32.mrb[0].mxu0
  %7286 = vmatprep.mubr.f32.mxu0 0.0
  %7287 = vmatmul.mubr.f32.gmra.mrb[0].mxu0 %v7214
  %v7288 = vpop.f32.mrb[0].mxu0
  %v7289 = vadd.f32 0.0, %v7288
  %v7290 = vpop.f32.mrb[0].mxu0
  %7291 = vmatprep.mubr.f32.mxu0 0.0
  %7292 = vmatmul.mubr.f32.gmra.mrb[0].mxu0 %v7215
  %v7293 = vpop.f32.mrb[0].mxu0
  %v7294 = vadd.f32 0.0, %v7293
  %v7295 = vpop.f32.mrb[0].mxu0
  %7296 = vmatprep.mubr.f32.mxu0 0.0
  %7297 = vmatmul.mubr.f32.gmra.mrb[0].mxu0 %v7216
  %v7298 = vpop.f32.mrb[0].mxu0
  %v7299 = vadd.f32 0.0, %v7298
  %v7300 = vpop.f32.mrb[0].mxu0
  %7301 = vdwg.mxu0
  %v7302 = vmul.f32 %v7284, %v274
  %v7303 = vmul.f32 %v7289, %v275
  %v7304 = vmul.f32 %v7294, %v276
  %v7305 = vmul.f32 %v7299, %v277
  %v7307 = vsel %vm791, %v7302, 0
  %v7310 = vsel %vm791, %v7303, 0
  %v7313 = vsel %vm791, %v7304, 0
  %v7316 = vsel %vm791, %v7305, 0
  %7318 = vmatprep.subr.mxu0 0.0
  %7319 = vmatpush1.msra.mxu0 %v7165
  %7320 = vmatprep.subr.mxu0 0.0
  %7321 = vmatpush1.msra.mxu0 %v7166
  %7322 = vmatprep.subr.mxu0 0.0
  %7323 = vmatpush1.msra.mxu0 %v7167
  %7324 = vmatprep.subr.mxu0 0.0
  %7325 = vmatpush1.msra.mxu0 %v7168
  %7326 = vmatprep.subr.mxu0 0.0
  %7327 = vmatpush1.msra.mxu0 0.0
  %7328 = vmatprep.subr.mxu0 0.0
  %7329 = vmatpush1.msra.mxu0 0.0
  %7330 = vmatprep.subr.mxu0 0.0
  %7331 = vmatpush1.msra.mxu0 0.0
  %7332 = vmatprep.subr.mxu0 0.0
  %7333 = vmatpush1.msra.mxu0 0.0
  %7334 = vmatprep.subr.mxu0 0.0
  %7335 = vmatpush1.msra.mxu0 0.0
  %7336 = vmatprep.subr.mxu0 0.0
  %7337 = vmatpush1.msra.mxu0 0.0
  %7338 = vmatprep.subr.mxu0 0.0
  %7339 = vmatpush1.msra.mxu0 0.0
  %7340 = vmatprep.subr.mxu0 0.0
  %7341 = vmatpush1.msra.mxu0 0.0
  %7342 = vmatprep.subr.mxu0 0.0
  %7343 = vmatpush1.msra.mxu0 0.0
  %7344 = vmatprep.subr.mxu0 0.0
  %7345 = vmatpush1.msra.mxu0 0.0
  %7346 = vmatprep.subr.mxu0 0.0
  %7347 = vmatpush1.msra.mxu0 0.0
  %7348 = vmatprep.subr.mxu0 0.0
  %7349 = vmatpush1.msra.mxu0 0.0
  %7350 = vmatprep.subr.mxu0 0.0
  %7351 = vmatpush1.msra.mxu0 0.0
  %7352 = vmatprep.subr.mxu0 0.0
  %7353 = vmatpush1.msra.mxu0 0.0
  %7354 = vmatprep.subr.mxu0 0.0
  %7355 = vmatpush1.msra.mxu0 0.0
  %7356 = vmatprep.subr.mxu0 0.0
  %7357 = vmatpush1.msra.mxu0 0.0
  %7358 = vmatprep.subr.mxu0 0.0
  %7359 = vmatpush1.msra.mxu0 0.0
  %7360 = vmatprep.subr.mxu0 0.0
  %7361 = vmatpush1.msra.mxu0 0.0
  %7362 = vmatprep.subr.mxu0 0.0
  %7363 = vmatpush1.msra.mxu0 0.0
  %7364 = vmatprep.subr.mxu0 0.0
  %7365 = vmatpush1.msra.mxu0 0.0
  %7366 = vmatprep.subr.mxu0 0.0
  %7367 = vmatpush1.msra.mxu0 0.0
  %7368 = vmatprep.subr.mxu0 0.0
  %7369 = vmatpush1.msra.mxu0 0.0
  %7370 = vmatprep.subr.mxu0 0.0
  %7371 = vmatpush1.msra.mxu0 0.0
  %7372 = vmatprep.subr.mxu0 0.0
  %7373 = vmatpush1.msra.mxu0 0.0
  %7374 = vmatprep.subr.mxu0 0.0
  %7375 = vmatpush1.msra.mxu0 0.0
  %7376 = vmatprep.subr.mxu0 0.0
  %7377 = vmatpush1.msra.mxu0 0.0
  %7378 = vmatprep.subr.mxu0 0.0
  %7379 = vmatpush1.msra.mxu0 0.0
  %7380 = vmatprep.subr.mxu0 0.0
  %7381 = vmatpush1.msra.mxu0 0.0
  %7382 = vmatprep.mubr.f32.mxu0 0.0
  %7383 = vmatmul.mubr.f32.gmra.mrb[0].mxu0 %v7307
  %v7384 = vpop.f32.mrb[0].mxu0
  %v7385 = vadd.f32 0.0, %v7384
  %v7386 = vpop.f32.mrb[0].mxu0
  %7387 = vmatprep.mubr.f32.mxu0 0.0
  %7388 = vmatmul.mubr.f32.gmra.mrb[0].mxu0 %v7310
  %v7389 = vpop.f32.mrb[0].mxu0
  %v7390 = vadd.f32 0.0, %v7389
  %v7391 = vpop.f32.mrb[0].mxu0
  %7392 = vmatprep.mubr.f32.mxu0 0.0
  %7393 = vmatmul.mubr.f32.gmra.mrb[0].mxu0 %v7313
  %v7394 = vpop.f32.mrb[0].mxu0
  %v7395 = vadd.f32 0.0, %v7394
  %v7396 = vpop.f32.mrb[0].mxu0
  %7397 = vmatprep.mubr.f32.mxu0 0.0
  %7398 = vmatmul.mubr.f32.gmra.mrb[0].mxu0 %v7316
  %v7399 = vpop.f32.mrb[0].mxu0
  %v7400 = vadd.f32 0.0, %v7399
  %v7401 = vpop.f32.mrb[0].mxu0
  %7402 = vdwg.mxu0
  %v7403 = vmul.f32 %v7385, %v278
  %v7404 = vmul.f32 %v7390, %v279
  %v7405 = vmul.f32 %v7395, %v280
  %v7406 = vmul.f32 %v7400, %v281
  %v7407 = vmul.f32 %v7173, %v283
  %v7408 = vmul.f32 %v7174, %v284
  %v7409 = vmul.f32 %v7175, %v285
  %v7410 = vmul.f32 %v7176, %v286
  %7411 = vmatprep.subr.mxu0 0.0
  %7412 = vmatpush1.xpose.msra.mxu0 %v7169
  %7413 = vmatprep.subr.mxu0 0.0
  %7414 = vmatpush1.xpose.msra.mxu0 %v7170
  %7415 = vmatprep.subr.mxu0 0.0
  %7416 = vmatpush1.xpose.msra.mxu0 %v7171
  %7417 = vmatprep.subr.mxu0 0.0
  %7418 = vmatpush1.xpose.msra.mxu0 %v7172
  %7419 = vmatprep.subr.mxu0 0.0
  %7420 = vmatpush1.xpose.msra.mxu0 0.0
  %7421 = vmatprep.subr.mxu0 0.0
  %7422 = vmatpush1.xpose.msra.mxu0 0.0
  %7423 = vmatprep.subr.mxu0 0.0
  %7424 = vmatpush1.xpose.msra.mxu0 0.0
  %7425 = vmatprep.subr.mxu0 0.0
  %7426 = vmatpush1.xpose.msra.mxu0 0.0
  %7427 = vmatprep.subr.mxu0 0.0
  %7428 = vmatpush1.xpose.msra.mxu0 0.0
  %7429 = vmatprep.subr.mxu0 0.0
  %7430 = vmatpush1.xpose.msra.mxu0 0.0
  %7431 = vmatprep.subr.mxu0 0.0
  %7432 = vmatpush1.xpose.msra.mxu0 0.0
  %7433 = vmatprep.subr.mxu0 0.0
  %7434 = vmatpush1.xpose.msra.mxu0 0.0
  %7435 = vmatprep.subr.mxu0 0.0
  %7436 = vmatpush1.xpose.msra.mxu0 0.0
  %7437 = vmatprep.subr.mxu0 0.0
  %7438 = vmatpush1.xpose.msra.mxu0 0.0
  %7439 = vmatprep.subr.mxu0 0.0
  %7440 = vmatpush1.xpose.msra.mxu0 0.0
  %7441 = vmatprep.subr.mxu0 0.0
  %7442 = vmatpush1.xpose.msra.mxu0 0.0
  %7443 = vmatprep.subr.mxu0 0.0
  %7444 = vmatpush1.xpose.msra.mxu0 0.0
  %7445 = vmatprep.subr.mxu0 0.0
  %7446 = vmatpush1.xpose.msra.mxu0 0.0
  %7447 = vmatprep.subr.mxu0 0.0
  %7448 = vmatpush1.xpose.msra.mxu0 0.0
  %7449 = vmatprep.subr.mxu0 0.0
  %7450 = vmatpush1.xpose.msra.mxu0 0.0
  %7451 = vmatprep.subr.mxu0 0.0
  %7452 = vmatpush1.xpose.msra.mxu0 0.0
  %7453 = vmatprep.subr.mxu0 0.0
  %7454 = vmatpush1.xpose.msra.mxu0 0.0
  %7455 = vmatprep.subr.mxu0 0.0
  %7456 = vmatpush1.xpose.msra.mxu0 0.0
  %7457 = vmatprep.subr.mxu0 0.0
  %7458 = vmatpush1.xpose.msra.mxu0 0.0
  %7459 = vmatprep.subr.mxu0 0.0
  %7460 = vmatpush1.xpose.msra.mxu0 0.0
  %7461 = vmatprep.subr.mxu0 0.0
  %7462 = vmatpush1.xpose.msra.mxu0 0.0
  %7463 = vmatprep.subr.mxu0 0.0
  %7464 = vmatpush1.xpose.msra.mxu0 0.0
  %7465 = vmatprep.subr.mxu0 0.0
  %7466 = vmatpush1.xpose.msra.mxu0 0.0
  %7467 = vmatprep.subr.mxu0 0.0
  %7468 = vmatpush1.xpose.msra.mxu0 0.0
  %7469 = vmatprep.subr.mxu0 0.0
  %7470 = vmatpush1.xpose.msra.mxu0 0.0
  %7471 = vmatprep.subr.mxu0 0.0
  %7472 = vmatpush1.xpose.msra.mxu0 0.0
  %7473 = vmatprep.subr.mxu0 0.0
  %7474 = vmatpush1.xpose.msra.mxu0 0.0
  %7475 = vmatprep.mubr.f32.mxu0 0.0
  %7476 = vmatmul.mubr.f32.gmra.mrb[0].mxu0 %v7407
  %v7477 = vpop.f32.mrb[0].mxu0
  %v7478 = vadd.f32 0.0, %v7477
  %v7479 = vpop.f32.mrb[0].mxu0
  %7480 = vmatprep.mubr.f32.mxu0 0.0
  %7481 = vmatmul.mubr.f32.gmra.mrb[0].mxu0 %v7408
  %v7482 = vpop.f32.mrb[0].mxu0
  %v7483 = vadd.f32 0.0, %v7482
  %v7484 = vpop.f32.mrb[0].mxu0
  %7485 = vmatprep.mubr.f32.mxu0 0.0
  %7486 = vmatmul.mubr.f32.gmra.mrb[0].mxu0 %v7409
  %v7487 = vpop.f32.mrb[0].mxu0
  %v7488 = vadd.f32 0.0, %v7487
  %v7489 = vpop.f32.mrb[0].mxu0
  %7490 = vmatprep.mubr.f32.mxu0 0.0
  %7491 = vmatmul.mubr.f32.gmra.mrb[0].mxu0 %v7410
  %v7492 = vpop.f32.mrb[0].mxu0
  %v7493 = vadd.f32 0.0, %v7492
  %v7494 = vpop.f32.mrb[0].mxu0
  %7495 = vdwg.mxu0
  %v7496 = vmul.f32 %v7478, %v274
  %v7497 = vmul.f32 %v7483, %v275
  %v7498 = vmul.f32 %v7488, %v276
  %v7499 = vmul.f32 %v7493, %v277
  %v7501 = vsel %vm791, %v7496, 0
  %v7504 = vsel %vm791, %v7497, 0
  %v7507 = vsel %vm791, %v7498, 0
  %v7510 = vsel %vm791, %v7499, 0
  %7512 = vmatprep.subr.mxu0 0.0
  %7513 = vmatpush1.msra.mxu0 %v7165
  %7514 = vmatprep.subr.mxu0 0.0
  %7515 = vmatpush1.msra.mxu0 %v7166
  %7516 = vmatprep.subr.mxu0 0.0
  %7517 = vmatpush1.msra.mxu0 %v7167
  %7518 = vmatprep.subr.mxu0 0.0
  %7519 = vmatpush1.msra.mxu0 %v7168
  %7520 = vmatprep.subr.mxu0 0.0
  %7521 = vmatpush1.msra.mxu0 0.0
  %7522 = vmatprep.subr.mxu0 0.0
  %7523 = vmatpush1.msra.mxu0 0.0
  %7524 = vmatprep.subr.mxu0 0.0
  %7525 = vmatpush1.msra.mxu0 0.0
  %7526 = vmatprep.subr.mxu0 0.0
  %7527 = vmatpush1.msra.mxu0 0.0
  %7528 = vmatprep.subr.mxu0 0.0
  %7529 = vmatpush1.msra.mxu0 0.0
  %7530 = vmatprep.subr.mxu0 0.0
  %7531 = vmatpush1.msra.mxu0 0.0
  %7532 = vmatprep.subr.mxu0 0.0
  %7533 = vmatpush1.msra.mxu0 0.0
  %7534 = vmatprep.subr.mxu0 0.0
  %7535 = vmatpush1.msra.mxu0 0.0
  %7536 = vmatprep.subr.mxu0 0.0
  %7537 = vmatpush1.msra.mxu0 0.0
  %7538 = vmatprep.subr.mxu0 0.0
  %7539 = vmatpush1.msra.mxu0 0.0
  %7540 = vmatprep.subr.mxu0 0.0
  %7541 = vmatpush1.msra.mxu0 0.0
  %7542 = vmatprep.subr.mxu0 0.0
  %7543 = vmatpush1.msra.mxu0 0.0
  %7544 = vmatprep.subr.mxu0 0.0
  %7545 = vmatpush1.msra.mxu0 0.0
  %7546 = vmatprep.subr.mxu0 0.0
  %7547 = vmatpush1.msra.mxu0 0.0
  %7548 = vmatprep.subr.mxu0 0.0
  %7549 = vmatpush1.msra.mxu0 0.0
  %7550 = vmatprep.subr.mxu0 0.0
  %7551 = vmatpush1.msra.mxu0 0.0
  %7552 = vmatprep.subr.mxu0 0.0
  %7553 = vmatpush1.msra.mxu0 0.0
  %7554 = vmatprep.subr.mxu0 0.0
  %7555 = vmatpush1.msra.mxu0 0.0
  %7556 = vmatprep.subr.mxu0 0.0
  %7557 = vmatpush1.msra.mxu0 0.0
  %7558 = vmatprep.subr.mxu0 0.0
  %7559 = vmatpush1.msra.mxu0 0.0
  %7560 = vmatprep.subr.mxu0 0.0
  %7561 = vmatpush1.msra.mxu0 0.0
  %7562 = vmatprep.subr.mxu0 0.0
  %7563 = vmatpush1.msra.mxu0 0.0
  %7564 = vmatprep.subr.mxu0 0.0
  %7565 = vmatpush1.msra.mxu0 0.0
  %7566 = vmatprep.subr.mxu0 0.0
  %7567 = vmatpush1.msra.mxu0 0.0
  %7568 = vmatprep.subr.mxu0 0.0
  %7569 = vmatpush1.msra.mxu0 0.0
  %7570 = vmatprep.subr.mxu0 0.0
  %7571 = vmatpush1.msra.mxu0 0.0
  %7572 = vmatprep.subr.mxu0 0.0
  %7573 = vmatpush1.msra.mxu0 0.0
  %7574 = vmatprep.subr.mxu0 0.0
  %7575 = vmatpush1.msra.mxu0 0.0
  %7576 = vmatprep.mubr.f32.mxu0 0.0
  %7577 = vmatmul.mubr.f32.gmra.mrb[0].mxu0 %v7501
  %v7578 = vpop.f32.mrb[0].mxu0
  %v7579 = vadd.f32 0.0, %v7578
  %v7580 = vpop.f32.mrb[0].mxu0
  %7581 = vmatprep.mubr.f32.mxu0 0.0
  %7582 = vmatmul.mubr.f32.gmra.mrb[0].mxu0 %v7504
  %v7583 = vpop.f32.mrb[0].mxu0
  %v7584 = vadd.f32 0.0, %v7583
  %v7585 = vpop.f32.mrb[0].mxu0
  %7586 = vmatprep.mubr.f32.mxu0 0.0
  %7587 = vmatmul.mubr.f32.gmra.mrb[0].mxu0 %v7507
  %v7588 = vpop.f32.mrb[0].mxu0
  %v7589 = vadd.f32 0.0, %v7588
  %v7590 = vpop.f32.mrb[0].mxu0
  %7591 = vmatprep.mubr.f32.mxu0 0.0
  %7592 = vmatmul.mubr.f32.gmra.mrb[0].mxu0 %v7510
  %v7593 = vpop.f32.mrb[0].mxu0
  %v7594 = vadd.f32 0.0, %v7593
  %v7595 = vpop.f32.mrb[0].mxu0
  %7596 = vdwg.mxu0
  %v7597 = vmul.f32 %v7579, %v283
  %v7598 = vmul.f32 %v7584, %v284
  %v7599 = vmul.f32 %v7589, %v285
  %v7600 = vmul.f32 %v7594, %v286
  %v7601 = vadd.f32 %v7403, %v7597
  %v7602 = vadd.f32 %v7404, %v7598
  %v7603 = vadd.f32 %v7405, %v7599
  %v7604 = vadd.f32 %v7406, %v7600
  %v7605 = vmul.f32 %v7601, 0.125
  %v7606 = vmul.f32 %v7602, 0.125
  %v7607 = vmul.f32 %v7603, 0.125
  %v7608 = vmul.f32 %v7604, 0.125
  %v7609 = vld [vmem:[#allocation8] sm:$0xff]
  %v7610 = vld [vmem:[#allocation8 + $0x8] sm:$0xff]
  %v7611 = vld [vmem:[#allocation8 + $0x10] sm:$0xff]
  %v7612 = vld [vmem:[#allocation8 + $0x18] sm:$0xff]
  %v7613 = vsub.f32 %v7605, %v7609
  %v7614 = vsub.f32 %v7606, %v7610
  %v7615 = vsub.f32 %v7607, %v7611
  %v7616 = vsub.f32 %v7608, %v7612
  %v7617 = vmul.f32 %v7613, 0.5
  %v7618 = vmul.f32 %v7614, 0.5
  %v7619 = vmul.f32 %v7615, 0.5
  %v7620 = vmul.f32 %v7616, 0.5
  %v7621 = vadd.f32 %v7609, %v7617
  %v7622 = vadd.f32 %v7610, %v7618
  %v7623 = vadd.f32 %v7611, %v7619
  %v7624 = vadd.f32 %v7612, %v7620
  %vm7625 = vcmp.ge.f32.partialorder %v7621, 0.5
  %vm7626 = vcmp.ge.f32.partialorder %v7622, 0.5
  %vm7627 = vcmp.ge.f32.partialorder %v7623, 0.5
  %vm7628 = vcmp.ge.f32.partialorder %v7624, 0.5
  %v7629 = vsel %vm7625, 1, 0
  %v7630 = vsel %vm7626, 1, 0
  %v7631 = vsel %vm7627, 1, 0
  %v7632 = vsel %vm7628, 1, 0
  %v7633 = vcvt.s32.f32 %v7629
  %v7634 = vcvt.s32.f32 %v7630
  %v7635 = vcvt.s32.f32 %v7631
  %v7636 = vcvt.s32.f32 %v7632
  %v7637 = vsub.f32 1.0, %v7633
  %v7638 = vsub.f32 1.0, %v7634
  %v7639 = vsub.f32 1.0, %v7635
  %v7640 = vsub.f32 1.0, %v7636
  %v7641 = vmul.f32 %v7621, %v7637
  %v7642 = vmul.f32 %v7622, %v7638
  %v7643 = vmul.f32 %v7623, %v7639
  %v7644 = vmul.f32 %v7624, %v7640
  %7645 = vst [vmem:[#allocation8] sm:$0xff] %v7641
  %7646 = vst [vmem:[#allocation8 + $0x8] sm:$0xff] %v7642
  %7647 = vst [vmem:[#allocation8 + $0x10] sm:$0xff] %v7643
  %7648 = vst [vmem:[#allocation8 + $0x18] sm:$0xff] %v7644
  %7649 = vmatprep.subr.mxu0 0.0
  %7650 = vmatpush1.msra.mxu0 %v7633
  %7651 = vmatprep.subr.mxu0 0.0
  %7652 = vmatpush1.msra.mxu0 %v7634
  %7653 = vmatprep.subr.mxu0 0.0
  %7654 = vmatpush1.msra.mxu0 %v7635
  %7655 = vmatprep.subr.mxu0 0.0
  %7656 = vmatpush1.msra.mxu0 %v7636
  %7657 = vmatprep.subr.mxu0 0.0
  %7658 = vmatpush1.msra.mxu0 0.0
  %7659 = vmatprep.subr.mxu0 0.0
  %7660 = vmatpush1.msra.mxu0 0.0
  %7661 = vmatprep.subr.mxu0 0.0
  %7662 = vmatpush1.msra.mxu0 0.0
  %7663 = vmatprep.subr.mxu0 0.0
  %7664 = vmatpush1.msra.mxu0 0.0
  %7665 = vmatprep.subr.mxu0 0.0
  %7666 = vmatpush1.msra.mxu0 0.0
  %7667 = vmatprep.subr.mxu0 0.0
  %7668 = vmatpush1.msra.mxu0 0.0
  %7669 = vmatprep.subr.mxu0 0.0
  %7670 = vmatpush1.msra.mxu0 0.0
  %7671 = vmatprep.subr.mxu0 0.0
  %7672 = vmatpush1.msra.mxu0 0.0
  %7673 = vmatprep.subr.mxu0 0.0
  %7674 = vmatpush1.msra.mxu0 0.0
  %7675 = vmatprep.subr.mxu0 0.0
  %7676 = vmatpush1.msra.mxu0 0.0
  %7677 = vmatprep.subr.mxu0 0.0
  %7678 = vmatpush1.msra.mxu0 0.0
  %7679 = vmatprep.subr.mxu0 0.0
  %7680 = vmatpush1.msra.mxu0 0.0
  %7681 = vmatprep.subr.mxu0 0.0
  %7682 = vmatpush1.msra.mxu0 0.0
  %7683 = vmatprep.subr.mxu0 0.0
  %7684 = vmatpush1.msra.mxu0 0.0
  %7685 = vmatprep.subr.mxu0 0.0
  %7686 = vmatpush1.msra.mxu0 0.0
  %7687 = vmatprep.subr.mxu0 0.0
  %7688 = vmatpush1.msra.mxu0 0.0
  %7689 = vmatprep.subr.mxu0 0.0
  %7690 = vmatpush1.msra.mxu0 0.0
  %7691 = vmatprep.subr.mxu0 0.0
  %7692 = vmatpush1.msra.mxu0 0.0
  %7693 = vmatprep.subr.mxu0 0.0
  %7694 = vmatpush1.msra.mxu0 0.0
  %7695 = vmatprep.subr.mxu0 0.0
  %7696 = vmatpush1.msra.mxu0 0.0
  %7697 = vmatprep.subr.mxu0 0.0
  %7698 = vmatpush1.msra.mxu0 0.0
  %7699 = vmatprep.subr.mxu0 0.0
  %7700 = vmatpush1.msra.mxu0 0.0
  %7701 = vmatprep.subr.mxu0 0.0
  %7702 = vmatpush1.msra.mxu0 0.0
  %7703 = vmatprep.subr.mxu0 0.0
  %7704 = vmatpush1.msra.mxu0 0.0
  %7705 = vmatprep.subr.mxu0 0.0
  %7706 = vmatpush1.msra.mxu0 0.0
  %7707 = vmatprep.subr.mxu0 0.0
  %7708 = vmatpush1.msra.mxu0 0.0
  %7709 = vmatprep.subr.mxu0 0.0
  %7710 = vmatpush1.msra.mxu0 0.0
  %7711 = vmatprep.subr.mxu0 0.0
  %7712 = vmatpush1.msra.mxu0 0.0
  %7713 = vmatprep.mubr.f32.mxu0 0.0
  %7714 = vmatmul.mubr.f32.gmra.mrb[0].mxu0 %v2682
  %v7715 = vpop.f32.mrb[0].mxu0
  %v7716 = vadd.f32 %v674, %v7715
  %v7717 = vpop.f32.mrb[0].mxu0
  %7718 = vmatprep.mubr.f32.mxu0 0.0
  %7719 = vmatmul.mubr.f32.gmra.mrb[0].mxu0 %v2685
  %v7720 = vpop.f32.mrb[0].mxu0
  %v7721 = vadd.f32 %v679, %v7720
  %v7722 = vpop.f32.mrb[0].mxu0
  %7723 = vmatprep.mubr.f32.mxu0 0.0
  %7724 = vmatmul.mubr.f32.gmra.mrb[0].mxu0 %v2688
  %v7725 = vpop.f32.mrb[0].mxu0
  %v7726 = vadd.f32 %v684, %v7725
  %v7727 = vpop.f32.mrb[0].mxu0
  %7728 = vmatprep.mubr.f32.mxu0 0.0
  %7729 = vmatmul.mubr.f32.gmra.mrb[0].mxu0 %v2691
  %v7730 = vpop.f32.mrb[0].mxu0
  %v7731 = vadd.f32 %v689, %v7730
  %v7732 = vpop.f32.mrb[0].mxu0
  %7733 = vdwg.mxu0
  %v7734 = vld [vmem:[#allocation9] sm:$0xff]
  %v7735 = vld [vmem:[#allocation9 + $0x8] sm:$0xff]
  %v7736 = vld [vmem:[#allocation9 + $0x10] sm:$0xff]
  %v7737 = vld [vmem:[#allocation9 + $0x18] sm:$0xff]
  %v7738 = vsub.f32 %v7716, %v7734
  %v7739 = vsub.f32 %v7721, %v7735
  %v7740 = vsub.f32 %v7726, %v7736
  %v7741 = vsub.f32 %v7731, %v7737
  %v7742 = vmul.f32 %v7738, 0.5
  %v7743 = vmul.f32 %v7739, 0.5
  %v7744 = vmul.f32 %v7740, 0.5
  %v7745 = vmul.f32 %v7741, 0.5
  %v7746 = vadd.f32 %v7734, %v7742
  %v7747 = vadd.f32 %v7735, %v7743
  %v7748 = vadd.f32 %v7736, %v7744
  %v7749 = vadd.f32 %v7737, %v7745
  %vm7750 = vcmp.ge.f32.partialorder %v7746, 1.0
  %vm7751 = vcmp.ge.f32.partialorder %v7747, 1.0
  %vm7752 = vcmp.ge.f32.partialorder %v7748, 1.0
  %vm7753 = vcmp.ge.f32.partialorder %v7749, 1.0
  %v7754 = vsel %vm7750, 1, 0
  %v7755 = vsel %vm7751, 1, 0
  %v7756 = vsel %vm7752, 1, 0
  %v7757 = vsel %vm7753, 1, 0
  %v7758 = vcvt.s32.f32 %v7754
  %v7759 = vcvt.s32.f32 %v7755
  %v7760 = vcvt.s32.f32 %v7756
  %v7761 = vcvt.s32.f32 %v7757
  %v7762 = vsub.f32 1.0, %v7758
  %v7763 = vsub.f32 1.0, %v7759
  %v7764 = vsub.f32 1.0, %v7760
  %v7765 = vsub.f32 1.0, %v7761
  %v7766 = vmul.f32 %v7746, %v7762
  %v7767 = vmul.f32 %v7747, %v7763
  %v7768 = vmul.f32 %v7748, %v7764
  %v7769 = vmul.f32 %v7749, %v7765
  %7770 = vst [vmem:[#allocation9] sm:$0xff] %v7766
  %7771 = vst [vmem:[#allocation9 + $0x8] sm:$0xff] %v7767
  %7772 = vst [vmem:[#allocation9 + $0x10] sm:$0xff] %v7768
  %7773 = vst [vmem:[#allocation9 + $0x18] sm:$0xff] %v7769
  %v7774 = vadd.f32 %v6964, %v7758
  %v7775 = vadd.f32 %v6965, %v7759
  %v7776 = vadd.f32 %v6966, %v7760
  %v7777 = vadd.f32 %v6967, %v7761
  %7778 = vmatprep.subr.mxu0 0.0
  %7779 = vmatpush1.msra.mxu0 %v7774
  %7780 = vmatprep.subr.mxu0 0.0
  %7781 = vmatpush1.msra.mxu0 %v7775
  %7782 = vmatprep.subr.mxu0 0.0
  %7783 = vmatpush1.msra.mxu0 %v7776
  %7784 = vmatprep.subr.mxu0 0.0
  %7785 = vmatpush1.msra.mxu0 %v7777
  %7786 = vmatprep.subr.mxu0 0.0
  %7787 = vmatpush1.msra.mxu0 0.0
  %7788 = vmatprep.subr.mxu0 0.0
  %7789 = vmatpush1.msra.mxu0 0.0
  %7790 = vmatprep.subr.mxu0 0.0
  %7791 = vmatpush1.msra.mxu0 0.0
  %7792 = vmatprep.subr.mxu0 0.0
  %7793 = vmatpush1.msra.mxu0 0.0
  %7794 = vmatprep.subr.mxu0 0.0
  %7795 = vmatpush1.msra.mxu0 0.0
  %7796 = vmatprep.subr.mxu0 0.0
  %7797 = vmatpush1.msra.mxu0 0.0
  %7798 = vmatprep.subr.mxu0 0.0
  %7799 = vmatpush1.msra.mxu0 0.0
  %7800 = vmatprep.subr.mxu0 0.0
  %7801 = vmatpush1.msra.mxu0 0.0
  %7802 = vmatprep.subr.mxu0 0.0
  %7803 = vmatpush1.msra.mxu0 0.0
  %7804 = vmatprep.subr.mxu0 0.0
  %7805 = vmatpush1.msra.mxu0 0.0
  %7806 = vmatprep.subr.mxu0 0.0
  %7807 = vmatpush1.msra.mxu0 0.0
  %7808 = vmatprep.subr.mxu0 0.0
  %7809 = vmatpush1.msra.mxu0 0.0
  %7810 = vmatprep.subr.mxu0 0.0
  %7811 = vmatpush1.msra.mxu0 0.0
  %7812 = vmatprep.subr.mxu0 0.0
  %7813 = vmatpush1.msra.mxu0 0.0
  %7814 = vmatprep.subr.mxu0 0.0
  %7815 = vmatpush1.msra.mxu0 0.0
  %7816 = vmatprep.subr.mxu0 0.0
  %7817 = vmatpush1.msra.mxu0 0.0
  %7818 = vmatprep.subr.mxu0 0.0
  %7819 = vmatpush1.msra.mxu0 0.0
  %7820 = vmatprep.subr.mxu0 0.0
  %7821 = vmatpush1.msra.mxu0 0.0
  %7822 = vmatprep.subr.mxu0 0.0
  %7823 = vmatpush1.msra.mxu0 0.0
  %7824 = vmatprep.subr.mxu0 0.0
  %7825 = vmatpush1.msra.mxu0 0.0
  %7826 = vmatprep.subr.mxu0 0.0
  %7827 = vmatpush1.msra.mxu0 0.0
  %7828 = vmatprep.subr.mxu0 0.0
  %7829 = vmatpush1.msra.mxu0 0.0
  %7830 = vmatprep.subr.mxu0 0.0
  %7831 = vmatpush1.msra.mxu0 0.0
  %7832 = vmatprep.subr.mxu0 0.0
  %7833 = vmatpush1.msra.mxu0 0.0
  %7834 = vmatprep.subr.mxu0 0.0
  %7835 = vmatpush1.msra.mxu0 0.0
  %7836 = vmatprep.subr.mxu0 0.0
  %7837 = vmatpush1.msra.mxu0 0.0
  %7838 = vmatprep.subr.mxu0 0.0
  %7839 = vmatpush1.msra.mxu0 0.0
  %7840 = vmatprep.subr.mxu0 0.0
  %7841 = vmatpush1.msra.mxu0 0.0
  %7842 = vmatprep.mubr.f32.mxu0 0.0
  %7843 = vmatmul.mubr.f32.gmra.mrb[0].mxu0 %v2811
  %v7844 = vpop.f32.mrb[0].mxu0
  %v7845 = vadd.f32 %v694, %v7844
  %v7846 = vpop.f32.mrb[0].mxu0
  %7847 = vmatprep.mubr.f32.mxu0 0.0
  %7848 = vmatmul.mubr.f32.gmra.mrb[0].mxu0 %v2814
  %v7849 = vpop.f32.mrb[0].mxu0
  %v7850 = vadd.f32 %v699, %v7849
  %v7851 = vpop.f32.mrb[0].mxu0
  %7852 = vmatprep.mubr.f32.mxu0 0.0
  %7853 = vmatmul.mubr.f32.gmra.mrb[0].mxu0 %v2817
  %v7854 = vpop.f32.mrb[0].mxu0
  %v7855 = vadd.f32 %v704, %v7854
  %v7856 = vpop.f32.mrb[0].mxu0
  %7857 = vmatprep.mubr.f32.mxu0 0.0
  %7858 = vmatmul.mubr.f32.gmra.mrb[0].mxu0 %v2820
  %v7859 = vpop.f32.mrb[0].mxu0
  %v7860 = vadd.f32 %v709, %v7859
  %v7861 = vpop.f32.mrb[0].mxu0
  %7862 = vmatprep.mubr.f32.mxu0 0.0
  %7863 = vmatmul.mubr.f32.gmra.mrb[0].mxu0 %v2823
  %v7864 = vpop.f32.mrb[0].mxu0
  %v7865 = vadd.f32 %v714, %v7864
  %v7866 = vpop.f32.mrb[0].mxu0
  %7867 = vmatprep.mubr.f32.mxu0 0.0
  %7868 = vmatmul.mubr.f32.gmra.mrb[0].mxu0 %v2826
  %v7869 = vpop.f32.mrb[0].mxu0
  %v7870 = vadd.f32 %v719, %v7869
  %v7871 = vpop.f32.mrb[0].mxu0
  %7872 = vmatprep.mubr.f32.mxu0 0.0
  %7873 = vmatmul.mubr.f32.gmra.mrb[0].mxu0 %v2829
  %v7874 = vpop.f32.mrb[0].mxu0
  %v7875 = vadd.f32 %v724, %v7874
  %v7876 = vpop.f32.mrb[0].mxu0
  %7877 = vmatprep.mubr.f32.mxu0 0.0
  %7878 = vmatmul.mubr.f32.gmra.mrb[0].mxu0 %v2832
  %v7879 = vpop.f32.mrb[0].mxu0
  %v7880 = vadd.f32 %v729, %v7879
  %v7881 = vpop.f32.mrb[0].mxu0
  %7882 = vmatprep.mubr.f32.mxu0 0.0
  %7883 = vmatmul.mubr.f32.gmra.mrb[0].mxu0 %v2835
  %v7884 = vpop.f32.mrb[0].mxu0
  %v7885 = vadd.f32 %v734, %v7884
  %v7886 = vpop.f32.mrb[0].mxu0
  %7887 = vmatprep.mubr.f32.mxu0 0.0
  %7888 = vmatmul.mubr.f32.gmra.mrb[0].mxu0 %v2838
  %v7889 = vpop.f32.mrb[0].mxu0
  %v7890 = vadd.f32 %v739, %v7889
  %v7891 = vpop.f32.mrb[0].mxu0
  %7892 = vmatprep.mubr.f32.mxu0 0.0
  %7893 = vmatmul.mubr.f32.gmra.mrb[0].mxu0 %v2841
  %v7894 = vpop.f32.mrb[0].mxu0
  %v7895 = vadd.f32 %v744, %v7894
  %v7896 = vpop.f32.mrb[0].mxu0
  %7897 = vmatprep.mubr.f32.mxu0 0.0
  %7898 = vmatmul.mubr.f32.gmra.mrb[0].mxu0 %v2844
  %v7899 = vpop.f32.mrb[0].mxu0
  %v7900 = vadd.f32 %v749, %v7899
  %v7901 = vpop.f32.mrb[0].mxu0
  %7902 = vmatprep.mubr.f32.mxu0 0.0
  %7903 = vmatmul.mubr.f32.gmra.mrb[0].mxu0 %v2847
  %v7904 = vpop.f32.mrb[0].mxu0
  %v7905 = vadd.f32 %v754, %v7904
  %v7906 = vpop.f32.mrb[0].mxu0
  %7907 = vmatprep.mubr.f32.mxu0 0.0
  %7908 = vmatmul.mubr.f32.gmra.mrb[0].mxu0 %v2850
  %v7909 = vpop.f32.mrb[0].mxu0
  %v7910 = vadd.f32 %v759, %v7909
  %v7911 = vpop.f32.mrb[0].mxu0
  %7912 = vmatprep.mubr.f32.mxu0 0.0
  %7913 = vmatmul.mubr.f32.gmra.mrb[0].mxu0 %v2853
  %v7914 = vpop.f32.mrb[0].mxu0
  %v7915 = vadd.f32 %v764, %v7914
  %v7916 = vpop.f32.mrb[0].mxu0
  %7917 = vmatprep.mubr.f32.mxu0 0.0
  %7918 = vmatmul.mubr.f32.gmra.mrb[0].mxu0 %v2856
  %v7919 = vpop.f32.mrb[0].mxu0
  %v7920 = vadd.f32 %v769, %v7919
  %v7921 = vpop.f32.mrb[0].mxu0
  %7922 = vdwg.mxu0
  %v7923 = vld [vmem:[#allocation10] sm:$0xff]
  %v7924 = vld [vmem:[#allocation10 + $0x8] sm:$0xff]
  %v7925 = vld [vmem:[#allocation10 + $0x10] sm:$0xff]
  %v7926 = vld [vmem:[#allocation10 + $0x18] sm:$0xff]
  %v7927 = vld [vmem:[#allocation10 + $0x20] sm:$0xff]
  %v7928 = vld [vmem:[#allocation10 + $0x28] sm:$0xff]
  %v7929 = vld [vmem:[#allocation10 + $0x30] sm:$0xff]
  %v7930 = vld [vmem:[#allocation10 + $0x38] sm:$0xff]
  %v7931 = vld [vmem:[#allocation10 + $0x40] sm:$0xff]
  %v7932 = vld [vmem:[#allocation10 + $0x48] sm:$0xff]
  %v7933 = vld [vmem:[#allocation10 + $0x50] sm:$0xff]
  %v7934 = vld [vmem:[#allocation10 + $0x58] sm:$0xff]
  %v7935 = vld [vmem:[#allocation10 + $0x60] sm:$0xff]
  %v7936 = vld [vmem:[#allocation10 + $0x68] sm:$0xff]
  %v7937 = vld [vmem:[#allocation10 + $0x70] sm:$0xff]
  %v7938 = vld [vmem:[#allocation10 + $0x78] sm:$0xff]
  %v7939 = vsub.f32 %v7845, %v7923
  %v7940 = vsub.f32 %v7850, %v7924
  %v7941 = vsub.f32 %v7855, %v7925
  %v7942 = vsub.f32 %v7860, %v7926
  %v7943 = vsub.f32 %v7865, %v7927
  %v7944 = vsub.f32 %v7870, %v7928
  %v7945 = vsub.f32 %v7875, %v7929
  %v7946 = vsub.f32 %v7880, %v7930
  %v7947 = vsub.f32 %v7885, %v7931
  %v7948 = vsub.f32 %v7890, %v7932
  %v7949 = vsub.f32 %v7895, %v7933
  %v7950 = vsub.f32 %v7900, %v7934
  %v7951 = vsub.f32 %v7905, %v7935
  %v7952 = vsub.f32 %v7910, %v7936
  %v7953 = vsub.f32 %v7915, %v7937
  %v7954 = vsub.f32 %v7920, %v7938
  %v7955 = vmul.f32 %v7939, 0.5
  %v7956 = vmul.f32 %v7940, 0.5
  %v7957 = vmul.f32 %v7941, 0.5
  %v7958 = vmul.f32 %v7942, 0.5
  %v7959 = vmul.f32 %v7943, 0.5
  %v7960 = vmul.f32 %v7944, 0.5
  %v7961 = vmul.f32 %v7945, 0.5
  %v7962 = vmul.f32 %v7946, 0.5
  %v7963 = vmul.f32 %v7947, 0.5
  %v7964 = vmul.f32 %v7948, 0.5
  %v7965 = vmul.f32 %v7949, 0.5
  %v7966 = vmul.f32 %v7950, 0.5
  %v7967 = vmul.f32 %v7951, 0.5
  %v7968 = vmul.f32 %v7952, 0.5
  %v7969 = vmul.f32 %v7953, 0.5
  %v7970 = vmul.f32 %v7954, 0.5
  %v7971 = vadd.f32 %v7923, %v7955
  %v7972 = vadd.f32 %v7924, %v7956
  %v7973 = vadd.f32 %v7925, %v7957
  %v7974 = vadd.f32 %v7926, %v7958
  %v7975 = vadd.f32 %v7927, %v7959
  %v7976 = vadd.f32 %v7928, %v7960
  %v7977 = vadd.f32 %v7929, %v7961
  %v7978 = vadd.f32 %v7930, %v7962
  %v7979 = vadd.f32 %v7931, %v7963
  %v7980 = vadd.f32 %v7932, %v7964
  %v7981 = vadd.f32 %v7933, %v7965
  %v7982 = vadd.f32 %v7934, %v7966
  %v7983 = vadd.f32 %v7935, %v7967
  %v7984 = vadd.f32 %v7936, %v7968
  %v7985 = vadd.f32 %v7937, %v7969
  %v7986 = vadd.f32 %v7938, %v7970
  %vm7987 = vcmp.ge.f32.partialorder %v7971, 1.0
  %vm7988 = vcmp.ge.f32.partialorder %v7972, 1.0
  %vm7989 = vcmp.ge.f32.partialorder %v7973, 1.0
  %vm7990 = vcmp.ge.f32.partialorder %v7974, 1.0
  %vm7991 = vcmp.ge.f32.partialorder %v7975, 1.0
  %vm7992 = vcmp.ge.f32.partialorder %v7976, 1.0
  %vm7993 = vcmp.ge.f32.partialorder %v7977, 1.0
  %vm7994 = vcmp.ge.f32.partialorder %v7978, 1.0
  %vm7995 = vcmp.ge.f32.partialorder %v7979, 1.0
  %vm7996 = vcmp.ge.f32.partialorder %v7980, 1.0
  %vm7997 = vcmp.ge.f32.partialorder %v7981, 1.0
  %vm7998 = vcmp.ge.f32.partialorder %v7982, 1.0
  %vm7999 = vcmp.ge.f32.partialorder %v7983, 1.0
  %vm8000 = vcmp.ge.f32.partialorder %v7984, 1.0
  %vm8001 = vcmp.ge.f32.partialorder %v7985, 1.0
  %vm8002 = vcmp.ge.f32.partialorder %v7986, 1.0
  %v8003 = vsel %vm7987, 1, 0
  %v8004 = vsel %vm7988, 1, 0
  %v8005 = vsel %vm7989, 1, 0
  %v8006 = vsel %vm7990, 1, 0
  %v8007 = vsel %vm7991, 1, 0
  %v8008 = vsel %vm7992, 1, 0
  %v8009 = vsel %vm7993, 1, 0
  %v8010 = vsel %vm7994, 1, 0
  %v8011 = vsel %vm7995, 1, 0
  %v8012 = vsel %vm7996, 1, 0
  %v8013 = vsel %vm7997, 1, 0
  %v8014 = vsel %vm7998, 1, 0
  %v8015 = vsel %vm7999, 1, 0
  %v8016 = vsel %vm8000, 1, 0
  %v8017 = vsel %vm8001, 1, 0
  %v8018 = vsel %vm8002, 1, 0
  %v8019 = vcvt.s32.f32 %v8003
  %v8020 = vcvt.s32.f32 %v8004
  %v8021 = vcvt.s32.f32 %v8005
  %v8022 = vcvt.s32.f32 %v8006
  %v8023 = vcvt.s32.f32 %v8007
  %v8024 = vcvt.s32.f32 %v8008
  %v8025 = vcvt.s32.f32 %v8009
  %v8026 = vcvt.s32.f32 %v8010
  %v8027 = vcvt.s32.f32 %v8011
  %v8028 = vcvt.s32.f32 %v8012
  %v8029 = vcvt.s32.f32 %v8013
  %v8030 = vcvt.s32.f32 %v8014
  %v8031 = vcvt.s32.f32 %v8015
  %v8032 = vcvt.s32.f32 %v8016
  %v8033 = vcvt.s32.f32 %v8017
  %v8034 = vcvt.s32.f32 %v8018
  %v8035 = vsub.f32 1.0, %v8019
  %v8036 = vsub.f32 1.0, %v8020
  %v8037 = vsub.f32 1.0, %v8021
  %v8038 = vsub.f32 1.0, %v8022
  %v8039 = vsub.f32 1.0, %v8023
  %v8040 = vsub.f32 1.0, %v8024
  %v8041 = vsub.f32 1.0, %v8025
  %v8042 = vsub.f32 1.0, %v8026
  %v8043 = vsub.f32 1.0, %v8027
  %v8044 = vsub.f32 1.0, %v8028
  %v8045 = vsub.f32 1.0, %v8029
  %v8046 = vsub.f32 1.0, %v8030
  %v8047 = vsub.f32 1.0, %v8031
  %v8048 = vsub.f32 1.0, %v8032
  %v8049 = vsub.f32 1.0, %v8033
  %v8050 = vsub.f32 1.0, %v8034
  %v8051 = vmul.f32 %v7971, %v8035
  %v8052 = vmul.f32 %v7972, %v8036
  %v8053 = vmul.f32 %v7973, %v8037
  %v8054 = vmul.f32 %v7974, %v8038
  %v8055 = vmul.f32 %v7975, %v8039
  %v8056 = vmul.f32 %v7976, %v8040
  %v8057 = vmul.f32 %v7977, %v8041
  %v8058 = vmul.f32 %v7978, %v8042
  %v8059 = vmul.f32 %v7979, %v8043
  %v8060 = vmul.f32 %v7980, %v8044
  %v8061 = vmul.f32 %v7981, %v8045
  %v8062 = vmul.f32 %v7982, %v8046
  %v8063 = vmul.f32 %v7983, %v8047
  %v8064 = vmul.f32 %v7984, %v8048
  %v8065 = vmul.f32 %v7985, %v8049
  %v8066 = vmul.f32 %v7986, %v8050
  %8067 = vst [vmem:[#allocation10] sm:$0xff] %v8051
  %8068 = vst [vmem:[#allocation10 + $0x8] sm:$0xff] %v8052
  %8069 = vst [vmem:[#allocation10 + $0x10] sm:$0xff] %v8053
  %8070 = vst [vmem:[#allocation10 + $0x18] sm:$0xff] %v8054
  %8071 = vst [vmem:[#allocation10 + $0x20] sm:$0xff] %v8055
  %8072 = vst [vmem:[#allocation10 + $0x28] sm:$0xff] %v8056
  %8073 = vst [vmem:[#allocation10 + $0x30] sm:$0xff] %v8057
  %8074 = vst [vmem:[#allocation10 + $0x38] sm:$0xff] %v8058
  %8075 = vst [vmem:[#allocation10 + $0x40] sm:$0xff] %v8059
  %8076 = vst [vmem:[#allocation10 + $0x48] sm:$0xff] %v8060
  %8077 = vst [vmem:[#allocation10 + $0x50] sm:$0xff] %v8061
  %8078 = vst [vmem:[#allocation10 + $0x58] sm:$0xff] %v8062
  %8079 = vst [vmem:[#allocation10 + $0x60] sm:$0xff] %v8063
  %8080 = vst [vmem:[#allocation10 + $0x68] sm:$0xff] %v8064
  %8081 = vst [vmem:[#allocation10 + $0x70] sm:$0xff] %v8065
  %8082 = vst [vmem:[#allocation10 + $0x78] sm:$0xff] %v8066
  %8083 = vmatprep.subr.mxu0 0.0
  %8084 = vmatpush1.msra.mxu0 %v8019
  %8085 = vmatprep.subr.mxu0 0.0
  %8086 = vmatpush1.msra.mxu0 %v8020
  %8087 = vmatprep.subr.mxu0 0.0
  %8088 = vmatpush1.msra.mxu0 %v8021
  %8089 = vmatprep.subr.mxu0 0.0
  %8090 = vmatpush1.msra.mxu0 %v8022
  %8091 = vmatprep.subr.mxu0 0.0
  %8092 = vmatpush1.msra.mxu0 %v8023
  %8093 = vmatprep.subr.mxu0 0.0
  %8094 = vmatpush1.msra.mxu0 %v8024
  %8095 = vmatprep.subr.mxu0 0.0
  %8096 = vmatpush1.msra.mxu0 %v8025
  %8097 = vmatprep.subr.mxu0 0.0
  %8098 = vmatpush1.msra.mxu0 %v8026
  %8099 = vmatprep.subr.mxu0 0.0
  %8100 = vmatpush1.msra.mxu0 %v8027
  %8101 = vmatprep.subr.mxu0 0.0
  %8102 = vmatpush1.msra.mxu0 %v8028
  %8103 = vmatprep.subr.mxu0 0.0
  %8104 = vmatpush1.msra.mxu0 %v8029
  %8105 = vmatprep.subr.mxu0 0.0
  %8106 = vmatpush1.msra.mxu0 %v8030
  %8107 = vmatprep.subr.mxu0 0.0
  %8108 = vmatpush1.msra.mxu0 %v8031
  %8109 = vmatprep.subr.mxu0 0.0
  %8110 = vmatpush1.msra.mxu0 %v8032
  %8111 = vmatprep.subr.mxu0 0.0
  %8112 = vmatpush1.msra.mxu0 %v8033
  %8113 = vmatprep.subr.mxu0 0.0
  %8114 = vmatpush1.msra.mxu0 %v8034
  %8115 = vmatprep.subr.mxu0 0.0
  %8116 = vmatpush1.msra.mxu0 0.0
  %8117 = vmatprep.subr.mxu0 0.0
  %8118 = vmatpush1.msra.mxu0 0.0
  %8119 = vmatprep.subr.mxu0 0.0
  %8120 = vmatpush1.msra.mxu0 0.0
  %8121 = vmatprep.subr.mxu0 0.0
  %8122 = vmatpush1.msra.mxu0 0.0
  %8123 = vmatprep.subr.mxu0 0.0
  %8124 = vmatpush1.msra.mxu0 0.0
  %8125 = vmatprep.subr.mxu0 0.0
  %8126 = vmatpush1.msra.mxu0 0.0
  %8127 = vmatprep.subr.mxu0 0.0
  %8128 = vmatpush1.msra.mxu0 0.0
  %8129 = vmatprep.subr.mxu0 0.0
  %8130 = vmatpush1.msra.mxu0 0.0
  %8131 = vmatprep.subr.mxu0 0.0
  %8132 = vmatpush1.msra.mxu0 0.0
  %8133 = vmatprep.subr.mxu0 0.0
  %8134 = vmatpush1.msra.mxu0 0.0
  %8135 = vmatprep.subr.mxu0 0.0
  %8136 = vmatpush1.msra.mxu0 0.0
  %8137 = vmatprep.subr.mxu0 0.0
  %8138 = vmatpush1.msra.mxu0 0.0
  %8139 = vmatprep.subr.mxu0 0.0
  %8140 = vmatpush1.msra.mxu0 0.0
  %8141 = vmatprep.subr.mxu0 0.0
  %8142 = vmatpush1.msra.mxu0 0.0
  %8143 = vmatprep.subr.mxu0 0.0
  %8144 = vmatpush1.msra.mxu0 0.0
  %8145 = vmatprep.subr.mxu0 0.0
  %8146 = vmatpush1.msra.mxu0 0.0
  %8147 = vmatprep.mubr.f32.mxu0 0.0
  %8148 = vmatmul.mubr.f32.gmra.mrb[0].mxu0 %v603
  %v8149 = vpop.f32.mrb[0].mxu0
  %v8150 = vadd.f32 %v774, %v8149
  %v8151 = vpop.f32.mrb[0].mxu0
  %8152 = vmatprep.mubr.f32.mxu0 0.0
  %8153 = vmatmul.mubr.f32.gmra.mrb[0].mxu0 %v604
  %v8154 = vpop.f32.mrb[0].mxu0
  %v8155 = vadd.f32 %v779, %v8154
  %v8156 = vpop.f32.mrb[0].mxu0
  %8157 = vmatprep.mubr.f32.mxu0 0.0
  %8158 = vmatmul.mubr.f32.gmra.mrb[0].mxu0 %v605
  %v8159 = vpop.f32.mrb[0].mxu0
  %v8160 = vadd.f32 %v784, %v8159
  %v8161 = vpop.f32.mrb[0].mxu0
  %8162 = vmatprep.mubr.f32.mxu0 0.0
  %8163 = vmatmul.mubr.f32.gmra.mrb[0].mxu0 %v606
  %v8164 = vpop.f32.mrb[0].mxu0
  %v8165 = vadd.f32 %v789, %v8164
  %v8166 = vpop.f32.mrb[0].mxu0
  %8167 = vdwg.mxu0
  %v8168 = vld [vmem:[#allocation11] sm:$0xff]
  %v8169 = vld [vmem:[#allocation11 + $0x8] sm:$0xff]
  %v8170 = vld [vmem:[#allocation11 + $0x10] sm:$0xff]
  %v8171 = vld [vmem:[#allocation11 + $0x18] sm:$0xff]
  %v8172 = vsub.f32 %v8150, %v8168
  %v8173 = vsub.f32 %v8155, %v8169
  %v8174 = vsub.f32 %v8160, %v8170
  %v8175 = vsub.f32 %v8165, %v8171
  %v8176 = vmul.f32 %v8172, 0.5
  %v8177 = vmul.f32 %v8173, 0.5
  %v8178 = vmul.f32 %v8174, 0.5
  %v8179 = vmul.f32 %v8175, 0.5
  %v8180 = vadd.f32 %v8168, %v8176
  %v8181 = vadd.f32 %v8169, %v8177
  %v8182 = vadd.f32 %v8170, %v8178
  %v8183 = vadd.f32 %v8171, %v8179
  %vm8184 = vcmp.ge.f32.partialorder %v8180, 1.0
  %vm8185 = vcmp.ge.f32.partialorder %v8181, 1.0
  %vm8186 = vcmp.ge.f32.partialorder %v8182, 1.0
  %vm8187 = vcmp.ge.f32.partialorder %v8183, 1.0
  %v8188 = vsel %vm8184, 1, 0
  %v8189 = vsel %vm8185, 1, 0
  %v8190 = vsel %vm8186, 1, 0
  %v8191 = vsel %vm8187, 1, 0
  %v8192 = vcvt.s32.f32 %v8188
  %v8193 = vcvt.s32.f32 %v8189
  %v8194 = vcvt.s32.f32 %v8190
  %v8195 = vcvt.s32.f32 %v8191
  %v8196 = vsub.f32 1.0, %v8192
  %v8197 = vsub.f32 1.0, %v8193
  %v8198 = vsub.f32 1.0, %v8194
  %v8199 = vsub.f32 1.0, %v8195
  %v8200 = vmul.f32 %v8180, %v8196
  %v8201 = vmul.f32 %v8181, %v8197
  %v8202 = vmul.f32 %v8182, %v8198
  %v8203 = vmul.f32 %v8183, %v8199
  %8204 = vst [vmem:[#allocation11] sm:$0xff] %v8200
  %8205 = vst [vmem:[#allocation11 + $0x8] sm:$0xff] %v8201
  %8206 = vst [vmem:[#allocation11 + $0x10] sm:$0xff] %v8202
  %8207 = vst [vmem:[#allocation11 + $0x18] sm:$0xff] %v8203
  %v8208 = vadd.f32 %v7774, %v8192
  %v8209 = vadd.f32 %v7775, %v8193
  %v8210 = vadd.f32 %v7776, %v8194
  %v8211 = vadd.f32 %v7777, %v8195
  %v8212 = vadd.f32 %v5720, %v8208
  %v8213 = vadd.f32 %v5721, %v8209
  %v8214 = vadd.f32 %v5722, %v8210
  %v8215 = vadd.f32 %v5723, %v8211
  %8216 = vmatprep.subr.mxu0 0.0
  %8217 = vmatpush1.msra.mxu0 %v254
  %8218 = vmatprep.subr.mxu0 0.0
  %8219 = vmatpush1.msra.mxu0 %v255
  %8220 = vmatprep.subr.mxu0 0.0
  %8221 = vmatpush1.msra.mxu0 %v256
  %8222 = vmatprep.subr.mxu0 0.0
  %8223 = vmatpush1.msra.mxu0 %v257
  %8224 = vmatprep.subr.mxu0 0.0
  %8225 = vmatpush1.msra.mxu0 0.0
  %8226 = vmatprep.subr.mxu0 0.0
  %8227 = vmatpush1.msra.mxu0 0.0
  %8228 = vmatprep.subr.mxu0 0.0
  %8229 = vmatpush1.msra.mxu0 0.0
  %8230 = vmatprep.subr.mxu0 0.0
  %8231 = vmatpush1.msra.mxu0 0.0
  %8232 = vmatprep.subr.mxu0 0.0
  %8233 = vmatpush1.msra.mxu0 0.0
  %8234 = vmatprep.subr.mxu0 0.0
  %8235 = vmatpush1.msra.mxu0 0.0
  %8236 = vmatprep.subr.mxu0 0.0
  %8237 = vmatpush1.msra.mxu0 0.0
  %8238 = vmatprep.subr.mxu0 0.0
  %8239 = vmatpush1.msra.mxu0 0.0
  %8240 = vmatprep.subr.mxu0 0.0
  %8241 = vmatpush1.msra.mxu0 0.0
  %8242 = vmatprep.subr.mxu0 0.0
  %8243 = vmatpush1.msra.mxu0 0.0
  %8244 = vmatprep.subr.mxu0 0.0
  %8245 = vmatpush1.msra.mxu0 0.0
  %8246 = vmatprep.subr.mxu0 0.0
  %8247 = vmatpush1.msra.mxu0 0.0
  %8248 = vmatprep.subr.mxu0 0.0
  %8249 = vmatpush1.msra.mxu0 0.0
  %8250 = vmatprep.subr.mxu0 0.0
  %8251 = vmatpush1.msra.mxu0 0.0
  %8252 = vmatprep.subr.mxu0 0.0
  %8253 = vmatpush1.msra.mxu0 0.0
  %8254 = vmatprep.subr.mxu0 0.0
  %8255 = vmatpush1.msra.mxu0 0.0
  %8256 = vmatprep.subr.mxu0 0.0
  %8257 = vmatpush1.msra.mxu0 0.0
  %8258 = vmatprep.subr.mxu0 0.0
  %8259 = vmatpush1.msra.mxu0 0.0
  %8260 = vmatprep.subr.mxu0 0.0
  %8261 = vmatpush1.msra.mxu0 0.0
  %8262 = vmatprep.subr.mxu0 0.0
  %8263 = vmatpush1.msra.mxu0 0.0
  %8264 = vmatprep.subr.mxu0 0.0
  %8265 = vmatpush1.msra.mxu0 0.0
  %8266 = vmatprep.subr.mxu0 0.0
  %8267 = vmatpush1.msra.mxu0 0.0
  %8268 = vmatprep.subr.mxu0 0.0
  %8269 = vmatpush1.msra.mxu0 0.0
  %8270 = vmatprep.subr.mxu0 0.0
  %8271 = vmatpush1.msra.mxu0 0.0
  %8272 = vmatprep.subr.mxu0 0.0
  %8273 = vmatpush1.msra.mxu0 0.0
  %8274 = vmatprep.subr.mxu0 0.0
  %8275 = vmatpush1.msra.mxu0 0.0
  %8276 = vmatprep.subr.mxu0 0.0
  %8277 = vmatpush1.msra.mxu0 0.0
  %8278 = vmatprep.subr.mxu0 0.0
  %8279 = vmatpush1.msra.mxu0 0.0
  %8280 = vmatprep.mubr.f32.mxu0 0.0
  %8281 = vmatmul.mubr.f32.gmra.mrb[0].mxu0 %v793
  %v8282 = vpop.f32.mrb[0].mxu0
  %v8283 = vadd.f32 %v362, %v8282
  %v8284 = vpop.f32.mrb[0].mxu0
  %8285 = vmatprep.mubr.f32.mxu0 0.0
  %8286 = vmatmul.mubr.f32.gmra.mrb[0].mxu0 %v796
  %v8287 = vpop.f32.mrb[0].mxu0
  %v8288 = vadd.f32 %v367, %v8287
  %v8289 = vpop.f32.mrb[0].mxu0
  %8290 = vmatprep.mubr.f32.mxu0 0.0
  %8291 = vmatmul.mubr.f32.gmra.mrb[0].mxu0 %v799
  %v8292 = vpop.f32.mrb[0].mxu0
  %v8293 = vadd.f32 %v372, %v8292
  %v8294 = vpop.f32.mrb[0].mxu0
  %8295 = vmatprep.mubr.f32.mxu0 0.0
  %8296 = vmatmul.mubr.f32.gmra.mrb[0].mxu0 %v802
  %v8297 = vpop.f32.mrb[0].mxu0
  %v8298 = vadd.f32 %v377, %v8297
  %v8299 = vpop.f32.mrb[0].mxu0
  %8300 = vmatprep.mubr.f32.mxu0 0.0
  %8301 = vmatmul.mubr.f32.gmra.mrb[0].mxu0 %v805
  %v8302 = vpop.f32.mrb[0].mxu0
  %v8303 = vadd.f32 %v382, %v8302
  %v8304 = vpop.f32.mrb[0].mxu0
  %8305 = vmatprep.mubr.f32.mxu0 0.0
  %8306 = vmatmul.mubr.f32.gmra.mrb[0].mxu0 %v808
  %v8307 = vpop.f32.mrb[0].mxu0
  %v8308 = vadd.f32 %v387, %v8307
  %v8309 = vpop.f32.mrb[0].mxu0
  %8310 = vmatprep.mubr.f32.mxu0 0.0
  %8311 = vmatmul.mubr.f32.gmra.mrb[0].mxu0 %v811
  %v8312 = vpop.f32.mrb[0].mxu0
  %v8313 = vadd.f32 %v392, %v8312
  %v8314 = vpop.f32.mrb[0].mxu0
  %8315 = vmatprep.mubr.f32.mxu0 0.0
  %8316 = vmatmul.mubr.f32.gmra.mrb[0].mxu0 %v814
  %v8317 = vpop.f32.mrb[0].mxu0
  %v8318 = vadd.f32 %v397, %v8317
  %v8319 = vpop.f32.mrb[0].mxu0
  %8320 = vmatprep.mubr.f32.mxu0 0.0
  %8321 = vmatmul.mubr.f32.gmra.mrb[0].mxu0 %v817
  %v8322 = vpop.f32.mrb[0].mxu0
  %v8323 = vadd.f32 %v402, %v8322
  %v8324 = vpop.f32.mrb[0].mxu0
  %8325 = vmatprep.mubr.f32.mxu0 0.0
  %8326 = vmatmul.mubr.f32.gmra.mrb[0].mxu0 %v820
  %v8327 = vpop.f32.mrb[0].mxu0
  %v8328 = vadd.f32 %v407, %v8327
  %v8329 = vpop.f32.mrb[0].mxu0
  %8330 = vmatprep.mubr.f32.mxu0 0.0
  %8331 = vmatmul.mubr.f32.gmra.mrb[0].mxu0 %v823
  %v8332 = vpop.f32.mrb[0].mxu0
  %v8333 = vadd.f32 %v412, %v8332
  %v8334 = vpop.f32.mrb[0].mxu0
  %8335 = vmatprep.mubr.f32.mxu0 0.0
  %8336 = vmatmul.mubr.f32.gmra.mrb[0].mxu0 %v826
  %v8337 = vpop.f32.mrb[0].mxu0
  %v8338 = vadd.f32 %v417, %v8337
  %v8339 = vpop.f32.mrb[0].mxu0
  %8340 = vdwg.mxu0
  %v8341 = vld [vmem:[#allocation2] sm:$0xff]
  %v8342 = vld [vmem:[#allocation2 + $0x8] sm:$0xff]
  %v8343 = vld [vmem:[#allocation2 + $0x10] sm:$0xff]
  %v8344 = vld [vmem:[#allocation2 + $0x18] sm:$0xff]
  %v8345 = vld [vmem:[#allocation2 + $0x20] sm:$0xff]
  %v8346 = vld [vmem:[#allocation2 + $0x28] sm:$0xff]
  %v8347 = vld [vmem:[#allocation2 + $0x30] sm:$0xff]
  %v8348 = vld [vmem:[#allocation2 + $0x38] sm:$0xff]
  %v8349 = vld [vmem:[#allocation2 + $0x40] sm:$0xff]
  %v8350 = vld [vmem:[#allocation2 + $0x48] sm:$0xff]
  %v8351 = vld [vmem:[#allocation2 + $0x50] sm:$0xff]
  %v8352 = vld [vmem:[#allocation2 + $0x58] sm:$0xff]
  %v8353 = vsub.f32 %v8283, %v8341
  %v8354 = vsub.f32 %v8288, %v8342
  %v8355 = vsub.f32 %v8293, %v8343
  %v8356 = vsub.f32 %v8298, %v8344
  %v8357 = vsub.f32 %v8303, %v8345
  %v8358 = vsub.f32 %v8308, %v8346
  %v8359 = vsub.f32 %v8313, %v8347
  %v8360 = vsub.f32 %v8318, %v8348
  %v8361 = vsub.f32 %v8323, %v8349
  %v8362 = vsub.f32 %v8328, %v8350
  %v8363 = vsub.f32 %v8333, %v8351
  %v8364 = vsub.f32 %v8338, %v8352
  %v8365 = vmul.f32 %v8353, 0.5
  %v8366 = vmul.f32 %v8354, 0.5
  %v8367 = vmul.f32 %v8355, 0.5
  %v8368 = vmul.f32 %v8356, 0.5
  %v8369 = vmul.f32 %v8357, 0.5
  %v8370 = vmul.f32 %v8358, 0.5
  %v8371 = vmul.f32 %v8359, 0.5
  %v8372 = vmul.f32 %v8360, 0.5
  %v8373 = vmul.f32 %v8361, 0.5
  %v8374 = vmul.f32 %v8362, 0.5
  %v8375 = vmul.f32 %v8363, 0.5
  %v8376 = vmul.f32 %v8364, 0.5
  %v8377 = vadd.f32 %v8341, %v8365
  %v8378 = vadd.f32 %v8342, %v8366
  %v8379 = vadd.f32 %v8343, %v8367
  %v8380 = vadd.f32 %v8344, %v8368
  %v8381 = vadd.f32 %v8345, %v8369
  %v8382 = vadd.f32 %v8346, %v8370
  %v8383 = vadd.f32 %v8347, %v8371
  %v8384 = vadd.f32 %v8348, %v8372
  %v8385 = vadd.f32 %v8349, %v8373
  %v8386 = vadd.f32 %v8350, %v8374
  %v8387 = vadd.f32 %v8351, %v8375
  %v8388 = vadd.f32 %v8352, %v8376
  %vm8389 = vcmp.ge.f32.partialorder %v8377, 1.0
  %vm8390 = vcmp.ge.f32.partialorder %v8378, 1.0
  %vm8391 = vcmp.ge.f32.partialorder %v8379, 1.0
  %vm8392 = vcmp.ge.f32.partialorder %v8380, 1.0
  %vm8393 = vcmp.ge.f32.partialorder %v8381, 1.0
  %vm8394 = vcmp.ge.f32.partialorder %v8382, 1.0
  %vm8395 = vcmp.ge.f32.partialorder %v8383, 1.0
  %vm8396 = vcmp.ge.f32.partialorder %v8384, 1.0
  %vm8397 = vcmp.ge.f32.partialorder %v8385, 1.0
  %vm8398 = vcmp.ge.f32.partialorder %v8386, 1.0
  %vm8399 = vcmp.ge.f32.partialorder %v8387, 1.0
  %vm8400 = vcmp.ge.f32.partialorder %v8388, 1.0
  %v8401 = vsel %vm8389, 1, 0
  %v8402 = vsel %vm8390, 1, 0
  %v8403 = vsel %vm8391, 1, 0
  %v8404 = vsel %vm8392, 1, 0
  %v8405 = vsel %vm8393, 1, 0
  %v8406 = vsel %vm8394, 1, 0
  %v8407 = vsel %vm8395, 1, 0
  %v8408 = vsel %vm8396, 1, 0
  %v8409 = vsel %vm8397, 1, 0
  %v8410 = vsel %vm8398, 1, 0
  %v8411 = vsel %vm8399, 1, 0
  %v8412 = vsel %vm8400, 1, 0
  %v8413 = vcvt.s32.f32 %v8401
  %v8414 = vcvt.s32.f32 %v8402
  %v8415 = vcvt.s32.f32 %v8403
  %v8416 = vcvt.s32.f32 %v8404
  %v8417 = vcvt.s32.f32 %v8405
  %v8418 = vcvt.s32.f32 %v8406
  %v8419 = vcvt.s32.f32 %v8407
  %v8420 = vcvt.s32.f32 %v8408
  %v8421 = vcvt.s32.f32 %v8409
  %v8422 = vcvt.s32.f32 %v8410
  %v8423 = vcvt.s32.f32 %v8411
  %v8424 = vcvt.s32.f32 %v8412
  %v8425 = vsub.f32 1.0, %v8413
  %v8426 = vsub.f32 1.0, %v8414
  %v8427 = vsub.f32 1.0, %v8415
  %v8428 = vsub.f32 1.0, %v8416
  %v8429 = vsub.f32 1.0, %v8417
  %v8430 = vsub.f32 1.0, %v8418
  %v8431 = vsub.f32 1.0, %v8419
  %v8432 = vsub.f32 1.0, %v8420
  %v8433 = vsub.f32 1.0, %v8421
  %v8434 = vsub.f32 1.0, %v8422
  %v8435 = vsub.f32 1.0, %v8423
  %v8436 = vsub.f32 1.0, %v8424
  %v8437 = vmul.f32 %v8377, %v8425
  %v8438 = vmul.f32 %v8378, %v8426
  %v8439 = vmul.f32 %v8379, %v8427
  %v8440 = vmul.f32 %v8380, %v8428
  %v8441 = vmul.f32 %v8381, %v8429
  %v8442 = vmul.f32 %v8382, %v8430
  %v8443 = vmul.f32 %v8383, %v8431
  %v8444 = vmul.f32 %v8384, %v8432
  %v8445 = vmul.f32 %v8385, %v8433
  %v8446 = vmul.f32 %v8386, %v8434
  %v8447 = vmul.f32 %v8387, %v8435
  %v8448 = vmul.f32 %v8388, %v8436
  %8449 = vst [vmem:[#allocation2] sm:$0xff] %v8437
  %8450 = vst [vmem:[#allocation2 + $0x8] sm:$0xff] %v8438
  %8451 = vst [vmem:[#allocation2 + $0x10] sm:$0xff] %v8439
  %8452 = vst [vmem:[#allocation2 + $0x18] sm:$0xff] %v8440
  %8453 = vst [vmem:[#allocation2 + $0x20] sm:$0xff] %v8441
  %8454 = vst [vmem:[#allocation2 + $0x28] sm:$0xff] %v8442
  %8455 = vst [vmem:[#allocation2 + $0x30] sm:$0xff] %v8443
  %8456 = vst [vmem:[#allocation2 + $0x38] sm:$0xff] %v8444
  %8457 = vst [vmem:[#allocation2 + $0x40] sm:$0xff] %v8445
  %8458 = vst [vmem:[#allocation2 + $0x48] sm:$0xff] %v8446
  %8459 = vst [vmem:[#allocation2 + $0x50] sm:$0xff] %v8447
  %8460 = vst [vmem:[#allocation2 + $0x58] sm:$0xff] %v8448
  %v8461 = vmul.f32 %v8421, %v278
  %v8462 = vmul.f32 %v8422, %v279
  %v8463 = vmul.f32 %v8423, %v280
  %v8464 = vmul.f32 %v8424, %v281
  %8465 = vmatprep.subr.mxu0 0.0
  %8466 = vmatpush1.xpose.msra.mxu0 %v8417
  %8467 = vmatprep.subr.mxu0 0.0
  %8468 = vmatpush1.xpose.msra.mxu0 %v8418
  %8469 = vmatprep.subr.mxu0 0.0
  %8470 = vmatpush1.xpose.msra.mxu0 %v8419
  %8471 = vmatprep.subr.mxu0 0.0
  %8472 = vmatpush1.xpose.msra.mxu0 %v8420
  %8473 = vmatprep.subr.mxu0 0.0
  %8474 = vmatpush1.xpose.msra.mxu0 0.0
  %8475 = vmatprep.subr.mxu0 0.0
  %8476 = vmatpush1.xpose.msra.mxu0 0.0
  %8477 = vmatprep.subr.mxu0 0.0
  %8478 = vmatpush1.xpose.msra.mxu0 0.0
  %8479 = vmatprep.subr.mxu0 0.0
  %8480 = vmatpush1.xpose.msra.mxu0 0.0
  %8481 = vmatprep.subr.mxu0 0.0
  %8482 = vmatpush1.xpose.msra.mxu0 0.0
  %8483 = vmatprep.subr.mxu0 0.0
  %8484 = vmatpush1.xpose.msra.mxu0 0.0
  %8485 = vmatprep.subr.mxu0 0.0
  %8486 = vmatpush1.xpose.msra.mxu0 0.0
  %8487 = vmatprep.subr.mxu0 0.0
  %8488 = vmatpush1.xpose.msra.mxu0 0.0
  %8489 = vmatprep.subr.mxu0 0.0
  %8490 = vmatpush1.xpose.msra.mxu0 0.0
  %8491 = vmatprep.subr.mxu0 0.0
  %8492 = vmatpush1.xpose.msra.mxu0 0.0
  %8493 = vmatprep.subr.mxu0 0.0
  %8494 = vmatpush1.xpose.msra.mxu0 0.0
  %8495 = vmatprep.subr.mxu0 0.0
  %8496 = vmatpush1.xpose.msra.mxu0 0.0
  %8497 = vmatprep.subr.mxu0 0.0
  %8498 = vmatpush1.xpose.msra.mxu0 0.0
  %8499 = vmatprep.subr.mxu0 0.0
  %8500 = vmatpush1.xpose.msra.mxu0 0.0
  %8501 = vmatprep.subr.mxu0 0.0
  %8502 = vmatpush1.xpose.msra.mxu0 0.0
  %8503 = vmatprep.subr.mxu0 0.0
  %8504 = vmatpush1.xpose.msra.mxu0 0.0
  %8505 = vmatprep.subr.mxu0 0.0
  %8506 = vmatpush1.xpose.msra.mxu0 0.0
  %8507 = vmatprep.subr.mxu0 0.0
  %8508 = vmatpush1.xpose.msra.mxu0 0.0
  %8509 = vmatprep.subr.mxu0 0.0
  %8510 = vmatpush1.xpose.msra.mxu0 0.0
  %8511 = vmatprep.subr.mxu0 0.0
  %8512 = vmatpush1.xpose.msra.mxu0 0.0
  %8513 = vmatprep.subr.mxu0 0.0
  %8514 = vmatpush1.xpose.msra.mxu0 0.0
  %8515 = vmatprep.subr.mxu0 0.0
  %8516 = vmatpush1.xpose.msra.mxu0 0.0
  %8517 = vmatprep.subr.mxu0 0.0
  %8518 = vmatpush1.xpose.msra.mxu0 0.0
  %8519 = vmatprep.subr.mxu0 0.0
  %8520 = vmatpush1.xpose.msra.mxu0 0.0
  %8521 = vmatprep.subr.mxu0 0.0
  %8522 = vmatpush1.xpose.msra.mxu0 0.0
  %8523 = vmatprep.subr.mxu0 0.0
  %8524 = vmatpush1.xpose.msra.mxu0 0.0
  %8525 = vmatprep.subr.mxu0 0.0
  %8526 = vmatpush1.xpose.msra.mxu0 0.0
  %8527 = vmatprep.subr.mxu0 0.0
  %8528 = vmatpush1.xpose.msra.mxu0 0.0
  %8529 = vmatprep.mubr.f32.mxu0 0.0
  %8530 = vmatmul.mubr.f32.gmra.mrb[0].mxu0 %v8461
  %v8531 = vpop.f32.mrb[0].mxu0
  %v8532 = vadd.f32 0.0, %v8531
  %v8533 = vpop.f32.mrb[0].mxu0
  %8534 = vmatprep.mubr.f32.mxu0 0.0
  %8535 = vmatmul.mubr.f32.gmra.mrb[0].mxu0 %v8462
  %v8536 = vpop.f32.mrb[0].mxu0
  %v8537 = vadd.f32 0.0, %v8536
  %v8538 = vpop.f32.mrb[0].mxu0
  %8539 = vmatprep.mubr.f32.mxu0 0.0
  %8540 = vmatmul.mubr.f32.gmra.mrb[0].mxu0 %v8463
  %v8541 = vpop.f32.mrb[0].mxu0
  %v8542 = vadd.f32 0.0, %v8541
  %v8543 = vpop.f32.mrb[0].mxu0
  %8544 = vmatprep.mubr.f32.mxu0 0.0
  %8545 = vmatmul.mubr.f32.gmra.mrb[0].mxu0 %v8464
  %v8546 = vpop.f32.mrb[0].mxu0
  %v8547 = vadd.f32 0.0, %v8546
  %v8548 = vpop.f32.mrb[0].mxu0
  %8549 = vdwg.mxu0
  %v8550 = vmul.f32 %v8532, %v274
  %v8551 = vmul.f32 %v8537, %v275
  %v8552 = vmul.f32 %v8542, %v276
  %v8553 = vmul.f32 %v8547, %v277
  %v8555 = vsel %vm791, %v8550, 0
  %v8558 = vsel %vm791, %v8551, 0
  %v8561 = vsel %vm791, %v8552, 0
  %v8564 = vsel %vm791, %v8553, 0
  %8566 = vmatprep.subr.mxu0 0.0
  %8567 = vmatpush1.msra.mxu0 %v8413
  %8568 = vmatprep.subr.mxu0 0.0
  %8569 = vmatpush1.msra.mxu0 %v8414
  %8570 = vmatprep.subr.mxu0 0.0
  %8571 = vmatpush1.msra.mxu0 %v8415
  %8572 = vmatprep.subr.mxu0 0.0
  %8573 = vmatpush1.msra.mxu0 %v8416
  %8574 = vmatprep.subr.mxu0 0.0
  %8575 = vmatpush1.msra.mxu0 0.0
  %8576 = vmatprep.subr.mxu0 0.0
  %8577 = vmatpush1.msra.mxu0 0.0
  %8578 = vmatprep.subr.mxu0 0.0
  %8579 = vmatpush1.msra.mxu0 0.0
  %8580 = vmatprep.subr.mxu0 0.0
  %8581 = vmatpush1.msra.mxu0 0.0
  %8582 = vmatprep.subr.mxu0 0.0
  %8583 = vmatpush1.msra.mxu0 0.0
  %8584 = vmatprep.subr.mxu0 0.0
  %8585 = vmatpush1.msra.mxu0 0.0
  %8586 = vmatprep.subr.mxu0 0.0
  %8587 = vmatpush1.msra.mxu0 0.0
  %8588 = vmatprep.subr.mxu0 0.0
  %8589 = vmatpush1.msra.mxu0 0.0
  %8590 = vmatprep.subr.mxu0 0.0
  %8591 = vmatpush1.msra.mxu0 0.0
  %8592 = vmatprep.subr.mxu0 0.0
  %8593 = vmatpush1.msra.mxu0 0.0
  %8594 = vmatprep.subr.mxu0 0.0
  %8595 = vmatpush1.msra.mxu0 0.0
  %8596 = vmatprep.subr.mxu0 0.0
  %8597 = vmatpush1.msra.mxu0 0.0
  %8598 = vmatprep.subr.mxu0 0.0
  %8599 = vmatpush1.msra.mxu0 0.0
  %8600 = vmatprep.subr.mxu0 0.0
  %8601 = vmatpush1.msra.mxu0 0.0
  %8602 = vmatprep.subr.mxu0 0.0
  %8603 = vmatpush1.msra.mxu0 0.0
  %8604 = vmatprep.subr.mxu0 0.0
  %8605 = vmatpush1.msra.mxu0 0.0
  %8606 = vmatprep.subr.mxu0 0.0
  %8607 = vmatpush1.msra.mxu0 0.0
  %8608 = vmatprep.subr.mxu0 0.0
  %8609 = vmatpush1.msra.mxu0 0.0
  %8610 = vmatprep.subr.mxu0 0.0
  %8611 = vmatpush1.msra.mxu0 0.0
  %8612 = vmatprep.subr.mxu0 0.0
  %8613 = vmatpush1.msra.mxu0 0.0
  %8614 = vmatprep.subr.mxu0 0.0
  %8615 = vmatpush1.msra.mxu0 0.0
  %8616 = vmatprep.subr.mxu0 0.0
  %8617 = vmatpush1.msra.mxu0 0.0
  %8618 = vmatprep.subr.mxu0 0.0
  %8619 = vmatpush1.msra.mxu0 0.0
  %8620 = vmatprep.subr.mxu0 0.0
  %8621 = vmatpush1.msra.mxu0 0.0
  %8622 = vmatprep.subr.mxu0 0.0
  %8623 = vmatpush1.msra.mxu0 0.0
  %8624 = vmatprep.subr.mxu0 0.0
  %8625 = vmatpush1.msra.mxu0 0.0
  %8626 = vmatprep.subr.mxu0 0.0
  %8627 = vmatpush1.msra.mxu0 0.0
  %8628 = vmatprep.subr.mxu0 0.0
  %8629 = vmatpush1.msra.mxu0 0.0
  %8630 = vmatprep.mubr.f32.mxu0 0.0
  %8631 = vmatmul.mubr.f32.gmra.mrb[0].mxu0 %v8555
  %v8632 = vpop.f32.mrb[0].mxu0
  %v8633 = vadd.f32 0.0, %v8632
  %v8634 = vpop.f32.mrb[0].mxu0
  %8635 = vmatprep.mubr.f32.mxu0 0.0
  %8636 = vmatmul.mubr.f32.gmra.mrb[0].mxu0 %v8558
  %v8637 = vpop.f32.mrb[0].mxu0
  %v8638 = vadd.f32 0.0, %v8637
  %v8639 = vpop.f32.mrb[0].mxu0
  %8640 = vmatprep.mubr.f32.mxu0 0.0
  %8641 = vmatmul.mubr.f32.gmra.mrb[0].mxu0 %v8561
  %v8642 = vpop.f32.mrb[0].mxu0
  %v8643 = vadd.f32 0.0, %v8642
  %v8644 = vpop.f32.mrb[0].mxu0
  %8645 = vmatprep.mubr.f32.mxu0 0.0
  %8646 = vmatmul.mubr.f32.gmra.mrb[0].mxu0 %v8564
  %v8647 = vpop.f32.mrb[0].mxu0
  %v8648 = vadd.f32 0.0, %v8647
  %v8649 = vpop.f32.mrb[0].mxu0
  %8650 = vdwg.mxu0
  %v8651 = vmul.f32 %v8633, %v278
  %v8652 = vmul.f32 %v8638, %v279
  %v8653 = vmul.f32 %v8643, %v280
  %v8654 = vmul.f32 %v8648, %v281
  %v8655 = vmul.f32 %v8421, %v283
  %v8656 = vmul.f32 %v8422, %v284
  %v8657 = vmul.f32 %v8423, %v285
  %v8658 = vmul.f32 %v8424, %v286
  %8659 = vmatprep.subr.mxu0 0.0
  %8660 = vmatpush1.xpose.msra.mxu0 %v8417
  %8661 = vmatprep.subr.mxu0 0.0
  %8662 = vmatpush1.xpose.msra.mxu0 %v8418
  %8663 = vmatprep.subr.mxu0 0.0
  %8664 = vmatpush1.xpose.msra.mxu0 %v8419
  %8665 = vmatprep.subr.mxu0 0.0
  %8666 = vmatpush1.xpose.msra.mxu0 %v8420
  %8667 = vmatprep.subr.mxu0 0.0
  %8668 = vmatpush1.xpose.msra.mxu0 0.0
  %8669 = vmatprep.subr.mxu0 0.0
  %8670 = vmatpush1.xpose.msra.mxu0 0.0
  %8671 = vmatprep.subr.mxu0 0.0
  %8672 = vmatpush1.xpose.msra.mxu0 0.0
  %8673 = vmatprep.subr.mxu0 0.0
  %8674 = vmatpush1.xpose.msra.mxu0 0.0
  %8675 = vmatprep.subr.mxu0 0.0
  %8676 = vmatpush1.xpose.msra.mxu0 0.0
  %8677 = vmatprep.subr.mxu0 0.0
  %8678 = vmatpush1.xpose.msra.mxu0 0.0
  %8679 = vmatprep.subr.mxu0 0.0
  %8680 = vmatpush1.xpose.msra.mxu0 0.0
  %8681 = vmatprep.subr.mxu0 0.0
  %8682 = vmatpush1.xpose.msra.mxu0 0.0
  %8683 = vmatprep.subr.mxu0 0.0
  %8684 = vmatpush1.xpose.msra.mxu0 0.0
  %8685 = vmatprep.subr.mxu0 0.0
  %8686 = vmatpush1.xpose.msra.mxu0 0.0
  %8687 = vmatprep.subr.mxu0 0.0
  %8688 = vmatpush1.xpose.msra.mxu0 0.0
  %8689 = vmatprep.subr.mxu0 0.0
  %8690 = vmatpush1.xpose.msra.mxu0 0.0
  %8691 = vmatprep.subr.mxu0 0.0
  %8692 = vmatpush1.xpose.msra.mxu0 0.0
  %8693 = vmatprep.subr.mxu0 0.0
  %8694 = vmatpush1.xpose.msra.mxu0 0.0
  %8695 = vmatprep.subr.mxu0 0.0
  %8696 = vmatpush1.xpose.msra.mxu0 0.0
  %8697 = vmatprep.subr.mxu0 0.0
  %8698 = vmatpush1.xpose.msra.mxu0 0.0
  %8699 = vmatprep.subr.mxu0 0.0
  %8700 = vmatpush1.xpose.msra.mxu0 0.0
  %8701 = vmatprep.subr.mxu0 0.0
  %8702 = vmatpush1.xpose.msra.mxu0 0.0
  %8703 = vmatprep.subr.mxu0 0.0
  %8704 = vmatpush1.xpose.msra.mxu0 0.0
  %8705 = vmatprep.subr.mxu0 0.0
  %8706 = vmatpush1.xpose.msra.mxu0 0.0
  %8707 = vmatprep.subr.mxu0 0.0
  %8708 = vmatpush1.xpose.msra.mxu0 0.0
  %8709 = vmatprep.subr.mxu0 0.0
  %8710 = vmatpush1.xpose.msra.mxu0 0.0
  %8711 = vmatprep.subr.mxu0 0.0
  %8712 = vmatpush1.xpose.msra.mxu0 0.0
  %8713 = vmatprep.subr.mxu0 0.0
  %8714 = vmatpush1.xpose.msra.mxu0 0.0
  %8715 = vmatprep.subr.mxu0 0.0
  %8716 = vmatpush1.xpose.msra.mxu0 0.0
  %8717 = vmatprep.subr.mxu0 0.0
  %8718 = vmatpush1.xpose.msra.mxu0 0.0
  %8719 = vmatprep.subr.mxu0 0.0
  %8720 = vmatpush1.xpose.msra.mxu0 0.0
  %8721 = vmatprep.subr.mxu0 0.0
  %8722 = vmatpush1.xpose.msra.mxu0 0.0
  %8723 = vmatprep.mubr.f32.mxu0 0.0
  %8724 = vmatmul.mubr.f32.gmra.mrb[0].mxu0 %v8655
  %v8725 = vpop.f32.mrb[0].mxu0
  %v8726 = vadd.f32 0.0, %v8725
  %v8727 = vpop.f32.mrb[0].mxu0
  %8728 = vmatprep.mubr.f32.mxu0 0.0
  %8729 = vmatmul.mubr.f32.gmra.mrb[0].mxu0 %v8656
  %v8730 = vpop.f32.mrb[0].mxu0
  %v8731 = vadd.f32 0.0, %v8730
  %v8732 = vpop.f32.mrb[0].mxu0
  %8733 = vmatprep.mubr.f32.mxu0 0.0
  %8734 = vmatmul.mubr.f32.gmra.mrb[0].mxu0 %v8657
  %v8735 = vpop.f32.mrb[0].mxu0
  %v8736 = vadd.f32 0.0, %v8735
  %v8737 = vpop.f32.mrb[0].mxu0
  %8738 = vmatprep.mubr.f32.mxu0 0.0
  %8739 = vmatmul.mubr.f32.gmra.mrb[0].mxu0 %v8658
  %v8740 = vpop.f32.mrb[0].mxu0
  %v8741 = vadd.f32 0.0, %v8740
  %v8742 = vpop.f32.mrb[0].mxu0
  %8743 = vdwg.mxu0
  %v8744 = vmul.f32 %v8726, %v274
  %v8745 = vmul.f32 %v8731, %v275
  %v8746 = vmul.f32 %v8736, %v276
  %v8747 = vmul.f32 %v8741, %v277
  %v8749 = vsel %vm791, %v8744, 0
  %v8752 = vsel %vm791, %v8745, 0
  %v8755 = vsel %vm791, %v8746, 0
  %v8758 = vsel %vm791, %v8747, 0
  %8760 = vmatprep.subr.mxu0 0.0
  %8761 = vmatpush1.msra.mxu0 %v8413
  %8762 = vmatprep.subr.mxu0 0.0
  %8763 = vmatpush1.msra.mxu0 %v8414
  %8764 = vmatprep.subr.mxu0 0.0
  %8765 = vmatpush1.msra.mxu0 %v8415
  %8766 = vmatprep.subr.mxu0 0.0
  %8767 = vmatpush1.msra.mxu0 %v8416
  %8768 = vmatprep.subr.mxu0 0.0
  %8769 = vmatpush1.msra.mxu0 0.0
  %8770 = vmatprep.subr.mxu0 0.0
  %8771 = vmatpush1.msra.mxu0 0.0
  %8772 = vmatprep.subr.mxu0 0.0
  %8773 = vmatpush1.msra.mxu0 0.0
  %8774 = vmatprep.subr.mxu0 0.0
  %8775 = vmatpush1.msra.mxu0 0.0
  %8776 = vmatprep.subr.mxu0 0.0
  %8777 = vmatpush1.msra.mxu0 0.0
  %8778 = vmatprep.subr.mxu0 0.0
  %8779 = vmatpush1.msra.mxu0 0.0
  %8780 = vmatprep.subr.mxu0 0.0
  %8781 = vmatpush1.msra.mxu0 0.0
  %8782 = vmatprep.subr.mxu0 0.0
  %8783 = vmatpush1.msra.mxu0 0.0
  %8784 = vmatprep.subr.mxu0 0.0
  %8785 = vmatpush1.msra.mxu0 0.0
  %8786 = vmatprep.subr.mxu0 0.0
  %8787 = vmatpush1.msra.mxu0 0.0
  %8788 = vmatprep.subr.mxu0 0.0
  %8789 = vmatpush1.msra.mxu0 0.0
  %8790 = vmatprep.subr.mxu0 0.0
  %8791 = vmatpush1.msra.mxu0 0.0
  %8792 = vmatprep.subr.mxu0 0.0
  %8793 = vmatpush1.msra.mxu0 0.0
  %8794 = vmatprep.subr.mxu0 0.0
  %8795 = vmatpush1.msra.mxu0 0.0
  %8796 = vmatprep.subr.mxu0 0.0
  %8797 = vmatpush1.msra.mxu0 0.0
  %8798 = vmatprep.subr.mxu0 0.0
  %8799 = vmatpush1.msra.mxu0 0.0
  %8800 = vmatprep.subr.mxu0 0.0
  %8801 = vmatpush1.msra.mxu0 0.0
  %8802 = vmatprep.subr.mxu0 0.0
  %8803 = vmatpush1.msra.mxu0 0.0
  %8804 = vmatprep.subr.mxu0 0.0
  %8805 = vmatpush1.msra.mxu0 0.0
  %8806 = vmatprep.subr.mxu0 0.0
  %8807 = vmatpush1.msra.mxu0 0.0
  %8808 = vmatprep.subr.mxu0 0.0
  %8809 = vmatpush1.msra.mxu0 0.0
  %8810 = vmatprep.subr.mxu0 0.0
  %8811 = vmatpush1.msra.mxu0 0.0
  %8812 = vmatprep.subr.mxu0 0.0
  %8813 = vmatpush1.msra.mxu0 0.0
  %8814 = vmatprep.subr.mxu0 0.0
  %8815 = vmatpush1.msra.mxu0 0.0
  %8816 = vmatprep.subr.mxu0 0.0
  %8817 = vmatpush1.msra.mxu0 0.0
  %8818 = vmatprep.subr.mxu0 0.0
  %8819 = vmatpush1.msra.mxu0 0.0
  %8820 = vmatprep.subr.mxu0 0.0
  %8821 = vmatpush1.msra.mxu0 0.0
  %8822 = vmatprep.subr.mxu0 0.0
  %8823 = vmatpush1.msra.mxu0 0.0
  %8824 = vmatprep.mubr.f32.mxu0 0.0
  %8825 = vmatmul.mubr.f32.gmra.mrb[0].mxu0 %v8749
  %v8826 = vpop.f32.mrb[0].mxu0
  %v8827 = vadd.f32 0.0, %v8826
  %v8828 = vpop.f32.mrb[0].mxu0
  %8829 = vmatprep.mubr.f32.mxu0 0.0
  %8830 = vmatmul.mubr.f32.gmra.mrb[0].mxu0 %v8752
  %v8831 = vpop.f32.mrb[0].mxu0
  %v8832 = vadd.f32 0.0, %v8831
  %v8833 = vpop.f32.mrb[0].mxu0
  %8834 = vmatprep.mubr.f32.mxu0 0.0
  %8835 = vmatmul.mubr.f32.gmra.mrb[0].mxu0 %v8755
  %v8836 = vpop.f32.mrb[0].mxu0
  %v8837 = vadd.f32 0.0, %v8836
  %v8838 = vpop.f32.mrb[0].mxu0
  %8839 = vmatprep.mubr.f32.mxu0 0.0
  %8840 = vmatmul.mubr.f32.gmra.mrb[0].mxu0 %v8758
  %v8841 = vpop.f32.mrb[0].mxu0
  %v8842 = vadd.f32 0.0, %v8841
  %v8843 = vpop.f32.mrb[0].mxu0
  %8844 = vdwg.mxu0
  %v8845 = vmul.f32 %v8827, %v283
  %v8846 = vmul.f32 %v8832, %v284
  %v8847 = vmul.f32 %v8837, %v285
  %v8848 = vmul.f32 %v8842, %v286
  %v8849 = vadd.f32 %v8651, %v8845
  %v8850 = vadd.f32 %v8652, %v8846
  %v8851 = vadd.f32 %v8653, %v8847
  %v8852 = vadd.f32 %v8654, %v8848
  %v8853 = vmul.f32 %v8849, 0.125
  %v8854 = vmul.f32 %v8850, 0.125
  %v8855 = vmul.f32 %v8851, 0.125
  %v8856 = vmul.f32 %v8852, 0.125
  %v8857 = vld [vmem:[#allocation3] sm:$0xff]
  %v8858 = vld [vmem:[#allocation3 + $0x8] sm:$0xff]
  %v8859 = vld [vmem:[#allocation3 + $0x10] sm:$0xff]
  %v8860 = vld [vmem:[#allocation3 + $0x18] sm:$0xff]
  %v8861 = vsub.f32 %v8853, %v8857
  %v8862 = vsub.f32 %v8854, %v8858
  %v8863 = vsub.f32 %v8855, %v8859
  %v8864 = vsub.f32 %v8856, %v8860
  %v8865 = vmul.f32 %v8861, 0.5
  %v8866 = vmul.f32 %v8862, 0.5
  %v8867 = vmul.f32 %v8863, 0.5
  %v8868 = vmul.f32 %v8864, 0.5
  %v8869 = vadd.f32 %v8857, %v8865
  %v8870 = vadd.f32 %v8858, %v8866
  %v8871 = vadd.f32 %v8859, %v8867
  %v8872 = vadd.f32 %v8860, %v8868
  %vm8873 = vcmp.ge.f32.partialorder %v8869, 0.5
  %vm8874 = vcmp.ge.f32.partialorder %v8870, 0.5
  %vm8875 = vcmp.ge.f32.partialorder %v8871, 0.5
  %vm8876 = vcmp.ge.f32.partialorder %v8872, 0.5
  %v8877 = vsel %vm8873, 1, 0
  %v8878 = vsel %vm8874, 1, 0
  %v8879 = vsel %vm8875, 1, 0
  %v8880 = vsel %vm8876, 1, 0
  %v8881 = vcvt.s32.f32 %v8877
  %v8882 = vcvt.s32.f32 %v8878
  %v8883 = vcvt.s32.f32 %v8879
  %v8884 = vcvt.s32.f32 %v8880
  %v8885 = vsub.f32 1.0, %v8881
  %v8886 = vsub.f32 1.0, %v8882
  %v8887 = vsub.f32 1.0, %v8883
  %v8888 = vsub.f32 1.0, %v8884
  %v8889 = vmul.f32 %v8869, %v8885
  %v8890 = vmul.f32 %v8870, %v8886
  %v8891 = vmul.f32 %v8871, %v8887
  %v8892 = vmul.f32 %v8872, %v8888
  %8893 = vst [vmem:[#allocation3] sm:$0xff] %v8889
  %8894 = vst [vmem:[#allocation3 + $0x8] sm:$0xff] %v8890
  %8895 = vst [vmem:[#allocation3 + $0x10] sm:$0xff] %v8891
  %8896 = vst [vmem:[#allocation3 + $0x18] sm:$0xff] %v8892
  %8897 = vmatprep.subr.mxu0 0.0
  %8898 = vmatpush1.msra.mxu0 %v8881
  %8899 = vmatprep.subr.mxu0 0.0
  %8900 = vmatpush1.msra.mxu0 %v8882
  %8901 = vmatprep.subr.mxu0 0.0
  %8902 = vmatpush1.msra.mxu0 %v8883
  %8903 = vmatprep.subr.mxu0 0.0
  %8904 = vmatpush1.msra.mxu0 %v8884
  %8905 = vmatprep.subr.mxu0 0.0
  %8906 = vmatpush1.msra.mxu0 0.0
  %8907 = vmatprep.subr.mxu0 0.0
  %8908 = vmatpush1.msra.mxu0 0.0
  %8909 = vmatprep.subr.mxu0 0.0
  %8910 = vmatpush1.msra.mxu0 0.0
  %8911 = vmatprep.subr.mxu0 0.0
  %8912 = vmatpush1.msra.mxu0 0.0
  %8913 = vmatprep.subr.mxu0 0.0
  %8914 = vmatpush1.msra.mxu0 0.0
  %8915 = vmatprep.subr.mxu0 0.0
  %8916 = vmatpush1.msra.mxu0 0.0
  %8917 = vmatprep.subr.mxu0 0.0
  %8918 = vmatpush1.msra.mxu0 0.0
  %8919 = vmatprep.subr.mxu0 0.0
  %8920 = vmatpush1.msra.mxu0 0.0
  %8921 = vmatprep.subr.mxu0 0.0
  %8922 = vmatpush1.msra.mxu0 0.0
  %8923 = vmatprep.subr.mxu0 0.0
  %8924 = vmatpush1.msra.mxu0 0.0
  %8925 = vmatprep.subr.mxu0 0.0
  %8926 = vmatpush1.msra.mxu0 0.0
  %8927 = vmatprep.subr.mxu0 0.0
  %8928 = vmatpush1.msra.mxu0 0.0
  %8929 = vmatprep.subr.mxu0 0.0
  %8930 = vmatpush1.msra.mxu0 0.0
  %8931 = vmatprep.subr.mxu0 0.0
  %8932 = vmatpush1.msra.mxu0 0.0
  %8933 = vmatprep.subr.mxu0 0.0
  %8934 = vmatpush1.msra.mxu0 0.0
  %8935 = vmatprep.subr.mxu0 0.0
  %8936 = vmatpush1.msra.mxu0 0.0
  %8937 = vmatprep.subr.mxu0 0.0
  %8938 = vmatpush1.msra.mxu0 0.0
  %8939 = vmatprep.subr.mxu0 0.0
  %8940 = vmatpush1.msra.mxu0 0.0
  %8941 = vmatprep.subr.mxu0 0.0
  %8942 = vmatpush1.msra.mxu0 0.0
  %8943 = vmatprep.subr.mxu0 0.0
  %8944 = vmatpush1.msra.mxu0 0.0
  %8945 = vmatprep.subr.mxu0 0.0
  %8946 = vmatpush1.msra.mxu0 0.0
  %8947 = vmatprep.subr.mxu0 0.0
  %8948 = vmatpush1.msra.mxu0 0.0
  %8949 = vmatprep.subr.mxu0 0.0
  %8950 = vmatpush1.msra.mxu0 0.0
  %8951 = vmatprep.subr.mxu0 0.0
  %8952 = vmatpush1.msra.mxu0 0.0
  %8953 = vmatprep.subr.mxu0 0.0
  %8954 = vmatpush1.msra.mxu0 0.0
  %8955 = vmatprep.subr.mxu0 0.0
  %8956 = vmatpush1.msra.mxu0 0.0
  %8957 = vmatprep.subr.mxu0 0.0
  %8958 = vmatpush1.msra.mxu0 0.0
  %8959 = vmatprep.subr.mxu0 0.0
  %8960 = vmatpush1.msra.mxu0 0.0
  %8961 = vmatprep.mubr.f32.mxu0 0.0
  %8962 = vmatmul.mubr.f32.gmra.mrb[0].mxu0 %v1462
  %v8963 = vpop.f32.mrb[0].mxu0
  %v8964 = vadd.f32 %v422, %v8963
  %v8965 = vpop.f32.mrb[0].mxu0
  %8966 = vmatprep.mubr.f32.mxu0 0.0
  %8967 = vmatmul.mubr.f32.gmra.mrb[0].mxu0 %v1465
  %v8968 = vpop.f32.mrb[0].mxu0
  %v8969 = vadd.f32 %v427, %v8968
  %v8970 = vpop.f32.mrb[0].mxu0
  %8971 = vmatprep.mubr.f32.mxu0 0.0
  %8972 = vmatmul.mubr.f32.gmra.mrb[0].mxu0 %v1468
  %v8973 = vpop.f32.mrb[0].mxu0
  %v8974 = vadd.f32 %v432, %v8973
  %v8975 = vpop.f32.mrb[0].mxu0
  %8976 = vmatprep.mubr.f32.mxu0 0.0
  %8977 = vmatmul.mubr.f32.gmra.mrb[0].mxu0 %v1471
  %v8978 = vpop.f32.mrb[0].mxu0
  %v8979 = vadd.f32 %v437, %v8978
  %v8980 = vpop.f32.mrb[0].mxu0
  %8981 = vdwg.mxu0
  %v8982 = vld [vmem:[#allocation4] sm:$0xff]
  %v8983 = vld [vmem:[#allocation4 + $0x8] sm:$0xff]
  %v8984 = vld [vmem:[#allocation4 + $0x10] sm:$0xff]
  %v8985 = vld [vmem:[#allocation4 + $0x18] sm:$0xff]
  %v8986 = vsub.f32 %v8964, %v8982
  %v8987 = vsub.f32 %v8969, %v8983
  %v8988 = vsub.f32 %v8974, %v8984
  %v8989 = vsub.f32 %v8979, %v8985
  %v8990 = vmul.f32 %v8986, 0.5
  %v8991 = vmul.f32 %v8987, 0.5
  %v8992 = vmul.f32 %v8988, 0.5
  %v8993 = vmul.f32 %v8989, 0.5
  %v8994 = vadd.f32 %v8982, %v8990
  %v8995 = vadd.f32 %v8983, %v8991
  %v8996 = vadd.f32 %v8984, %v8992
  %v8997 = vadd.f32 %v8985, %v8993
  %vm8998 = vcmp.ge.f32.partialorder %v8994, 1.0
  %vm8999 = vcmp.ge.f32.partialorder %v8995, 1.0
  %vm9000 = vcmp.ge.f32.partialorder %v8996, 1.0
  %vm9001 = vcmp.ge.f32.partialorder %v8997, 1.0
  %v9002 = vsel %vm8998, 1, 0
  %v9003 = vsel %vm8999, 1, 0
  %v9004 = vsel %vm9000, 1, 0
  %v9005 = vsel %vm9001, 1, 0
  %v9006 = vcvt.s32.f32 %v9002
  %v9007 = vcvt.s32.f32 %v9003
  %v9008 = vcvt.s32.f32 %v9004
  %v9009 = vcvt.s32.f32 %v9005
  %v9010 = vsub.f32 1.0, %v9006
  %v9011 = vsub.f32 1.0, %v9007
  %v9012 = vsub.f32 1.0, %v9008
  %v9013 = vsub.f32 1.0, %v9009
  %v9014 = vmul.f32 %v8994, %v9010
  %v9015 = vmul.f32 %v8995, %v9011
  %v9016 = vmul.f32 %v8996, %v9012
  %v9017 = vmul.f32 %v8997, %v9013
  %9018 = vst [vmem:[#allocation4] sm:$0xff] %v9014
  %9019 = vst [vmem:[#allocation4 + $0x8] sm:$0xff] %v9015
  %9020 = vst [vmem:[#allocation4 + $0x10] sm:$0xff] %v9016
  %9021 = vst [vmem:[#allocation4 + $0x18] sm:$0xff] %v9017
  %v9022 = vadd.f32 %v254, %v9006
  %v9023 = vadd.f32 %v255, %v9007
  %v9024 = vadd.f32 %v256, %v9008
  %v9025 = vadd.f32 %v257, %v9009
  %9026 = vmatprep.subr.mxu0 0.0
  %9027 = vmatpush1.msra.mxu0 %v9022
  %9028 = vmatprep.subr.mxu0 0.0
  %9029 = vmatpush1.msra.mxu0 %v9023
  %9030 = vmatprep.subr.mxu0 0.0
  %9031 = vmatpush1.msra.mxu0 %v9024
  %9032 = vmatprep.subr.mxu0 0.0
  %9033 = vmatpush1.msra.mxu0 %v9025
  %9034 = vmatprep.subr.mxu0 0.0
  %9035 = vmatpush1.msra.mxu0 0.0
  %9036 = vmatprep.subr.mxu0 0.0
  %9037 = vmatpush1.msra.mxu0 0.0
  %9038 = vmatprep.subr.mxu0 0.0
  %9039 = vmatpush1.msra.mxu0 0.0
  %9040 = vmatprep.subr.mxu0 0.0
  %9041 = vmatpush1.msra.mxu0 0.0
  %9042 = vmatprep.subr.mxu0 0.0
  %9043 = vmatpush1.msra.mxu0 0.0
  %9044 = vmatprep.subr.mxu0 0.0
  %9045 = vmatpush1.msra.mxu0 0.0
  %9046 = vmatprep.subr.mxu0 0.0
  %9047 = vmatpush1.msra.mxu0 0.0
  %9048 = vmatprep.subr.mxu0 0.0
  %9049 = vmatpush1.msra.mxu0 0.0
  %9050 = vmatprep.subr.mxu0 0.0
  %9051 = vmatpush1.msra.mxu0 0.0
  %9052 = vmatprep.subr.mxu0 0.0
  %9053 = vmatpush1.msra.mxu0 0.0
  %9054 = vmatprep.subr.mxu0 0.0
  %9055 = vmatpush1.msra.mxu0 0.0
  %9056 = vmatprep.subr.mxu0 0.0
  %9057 = vmatpush1.msra.mxu0 0.0
  %9058 = vmatprep.subr.mxu0 0.0
  %9059 = vmatpush1.msra.mxu0 0.0
  %9060 = vmatprep.subr.mxu0 0.0
  %9061 = vmatpush1.msra.mxu0 0.0
  %9062 = vmatprep.subr.mxu0 0.0
  %9063 = vmatpush1.msra.mxu0 0.0
  %9064 = vmatprep.subr.mxu0 0.0
  %9065 = vmatpush1.msra.mxu0 0.0
  %9066 = vmatprep.subr.mxu0 0.0
  %9067 = vmatpush1.msra.mxu0 0.0
  %9068 = vmatprep.subr.mxu0 0.0
  %9069 = vmatpush1.msra.mxu0 0.0
  %9070 = vmatprep.subr.mxu0 0.0
  %9071 = vmatpush1.msra.mxu0 0.0
  %9072 = vmatprep.subr.mxu0 0.0
  %9073 = vmatpush1.msra.mxu0 0.0
  %9074 = vmatprep.subr.mxu0 0.0
  %9075 = vmatpush1.msra.mxu0 0.0
  %9076 = vmatprep.subr.mxu0 0.0
  %9077 = vmatpush1.msra.mxu0 0.0
  %9078 = vmatprep.subr.mxu0 0.0
  %9079 = vmatpush1.msra.mxu0 0.0
  %9080 = vmatprep.subr.mxu0 0.0
  %9081 = vmatpush1.msra.mxu0 0.0
  %9082 = vmatprep.subr.mxu0 0.0
  %9083 = vmatpush1.msra.mxu0 0.0
  %9084 = vmatprep.subr.mxu0 0.0
  %9085 = vmatpush1.msra.mxu0 0.0
  %9086 = vmatprep.subr.mxu0 0.0
  %9087 = vmatpush1.msra.mxu0 0.0
  %9088 = vmatprep.subr.mxu0 0.0
  %9089 = vmatpush1.msra.mxu0 0.0
  %9090 = vmatprep.mubr.f32.mxu0 0.0
  %9091 = vmatmul.mubr.f32.gmra.mrb[0].mxu0 %v1591
  %v9092 = vpop.f32.mrb[0].mxu0
  %v9093 = vadd.f32 %v442, %v9092
  %v9094 = vpop.f32.mrb[0].mxu0
  %9095 = vmatprep.mubr.f32.mxu0 0.0
  %9096 = vmatmul.mubr.f32.gmra.mrb[0].mxu0 %v1594
  %v9097 = vpop.f32.mrb[0].mxu0
  %v9098 = vadd.f32 %v447, %v9097
  %v9099 = vpop.f32.mrb[0].mxu0
  %9100 = vmatprep.mubr.f32.mxu0 0.0
  %9101 = vmatmul.mubr.f32.gmra.mrb[0].mxu0 %v1597
  %v9102 = vpop.f32.mrb[0].mxu0
  %v9103 = vadd.f32 %v452, %v9102
  %v9104 = vpop.f32.mrb[0].mxu0
  %9105 = vmatprep.mubr.f32.mxu0 0.0
  %9106 = vmatmul.mubr.f32.gmra.mrb[0].mxu0 %v1600
  %v9107 = vpop.f32.mrb[0].mxu0
  %v9108 = vadd.f32 %v457, %v9107
  %v9109 = vpop.f32.mrb[0].mxu0
  %9110 = vmatprep.mubr.f32.mxu0 0.0
  %9111 = vmatmul.mubr.f32.gmra.mrb[0].mxu0 %v1603
  %v9112 = vpop.f32.mrb[0].mxu0
  %v9113 = vadd.f32 %v462, %v9112
  %v9114 = vpop.f32.mrb[0].mxu0
  %9115 = vmatprep.mubr.f32.mxu0 0.0
  %9116 = vmatmul.mubr.f32.gmra.mrb[0].mxu0 %v1606
  %v9117 = vpop.f32.mrb[0].mxu0
  %v9118 = vadd.f32 %v467, %v9117
  %v9119 = vpop.f32.mrb[0].mxu0
  %9120 = vmatprep.mubr.f32.mxu0 0.0
  %9121 = vmatmul.mubr.f32.gmra.mrb[0].mxu0 %v1609
  %v9122 = vpop.f32.mrb[0].mxu0
  %v9123 = vadd.f32 %v472, %v9122
  %v9124 = vpop.f32.mrb[0].mxu0
  %9125 = vmatprep.mubr.f32.mxu0 0.0
  %9126 = vmatmul.mubr.f32.gmra.mrb[0].mxu0 %v1612
  %v9127 = vpop.f32.mrb[0].mxu0
  %v9128 = vadd.f32 %v477, %v9127
  %v9129 = vpop.f32.mrb[0].mxu0
  %9130 = vmatprep.mubr.f32.mxu0 0.0
  %9131 = vmatmul.mubr.f32.gmra.mrb[0].mxu0 %v1615
  %v9132 = vpop.f32.mrb[0].mxu0
  %v9133 = vadd.f32 %v482, %v9132
  %v9134 = vpop.f32.mrb[0].mxu0
  %9135 = vmatprep.mubr.f32.mxu0 0.0
  %9136 = vmatmul.mubr.f32.gmra.mrb[0].mxu0 %v1618
  %v9137 = vpop.f32.mrb[0].mxu0
  %v9138 = vadd.f32 %v487, %v9137
  %v9139 = vpop.f32.mrb[0].mxu0
  %9140 = vmatprep.mubr.f32.mxu0 0.0
  %9141 = vmatmul.mubr.f32.gmra.mrb[0].mxu0 %v1621
  %v9142 = vpop.f32.mrb[0].mxu0
  %v9143 = vadd.f32 %v492, %v9142
  %v9144 = vpop.f32.mrb[0].mxu0
  %9145 = vmatprep.mubr.f32.mxu0 0.0
  %9146 = vmatmul.mubr.f32.gmra.mrb[0].mxu0 %v1624
  %v9147 = vpop.f32.mrb[0].mxu0
  %v9148 = vadd.f32 %v497, %v9147
  %v9149 = vpop.f32.mrb[0].mxu0
  %9150 = vmatprep.mubr.f32.mxu0 0.0
  %9151 = vmatmul.mubr.f32.gmra.mrb[0].mxu0 %v1627
  %v9152 = vpop.f32.mrb[0].mxu0
  %v9153 = vadd.f32 %v502, %v9152
  %v9154 = vpop.f32.mrb[0].mxu0
  %9155 = vmatprep.mubr.f32.mxu0 0.0
  %9156 = vmatmul.mubr.f32.gmra.mrb[0].mxu0 %v1630
  %v9157 = vpop.f32.mrb[0].mxu0
  %v9158 = vadd.f32 %v507, %v9157
  %v9159 = vpop.f32.mrb[0].mxu0
  %9160 = vmatprep.mubr.f32.mxu0 0.0
  %9161 = vmatmul.mubr.f32.gmra.mrb[0].mxu0 %v1633
  %v9162 = vpop.f32.mrb[0].mxu0
  %v9163 = vadd.f32 %v512, %v9162
  %v9164 = vpop.f32.mrb[0].mxu0
  %9165 = vmatprep.mubr.f32.mxu0 0.0
  %9166 = vmatmul.mubr.f32.gmra.mrb[0].mxu0 %v1636
  %v9167 = vpop.f32.mrb[0].mxu0
  %v9168 = vadd.f32 %v517, %v9167
  %v9169 = vpop.f32.mrb[0].mxu0
  %9170 = vdwg.mxu0
  %v9171 = vld [vmem:[#allocation5] sm:$0xff]
  %v9172 = vld [vmem:[#allocation5 + $0x8] sm:$0xff]
  %v9173 = vld [vmem:[#allocation5 + $0x10] sm:$0xff]
  %v9174 = vld [vmem:[#allocation5 + $0x18] sm:$0xff]
  %v9175 = vld [vmem:[#allocation5 + $0x20] sm:$0xff]
  %v9176 = vld [vmem:[#allocation5 + $0x28] sm:$0xff]
  %v9177 = vld [vmem:[#allocation5 + $0x30] sm:$0xff]
  %v9178 = vld [vmem:[#allocation5 + $0x38] sm:$0xff]
  %v9179 = vld [vmem:[#allocation5 + $0x40] sm:$0xff]
  %v9180 = vld [vmem:[#allocation5 + $0x48] sm:$0xff]
  %v9181 = vld [vmem:[#allocation5 + $0x50] sm:$0xff]
  %v9182 = vld [vmem:[#allocation5 + $0x58] sm:$0xff]
  %v9183 = vld [vmem:[#allocation5 + $0x60] sm:$0xff]
  %v9184 = vld [vmem:[#allocation5 + $0x68] sm:$0xff]
  %v9185 = vld [vmem:[#allocation5 + $0x70] sm:$0xff]
  %v9186 = vld [vmem:[#allocation5 + $0x78] sm:$0xff]
  %v9187 = vsub.f32 %v9093, %v9171
  %v9188 = vsub.f32 %v9098, %v9172
  %v9189 = vsub.f32 %v9103, %v9173
  %v9190 = vsub.f32 %v9108, %v9174
  %v9191 = vsub.f32 %v9113, %v9175
  %v9192 = vsub.f32 %v9118, %v9176
  %v9193 = vsub.f32 %v9123, %v9177
  %v9194 = vsub.f32 %v9128, %v9178
  %v9195 = vsub.f32 %v9133, %v9179
  %v9196 = vsub.f32 %v9138, %v9180
  %v9197 = vsub.f32 %v9143, %v9181
  %v9198 = vsub.f32 %v9148, %v9182
  %v9199 = vsub.f32 %v9153, %v9183
  %v9200 = vsub.f32 %v9158, %v9184
  %v9201 = vsub.f32 %v9163, %v9185
  %v9202 = vsub.f32 %v9168, %v9186
  %v9203 = vmul.f32 %v9187, 0.5
  %v9204 = vmul.f32 %v9188, 0.5
  %v9205 = vmul.f32 %v9189, 0.5
  %v9206 = vmul.f32 %v9190, 0.5
  %v9207 = vmul.f32 %v9191, 0.5
  %v9208 = vmul.f32 %v9192, 0.5
  %v9209 = vmul.f32 %v9193, 0.5
  %v9210 = vmul.f32 %v9194, 0.5
  %v9211 = vmul.f32 %v9195, 0.5
  %v9212 = vmul.f32 %v9196, 0.5
  %v9213 = vmul.f32 %v9197, 0.5
  %v9214 = vmul.f32 %v9198, 0.5
  %v9215 = vmul.f32 %v9199, 0.5
  %v9216 = vmul.f32 %v9200, 0.5
  %v9217 = vmul.f32 %v9201, 0.5
  %v9218 = vmul.f32 %v9202, 0.5
  %v9219 = vadd.f32 %v9171, %v9203
  %v9220 = vadd.f32 %v9172, %v9204
  %v9221 = vadd.f32 %v9173, %v9205
  %v9222 = vadd.f32 %v9174, %v9206
  %v9223 = vadd.f32 %v9175, %v9207
  %v9224 = vadd.f32 %v9176, %v9208
  %v9225 = vadd.f32 %v9177, %v9209
  %v9226 = vadd.f32 %v9178, %v9210
  %v9227 = vadd.f32 %v9179, %v9211
  %v9228 = vadd.f32 %v9180, %v9212
  %v9229 = vadd.f32 %v9181, %v9213
  %v9230 = vadd.f32 %v9182, %v9214
  %v9231 = vadd.f32 %v9183, %v9215
  %v9232 = vadd.f32 %v9184, %v9216
  %v9233 = vadd.f32 %v9185, %v9217
  %v9234 = vadd.f32 %v9186, %v9218
  %vm9235 = vcmp.ge.f32.partialorder %v9219, 1.0
  %vm9236 = vcmp.ge.f32.partialorder %v9220, 1.0
  %vm9237 = vcmp.ge.f32.partialorder %v9221, 1.0
  %vm9238 = vcmp.ge.f32.partialorder %v9222, 1.0
  %vm9239 = vcmp.ge.f32.partialorder %v9223, 1.0
  %vm9240 = vcmp.ge.f32.partialorder %v9224, 1.0
  %vm9241 = vcmp.ge.f32.partialorder %v9225, 1.0
  %vm9242 = vcmp.ge.f32.partialorder %v9226, 1.0
  %vm9243 = vcmp.ge.f32.partialorder %v9227, 1.0
  %vm9244 = vcmp.ge.f32.partialorder %v9228, 1.0
  %vm9245 = vcmp.ge.f32.partialorder %v9229, 1.0
  %vm9246 = vcmp.ge.f32.partialorder %v9230, 1.0
  %vm9247 = vcmp.ge.f32.partialorder %v9231, 1.0
  %vm9248 = vcmp.ge.f32.partialorder %v9232, 1.0
  %vm9249 = vcmp.ge.f32.partialorder %v9233, 1.0
  %vm9250 = vcmp.ge.f32.partialorder %v9234, 1.0
  %v9251 = vsel %vm9235, 1, 0
  %v9252 = vsel %vm9236, 1, 0
  %v9253 = vsel %vm9237, 1, 0
  %v9254 = vsel %vm9238, 1, 0
  %v9255 = vsel %vm9239, 1, 0
  %v9256 = vsel %vm9240, 1, 0
  %v9257 = vsel %vm9241, 1, 0
  %v9258 = vsel %vm9242, 1, 0
  %v9259 = vsel %vm9243, 1, 0
  %v9260 = vsel %vm9244, 1, 0
  %v9261 = vsel %vm9245, 1, 0
  %v9262 = vsel %vm9246, 1, 0
  %v9263 = vsel %vm9247, 1, 0
  %v9264 = vsel %vm9248, 1, 0
  %v9265 = vsel %vm9249, 1, 0
  %v9266 = vsel %vm9250, 1, 0
  %v9267 = vcvt.s32.f32 %v9251
  %v9268 = vcvt.s32.f32 %v9252
  %v9269 = vcvt.s32.f32 %v9253
  %v9270 = vcvt.s32.f32 %v9254
  %v9271 = vcvt.s32.f32 %v9255
  %v9272 = vcvt.s32.f32 %v9256
  %v9273 = vcvt.s32.f32 %v9257
  %v9274 = vcvt.s32.f32 %v9258
  %v9275 = vcvt.s32.f32 %v9259
  %v9276 = vcvt.s32.f32 %v9260
  %v9277 = vcvt.s32.f32 %v9261
  %v9278 = vcvt.s32.f32 %v9262
  %v9279 = vcvt.s32.f32 %v9263
  %v9280 = vcvt.s32.f32 %v9264
  %v9281 = vcvt.s32.f32 %v9265
  %v9282 = vcvt.s32.f32 %v9266
  %v9283 = vsub.f32 1.0, %v9267
  %v9284 = vsub.f32 1.0, %v9268
  %v9285 = vsub.f32 1.0, %v9269
  %v9286 = vsub.f32 1.0, %v9270
  %v9287 = vsub.f32 1.0, %v9271
  %v9288 = vsub.f32 1.0, %v9272
  %v9289 = vsub.f32 1.0, %v9273
  %v9290 = vsub.f32 1.0, %v9274
  %v9291 = vsub.f32 1.0, %v9275
  %v9292 = vsub.f32 1.0, %v9276
  %v9293 = vsub.f32 1.0, %v9277
  %v9294 = vsub.f32 1.0, %v9278
  %v9295 = vsub.f32 1.0, %v9279
  %v9296 = vsub.f32 1.0, %v9280
  %v9297 = vsub.f32 1.0, %v9281
  %v9298 = vsub.f32 1.0, %v9282
  %v9299 = vmul.f32 %v9219, %v9283
  %v9300 = vmul.f32 %v9220, %v9284
  %v9301 = vmul.f32 %v9221, %v9285
  %v9302 = vmul.f32 %v9222, %v9286
  %v9303 = vmul.f32 %v9223, %v9287
  %v9304 = vmul.f32 %v9224, %v9288
  %v9305 = vmul.f32 %v9225, %v9289
  %v9306 = vmul.f32 %v9226, %v9290
  %v9307 = vmul.f32 %v9227, %v9291
  %v9308 = vmul.f32 %v9228, %v9292
  %v9309 = vmul.f32 %v9229, %v9293
  %v9310 = vmul.f32 %v9230, %v9294
  %v9311 = vmul.f32 %v9231, %v9295
  %v9312 = vmul.f32 %v9232, %v9296
  %v9313 = vmul.f32 %v9233, %v9297
  %v9314 = vmul.f32 %v9234, %v9298
  %9315 = vst [vmem:[#allocation5] sm:$0xff] %v9299
  %9316 = vst [vmem:[#allocation5 + $0x8] sm:$0xff] %v9300
  %9317 = vst [vmem:[#allocation5 + $0x10] sm:$0xff] %v9301
  %9318 = vst [vmem:[#allocation5 + $0x18] sm:$0xff] %v9302
  %9319 = vst [vmem:[#allocation5 + $0x20] sm:$0xff] %v9303
  %9320 = vst [vmem:[#allocation5 + $0x28] sm:$0xff] %v9304
  %9321 = vst [vmem:[#allocation5 + $0x30] sm:$0xff] %v9305
  %9322 = vst [vmem:[#allocation5 + $0x38] sm:$0xff] %v9306
  %9323 = vst [vmem:[#allocation5 + $0x40] sm:$0xff] %v9307
  %9324 = vst [vmem:[#allocation5 + $0x48] sm:$0xff] %v9308
  %9325 = vst [vmem:[#allocation5 + $0x50] sm:$0xff] %v9309
  %9326 = vst [vmem:[#allocation5 + $0x58] sm:$0xff] %v9310
  %9327 = vst [vmem:[#allocation5 + $0x60] sm:$0xff] %v9311
  %9328 = vst [vmem:[#allocation5 + $0x68] sm:$0xff] %v9312
  %9329 = vst [vmem:[#allocation5 + $0x70] sm:$0xff] %v9313
  %9330 = vst [vmem:[#allocation5 + $0x78] sm:$0xff] %v9314
  %9331 = vmatprep.subr.mxu0 0.0
  %9332 = vmatpush1.msra.mxu0 %v9267
  %9333 = vmatprep.subr.mxu0 0.0
  %9334 = vmatpush1.msra.mxu0 %v9268
  %9335 = vmatprep.subr.mxu0 0.0
  %9336 = vmatpush1.msra.mxu0 %v9269
  %9337 = vmatprep.subr.mxu0 0.0
  %9338 = vmatpush1.msra.mxu0 %v9270
  %9339 = vmatprep.subr.mxu0 0.0
  %9340 = vmatpush1.msra.mxu0 %v9271
  %9341 = vmatprep.subr.mxu0 0.0
  %9342 = vmatpush1.msra.mxu0 %v9272
  %9343 = vmatprep.subr.mxu0 0.0
  %9344 = vmatpush1.msra.mxu0 %v9273
  %9345 = vmatprep.subr.mxu0 0.0
  %9346 = vmatpush1.msra.mxu0 %v9274
  %9347 = vmatprep.subr.mxu0 0.0
  %9348 = vmatpush1.msra.mxu0 %v9275
  %9349 = vmatprep.subr.mxu0 0.0
  %9350 = vmatpush1.msra.mxu0 %v9276
  %9351 = vmatprep.subr.mxu0 0.0
  %9352 = vmatpush1.msra.mxu0 %v9277
  %9353 = vmatprep.subr.mxu0 0.0
  %9354 = vmatpush1.msra.mxu0 %v9278
  %9355 = vmatprep.subr.mxu0 0.0
  %9356 = vmatpush1.msra.mxu0 %v9279
  %9357 = vmatprep.subr.mxu0 0.0
  %9358 = vmatpush1.msra.mxu0 %v9280
  %9359 = vmatprep.subr.mxu0 0.0
  %9360 = vmatpush1.msra.mxu0 %v9281
  %9361 = vmatprep.subr.mxu0 0.0
  %9362 = vmatpush1.msra.mxu0 %v9282
  %9363 = vmatprep.subr.mxu0 0.0
  %9364 = vmatpush1.msra.mxu0 0.0
  %9365 = vmatprep.subr.mxu0 0.0
  %9366 = vmatpush1.msra.mxu0 0.0
  %9367 = vmatprep.subr.mxu0 0.0
  %9368 = vmatpush1.msra.mxu0 0.0
  %9369 = vmatprep.subr.mxu0 0.0
  %9370 = vmatpush1.msra.mxu0 0.0
  %9371 = vmatprep.subr.mxu0 0.0
  %9372 = vmatpush1.msra.mxu0 0.0
  %9373 = vmatprep.subr.mxu0 0.0
  %9374 = vmatpush1.msra.mxu0 0.0
  %9375 = vmatprep.subr.mxu0 0.0
  %9376 = vmatpush1.msra.mxu0 0.0
  %9377 = vmatprep.subr.mxu0 0.0
  %9378 = vmatpush1.msra.mxu0 0.0
  %9379 = vmatprep.subr.mxu0 0.0
  %9380 = vmatpush1.msra.mxu0 0.0
  %9381 = vmatprep.subr.mxu0 0.0
  %9382 = vmatpush1.msra.mxu0 0.0
  %9383 = vmatprep.subr.mxu0 0.0
  %9384 = vmatpush1.msra.mxu0 0.0
  %9385 = vmatprep.subr.mxu0 0.0
  %9386 = vmatpush1.msra.mxu0 0.0
  %9387 = vmatprep.subr.mxu0 0.0
  %9388 = vmatpush1.msra.mxu0 0.0
  %9389 = vmatprep.subr.mxu0 0.0
  %9390 = vmatpush1.msra.mxu0 0.0
  %9391 = vmatprep.subr.mxu0 0.0
  %9392 = vmatpush1.msra.mxu0 0.0
  %9393 = vmatprep.subr.mxu0 0.0
  %9394 = vmatpush1.msra.mxu0 0.0
  %9395 = vmatprep.mubr.f32.mxu0 0.0
  %9396 = vmatmul.mubr.f32.gmra.mrb[0].mxu0 %v351
  %v9397 = vpop.f32.mrb[0].mxu0
  %v9398 = vadd.f32 %v522, %v9397
  %v9399 = vpop.f32.mrb[0].mxu0
  %9400 = vmatprep.mubr.f32.mxu0 0.0
  %9401 = vmatmul.mubr.f32.gmra.mrb[0].mxu0 %v352
  %v9402 = vpop.f32.mrb[0].mxu0
  %v9403 = vadd.f32 %v527, %v9402
  %v9404 = vpop.f32.mrb[0].mxu0
  %9405 = vmatprep.mubr.f32.mxu0 0.0
  %9406 = vmatmul.mubr.f32.gmra.mrb[0].mxu0 %v353
  %v9407 = vpop.f32.mrb[0].mxu0
  %v9408 = vadd.f32 %v532, %v9407
  %v9409 = vpop.f32.mrb[0].mxu0
  %9410 = vmatprep.mubr.f32.mxu0 0.0
  %9411 = vmatmul.mubr.f32.gmra.mrb[0].mxu0 %v354
  %v9412 = vpop.f32.mrb[0].mxu0
  %v9413 = vadd.f32 %v537, %v9412
  %v9414 = vpop.f32.mrb[0].mxu0
  %9415 = vdwg.mxu0
  %v9416 = vld [vmem:[#allocation6] sm:$0xff]
  %v9417 = vld [vmem:[#allocation6 + $0x8] sm:$0xff]
  %v9418 = vld [vmem:[#allocation6 + $0x10] sm:$0xff]
  %v9419 = vld [vmem:[#allocation6 + $0x18] sm:$0xff]
  %v9420 = vsub.f32 %v9398, %v9416
  %v9421 = vsub.f32 %v9403, %v9417
  %v9422 = vsub.f32 %v9408, %v9418
  %v9423 = vsub.f32 %v9413, %v9419
  %v9424 = vmul.f32 %v9420, 0.5
  %v9425 = vmul.f32 %v9421, 0.5
  %v9426 = vmul.f32 %v9422, 0.5
  %v9427 = vmul.f32 %v9423, 0.5
  %v9428 = vadd.f32 %v9416, %v9424
  %v9429 = vadd.f32 %v9417, %v9425
  %v9430 = vadd.f32 %v9418, %v9426
  %v9431 = vadd.f32 %v9419, %v9427
  %vm9432 = vcmp.ge.f32.partialorder %v9428, 1.0
  %vm9433 = vcmp.ge.f32.partialorder %v9429, 1.0
  %vm9434 = vcmp.ge.f32.partialorder %v9430, 1.0
  %vm9435 = vcmp.ge.f32.partialorder %v9431, 1.0
  %v9436 = vsel %vm9432, 1, 0
  %v9437 = vsel %vm9433, 1, 0
  %v9438 = vsel %vm9434, 1, 0
  %v9439 = vsel %vm9435, 1, 0
  %v9440 = vcvt.s32.f32 %v9436
  %v9441 = vcvt.s32.f32 %v9437
  %v9442 = vcvt.s32.f32 %v9438
  %v9443 = vcvt.s32.f32 %v9439
  %v9444 = vsub.f32 1.0, %v9440
  %v9445 = vsub.f32 1.0, %v9441
  %v9446 = vsub.f32 1.0, %v9442
  %v9447 = vsub.f32 1.0, %v9443
  %v9448 = vmul.f32 %v9428, %v9444
  %v9449 = vmul.f32 %v9429, %v9445
  %v9450 = vmul.f32 %v9430, %v9446
  %v9451 = vmul.f32 %v9431, %v9447
  %9452 = vst [vmem:[#allocation6] sm:$0xff] %v9448
  %9453 = vst [vmem:[#allocation6 + $0x8] sm:$0xff] %v9449
  %9454 = vst [vmem:[#allocation6 + $0x10] sm:$0xff] %v9450
  %9455 = vst [vmem:[#allocation6 + $0x18] sm:$0xff] %v9451
  %v9456 = vadd.f32 %v9022, %v9440
  %v9457 = vadd.f32 %v9023, %v9441
  %v9458 = vadd.f32 %v9024, %v9442
  %v9459 = vadd.f32 %v9025, %v9443
  %9460 = vmatprep.subr.mxu0 0.0
  %9461 = vmatpush1.msra.mxu0 %v9456
  %9462 = vmatprep.subr.mxu0 0.0
  %9463 = vmatpush1.msra.mxu0 %v9457
  %9464 = vmatprep.subr.mxu0 0.0
  %9465 = vmatpush1.msra.mxu0 %v9458
  %9466 = vmatprep.subr.mxu0 0.0
  %9467 = vmatpush1.msra.mxu0 %v9459
  %9468 = vmatprep.subr.mxu0 0.0
  %9469 = vmatpush1.msra.mxu0 0.0
  %9470 = vmatprep.subr.mxu0 0.0
  %9471 = vmatpush1.msra.mxu0 0.0
  %9472 = vmatprep.subr.mxu0 0.0
  %9473 = vmatpush1.msra.mxu0 0.0
  %9474 = vmatprep.subr.mxu0 0.0
  %9475 = vmatpush1.msra.mxu0 0.0
  %9476 = vmatprep.subr.mxu0 0.0
  %9477 = vmatpush1.msra.mxu0 0.0
  %9478 = vmatprep.subr.mxu0 0.0
  %9479 = vmatpush1.msra.mxu0 0.0
  %9480 = vmatprep.subr.mxu0 0.0
  %9481 = vmatpush1.msra.mxu0 0.0
  %9482 = vmatprep.subr.mxu0 0.0
  %9483 = vmatpush1.msra.mxu0 0.0
  %9484 = vmatprep.subr.mxu0 0.0
  %9485 = vmatpush1.msra.mxu0 0.0
  %9486 = vmatprep.subr.mxu0 0.0
  %9487 = vmatpush1.msra.mxu0 0.0
  %9488 = vmatprep.subr.mxu0 0.0
  %9489 = vmatpush1.msra.mxu0 0.0
  %9490 = vmatprep.subr.mxu0 0.0
  %9491 = vmatpush1.msra.mxu0 0.0
  %9492 = vmatprep.subr.mxu0 0.0
  %9493 = vmatpush1.msra.mxu0 0.0
  %9494 = vmatprep.subr.mxu0 0.0
  %9495 = vmatpush1.msra.mxu0 0.0
  %9496 = vmatprep.subr.mxu0 0.0
  %9497 = vmatpush1.msra.mxu0 0.0
  %9498 = vmatprep.subr.mxu0 0.0
  %9499 = vmatpush1.msra.mxu0 0.0
  %9500 = vmatprep.subr.mxu0 0.0
  %9501 = vmatpush1.msra.mxu0 0.0
  %9502 = vmatprep.subr.mxu0 0.0
  %9503 = vmatpush1.msra.mxu0 0.0
  %9504 = vmatprep.subr.mxu0 0.0
  %9505 = vmatpush1.msra.mxu0 0.0
  %9506 = vmatprep.subr.mxu0 0.0
  %9507 = vmatpush1.msra.mxu0 0.0
  %9508 = vmatprep.subr.mxu0 0.0
  %9509 = vmatpush1.msra.mxu0 0.0
  %9510 = vmatprep.subr.mxu0 0.0
  %9511 = vmatpush1.msra.mxu0 0.0
  %9512 = vmatprep.subr.mxu0 0.0
  %9513 = vmatpush1.msra.mxu0 0.0
  %9514 = vmatprep.subr.mxu0 0.0
  %9515 = vmatpush1.msra.mxu0 0.0
  %9516 = vmatprep.subr.mxu0 0.0
  %9517 = vmatpush1.msra.mxu0 0.0
  %9518 = vmatprep.subr.mxu0 0.0
  %9519 = vmatpush1.msra.mxu0 0.0
  %9520 = vmatprep.subr.mxu0 0.0
  %9521 = vmatpush1.msra.mxu0 0.0
  %9522 = vmatprep.subr.mxu0 0.0
  %9523 = vmatpush1.msra.mxu0 0.0
  %9524 = vmatprep.mubr.f32.mxu0 0.0
  %9525 = vmatmul.mubr.f32.gmra.mrb[0].mxu0 %v2013
  %v9526 = vpop.f32.mrb[0].mxu0
  %v9527 = vadd.f32 %v614, %v9526
  %v9528 = vpop.f32.mrb[0].mxu0
  %9529 = vmatprep.mubr.f32.mxu0 0.0
  %9530 = vmatmul.mubr.f32.gmra.mrb[0].mxu0 %v2016
  %v9531 = vpop.f32.mrb[0].mxu0
  %v9532 = vadd.f32 %v619, %v9531
  %v9533 = vpop.f32.mrb[0].mxu0
  %9534 = vmatprep.mubr.f32.mxu0 0.0
  %9535 = vmatmul.mubr.f32.gmra.mrb[0].mxu0 %v2019
  %v9536 = vpop.f32.mrb[0].mxu0
  %v9537 = vadd.f32 %v624, %v9536
  %v9538 = vpop.f32.mrb[0].mxu0
  %9539 = vmatprep.mubr.f32.mxu0 0.0
  %9540 = vmatmul.mubr.f32.gmra.mrb[0].mxu0 %v2022
  %v9541 = vpop.f32.mrb[0].mxu0
  %v9542 = vadd.f32 %v629, %v9541
  %v9543 = vpop.f32.mrb[0].mxu0
  %9544 = vmatprep.mubr.f32.mxu0 0.0
  %9545 = vmatmul.mubr.f32.gmra.mrb[0].mxu0 %v2025
  %v9546 = vpop.f32.mrb[0].mxu0
  %v9547 = vadd.f32 %v634, %v9546
  %v9548 = vpop.f32.mrb[0].mxu0
  %9549 = vmatprep.mubr.f32.mxu0 0.0
  %9550 = vmatmul.mubr.f32.gmra.mrb[0].mxu0 %v2028
  %v9551 = vpop.f32.mrb[0].mxu0
  %v9552 = vadd.f32 %v639, %v9551
  %v9553 = vpop.f32.mrb[0].mxu0
  %9554 = vmatprep.mubr.f32.mxu0 0.0
  %9555 = vmatmul.mubr.f32.gmra.mrb[0].mxu0 %v2031
  %v9556 = vpop.f32.mrb[0].mxu0
  %v9557 = vadd.f32 %v644, %v9556
  %v9558 = vpop.f32.mrb[0].mxu0
  %9559 = vmatprep.mubr.f32.mxu0 0.0
  %9560 = vmatmul.mubr.f32.gmra.mrb[0].mxu0 %v2034
  %v9561 = vpop.f32.mrb[0].mxu0
  %v9562 = vadd.f32 %v649, %v9561
  %v9563 = vpop.f32.mrb[0].mxu0
  %9564 = vmatprep.mubr.f32.mxu0 0.0
  %9565 = vmatmul.mubr.f32.gmra.mrb[0].mxu0 %v2037
  %v9566 = vpop.f32.mrb[0].mxu0
  %v9567 = vadd.f32 %v654, %v9566
  %v9568 = vpop.f32.mrb[0].mxu0
  %9569 = vmatprep.mubr.f32.mxu0 0.0
  %9570 = vmatmul.mubr.f32.gmra.mrb[0].mxu0 %v2040
  %v9571 = vpop.f32.mrb[0].mxu0
  %v9572 = vadd.f32 %v659, %v9571
  %v9573 = vpop.f32.mrb[0].mxu0
  %9574 = vmatprep.mubr.f32.mxu0 0.0
  %9575 = vmatmul.mubr.f32.gmra.mrb[0].mxu0 %v2043
  %v9576 = vpop.f32.mrb[0].mxu0
  %v9577 = vadd.f32 %v664, %v9576
  %v9578 = vpop.f32.mrb[0].mxu0
  %9579 = vmatprep.mubr.f32.mxu0 0.0
  %9580 = vmatmul.mubr.f32.gmra.mrb[0].mxu0 %v2046
  %v9581 = vpop.f32.mrb[0].mxu0
  %v9582 = vadd.f32 %v669, %v9581
  %v9583 = vpop.f32.mrb[0].mxu0
  %9584 = vdwg.mxu0
  %v9585 = vld [vmem:[#allocation7] sm:$0xff]
  %v9586 = vld [vmem:[#allocation7 + $0x8] sm:$0xff]
  %v9587 = vld [vmem:[#allocation7 + $0x10] sm:$0xff]
  %v9588 = vld [vmem:[#allocation7 + $0x18] sm:$0xff]
  %v9589 = vld [vmem:[#allocation7 + $0x20] sm:$0xff]
  %v9590 = vld [vmem:[#allocation7 + $0x28] sm:$0xff]
  %v9591 = vld [vmem:[#allocation7 + $0x30] sm:$0xff]
  %v9592 = vld [vmem:[#allocation7 + $0x38] sm:$0xff]
  %v9593 = vld [vmem:[#allocation7 + $0x40] sm:$0xff]
  %v9594 = vld [vmem:[#allocation7 + $0x48] sm:$0xff]
  %v9595 = vld [vmem:[#allocation7 + $0x50] sm:$0xff]
  %v9596 = vld [vmem:[#allocation7 + $0x58] sm:$0xff]
  %v9597 = vsub.f32 %v9527, %v9585
  %v9598 = vsub.f32 %v9532, %v9586
  %v9599 = vsub.f32 %v9537, %v9587
  %v9600 = vsub.f32 %v9542, %v9588
  %v9601 = vsub.f32 %v9547, %v9589
  %v9602 = vsub.f32 %v9552, %v9590
  %v9603 = vsub.f32 %v9557, %v9591
  %v9604 = vsub.f32 %v9562, %v9592
  %v9605 = vsub.f32 %v9567, %v9593
  %v9606 = vsub.f32 %v9572, %v9594
  %v9607 = vsub.f32 %v9577, %v9595
  %v9608 = vsub.f32 %v9582, %v9596
  %v9609 = vmul.f32 %v9597, 0.5
  %v9610 = vmul.f32 %v9598, 0.5
  %v9611 = vmul.f32 %v9599, 0.5
  %v9612 = vmul.f32 %v9600, 0.5
  %v9613 = vmul.f32 %v9601, 0.5
  %v9614 = vmul.f32 %v9602, 0.5
  %v9615 = vmul.f32 %v9603, 0.5
  %v9616 = vmul.f32 %v9604, 0.5
  %v9617 = vmul.f32 %v9605, 0.5
  %v9618 = vmul.f32 %v9606, 0.5
  %v9619 = vmul.f32 %v9607, 0.5
  %v9620 = vmul.f32 %v9608, 0.5
  %v9621 = vadd.f32 %v9585, %v9609
  %v9622 = vadd.f32 %v9586, %v9610
  %v9623 = vadd.f32 %v9587, %v9611
  %v9624 = vadd.f32 %v9588, %v9612
  %v9625 = vadd.f32 %v9589, %v9613
  %v9626 = vadd.f32 %v9590, %v9614
  %v9627 = vadd.f32 %v9591, %v9615
  %v9628 = vadd.f32 %v9592, %v9616
  %v9629 = vadd.f32 %v9593, %v9617
  %v9630 = vadd.f32 %v9594, %v9618
  %v9631 = vadd.f32 %v9595, %v9619
  %v9632 = vadd.f32 %v9596, %v9620
  %vm9633 = vcmp.ge.f32.partialorder %v9621, 1.0
  %vm9634 = vcmp.ge.f32.partialorder %v9622, 1.0
  %vm9635 = vcmp.ge.f32.partialorder %v9623, 1.0
  %vm9636 = vcmp.ge.f32.partialorder %v9624, 1.0
  %vm9637 = vcmp.ge.f32.partialorder %v9625, 1.0
  %vm9638 = vcmp.ge.f32.partialorder %v9626, 1.0
  %vm9639 = vcmp.ge.f32.partialorder %v9627, 1.0
  %vm9640 = vcmp.ge.f32.partialorder %v9628, 1.0
  %vm9641 = vcmp.ge.f32.partialorder %v9629, 1.0
  %vm9642 = vcmp.ge.f32.partialorder %v9630, 1.0
  %vm9643 = vcmp.ge.f32.partialorder %v9631, 1.0
  %vm9644 = vcmp.ge.f32.partialorder %v9632, 1.0
  %v9645 = vsel %vm9633, 1, 0
  %v9646 = vsel %vm9634, 1, 0
  %v9647 = vsel %vm9635, 1, 0
  %v9648 = vsel %vm9636, 1, 0
  %v9649 = vsel %vm9637, 1, 0
  %v9650 = vsel %vm9638, 1, 0
  %v9651 = vsel %vm9639, 1, 0
  %v9652 = vsel %vm9640, 1, 0
  %v9653 = vsel %vm9641, 1, 0
  %v9654 = vsel %vm9642, 1, 0
  %v9655 = vsel %vm9643, 1, 0
  %v9656 = vsel %vm9644, 1, 0
  %v9657 = vcvt.s32.f32 %v9645
  %v9658 = vcvt.s32.f32 %v9646
  %v9659 = vcvt.s32.f32 %v9647
  %v9660 = vcvt.s32.f32 %v9648
  %v9661 = vcvt.s32.f32 %v9649
  %v9662 = vcvt.s32.f32 %v9650
  %v9663 = vcvt.s32.f32 %v9651
  %v9664 = vcvt.s32.f32 %v9652
  %v9665 = vcvt.s32.f32 %v9653
  %v9666 = vcvt.s32.f32 %v9654
  %v9667 = vcvt.s32.f32 %v9655
  %v9668 = vcvt.s32.f32 %v9656
  %v9669 = vsub.f32 1.0, %v9657
  %v9670 = vsub.f32 1.0, %v9658
  %v9671 = vsub.f32 1.0, %v9659
  %v9672 = vsub.f32 1.0, %v9660
  %v9673 = vsub.f32 1.0, %v9661
  %v9674 = vsub.f32 1.0, %v9662
  %v9675 = vsub.f32 1.0, %v9663
  %v9676 = vsub.f32 1.0, %v9664
  %v9677 = vsub.f32 1.0, %v9665
  %v9678 = vsub.f32 1.0, %v9666
  %v9679 = vsub.f32 1.0, %v9667
  %v9680 = vsub.f32 1.0, %v9668
  %v9681 = vmul.f32 %v9621, %v9669
  %v9682 = vmul.f32 %v9622, %v9670
  %v9683 = vmul.f32 %v9623, %v9671
  %v9684 = vmul.f32 %v9624, %v9672
  %v9685 = vmul.f32 %v9625, %v9673
  %v9686 = vmul.f32 %v9626, %v9674
  %v9687 = vmul.f32 %v9627, %v9675
  %v9688 = vmul.f32 %v9628, %v9676
  %v9689 = vmul.f32 %v9629, %v9677
  %v9690 = vmul.f32 %v9630, %v9678
  %v9691 = vmul.f32 %v9631, %v9679
  %v9692 = vmul.f32 %v9632, %v9680
  %9693 = vst [vmem:[#allocation7] sm:$0xff] %v9681
  %9694 = vst [vmem:[#allocation7 + $0x8] sm:$0xff] %v9682
  %9695 = vst [vmem:[#allocation7 + $0x10] sm:$0xff] %v9683
  %9696 = vst [vmem:[#allocation7 + $0x18] sm:$0xff] %v9684
  %9697 = vst [vmem:[#allocation7 + $0x20] sm:$0xff] %v9685
  %9698 = vst [vmem:[#allocation7 + $0x28] sm:$0xff] %v9686
  %9699 = vst [vmem:[#allocation7 + $0x30] sm:$0xff] %v9687
  %9700 = vst [vmem:[#allocation7 + $0x38] sm:$0xff] %v9688
  %9701 = vst [vmem:[#allocation7 + $0x40] sm:$0xff] %v9689
  %9702 = vst [vmem:[#allocation7 + $0x48] sm:$0xff] %v9690
  %9703 = vst [vmem:[#allocation7 + $0x50] sm:$0xff] %v9691
  %9704 = vst [vmem:[#allocation7 + $0x58] sm:$0xff] %v9692
  %v9705 = vmul.f32 %v9665, %v278
  %v9706 = vmul.f32 %v9666, %v279
  %v9707 = vmul.f32 %v9667, %v280
  %v9708 = vmul.f32 %v9668, %v281
  %9709 = vmatprep.subr.mxu0 0.0
  %9710 = vmatpush1.xpose.msra.mxu0 %v9661
  %9711 = vmatprep.subr.mxu0 0.0
  %9712 = vmatpush1.xpose.msra.mxu0 %v9662
  %9713 = vmatprep.subr.mxu0 0.0
  %9714 = vmatpush1.xpose.msra.mxu0 %v9663
  %9715 = vmatprep.subr.mxu0 0.0
  %9716 = vmatpush1.xpose.msra.mxu0 %v9664
  %9717 = vmatprep.subr.mxu0 0.0
  %9718 = vmatpush1.xpose.msra.mxu0 0.0
  %9719 = vmatprep.subr.mxu0 0.0
  %9720 = vmatpush1.xpose.msra.mxu0 0.0
  %9721 = vmatprep.subr.mxu0 0.0
  %9722 = vmatpush1.xpose.msra.mxu0 0.0
  %9723 = vmatprep.subr.mxu0 0.0
  %9724 = vmatpush1.xpose.msra.mxu0 0.0
  %9725 = vmatprep.subr.mxu0 0.0
  %9726 = vmatpush1.xpose.msra.mxu0 0.0
  %9727 = vmatprep.subr.mxu0 0.0
  %9728 = vmatpush1.xpose.msra.mxu0 0.0
  %9729 = vmatprep.subr.mxu0 0.0
  %9730 = vmatpush1.xpose.msra.mxu0 0.0
  %9731 = vmatprep.subr.mxu0 0.0
  %9732 = vmatpush1.xpose.msra.mxu0 0.0
  %9733 = vmatprep.subr.mxu0 0.0
  %9734 = vmatpush1.xpose.msra.mxu0 0.0
  %9735 = vmatprep.subr.mxu0 0.0
  %9736 = vmatpush1.xpose.msra.mxu0 0.0
  %9737 = vmatprep.subr.mxu0 0.0
  %9738 = vmatpush1.xpose.msra.mxu0 0.0
  %9739 = vmatprep.subr.mxu0 0.0
  %9740 = vmatpush1.xpose.msra.mxu0 0.0
  %9741 = vmatprep.subr.mxu0 0.0
  %9742 = vmatpush1.xpose.msra.mxu0 0.0
  %9743 = vmatprep.subr.mxu0 0.0
  %9744 = vmatpush1.xpose.msra.mxu0 0.0
  %9745 = vmatprep.subr.mxu0 0.0
  %9746 = vmatpush1.xpose.msra.mxu0 0.0
  %9747 = vmatprep.subr.mxu0 0.0
  %9748 = vmatpush1.xpose.msra.mxu0 0.0
  %9749 = vmatprep.subr.mxu0 0.0
  %9750 = vmatpush1.xpose.msra.mxu0 0.0
  %9751 = vmatprep.subr.mxu0 0.0
  %9752 = vmatpush1.xpose.msra.mxu0 0.0
  %9753 = vmatprep.subr.mxu0 0.0
  %9754 = vmatpush1.xpose.msra.mxu0 0.0
  %9755 = vmatprep.subr.mxu0 0.0
  %9756 = vmatpush1.xpose.msra.mxu0 0.0
  %9757 = vmatprep.subr.mxu0 0.0
  %9758 = vmatpush1.xpose.msra.mxu0 0.0
  %9759 = vmatprep.subr.mxu0 0.0
  %9760 = vmatpush1.xpose.msra.mxu0 0.0
  %9761 = vmatprep.subr.mxu0 0.0
  %9762 = vmatpush1.xpose.msra.mxu0 0.0
  %9763 = vmatprep.subr.mxu0 0.0
  %9764 = vmatpush1.xpose.msra.mxu0 0.0
  %9765 = vmatprep.subr.mxu0 0.0
  %9766 = vmatpush1.xpose.msra.mxu0 0.0
  %9767 = vmatprep.subr.mxu0 0.0
  %9768 = vmatpush1.xpose.msra.mxu0 0.0
  %9769 = vmatprep.subr.mxu0 0.0
  %9770 = vmatpush1.xpose.msra.mxu0 0.0
  %9771 = vmatprep.subr.mxu0 0.0
  %9772 = vmatpush1.xpose.msra.mxu0 0.0
  %9773 = vmatprep.mubr.f32.mxu0 0.0
  %9774 = vmatmul.mubr.f32.gmra.mrb[0].mxu0 %v9705
  %v9775 = vpop.f32.mrb[0].mxu0
  %v9776 = vadd.f32 0.0, %v9775
  %v9777 = vpop.f32.mrb[0].mxu0
  %9778 = vmatprep.mubr.f32.mxu0 0.0
  %9779 = vmatmul.mubr.f32.gmra.mrb[0].mxu0 %v9706
  %v9780 = vpop.f32.mrb[0].mxu0
  %v9781 = vadd.f32 0.0, %v9780
  %v9782 = vpop.f32.mrb[0].mxu0
  %9783 = vmatprep.mubr.f32.mxu0 0.0
  %9784 = vmatmul.mubr.f32.gmra.mrb[0].mxu0 %v9707
  %v9785 = vpop.f32.mrb[0].mxu0
  %v9786 = vadd.f32 0.0, %v9785
  %v9787 = vpop.f32.mrb[0].mxu0
  %9788 = vmatprep.mubr.f32.mxu0 0.0
  %9789 = vmatmul.mubr.f32.gmra.mrb[0].mxu0 %v9708
  %v9790 = vpop.f32.mrb[0].mxu0
  %v9791 = vadd.f32 0.0, %v9790
  %v9792 = vpop.f32.mrb[0].mxu0
  %9793 = vdwg.mxu0
  %v9794 = vmul.f32 %v9776, %v274
  %v9795 = vmul.f32 %v9781, %v275
  %v9796 = vmul.f32 %v9786, %v276
  %v9797 = vmul.f32 %v9791, %v277
  %v9799 = vsel %vm791, %v9794, 0
  %v9802 = vsel %vm791, %v9795, 0
  %v9805 = vsel %vm791, %v9796, 0
  %v9808 = vsel %vm791, %v9797, 0
  %9810 = vmatprep.subr.mxu0 0.0
  %9811 = vmatpush1.msra.mxu0 %v9657
  %9812 = vmatprep.subr.mxu0 0.0
  %9813 = vmatpush1.msra.mxu0 %v9658
  %9814 = vmatprep.subr.mxu0 0.0
  %9815 = vmatpush1.msra.mxu0 %v9659
  %9816 = vmatprep.subr.mxu0 0.0
  %9817 = vmatpush1.msra.mxu0 %v9660
  %9818 = vmatprep.subr.mxu0 0.0
  %9819 = vmatpush1.msra.mxu0 0.0
  %9820 = vmatprep.subr.mxu0 0.0
  %9821 = vmatpush1.msra.mxu0 0.0
  %9822 = vmatprep.subr.mxu0 0.0
  %9823 = vmatpush1.msra.mxu0 0.0
  %9824 = vmatprep.subr.mxu0 0.0
  %9825 = vmatpush1.msra.mxu0 0.0
  %9826 = vmatprep.subr.mxu0 0.0
  %9827 = vmatpush1.msra.mxu0 0.0
  %9828 = vmatprep.subr.mxu0 0.0
  %9829 = vmatpush1.msra.mxu0 0.0
  %9830 = vmatprep.subr.mxu0 0.0
  %9831 = vmatpush1.msra.mxu0 0.0
  %9832 = vmatprep.subr.mxu0 0.0
  %9833 = vmatpush1.msra.mxu0 0.0
  %9834 = vmatprep.subr.mxu0 0.0
  %9835 = vmatpush1.msra.mxu0 0.0
  %9836 = vmatprep.subr.mxu0 0.0
  %9837 = vmatpush1.msra.mxu0 0.0
  %9838 = vmatprep.subr.mxu0 0.0
  %9839 = vmatpush1.msra.mxu0 0.0
  %9840 = vmatprep.subr.mxu0 0.0
  %9841 = vmatpush1.msra.mxu0 0.0
  %9842 = vmatprep.subr.mxu0 0.0
  %9843 = vmatpush1.msra.mxu0 0.0
  %9844 = vmatprep.subr.mxu0 0.0
  %9845 = vmatpush1.msra.mxu0 0.0
  %9846 = vmatprep.subr.mxu0 0.0
  %9847 = vmatpush1.msra.mxu0 0.0
  %9848 = vmatprep.subr.mxu0 0.0
  %9849 = vmatpush1.msra.mxu0 0.0
  %9850 = vmatprep.subr.mxu0 0.0
  %9851 = vmatpush1.msra.mxu0 0.0
  %9852 = vmatprep.subr.mxu0 0.0
  %9853 = vmatpush1.msra.mxu0 0.0
  %9854 = vmatprep.subr.mxu0 0.0
  %9855 = vmatpush1.msra.mxu0 0.0
  %9856 = vmatprep.subr.mxu0 0.0
  %9857 = vmatpush1.msra.mxu0 0.0
  %9858 = vmatprep.subr.mxu0 0.0
  %9859 = vmatpush1.msra.mxu0 0.0
  %9860 = vmatprep.subr.mxu0 0.0
  %9861 = vmatpush1.msra.mxu0 0.0
  %9862 = vmatprep.subr.mxu0 0.0
  %9863 = vmatpush1.msra.mxu0 0.0
  %9864 = vmatprep.subr.mxu0 0.0
  %9865 = vmatpush1.msra.mxu0 0.0
  %9866 = vmatprep.subr.mxu0 0.0
  %9867 = vmatpush1.msra.mxu0 0.0
  %9868 = vmatprep.subr.mxu0 0.0
  %9869 = vmatpush1.msra.mxu0 0.0
  %9870 = vmatprep.subr.mxu0 0.0
  %9871 = vmatpush1.msra.mxu0 0.0
  %9872 = vmatprep.subr.mxu0 0.0
  %9873 = vmatpush1.msra.mxu0 0.0
  %9874 = vmatprep.mubr.f32.mxu0 0.0
  %9875 = vmatmul.mubr.f32.gmra.mrb[0].mxu0 %v9799
  %v9876 = vpop.f32.mrb[0].mxu0
  %v9877 = vadd.f32 0.0, %v9876
  %v9878 = vpop.f32.mrb[0].mxu0
  %9879 = vmatprep.mubr.f32.mxu0 0.0
  %9880 = vmatmul.mubr.f32.gmra.mrb[0].mxu0 %v9802
  %v9881 = vpop.f32.mrb[0].mxu0
  %v9882 = vadd.f32 0.0, %v9881
  %v9883 = vpop.f32.mrb[0].mxu0
  %9884 = vmatprep.mubr.f32.mxu0 0.0
  %9885 = vmatmul.mubr.f32.gmra.mrb[0].mxu0 %v9805
  %v9886 = vpop.f32.mrb[0].mxu0
  %v9887 = vadd.f32 0.0, %v9886
  %v9888 = vpop.f32.mrb[0].mxu0
  %9889 = vmatprep.mubr.f32.mxu0 0.0
  %9890 = vmatmul.mubr.f32.gmra.mrb[0].mxu0 %v9808
  %v9891 = vpop.f32.mrb[0].mxu0
  %v9892 = vadd.f32 0.0, %v9891
  %v9893 = vpop.f32.mrb[0].mxu0
  %9894 = vdwg.mxu0
  %v9895 = vmul.f32 %v9877, %v278
  %v9896 = vmul.f32 %v9882, %v279
  %v9897 = vmul.f32 %v9887, %v280
  %v9898 = vmul.f32 %v9892, %v281
  %v9899 = vmul.f32 %v9665, %v283
  %v9900 = vmul.f32 %v9666, %v284
  %v9901 = vmul.f32 %v9667, %v285
  %v9902 = vmul.f32 %v9668, %v286
  %9903 = vmatprep.subr.mxu0 0.0
  %9904 = vmatpush1.xpose.msra.mxu0 %v9661
  %9905 = vmatprep.subr.mxu0 0.0
  %9906 = vmatpush1.xpose.msra.mxu0 %v9662
  %9907 = vmatprep.subr.mxu0 0.0
  %9908 = vmatpush1.xpose.msra.mxu0 %v9663
  %9909 = vmatprep.subr.mxu0 0.0
  %9910 = vmatpush1.xpose.msra.mxu0 %v9664
  %9911 = vmatprep.subr.mxu0 0.0
  %9912 = vmatpush1.xpose.msra.mxu0 0.0
  %9913 = vmatprep.subr.mxu0 0.0
  %9914 = vmatpush1.xpose.msra.mxu0 0.0
  %9915 = vmatprep.subr.mxu0 0.0
  %9916 = vmatpush1.xpose.msra.mxu0 0.0
  %9917 = vmatprep.subr.mxu0 0.0
  %9918 = vmatpush1.xpose.msra.mxu0 0.0
  %9919 = vmatprep.subr.mxu0 0.0
  %9920 = vmatpush1.xpose.msra.mxu0 0.0
  %9921 = vmatprep.subr.mxu0 0.0
  %9922 = vmatpush1.xpose.msra.mxu0 0.0
  %9923 = vmatprep.subr.mxu0 0.0
  %9924 = vmatpush1.xpose.msra.mxu0 0.0
  %9925 = vmatprep.subr.mxu0 0.0
  %9926 = vmatpush1.xpose.msra.mxu0 0.0
  %9927 = vmatprep.subr.mxu0 0.0
  %9928 = vmatpush1.xpose.msra.mxu0 0.0
  %9929 = vmatprep.subr.mxu0 0.0
  %9930 = vmatpush1.xpose.msra.mxu0 0.0
  %9931 = vmatprep.subr.mxu0 0.0
  %9932 = vmatpush1.xpose.msra.mxu0 0.0
  %9933 = vmatprep.subr.mxu0 0.0
  %9934 = vmatpush1.xpose.msra.mxu0 0.0
  %9935 = vmatprep.subr.mxu0 0.0
  %9936 = vmatpush1.xpose.msra.mxu0 0.0
  %9937 = vmatprep.subr.mxu0 0.0
  %9938 = vmatpush1.xpose.msra.mxu0 0.0
  %9939 = vmatprep.subr.mxu0 0.0
  %9940 = vmatpush1.xpose.msra.mxu0 0.0
  %9941 = vmatprep.subr.mxu0 0.0
  %9942 = vmatpush1.xpose.msra.mxu0 0.0
  %9943 = vmatprep.subr.mxu0 0.0
  %9944 = vmatpush1.xpose.msra.mxu0 0.0
  %9945 = vmatprep.subr.mxu0 0.0
  %9946 = vmatpush1.xpose.msra.mxu0 0.0
  %9947 = vmatprep.subr.mxu0 0.0
  %9948 = vmatpush1.xpose.msra.mxu0 0.0
  %9949 = vmatprep.subr.mxu0 0.0
  %9950 = vmatpush1.xpose.msra.mxu0 0.0
  %9951 = vmatprep.subr.mxu0 0.0
  %9952 = vmatpush1.xpose.msra.mxu0 0.0
  %9953 = vmatprep.subr.mxu0 0.0
  %9954 = vmatpush1.xpose.msra.mxu0 0.0
  %9955 = vmatprep.subr.mxu0 0.0
  %9956 = vmatpush1.xpose.msra.mxu0 0.0
  %9957 = vmatprep.subr.mxu0 0.0
  %9958 = vmatpush1.xpose.msra.mxu0 0.0
  %9959 = vmatprep.subr.mxu0 0.0
  %9960 = vmatpush1.xpose.msra.mxu0 0.0
  %9961 = vmatprep.subr.mxu0 0.0
  %9962 = vmatpush1.xpose.msra.mxu0 0.0
  %9963 = vmatprep.subr.mxu0 0.0
  %9964 = vmatpush1.xpose.msra.mxu0 0.0
  %9965 = vmatprep.subr.mxu0 0.0
  %9966 = vmatpush1.xpose.msra.mxu0 0.0
  %9967 = vmatprep.mubr.f32.mxu0 0.0
  %9968 = vmatmul.mubr.f32.gmra.mrb[0].mxu0 %v9899
  %v9969 = vpop.f32.mrb[0].mxu0
  %v9970 = vadd.f32 0.0, %v9969
  %v9971 = vpop.f32.mrb[0].mxu0
  %9972 = vmatprep.mubr.f32.mxu0 0.0
  %9973 = vmatmul.mubr.f32.gmra.mrb[0].mxu0 %v9900
  %v9974 = vpop.f32.mrb[0].mxu0
  %v9975 = vadd.f32 0.0, %v9974
  %v9976 = vpop.f32.mrb[0].mxu0
  %9977 = vmatprep.mubr.f32.mxu0 0.0
  %9978 = vmatmul.mubr.f32.gmra.mrb[0].mxu0 %v9901
  %v9979 = vpop.f32.mrb[0].mxu0
  %v9980 = vadd.f32 0.0, %v9979
  %v9981 = vpop.f32.mrb[0].mxu0
  %9982 = vmatprep.mubr.f32.mxu0 0.0
  %9983 = vmatmul.mubr.f32.gmra.mrb[0].mxu0 %v9902
  %v9984 = vpop.f32.mrb[0].mxu0
  %v9985 = vadd.f32 0.0, %v9984
  %v9986 = vpop.f32.mrb[0].mxu0
  %9987 = vdwg.mxu0
  %v9988 = vmul.f32 %v9970, %v274
  %v9989 = vmul.f32 %v9975, %v275
  %v9990 = vmul.f32 %v9980, %v276
  %v9991 = vmul.f32 %v9985, %v277
  %v9993 = vsel %vm791, %v9988, 0
  %v9996 = vsel %vm791, %v9989, 0
  %v9999 = vsel %vm791, %v9990, 0
  %v10002 = vsel %vm791, %v9991, 0
  %10004 = vmatprep.subr.mxu0 0.0
  %10005 = vmatpush1.msra.mxu0 %v9657
  %10006 = vmatprep.subr.mxu0 0.0
  %10007 = vmatpush1.msra.mxu0 %v9658
  %10008 = vmatprep.subr.mxu0 0.0
  %10009 = vmatpush1.msra.mxu0 %v9659
  %10010 = vmatprep.subr.mxu0 0.0
  %10011 = vmatpush1.msra.mxu0 %v9660
  %10012 = vmatprep.subr.mxu0 0.0
  %10013 = vmatpush1.msra.mxu0 0.0
  %10014 = vmatprep.subr.mxu0 0.0
  %10015 = vmatpush1.msra.mxu0 0.0
  %10016 = vmatprep.subr.mxu0 0.0
  %10017 = vmatpush1.msra.mxu0 0.0
  %10018 = vmatprep.subr.mxu0 0.0
  %10019 = vmatpush1.msra.mxu0 0.0
  %10020 = vmatprep.subr.mxu0 0.0
  %10021 = vmatpush1.msra.mxu0 0.0
  %10022 = vmatprep.subr.mxu0 0.0
  %10023 = vmatpush1.msra.mxu0 0.0
  %10024 = vmatprep.subr.mxu0 0.0
  %10025 = vmatpush1.msra.mxu0 0.0
  %10026 = vmatprep.subr.mxu0 0.0
  %10027 = vmatpush1.msra.mxu0 0.0
  %10028 = vmatprep.subr.mxu0 0.0
  %10029 = vmatpush1.msra.mxu0 0.0
  %10030 = vmatprep.subr.mxu0 0.0
  %10031 = vmatpush1.msra.mxu0 0.0
  %10032 = vmatprep.subr.mxu0 0.0
  %10033 = vmatpush1.msra.mxu0 0.0
  %10034 = vmatprep.subr.mxu0 0.0
  %10035 = vmatpush1.msra.mxu0 0.0
  %10036 = vmatprep.subr.mxu0 0.0
  %10037 = vmatpush1.msra.mxu0 0.0
  %10038 = vmatprep.subr.mxu0 0.0
  %10039 = vmatpush1.msra.mxu0 0.0
  %10040 = vmatprep.subr.mxu0 0.0
  %10041 = vmatpush1.msra.mxu0 0.0
  %10042 = vmatprep.subr.mxu0 0.0
  %10043 = vmatpush1.msra.mxu0 0.0
  %10044 = vmatprep.subr.mxu0 0.0
  %10045 = vmatpush1.msra.mxu0 0.0
  %10046 = vmatprep.subr.mxu0 0.0
  %10047 = vmatpush1.msra.mxu0 0.0
  %10048 = vmatprep.subr.mxu0 0.0
  %10049 = vmatpush1.msra.mxu0 0.0
  %10050 = vmatprep.subr.mxu0 0.0
  %10051 = vmatpush1.msra.mxu0 0.0
  %10052 = vmatprep.subr.mxu0 0.0
  %10053 = vmatpush1.msra.mxu0 0.0
  %10054 = vmatprep.subr.mxu0 0.0
  %10055 = vmatpush1.msra.mxu0 0.0
  %10056 = vmatprep.subr.mxu0 0.0
  %10057 = vmatpush1.msra.mxu0 0.0
  %10058 = vmatprep.subr.mxu0 0.0
  %10059 = vmatpush1.msra.mxu0 0.0
  %10060 = vmatprep.subr.mxu0 0.0
  %10061 = vmatpush1.msra.mxu0 0.0
  %10062 = vmatprep.subr.mxu0 0.0
  %10063 = vmatpush1.msra.mxu0 0.0
  %10064 = vmatprep.subr.mxu0 0.0
  %10065 = vmatpush1.msra.mxu0 0.0
  %10066 = vmatprep.subr.mxu0 0.0
  %10067 = vmatpush1.msra.mxu0 0.0
  %10068 = vmatprep.mubr.f32.mxu0 0.0
  %10069 = vmatmul.mubr.f32.gmra.mrb[0].mxu0 %v9993
  %v10070 = vpop.f32.mrb[0].mxu0
  %v10071 = vadd.f32 0.0, %v10070
  %v10072 = vpop.f32.mrb[0].mxu0
  %10073 = vmatprep.mubr.f32.mxu0 0.0
  %10074 = vmatmul.mubr.f32.gmra.mrb[0].mxu0 %v9996
  %v10075 = vpop.f32.mrb[0].mxu0
  %v10076 = vadd.f32 0.0, %v10075
  %v10077 = vpop.f32.mrb[0].mxu0
  %10078 = vmatprep.mubr.f32.mxu0 0.0
  %10079 = vmatmul.mubr.f32.gmra.mrb[0].mxu0 %v9999
  %v10080 = vpop.f32.mrb[0].mxu0
  %v10081 = vadd.f32 0.0, %v10080
  %v10082 = vpop.f32.mrb[0].mxu0
  %10083 = vmatprep.mubr.f32.mxu0 0.0
  %10084 = vmatmul.mubr.f32.gmra.mrb[0].mxu0 %v10002
  %v10085 = vpop.f32.mrb[0].mxu0
  %v10086 = vadd.f32 0.0, %v10085
  %v10087 = vpop.f32.mrb[0].mxu0
  %10088 = vdwg.mxu0
  %v10089 = vmul.f32 %v10071, %v283
  %v10090 = vmul.f32 %v10076, %v284
  %v10091 = vmul.f32 %v10081, %v285
  %v10092 = vmul.f32 %v10086, %v286
  %v10093 = vadd.f32 %v9895, %v10089
  %v10094 = vadd.f32 %v9896, %v10090
  %v10095 = vadd.f32 %v9897, %v10091
  %v10096 = vadd.f32 %v9898, %v10092
  %v10097 = vmul.f32 %v10093, 0.125
  %v10098 = vmul.f32 %v10094, 0.125
  %v10099 = vmul.f32 %v10095, 0.125
  %v10100 = vmul.f32 %v10096, 0.125
  %v10101 = vld [vmem:[#allocation8] sm:$0xff]
  %v10102 = vld [vmem:[#allocation8 + $0x8] sm:$0xff]
  %v10103 = vld [vmem:[#allocation8 + $0x10] sm:$0xff]
  %v10104 = vld [vmem:[#allocation8 + $0x18] sm:$0xff]
  %v10105 = vsub.f32 %v10097, %v10101
  %v10106 = vsub.f32 %v10098, %v10102
  %v10107 = vsub.f32 %v10099, %v10103
  %v10108 = vsub.f32 %v10100, %v10104
  %v10109 = vmul.f32 %v10105, 0.5
  %v10110 = vmul.f32 %v10106, 0.5
  %v10111 = vmul.f32 %v10107, 0.5
  %v10112 = vmul.f32 %v10108, 0.5
  %v10113 = vadd.f32 %v10101, %v10109
  %v10114 = vadd.f32 %v10102, %v10110
  %v10115 = vadd.f32 %v10103, %v10111
  %v10116 = vadd.f32 %v10104, %v10112
  %vm10117 = vcmp.ge.f32.partialorder %v10113, 0.5
  %vm10118 = vcmp.ge.f32.partialorder %v10114, 0.5
  %vm10119 = vcmp.ge.f32.partialorder %v10115, 0.5
  %vm10120 = vcmp.ge.f32.partialorder %v10116, 0.5
  %v10121 = vsel %vm10117, 1, 0
  %v10122 = vsel %vm10118, 1, 0
  %v10123 = vsel %vm10119, 1, 0
  %v10124 = vsel %vm10120, 1, 0
  %v10125 = vcvt.s32.f32 %v10121
  %v10126 = vcvt.s32.f32 %v10122
  %v10127 = vcvt.s32.f32 %v10123
  %v10128 = vcvt.s32.f32 %v10124
  %v10129 = vsub.f32 1.0, %v10125
  %v10130 = vsub.f32 1.0, %v10126
  %v10131 = vsub.f32 1.0, %v10127
  %v10132 = vsub.f32 1.0, %v10128
  %v10133 = vmul.f32 %v10113, %v10129
  %v10134 = vmul.f32 %v10114, %v10130
  %v10135 = vmul.f32 %v10115, %v10131
  %v10136 = vmul.f32 %v10116, %v10132
  %10137 = vst [vmem:[#allocation8] sm:$0xff] %v10133
  %10138 = vst [vmem:[#allocation8 + $0x8] sm:$0xff] %v10134
  %10139 = vst [vmem:[#allocation8 + $0x10] sm:$0xff] %v10135
  %10140 = vst [vmem:[#allocation8 + $0x18] sm:$0xff] %v10136
  %10141 = vmatprep.subr.mxu0 0.0
  %10142 = vmatpush1.msra.mxu0 %v10125
  %10143 = vmatprep.subr.mxu0 0.0
  %10144 = vmatpush1.msra.mxu0 %v10126
  %10145 = vmatprep.subr.mxu0 0.0
  %10146 = vmatpush1.msra.mxu0 %v10127
  %10147 = vmatprep.subr.mxu0 0.0
  %10148 = vmatpush1.msra.mxu0 %v10128
  %10149 = vmatprep.subr.mxu0 0.0
  %10150 = vmatpush1.msra.mxu0 0.0
  %10151 = vmatprep.subr.mxu0 0.0
  %10152 = vmatpush1.msra.mxu0 0.0
  %10153 = vmatprep.subr.mxu0 0.0
  %10154 = vmatpush1.msra.mxu0 0.0
  %10155 = vmatprep.subr.mxu0 0.0
  %10156 = vmatpush1.msra.mxu0 0.0
  %10157 = vmatprep.subr.mxu0 0.0
  %10158 = vmatpush1.msra.mxu0 0.0
  %10159 = vmatprep.subr.mxu0 0.0
  %10160 = vmatpush1.msra.mxu0 0.0
  %10161 = vmatprep.subr.mxu0 0.0
  %10162 = vmatpush1.msra.mxu0 0.0
  %10163 = vmatprep.subr.mxu0 0.0
  %10164 = vmatpush1.msra.mxu0 0.0
  %10165 = vmatprep.subr.mxu0 0.0
  %10166 = vmatpush1.msra.mxu0 0.0
  %10167 = vmatprep.subr.mxu0 0.0
  %10168 = vmatpush1.msra.mxu0 0.0
  %10169 = vmatprep.subr.mxu0 0.0
  %10170 = vmatpush1.msra.mxu0 0.0
  %10171 = vmatprep.subr.mxu0 0.0
  %10172 = vmatpush1.msra.mxu0 0.0
  %10173 = vmatprep.subr.mxu0 0.0
  %10174 = vmatpush1.msra.mxu0 0.0
  %10175 = vmatprep.subr.mxu0 0.0
  %10176 = vmatpush1.msra.mxu0 0.0
  %10177 = vmatprep.subr.mxu0 0.0
  %10178 = vmatpush1.msra.mxu0 0.0
  %10179 = vmatprep.subr.mxu0 0.0
  %10180 = vmatpush1.msra.mxu0 0.0
  %10181 = vmatprep.subr.mxu0 0.0
  %10182 = vmatpush1.msra.mxu0 0.0
  %10183 = vmatprep.subr.mxu0 0.0
  %10184 = vmatpush1.msra.mxu0 0.0
  %10185 = vmatprep.subr.mxu0 0.0
  %10186 = vmatpush1.msra.mxu0 0.0
  %10187 = vmatprep.subr.mxu0 0.0
  %10188 = vmatpush1.msra.mxu0 0.0
  %10189 = vmatprep.subr.mxu0 0.0
  %10190 = vmatpush1.msra.mxu0 0.0
  %10191 = vmatprep.subr.mxu0 0.0
  %10192 = vmatpush1.msra.mxu0 0.0
  %10193 = vmatprep.subr.mxu0 0.0
  %10194 = vmatpush1.msra.mxu0 0.0
  %10195 = vmatprep.subr.mxu0 0.0
  %10196 = vmatpush1.msra.mxu0 0.0
  %10197 = vmatprep.subr.mxu0 0.0
  %10198 = vmatpush1.msra.mxu0 0.0
  %10199 = vmatprep.subr.mxu0 0.0
  %10200 = vmatpush1.msra.mxu0 0.0
  %10201 = vmatprep.subr.mxu0 0.0
  %10202 = vmatpush1.msra.mxu0 0.0
  %10203 = vmatprep.subr.mxu0 0.0
  %10204 = vmatpush1.msra.mxu0 0.0
  %10205 = vmatprep.mubr.f32.mxu0 0.0
  %10206 = vmatmul.mubr.f32.gmra.mrb[0].mxu0 %v2682
  %v10207 = vpop.f32.mrb[0].mxu0
  %v10208 = vadd.f32 %v674, %v10207
  %v10209 = vpop.f32.mrb[0].mxu0
  %10210 = vmatprep.mubr.f32.mxu0 0.0
  %10211 = vmatmul.mubr.f32.gmra.mrb[0].mxu0 %v2685
  %v10212 = vpop.f32.mrb[0].mxu0
  %v10213 = vadd.f32 %v679, %v10212
  %v10214 = vpop.f32.mrb[0].mxu0
  %10215 = vmatprep.mubr.f32.mxu0 0.0
  %10216 = vmatmul.mubr.f32.gmra.mrb[0].mxu0 %v2688
  %v10217 = vpop.f32.mrb[0].mxu0
  %v10218 = vadd.f32 %v684, %v10217
  %v10219 = vpop.f32.mrb[0].mxu0
  %10220 = vmatprep.mubr.f32.mxu0 0.0
  %10221 = vmatmul.mubr.f32.gmra.mrb[0].mxu0 %v2691
  %v10222 = vpop.f32.mrb[0].mxu0
  %v10223 = vadd.f32 %v689, %v10222
  %v10224 = vpop.f32.mrb[0].mxu0
  %10225 = vdwg.mxu0
  %v10226 = vld [vmem:[#allocation9] sm:$0xff]
  %v10227 = vld [vmem:[#allocation9 + $0x8] sm:$0xff]
  %v10228 = vld [vmem:[#allocation9 + $0x10] sm:$0xff]
  %v10229 = vld [vmem:[#allocation9 + $0x18] sm:$0xff]
  %v10230 = vsub.f32 %v10208, %v10226
  %v10231 = vsub.f32 %v10213, %v10227
  %v10232 = vsub.f32 %v10218, %v10228
  %v10233 = vsub.f32 %v10223, %v10229
  %v10234 = vmul.f32 %v10230, 0.5
  %v10235 = vmul.f32 %v10231, 0.5
  %v10236 = vmul.f32 %v10232, 0.5
  %v10237 = vmul.f32 %v10233, 0.5
  %v10238 = vadd.f32 %v10226, %v10234
  %v10239 = vadd.f32 %v10227, %v10235
  %v10240 = vadd.f32 %v10228, %v10236
  %v10241 = vadd.f32 %v10229, %v10237
  %vm10242 = vcmp.ge.f32.partialorder %v10238, 1.0
  %vm10243 = vcmp.ge.f32.partialorder %v10239, 1.0
  %vm10244 = vcmp.ge.f32.partialorder %v10240, 1.0
  %vm10245 = vcmp.ge.f32.partialorder %v10241, 1.0
  %v10246 = vsel %vm10242, 1, 0
  %v10247 = vsel %vm10243, 1, 0
  %v10248 = vsel %vm10244, 1, 0
  %v10249 = vsel %vm10245, 1, 0
  %v10250 = vcvt.s32.f32 %v10246
  %v10251 = vcvt.s32.f32 %v10247
  %v10252 = vcvt.s32.f32 %v10248
  %v10253 = vcvt.s32.f32 %v10249
  %v10254 = vsub.f32 1.0, %v10250
  %v10255 = vsub.f32 1.0, %v10251
  %v10256 = vsub.f32 1.0, %v10252
  %v10257 = vsub.f32 1.0, %v10253
  %v10258 = vmul.f32 %v10238, %v10254
  %v10259 = vmul.f32 %v10239, %v10255
  %v10260 = vmul.f32 %v10240, %v10256
  %v10261 = vmul.f32 %v10241, %v10257
  %10262 = vst [vmem:[#allocation9] sm:$0xff] %v10258
  %10263 = vst [vmem:[#allocation9 + $0x8] sm:$0xff] %v10259
  %10264 = vst [vmem:[#allocation9 + $0x10] sm:$0xff] %v10260
  %10265 = vst [vmem:[#allocation9 + $0x18] sm:$0xff] %v10261
  %v10266 = vadd.f32 %v9456, %v10250
  %v10267 = vadd.f32 %v9457, %v10251
  %v10268 = vadd.f32 %v9458, %v10252
  %v10269 = vadd.f32 %v9459, %v10253
  %10270 = vmatprep.subr.mxu0 0.0
  %10271 = vmatpush1.msra.mxu0 %v10266
  %10272 = vmatprep.subr.mxu0 0.0
  %10273 = vmatpush1.msra.mxu0 %v10267
  %10274 = vmatprep.subr.mxu0 0.0
  %10275 = vmatpush1.msra.mxu0 %v10268
  %10276 = vmatprep.subr.mxu0 0.0
  %10277 = vmatpush1.msra.mxu0 %v10269
  %10278 = vmatprep.subr.mxu0 0.0
  %10279 = vmatpush1.msra.mxu0 0.0
  %10280 = vmatprep.subr.mxu0 0.0
  %10281 = vmatpush1.msra.mxu0 0.0
  %10282 = vmatprep.subr.mxu0 0.0
  %10283 = vmatpush1.msra.mxu0 0.0
  %10284 = vmatprep.subr.mxu0 0.0
  %10285 = vmatpush1.msra.mxu0 0.0
  %10286 = vmatprep.subr.mxu0 0.0
  %10287 = vmatpush1.msra.mxu0 0.0
  %10288 = vmatprep.subr.mxu0 0.0
  %10289 = vmatpush1.msra.mxu0 0.0
  %10290 = vmatprep.subr.mxu0 0.0
  %10291 = vmatpush1.msra.mxu0 0.0
  %10292 = vmatprep.subr.mxu0 0.0
  %10293 = vmatpush1.msra.mxu0 0.0
  %10294 = vmatprep.subr.mxu0 0.0
  %10295 = vmatpush1.msra.mxu0 0.0
  %10296 = vmatprep.subr.mxu0 0.0
  %10297 = vmatpush1.msra.mxu0 0.0
  %10298 = vmatprep.subr.mxu0 0.0
  %10299 = vmatpush1.msra.mxu0 0.0
  %10300 = vmatprep.subr.mxu0 0.0
  %10301 = vmatpush1.msra.mxu0 0.0
  %10302 = vmatprep.subr.mxu0 0.0
  %10303 = vmatpush1.msra.mxu0 0.0
  %10304 = vmatprep.subr.mxu0 0.0
  %10305 = vmatpush1.msra.mxu0 0.0
  %10306 = vmatprep.subr.mxu0 0.0
  %10307 = vmatpush1.msra.mxu0 0.0
  %10308 = vmatprep.subr.mxu0 0.0
  %10309 = vmatpush1.msra.mxu0 0.0
  %10310 = vmatprep.subr.mxu0 0.0
  %10311 = vmatpush1.msra.mxu0 0.0
  %10312 = vmatprep.subr.mxu0 0.0
  %10313 = vmatpush1.msra.mxu0 0.0
  %10314 = vmatprep.subr.mxu0 0.0
  %10315 = vmatpush1.msra.mxu0 0.0
  %10316 = vmatprep.subr.mxu0 0.0
  %10317 = vmatpush1.msra.mxu0 0.0
  %10318 = vmatprep.subr.mxu0 0.0
  %10319 = vmatpush1.msra.mxu0 0.0
  %10320 = vmatprep.subr.mxu0 0.0
  %10321 = vmatpush1.msra.mxu0 0.0
  %10322 = vmatprep.subr.mxu0 0.0
  %10323 = vmatpush1.msra.mxu0 0.0
  %10324 = vmatprep.subr.mxu0 0.0
  %10325 = vmatpush1.msra.mxu0 0.0
  %10326 = vmatprep.subr.mxu0 0.0
  %10327 = vmatpush1.msra.mxu0 0.0
  %10328 = vmatprep.subr.mxu0 0.0
  %10329 = vmatpush1.msra.mxu0 0.0
  %10330 = vmatprep.subr.mxu0 0.0
  %10331 = vmatpush1.msra.mxu0 0.0
  %10332 = vmatprep.subr.mxu0 0.0
  %10333 = vmatpush1.msra.mxu0 0.0
  %10334 = vmatprep.mubr.f32.mxu0 0.0
  %10335 = vmatmul.mubr.f32.gmra.mrb[0].mxu0 %v2811
  %v10336 = vpop.f32.mrb[0].mxu0
  %v10337 = vadd.f32 %v694, %v10336
  %v10338 = vpop.f32.mrb[0].mxu0
  %10339 = vmatprep.mubr.f32.mxu0 0.0
  %10340 = vmatmul.mubr.f32.gmra.mrb[0].mxu0 %v2814
  %v10341 = vpop.f32.mrb[0].mxu0
  %v10342 = vadd.f32 %v699, %v10341
  %v10343 = vpop.f32.mrb[0].mxu0
  %10344 = vmatprep.mubr.f32.mxu0 0.0
  %10345 = vmatmul.mubr.f32.gmra.mrb[0].mxu0 %v2817
  %v10346 = vpop.f32.mrb[0].mxu0
  %v10347 = vadd.f32 %v704, %v10346
  %v10348 = vpop.f32.mrb[0].mxu0
  %10349 = vmatprep.mubr.f32.mxu0 0.0
  %10350 = vmatmul.mubr.f32.gmra.mrb[0].mxu0 %v2820
  %v10351 = vpop.f32.mrb[0].mxu0
  %v10352 = vadd.f32 %v709, %v10351
  %v10353 = vpop.f32.mrb[0].mxu0
  %10354 = vmatprep.mubr.f32.mxu0 0.0
  %10355 = vmatmul.mubr.f32.gmra.mrb[0].mxu0 %v2823
  %v10356 = vpop.f32.mrb[0].mxu0
  %v10357 = vadd.f32 %v714, %v10356
  %v10358 = vpop.f32.mrb[0].mxu0
  %10359 = vmatprep.mubr.f32.mxu0 0.0
  %10360 = vmatmul.mubr.f32.gmra.mrb[0].mxu0 %v2826
  %v10361 = vpop.f32.mrb[0].mxu0
  %v10362 = vadd.f32 %v719, %v10361
  %v10363 = vpop.f32.mrb[0].mxu0
  %10364 = vmatprep.mubr.f32.mxu0 0.0
  %10365 = vmatmul.mubr.f32.gmra.mrb[0].mxu0 %v2829
  %v10366 = vpop.f32.mrb[0].mxu0
  %v10367 = vadd.f32 %v724, %v10366
  %v10368 = vpop.f32.mrb[0].mxu0
  %10369 = vmatprep.mubr.f32.mxu0 0.0
  %10370 = vmatmul.mubr.f32.gmra.mrb[0].mxu0 %v2832
  %v10371 = vpop.f32.mrb[0].mxu0
  %v10372 = vadd.f32 %v729, %v10371
  %v10373 = vpop.f32.mrb[0].mxu0
  %10374 = vmatprep.mubr.f32.mxu0 0.0
  %10375 = vmatmul.mubr.f32.gmra.mrb[0].mxu0 %v2835
  %v10376 = vpop.f32.mrb[0].mxu0
  %v10377 = vadd.f32 %v734, %v10376
  %v10378 = vpop.f32.mrb[0].mxu0
  %10379 = vmatprep.mubr.f32.mxu0 0.0
  %10380 = vmatmul.mubr.f32.gmra.mrb[0].mxu0 %v2838
  %v10381 = vpop.f32.mrb[0].mxu0
  %v10382 = vadd.f32 %v739, %v10381
  %v10383 = vpop.f32.mrb[0].mxu0
  %10384 = vmatprep.mubr.f32.mxu0 0.0
  %10385 = vmatmul.mubr.f32.gmra.mrb[0].mxu0 %v2841
  %v10386 = vpop.f32.mrb[0].mxu0
  %v10387 = vadd.f32 %v744, %v10386
  %v10388 = vpop.f32.mrb[0].mxu0
  %10389 = vmatprep.mubr.f32.mxu0 0.0
  %10390 = vmatmul.mubr.f32.gmra.mrb[0].mxu0 %v2844
  %v10391 = vpop.f32.mrb[0].mxu0
  %v10392 = vadd.f32 %v749, %v10391
  %v10393 = vpop.f32.mrb[0].mxu0
  %10394 = vmatprep.mubr.f32.mxu0 0.0
  %10395 = vmatmul.mubr.f32.gmra.mrb[0].mxu0 %v2847
  %v10396 = vpop.f32.mrb[0].mxu0
  %v10397 = vadd.f32 %v754, %v10396
  %v10398 = vpop.f32.mrb[0].mxu0
  %10399 = vmatprep.mubr.f32.mxu0 0.0
  %10400 = vmatmul.mubr.f32.gmra.mrb[0].mxu0 %v2850
  %v10401 = vpop.f32.mrb[0].mxu0
  %v10402 = vadd.f32 %v759, %v10401
  %v10403 = vpop.f32.mrb[0].mxu0
  %10404 = vmatprep.mubr.f32.mxu0 0.0
  %10405 = vmatmul.mubr.f32.gmra.mrb[0].mxu0 %v2853
  %v10406 = vpop.f32.mrb[0].mxu0
  %v10407 = vadd.f32 %v764, %v10406
  %v10408 = vpop.f32.mrb[0].mxu0
  %10409 = vmatprep.mubr.f32.mxu0 0.0
  %10410 = vmatmul.mubr.f32.gmra.mrb[0].mxu0 %v2856
  %v10411 = vpop.f32.mrb[0].mxu0
  %v10412 = vadd.f32 %v769, %v10411
  %v10413 = vpop.f32.mrb[0].mxu0
  %10414 = vdwg.mxu0
  %v10415 = vld [vmem:[#allocation10] sm:$0xff]
  %v10416 = vld [vmem:[#allocation10 + $0x8] sm:$0xff]
  %v10417 = vld [vmem:[#allocation10 + $0x10] sm:$0xff]
  %v10418 = vld [vmem:[#allocation10 + $0x18] sm:$0xff]
  %v10419 = vld [vmem:[#allocation10 + $0x20] sm:$0xff]
  %v10420 = vld [vmem:[#allocation10 + $0x28] sm:$0xff]
  %v10421 = vld [vmem:[#allocation10 + $0x30] sm:$0xff]
  %v10422 = vld [vmem:[#allocation10 + $0x38] sm:$0xff]
  %v10423 = vld [vmem:[#allocation10 + $0x40] sm:$0xff]
  %v10424 = vld [vmem:[#allocation10 + $0x48] sm:$0xff]
  %v10425 = vld [vmem:[#allocation10 + $0x50] sm:$0xff]
  %v10426 = vld [vmem:[#allocation10 + $0x58] sm:$0xff]
  %v10427 = vld [vmem:[#allocation10 + $0x60] sm:$0xff]
  %v10428 = vld [vmem:[#allocation10 + $0x68] sm:$0xff]
  %v10429 = vld [vmem:[#allocation10 + $0x70] sm:$0xff]
  %v10430 = vld [vmem:[#allocation10 + $0x78] sm:$0xff]
  %v10431 = vsub.f32 %v10337, %v10415
  %v10432 = vsub.f32 %v10342, %v10416
  %v10433 = vsub.f32 %v10347, %v10417
  %v10434 = vsub.f32 %v10352, %v10418
  %v10435 = vsub.f32 %v10357, %v10419
  %v10436 = vsub.f32 %v10362, %v10420
  %v10437 = vsub.f32 %v10367, %v10421
  %v10438 = vsub.f32 %v10372, %v10422
  %v10439 = vsub.f32 %v10377, %v10423
  %v10440 = vsub.f32 %v10382, %v10424
  %v10441 = vsub.f32 %v10387, %v10425
  %v10442 = vsub.f32 %v10392, %v10426
  %v10443 = vsub.f32 %v10397, %v10427
  %v10444 = vsub.f32 %v10402, %v10428
  %v10445 = vsub.f32 %v10407, %v10429
  %v10446 = vsub.f32 %v10412, %v10430
  %v10447 = vmul.f32 %v10431, 0.5
  %v10448 = vmul.f32 %v10432, 0.5
  %v10449 = vmul.f32 %v10433, 0.5
  %v10450 = vmul.f32 %v10434, 0.5
  %v10451 = vmul.f32 %v10435, 0.5
  %v10452 = vmul.f32 %v10436, 0.5
  %v10453 = vmul.f32 %v10437, 0.5
  %v10454 = vmul.f32 %v10438, 0.5
  %v10455 = vmul.f32 %v10439, 0.5
  %v10456 = vmul.f32 %v10440, 0.5
  %v10457 = vmul.f32 %v10441, 0.5
  %v10458 = vmul.f32 %v10442, 0.5
  %v10459 = vmul.f32 %v10443, 0.5
  %v10460 = vmul.f32 %v10444, 0.5
  %v10461 = vmul.f32 %v10445, 0.5
  %v10462 = vmul.f32 %v10446, 0.5
  %v10463 = vadd.f32 %v10415, %v10447
  %v10464 = vadd.f32 %v10416, %v10448
  %v10465 = vadd.f32 %v10417, %v10449
  %v10466 = vadd.f32 %v10418, %v10450
  %v10467 = vadd.f32 %v10419, %v10451
  %v10468 = vadd.f32 %v10420, %v10452
  %v10469 = vadd.f32 %v10421, %v10453
  %v10470 = vadd.f32 %v10422, %v10454
  %v10471 = vadd.f32 %v10423, %v10455
  %v10472 = vadd.f32 %v10424, %v10456
  %v10473 = vadd.f32 %v10425, %v10457
  %v10474 = vadd.f32 %v10426, %v10458
  %v10475 = vadd.f32 %v10427, %v10459
  %v10476 = vadd.f32 %v10428, %v10460
  %v10477 = vadd.f32 %v10429, %v10461
  %v10478 = vadd.f32 %v10430, %v10462
  %vm10479 = vcmp.ge.f32.partialorder %v10463, 1.0
  %vm10480 = vcmp.ge.f32.partialorder %v10464, 1.0
  %vm10481 = vcmp.ge.f32.partialorder %v10465, 1.0
  %vm10482 = vcmp.ge.f32.partialorder %v10466, 1.0
  %vm10483 = vcmp.ge.f32.partialorder %v10467, 1.0
  %vm10484 = vcmp.ge.f32.partialorder %v10468, 1.0
  %vm10485 = vcmp.ge.f32.partialorder %v10469, 1.0
  %vm10486 = vcmp.ge.f32.partialorder %v10470, 1.0
  %vm10487 = vcmp.ge.f32.partialorder %v10471, 1.0
  %vm10488 = vcmp.ge.f32.partialorder %v10472, 1.0
  %vm10489 = vcmp.ge.f32.partialorder %v10473, 1.0
  %vm10490 = vcmp.ge.f32.partialorder %v10474, 1.0
  %vm10491 = vcmp.ge.f32.partialorder %v10475, 1.0
  %vm10492 = vcmp.ge.f32.partialorder %v10476, 1.0
  %vm10493 = vcmp.ge.f32.partialorder %v10477, 1.0
  %vm10494 = vcmp.ge.f32.partialorder %v10478, 1.0
  %v10495 = vsel %vm10479, 1, 0
  %v10496 = vsel %vm10480, 1, 0
  %v10497 = vsel %vm10481, 1, 0
  %v10498 = vsel %vm10482, 1, 0
  %v10499 = vsel %vm10483, 1, 0
  %v10500 = vsel %vm10484, 1, 0
  %v10501 = vsel %vm10485, 1, 0
  %v10502 = vsel %vm10486, 1, 0
  %v10503 = vsel %vm10487, 1, 0
  %v10504 = vsel %vm10488, 1, 0
  %v10505 = vsel %vm10489, 1, 0
  %v10506 = vsel %vm10490, 1, 0
  %v10507 = vsel %vm10491, 1, 0
  %v10508 = vsel %vm10492, 1, 0
  %v10509 = vsel %vm10493, 1, 0
  %v10510 = vsel %vm10494, 1, 0
  %v10511 = vcvt.s32.f32 %v10495
  %v10512 = vcvt.s32.f32 %v10496
  %v10513 = vcvt.s32.f32 %v10497
  %v10514 = vcvt.s32.f32 %v10498
  %v10515 = vcvt.s32.f32 %v10499
  %v10516 = vcvt.s32.f32 %v10500
  %v10517 = vcvt.s32.f32 %v10501
  %v10518 = vcvt.s32.f32 %v10502
  %v10519 = vcvt.s32.f32 %v10503
  %v10520 = vcvt.s32.f32 %v10504
  %v10521 = vcvt.s32.f32 %v10505
  %v10522 = vcvt.s32.f32 %v10506
  %v10523 = vcvt.s32.f32 %v10507
  %v10524 = vcvt.s32.f32 %v10508
  %v10525 = vcvt.s32.f32 %v10509
  %v10526 = vcvt.s32.f32 %v10510
  %v10527 = vsub.f32 1.0, %v10511
  %v10528 = vsub.f32 1.0, %v10512
  %v10529 = vsub.f32 1.0, %v10513
  %v10530 = vsub.f32 1.0, %v10514
  %v10531 = vsub.f32 1.0, %v10515
  %v10532 = vsub.f32 1.0, %v10516
  %v10533 = vsub.f32 1.0, %v10517
  %v10534 = vsub.f32 1.0, %v10518
  %v10535 = vsub.f32 1.0, %v10519
  %v10536 = vsub.f32 1.0, %v10520
  %v10537 = vsub.f32 1.0, %v10521
  %v10538 = vsub.f32 1.0, %v10522
  %v10539 = vsub.f32 1.0, %v10523
  %v10540 = vsub.f32 1.0, %v10524
  %v10541 = vsub.f32 1.0, %v10525
  %v10542 = vsub.f32 1.0, %v10526
  %v10543 = vmul.f32 %v10463, %v10527
  %v10544 = vmul.f32 %v10464, %v10528
  %v10545 = vmul.f32 %v10465, %v10529
  %v10546 = vmul.f32 %v10466, %v10530
  %v10547 = vmul.f32 %v10467, %v10531
  %v10548 = vmul.f32 %v10468, %v10532
  %v10549 = vmul.f32 %v10469, %v10533
  %v10550 = vmul.f32 %v10470, %v10534
  %v10551 = vmul.f32 %v10471, %v10535
  %v10552 = vmul.f32 %v10472, %v10536
  %v10553 = vmul.f32 %v10473, %v10537
  %v10554 = vmul.f32 %v10474, %v10538
  %v10555 = vmul.f32 %v10475, %v10539
  %v10556 = vmul.f32 %v10476, %v10540
  %v10557 = vmul.f32 %v10477, %v10541
  %v10558 = vmul.f32 %v10478, %v10542
  %10559 = vst [vmem:[#allocation10] sm:$0xff] %v10543
  %10560 = vst [vmem:[#allocation10 + $0x8] sm:$0xff] %v10544
  %10561 = vst [vmem:[#allocation10 + $0x10] sm:$0xff] %v10545
  %10562 = vst [vmem:[#allocation10 + $0x18] sm:$0xff] %v10546
  %10563 = vst [vmem:[#allocation10 + $0x20] sm:$0xff] %v10547
  %10564 = vst [vmem:[#allocation10 + $0x28] sm:$0xff] %v10548
  %10565 = vst [vmem:[#allocation10 + $0x30] sm:$0xff] %v10549
  %10566 = vst [vmem:[#allocation10 + $0x38] sm:$0xff] %v10550
  %10567 = vst [vmem:[#allocation10 + $0x40] sm:$0xff] %v10551
  %10568 = vst [vmem:[#allocation10 + $0x48] sm:$0xff] %v10552
  %10569 = vst [vmem:[#allocation10 + $0x50] sm:$0xff] %v10553
  %10570 = vst [vmem:[#allocation10 + $0x58] sm:$0xff] %v10554
  %10571 = vst [vmem:[#allocation10 + $0x60] sm:$0xff] %v10555
  %10572 = vst [vmem:[#allocation10 + $0x68] sm:$0xff] %v10556
  %10573 = vst [vmem:[#allocation10 + $0x70] sm:$0xff] %v10557
  %10574 = vst [vmem:[#allocation10 + $0x78] sm:$0xff] %v10558
  %10575 = vmatprep.subr.mxu0 0.0
  %10576 = vmatpush1.msra.mxu0 %v10511
  %10577 = vmatprep.subr.mxu0 0.0
  %10578 = vmatpush1.msra.mxu0 %v10512
  %10579 = vmatprep.subr.mxu0 0.0
  %10580 = vmatpush1.msra.mxu0 %v10513
  %10581 = vmatprep.subr.mxu0 0.0
  %10582 = vmatpush1.msra.mxu0 %v10514
  %10583 = vmatprep.subr.mxu0 0.0
  %10584 = vmatpush1.msra.mxu0 %v10515
  %10585 = vmatprep.subr.mxu0 0.0
  %10586 = vmatpush1.msra.mxu0 %v10516
  %10587 = vmatprep.subr.mxu0 0.0
  %10588 = vmatpush1.msra.mxu0 %v10517
  %10589 = vmatprep.subr.mxu0 0.0
  %10590 = vmatpush1.msra.mxu0 %v10518
  %10591 = vmatprep.subr.mxu0 0.0
  %10592 = vmatpush1.msra.mxu0 %v10519
  %10593 = vmatprep.subr.mxu0 0.0
  %10594 = vmatpush1.msra.mxu0 %v10520
  %10595 = vmatprep.subr.mxu0 0.0
  %10596 = vmatpush1.msra.mxu0 %v10521
  %10597 = vmatprep.subr.mxu0 0.0
  %10598 = vmatpush1.msra.mxu0 %v10522
  %10599 = vmatprep.subr.mxu0 0.0
  %10600 = vmatpush1.msra.mxu0 %v10523
  %10601 = vmatprep.subr.mxu0 0.0
  %10602 = vmatpush1.msra.mxu0 %v10524
  %10603 = vmatprep.subr.mxu0 0.0
  %10604 = vmatpush1.msra.mxu0 %v10525
  %10605 = vmatprep.subr.mxu0 0.0
  %10606 = vmatpush1.msra.mxu0 %v10526
  %10607 = vmatprep.subr.mxu0 0.0
  %10608 = vmatpush1.msra.mxu0 0.0
  %10609 = vmatprep.subr.mxu0 0.0
  %10610 = vmatpush1.msra.mxu0 0.0
  %10611 = vmatprep.subr.mxu0 0.0
  %10612 = vmatpush1.msra.mxu0 0.0
  %10613 = vmatprep.subr.mxu0 0.0
  %10614 = vmatpush1.msra.mxu0 0.0
  %10615 = vmatprep.subr.mxu0 0.0
  %10616 = vmatpush1.msra.mxu0 0.0
  %10617 = vmatprep.subr.mxu0 0.0
  %10618 = vmatpush1.msra.mxu0 0.0
  %10619 = vmatprep.subr.mxu0 0.0
  %10620 = vmatpush1.msra.mxu0 0.0
  %10621 = vmatprep.subr.mxu0 0.0
  %10622 = vmatpush1.msra.mxu0 0.0
  %10623 = vmatprep.subr.mxu0 0.0
  %10624 = vmatpush1.msra.mxu0 0.0
  %10625 = vmatprep.subr.mxu0 0.0
  %10626 = vmatpush1.msra.mxu0 0.0
  %10627 = vmatprep.subr.mxu0 0.0
  %10628 = vmatpush1.msra.mxu0 0.0
  %10629 = vmatprep.subr.mxu0 0.0
  %10630 = vmatpush1.msra.mxu0 0.0
  %10631 = vmatprep.subr.mxu0 0.0
  %10632 = vmatpush1.msra.mxu0 0.0
  %10633 = vmatprep.subr.mxu0 0.0
  %10634 = vmatpush1.msra.mxu0 0.0
  %10635 = vmatprep.subr.mxu0 0.0
  %10636 = vmatpush1.msra.mxu0 0.0
  %10637 = vmatprep.subr.mxu0 0.0
  %10638 = vmatpush1.msra.mxu0 0.0
  %10639 = vmatprep.mubr.f32.mxu0 0.0
  %10640 = vmatmul.mubr.f32.gmra.mrb[0].mxu0 %v603
  %v10641 = vpop.f32.mrb[0].mxu0
  %v10642 = vadd.f32 %v774, %v10641
  %v10643 = vpop.f32.mrb[0].mxu0
  %10644 = vmatprep.mubr.f32.mxu0 0.0
  %10645 = vmatmul.mubr.f32.gmra.mrb[0].mxu0 %v604
  %v10646 = vpop.f32.mrb[0].mxu0
  %v10647 = vadd.f32 %v779, %v10646
  %v10648 = vpop.f32.mrb[0].mxu0
  %10649 = vmatprep.mubr.f32.mxu0 0.0
  %10650 = vmatmul.mubr.f32.gmra.mrb[0].mxu0 %v605
  %v10651 = vpop.f32.mrb[0].mxu0
  %v10652 = vadd.f32 %v784, %v10651
  %v10653 = vpop.f32.mrb[0].mxu0
  %10654 = vmatprep.mubr.f32.mxu0 0.0
  %10655 = vmatmul.mubr.f32.gmra.mrb[0].mxu0 %v606
  %v10656 = vpop.f32.mrb[0].mxu0
  %v10657 = vadd.f32 %v789, %v10656
  %v10658 = vpop.f32.mrb[0].mxu0
  %10659 = vdwg.mxu0
  %v10660 = vld [vmem:[#allocation11] sm:$0xff]
  %v10661 = vld [vmem:[#allocation11 + $0x8] sm:$0xff]
  %v10662 = vld [vmem:[#allocation11 + $0x10] sm:$0xff]
  %v10663 = vld [vmem:[#allocation11 + $0x18] sm:$0xff]
  %v10664 = vsub.f32 %v10642, %v10660
  %v10665 = vsub.f32 %v10647, %v10661
  %v10666 = vsub.f32 %v10652, %v10662
  %v10667 = vsub.f32 %v10657, %v10663
  %v10668 = vmul.f32 %v10664, 0.5
  %v10669 = vmul.f32 %v10665, 0.5
  %v10670 = vmul.f32 %v10666, 0.5
  %v10671 = vmul.f32 %v10667, 0.5
  %v10672 = vadd.f32 %v10660, %v10668
  %v10673 = vadd.f32 %v10661, %v10669
  %v10674 = vadd.f32 %v10662, %v10670
  %v10675 = vadd.f32 %v10663, %v10671
  %vm10676 = vcmp.ge.f32.partialorder %v10672, 1.0
  %vm10677 = vcmp.ge.f32.partialorder %v10673, 1.0
  %vm10678 = vcmp.ge.f32.partialorder %v10674, 1.0
  %vm10679 = vcmp.ge.f32.partialorder %v10675, 1.0
  %v10680 = vsel %vm10676, 1, 0
  %v10681 = vsel %vm10677, 1, 0
  %v10682 = vsel %vm10678, 1, 0
  %v10683 = vsel %vm10679, 1, 0
  %v10684 = vcvt.s32.f32 %v10680
  %v10685 = vcvt.s32.f32 %v10681
  %v10686 = vcvt.s32.f32 %v10682
  %v10687 = vcvt.s32.f32 %v10683
  %v10688 = vsub.f32 1.0, %v10684
  %v10689 = vsub.f32 1.0, %v10685
  %v10690 = vsub.f32 1.0, %v10686
  %v10691 = vsub.f32 1.0, %v10687
  %v10692 = vmul.f32 %v10672, %v10688
  %v10693 = vmul.f32 %v10673, %v10689
  %v10694 = vmul.f32 %v10674, %v10690
  %v10695 = vmul.f32 %v10675, %v10691
  %10696 = vst [vmem:[#allocation11] sm:$0xff] %v10692
  %10697 = vst [vmem:[#allocation11 + $0x8] sm:$0xff] %v10693
  %10698 = vst [vmem:[#allocation11 + $0x10] sm:$0xff] %v10694
  %10699 = vst [vmem:[#allocation11 + $0x18] sm:$0xff] %v10695
  %v10700 = vadd.f32 %v10266, %v10684
  %v10701 = vadd.f32 %v10267, %v10685
  %v10702 = vadd.f32 %v10268, %v10686
  %v10703 = vadd.f32 %v10269, %v10687
  %v10704 = vadd.f32 %v8212, %v10700
  %v10705 = vadd.f32 %v8213, %v10701
  %v10706 = vadd.f32 %v8214, %v10702
  %v10707 = vadd.f32 %v8215, %v10703
  %v10708 = vld [vmem:[%s23] sm:$0xff]
  %v10709 = vld [vmem:[%s23 + $0x8] sm:$0xff]
  %v10710 = vld [vmem:[%s23 + $0x10] sm:$0xff]
  %v10711 = vld [vmem:[%s23 + $0x18] sm:$0xff]
  %v10712 = vld [vmem:[%s23 + $0x20] sm:$0xff]
  %v10713 = vld [vmem:[%s23 + $0x28] sm:$0xff]
  %v10714 = vld [vmem:[%s23 + $0x30] sm:$0xff]
  %v10715 = vld [vmem:[%s23 + $0x38] sm:$0xff]
  %v10716 = vld [vmem:[%s23 + $0x40] sm:$0xff]
  %v10717 = vld [vmem:[%s23 + $0x48] sm:$0xff]
  %v10718 = vld [vmem:[%s23 + $0x50] sm:$0xff]
  %v10719 = vld [vmem:[%s23 + $0x58] sm:$0xff]
  %v10720 = vld [vmem:[%s23 + $0x60] sm:$0xff]
  %v10721 = vld [vmem:[%s23 + $0x68] sm:$0xff]
  %v10722 = vld [vmem:[%s23 + $0x70] sm:$0xff]
  %v10723 = vld [vmem:[%s23 + $0x78] sm:$0xff]
  %10724 = vmatprep.subr.mxu0 0.0
  %10725 = vmatpush1.msra.mxu0 %v10708
  %10726 = vmatprep.subr.mxu0 0.0
  %10727 = vmatpush1.msra.mxu0 %v10709
  %10728 = vmatprep.subr.mxu0 0.0
  %10729 = vmatpush1.msra.mxu0 %v10710
  %10730 = vmatprep.subr.mxu0 0.0
  %10731 = vmatpush1.msra.mxu0 %v10711
  %10732 = vmatprep.subr.mxu0 0.0
  %10733 = vmatpush1.msra.mxu0 %v10712
  %10734 = vmatprep.subr.mxu0 0.0
  %10735 = vmatpush1.msra.mxu0 %v10713
  %10736 = vmatprep.subr.mxu0 0.0
  %10737 = vmatpush1.msra.mxu0 %v10714
  %10738 = vmatprep.subr.mxu0 0.0
  %10739 = vmatpush1.msra.mxu0 %v10715
  %10740 = vmatprep.subr.mxu0 0.0
  %10741 = vmatpush1.msra.mxu0 %v10716
  %10742 = vmatprep.subr.mxu0 0.0
  %10743 = vmatpush1.msra.mxu0 %v10717
  %10744 = vmatprep.subr.mxu0 0.0
  %10745 = vmatpush1.msra.mxu0 %v10718
  %10746 = vmatprep.subr.mxu0 0.0
  %10747 = vmatpush1.msra.mxu0 %v10719
  %10748 = vmatprep.subr.mxu0 0.0
  %10749 = vmatpush1.msra.mxu0 %v10720
  %10750 = vmatprep.subr.mxu0 0.0
  %10751 = vmatpush1.msra.mxu0 %v10721
  %10752 = vmatprep.subr.mxu0 0.0
  %10753 = vmatpush1.msra.mxu0 %v10722
  %10754 = vmatprep.subr.mxu0 0.0
  %10755 = vmatpush1.msra.mxu0 %v10723
  %10756 = vmatprep.subr.mxu0 0.0
  %10757 = vmatpush1.msra.mxu0 0.0
  %10758 = vmatprep.subr.mxu0 0.0
  %10759 = vmatpush1.msra.mxu0 0.0
  %10760 = vmatprep.subr.mxu0 0.0
  %10761 = vmatpush1.msra.mxu0 0.0
  %10762 = vmatprep.subr.mxu0 0.0
  %10763 = vmatpush1.msra.mxu0 0.0
  %10764 = vmatprep.subr.mxu0 0.0
  %10765 = vmatpush1.msra.mxu0 0.0
  %10766 = vmatprep.subr.mxu0 0.0
  %10767 = vmatpush1.msra.mxu0 0.0
  %10768 = vmatprep.subr.mxu0 0.0
  %10769 = vmatpush1.msra.mxu0 0.0
  %10770 = vmatprep.subr.mxu0 0.0
  %10771 = vmatpush1.msra.mxu0 0.0
  %10772 = vmatprep.subr.mxu0 0.0
  %10773 = vmatpush1.msra.mxu0 0.0
  %10774 = vmatprep.subr.mxu0 0.0
  %10775 = vmatpush1.msra.mxu0 0.0
  %10776 = vmatprep.subr.mxu0 0.0
  %10777 = vmatpush1.msra.mxu0 0.0
  %10778 = vmatprep.subr.mxu0 0.0
  %10779 = vmatpush1.msra.mxu0 0.0
  %10780 = vmatprep.subr.mxu0 0.0
  %10781 = vmatpush1.msra.mxu0 0.0
  %10782 = vmatprep.subr.mxu0 0.0
  %10783 = vmatpush1.msra.mxu0 0.0
  %10784 = vmatprep.subr.mxu0 0.0
  %10785 = vmatpush1.msra.mxu0 0.0
  %10786 = vmatprep.subr.mxu0 0.0
  %10787 = vmatpush1.msra.mxu0 0.0
  %10788 = vmatprep.mubr.f32.mxu0 0.0
  %10789 = vmatmul.mubr.f32.gmra.mrb[0].mxu0 %v10704
  %v10790 = vpop.f32.mrb[0].mxu0
  %v10791 = vadd.f32 0.0, %v10790
  %v10792 = vpop.f32.mrb[0].mxu0
  %10793 = vmatprep.mubr.f32.mxu0 0.0
  %10794 = vmatmul.mubr.f32.gmra.mrb[0].mxu0 %v10705
  %v10795 = vpop.f32.mrb[0].mxu0
  %v10796 = vadd.f32 0.0, %v10795
  %v10797 = vpop.f32.mrb[0].mxu0
  %10798 = vmatprep.mubr.f32.mxu0 0.0
  %10799 = vmatmul.mubr.f32.gmra.mrb[0].mxu0 %v10706
  %v10800 = vpop.f32.mrb[0].mxu0
  %v10801 = vadd.f32 0.0, %v10800
  %v10802 = vpop.f32.mrb[0].mxu0
  %10803 = vmatprep.mubr.f32.mxu0 0.0
  %10804 = vmatmul.mubr.f32.gmra.mrb[0].mxu0 %v10707
  %v10805 = vpop.f32.mrb[0].mxu0
  %v10806 = vadd.f32 0.0, %v10805
  %v10807 = vpop.f32.mrb[0].mxu0
  %10808 = vdwg.mxu0
  %v10809 = vld [vmem:[%s19] sm:$0xff]
  %v10810 = vld [vmem:[%s19 + $0x8] sm:$0x3]
  %v10811 = vld [vmem:[%s20] sm:$0xff]
  %v10812 = vld [vmem:[%s20 + $0x8] sm:$0x3]
  %10814 = vset.pattern.permute.xlu0 0
  %10815 = vperm.xlu0 %10814, %v10811
  %v10816 = vpop.permute.xlu0 %10815
  %10819 = vset.pattern.permute.xlu0 0
  %10820 = vperm.xlu0 %10819, %v10812
  %v10821 = vpop.permute.xlu0 %10820
  %v10824 = vsel %vm791, %v10809, 0
  %v10827 = vsel %vm791, %v10810, 0
  %10829 = vmatprep.subr.mxu0 0.0
  %10830 = vmatpush1.msra.mxu0 %v10791
  %10831 = vmatprep.subr.mxu0 0.0
  %10832 = vmatpush1.msra.mxu0 %v10796
  %10833 = vmatprep.subr.mxu0 0.0
  %10834 = vmatpush1.msra.mxu0 %v10801
  %10835 = vmatprep.subr.mxu0 0.0
  %10836 = vmatpush1.msra.mxu0 %v10806
  %10837 = vmatprep.subr.mxu0 0.0
  %10838 = vmatpush1.msra.mxu0 0.0
  %10839 = vmatprep.subr.mxu0 0.0
  %10840 = vmatpush1.msra.mxu0 0.0
  %10841 = vmatprep.subr.mxu0 0.0
  %10842 = vmatpush1.msra.mxu0 0.0
  %10843 = vmatprep.subr.mxu0 0.0
  %10844 = vmatpush1.msra.mxu0 0.0
  %10845 = vmatprep.subr.mxu0 0.0
  %10846 = vmatpush1.msra.mxu0 0.0
  %10847 = vmatprep.subr.mxu0 0.0
  %10848 = vmatpush1.msra.mxu0 0.0
  %10849 = vmatprep.subr.mxu0 0.0
  %10850 = vmatpush1.msra.mxu0 0.0
  %10851 = vmatprep.subr.mxu0 0.0
  %10852 = vmatpush1.msra.mxu0 0.0
  %10853 = vmatprep.subr.mxu0 0.0
  %10854 = vmatpush1.msra.mxu0 0.0
  %10855 = vmatprep.subr.mxu0 0.0
  %10856 = vmatpush1.msra.mxu0 0.0
  %10857 = vmatprep.subr.mxu0 0.0
  %10858 = vmatpush1.msra.mxu0 0.0
  %10859 = vmatprep.subr.mxu0 0.0
  %10860 = vmatpush1.msra.mxu0 0.0
  %10861 = vmatprep.subr.mxu0 0.0
  %10862 = vmatpush1.msra.mxu0 0.0
  %10863 = vmatprep.subr.mxu0 0.0
  %10864 = vmatpush1.msra.mxu0 0.0
  %10865 = vmatprep.subr.mxu0 0.0
  %10866 = vmatpush1.msra.mxu0 0.0
  %10867 = vmatprep.subr.mxu0 0.0
  %10868 = vmatpush1.msra.mxu0 0.0
  %10869 = vmatprep.subr.mxu0 0.0
  %10870 = vmatpush1.msra.mxu0 0.0
  %10871 = vmatprep.subr.mxu0 0.0
  %10872 = vmatpush1.msra.mxu0 0.0
  %10873 = vmatprep.subr.mxu0 0.0
  %10874 = vmatpush1.msra.mxu0 0.0
  %10875 = vmatprep.subr.mxu0 0.0
  %10876 = vmatpush1.msra.mxu0 0.0
  %10877 = vmatprep.subr.mxu0 0.0
  %10878 = vmatpush1.msra.mxu0 0.0
  %10879 = vmatprep.subr.mxu0 0.0
  %10880 = vmatpush1.msra.mxu0 0.0
  %10881 = vmatprep.subr.mxu0 0.0
  %10882 = vmatpush1.msra.mxu0 0.0
  %10883 = vmatprep.subr.mxu0 0.0
  %10884 = vmatpush1.msra.mxu0 0.0
  %10885 = vmatprep.subr.mxu0 0.0
  %10886 = vmatpush1.msra.mxu0 0.0
  %10887 = vmatprep.subr.mxu0 0.0
  %10888 = vmatpush1.msra.mxu0 0.0
  %10889 = vmatprep.subr.mxu0 0.0
  %10890 = vmatpush1.msra.mxu0 0.0
  %10891 = vmatprep.subr.mxu0 0.0
  %10892 = vmatpush1.msra.mxu0 0.0
  %10893 = vmatprep.mubr.f32.mxu0 0.0
  %10894 = vmatmul.mubr.f32.gmra.mrb[0].mxu0 %v10824
  %v10895 = vpop.f32.mrb[0].mxu0
  %v10896 = vadd.f32 %v10816, %v10895
  %v10897 = vpop.f32.mrb[0].mxu0
  %10898 = vmatprep.mubr.f32.mxu0 0.0
  %10899 = vmatmul.mubr.f32.gmra.mrb[0].mxu0 %v10827
  %v10900 = vpop.f32.mrb[0].mxu0
  %v10901 = vadd.f32 %v10821, %v10900
  %v10902 = vpop.f32.mrb[0].mxu0
  %10903 = vdwg.mxu0
  %vm10904 = vcmask 15360
  %10905 = vst.msk [vmem:[%s24] sm:$0xff] %vm10904, %v10896
  %vm10906 = vcmask 9216
  %10907 = vst.msk [vmem:[%s24 + $0x8] sm:$0x3] %vm10906, %v10901
  // Predicated region
  $region98: #{spikformer_forward.1} parent=0 // pred_check
    _
  $region99: #{spikformer_forward.1} parent=0 // pred_check_branch
    %10909 = sbr.rel (0) target = $region101
  $region100: #{spikformer_forward.1} parent=0 // pred_region
    _
  $region101: #{spikformer_forward.1} parent=0 // pred_fallthru
    _
  // Predicated region
  $region102: #{spikformer_forward.1} parent=0 // pred_check
    _
  $region103: #{spikformer_forward.1} parent=0 // pred_check_branch
    %10911 = sbr.rel (0) target = $region105
  $region104: #{spikformer_forward.1} parent=0 // pred_region
    _
  $region105: #{spikformer_forward.1} parent=0 // pred_fallthru
    _
  // Predicated region
  $region106: #{spikformer_forward.1} parent=0 // pred_check
    _
  $region107: #{spikformer_forward.1} parent=0 // pred_check_branch
    %10913 = sbr.rel (0) target = $region109
  $region108: #{spikformer_forward.1} parent=0 // pred_region
    _
  $region109: #{spikformer_forward.1} parent=0 // pred_fallthru
    _
  // Predicated region
  $region110: #{spikformer_forward.1} parent=0 // pred_check
    _
  $region111: #{spikformer_forward.1} parent=0 // pred_check_branch
    %10915 = sbr.rel (0) target = $region113
  $region112: #{spikformer_forward.1} parent=0 // pred_region
    _
  $region113: #{spikformer_forward.1} parent=0 // pred_fallthru
    _

</llo_original>
